<compile_context>
chip_gen: v5e
topology: v5e:2x2
jax: 0.10.0
libtpu: 0.0.40
codegen_flags: <defaults>
</compile_context>

<pallas_src>
import math
from functools import partial

import jax
import jax.numpy as jnp
from jax.experimental import pallas as pl
from jax.experimental.pallas import tpu as pltpu

EPS = 1e-6
IMG_TOKENS = 257            # fixed split in the PyTorch module: context[:, :257]
VMEM_LIMIT = 48 * 1024 * 1024


def _pick_tile(L, candidates=(512, 256, 128)):
    for t in candidates:
        if L % t == 0:
            return t
    return L                # fall back to a full-extent block


def _pad_seq(t, mult):
    pad = (-t.shape[1]) % mult
    if pad:
        t = jnp.pad(t, ((0, 0), (0, pad), (0, 0)))
    return t


# ----------------------------------------------------------------------------
# Kernel 1: tiled Linear (+ optional fused RMSNorm over the full channel dim)
# ----------------------------------------------------------------------------
def _proj_kernel_factory(apply_norm):
    def kernel(x_ref, w_ref, b_ref, g_ref, o_ref):
        # native-dtype operands, f32 accumulator on the MXU
        y = jnp.dot(x_ref[...], w_ref[...], preferred_element_type=jnp.float32)
        y = y + b_ref[...].astype(jnp.float32)                 # [TL, Cout]
        if apply_norm:
            var = jnp.mean(y * y, axis=-1, keepdims=True)
            y = y * jax.lax.rsqrt(var + EPS)
            y = y * g_ref[...].astype(jnp.float32)
        o_ref[...] = y.astype(o_ref.dtype)
    return kernel


def linear_proj(x, w, b, gamma=None):
    """x: [B, L, Cin]; w: [Cin, Cout]; b: [Cout]; optional fused RMSNorm(gamma)."""
    B, L, Cin = x.shape
    Cout = w.shape[1]
    TL = _pick_tile(L)
    apply_norm = gamma is not None
    if gamma is None:
        gamma = jnp.ones((Cout,), x.dtype)
    # TODO(synk): for very large Cout (e.g. C=5120 on v7x) the weight block
    # should additionally be tiled over Cout with a two-pass RMSNorm.
    kernel = _proj_kernel_factory(apply_norm)
    return pl.pallas_call(
        kernel,
        out_shape=jax.ShapeDtypeStruct((B, L, Cout), x.dtype),
        grid_spec=pltpu.PrefetchScalarGridSpec(
            num_scalar_prefetch=0,
            grid=(B, L // TL),
            in_specs=[
                pl.BlockSpec((pl.Squeezed(), TL, Cin), lambda b, i: (b, i, 0)),
                pl.BlockSpec((Cin, Cout), lambda b, i: (0, 0)),   # VMEM-resident
                pl.BlockSpec((1, Cout), lambda b, i: (0, 0)),
                pl.BlockSpec((1, Cout), lambda b, i: (0, 0)),
            ],
            out_specs=pl.BlockSpec((pl.Squeezed(), TL, Cout), lambda b, i: (b, i, 0)),
        ),
        compiler_params=pltpu.CompilerParams(
            dimension_semantics=("parallel", "parallel"),
            vmem_limit_bytes=VMEM_LIMIT),
    )(x, w, b.reshape(1, Cout), gamma.reshape(1, Cout))


# ----------------------------------------------------------------------------
# Kernel 2: fused (image + text) cross-attention, head-indexed from [B, L, C]
# ----------------------------------------------------------------------------
def _fused_attn_kernel(lens_ref, q_ref, ki_ref, vi_ref, kt_ref, vt_ref, o_ref,
                       *, scale, img_len):
    b = pl.program_id(0)
    q = q_ref[...]                                   # [TQ, D] native dtype
    q = q * jnp.asarray(scale, q.dtype)              # fold softmax scale into Q

    def branch(k_ref, v_ref, valid_len):
        # scores: bf16/f32 operands, f32 accumulator
        s = jax.lax.dot_general(q, k_ref[...], (((1,), (1,)), ((), ())),
                                preferred_element_type=jnp.float32)   # [TQ, Lk]
        if valid_len is not None:
            col = jax.lax.broadcasted_iota(jnp.int32, s.shape, 1)
            s = jnp.where(col < valid_len, s, -jnp.inf)
        m = jnp.max(s, axis=-1, keepdims=True)
        p = jnp.exp(s - m)
        denom = jnp.sum(p, axis=-1, keepdims=True)
        o = jnp.dot(p.astype(v_ref.dtype), v_ref[...],
                    preferred_element_type=jnp.float32)               # [TQ, D]
        return o * pl.reciprocal(denom, approx=True)

    # image branch: k_lens=None in the reference -> mask only the 128-padding
    img_valid = None if img_len == ki_ref.shape[0] else img_len
    o_img = branch(ki_ref, vi_ref, img_valid)
    # text branch: masked by per-batch context length (covers padding too).
    # TODO(synk): a zero context length would make the text row all -inf (NaN),
    # same as the PyTorch reference; guard upstream if that can occur.
    o_txt = branch(kt_ref, vt_ref, lens_ref[b])
    o_ref[...] = (o_img + o_txt).astype(o_ref.dtype)


def fused_cross_attention(q, k_img, v_img, k_txt, v_txt, context_lens,
                          *, num_heads, img_len):
    """All tensors in [B, L, C] layout (C = H*D); heads indexed via BlockSpec."""
    B, Lq, C = q.shape
    D = C // num_heads
    Lki = k_img.shape[1]
    Lkt = k_txt.shape[1]
    TQ = _pick_tile(Lq)
    kernel = partial(_fused_attn_kernel, scale=1.0 / math.sqrt(D), img_len=img_len)

    q_spec = pl.BlockSpec((pl.Squeezed(), TQ, D), lambda b, h, i, lens: (b, i, h))
    kv_spec = lambda Lk: pl.BlockSpec(
        (pl.Squeezed(), Lk, D), lambda b, h, i, lens: (b, 0, h))

    return pl.pallas_call(
        kernel,
        out_shape=jax.ShapeDtypeStruct((B, Lq, C), q.dtype),
        grid_spec=pltpu.PrefetchScalarGridSpec(
            num_scalar_prefetch=1,
            grid=(B, num_heads, Lq // TQ),
            in_specs=[q_spec, kv_spec(Lki), kv_spec(Lki), kv_spec(Lkt), kv_spec(Lkt)],
            out_specs=q_spec,
        ),
        compiler_params=pltpu.CompilerParams(
            dimension_semantics=("parallel", "parallel", "parallel"),
            vmem_limit_bytes=VMEM_LIMIT),
    )(context_lens, q, k_img, v_img, k_txt, v_txt)


# ----------------------------------------------------------------------------
# Full forward
# ----------------------------------------------------------------------------
def wan_i2v_cross_attention(params, x, context, context_lens, *, num_heads):
    B, L1, C = x.shape

    context_img = _pad_seq(context[:, :IMG_TOKENS], 128)   # 257 -> 384
    context_txt = _pad_seq(context[:, IMG_TOKENS:], 128)

    x_p = _pad_seq(x, 128)        # query rows padded then sliced off at the end
    L1p = x_p.shape[1]

    q = linear_proj(x_p, params["wq"], params["bq"], params["gq"])
    k = linear_proj(context_txt, params["wk"], params["bk"], params["gk"])
    v = linear_proj(context_txt, params["wv"], params["bv"])
    k_img = linear_proj(context_img, params["wk_img"], params["bk_img"], params["gk_img"])
    v_img = linear_proj(context_img, params["wv_img"], params["bv_img"])

    attn = fused_cross_attention(q, k_img, v_img, k, v,
                                 context_lens.astype(jnp.int32),
                                 num_heads=num_heads, img_len=IMG_TOKENS)

    out = linear_proj(attn, params["wo"], params["bo"])
    if L1p != L1:
        out = out[:, :L1]
    return out


# ----------------------------------------------------------------------------
# Deterministic parameter init + pure-JAX reference for verification
# ----------------------------------------------------------------------------
def init_params(key, dim):
    ks = iter(jax.random.split(key, 16))
    w = lambda: jax.random.normal(next(ks), (dim, dim), jnp.float32) / math.sqrt(dim)
    b = lambda: 0.02 * jax.random.normal(next(ks), (dim,), jnp.float32)
    g = lambda: 1.0 + 0.1 * jax.random.normal(next(ks), (dim,), jnp.float32)
    return dict(
        wq=w(), bq=b(), gq=g(),
        wk=w(), bk=b(), gk=g(),
        wv=w(), bv=b(),
        wk_img=w(), bk_img=b(), gk_img=g(),
        wv_img=w(), bv_img=b(),
        wo=w(), bo=b(),
    )


def reference(params, x, context, context_lens, *, num_heads):
    B, L1, C = x.shape
    D = C // num_heads
    P = jax.lax.Precision.HIGHEST

    def rms(y, gm):
        yf = y.astype(jnp.float32)
        var = jnp.mean(yf * yf, axis=-1, keepdims=True)
        return (yf * jax.lax.rsqrt(var + EPS)) * gm

    def lin(t, w, b):
        return jnp.einsum("blc,cd->bld", t.astype(jnp.float32), w, precision=P) + b

    ci, ct = context[:, :IMG_TOKENS], context[:, IMG_TOKENS:]
    q = rms(lin(x, params["wq"], params["bq"]), params["gq"]).reshape(B, L1, num_heads, D)
    k = rms(lin(ct, params["wk"], params["bk"]), params["gk"]).reshape(B, -1, num_heads, D)
    v = lin(ct, params["wv"], params["bv"]).reshape(B, -1, num_heads, D)
    ki = rms(lin(ci, params["wk_img"], params["bk_img"]), params["gk_img"]).reshape(B, -1, num_heads, D)
    vi = lin(ci, params["wv_img"], params["bv_img"]).reshape(B, -1, num_heads, D)

    def attn(q_, k_, v_, lens):
        Lk = k_.shape[1]
        s = jnp.einsum("bqhd,bkhd->bhqk", q_, k_, precision=P) / math.sqrt(D)
        if lens is not None:
            m = jnp.arange(Lk)[None, None, None, :] < lens[:, None, None, None]
            s = jnp.where(m, s, -jnp.inf)
        p = jax.nn.softmax(s, axis=-1)
        return jnp.einsum("bhqk,bkhd->bqhd", p, v_, precision=P)

    img_x = attn(q, ki, vi, None).reshape(B, L1, C)
    txt_x = attn(q, k, v, context_lens).reshape(B, L1, C)
    return jnp.einsum("blc,cd->bld", txt_x + img_x, params["wo"], precision=P) + params["bo"]


if __name__ == "__main__":
    # small but layout-realistic shapes: head_dim = 128 so head blocks are
    # lane-aligned; 2 heads, 256 channels, 256 query tokens, 63 text tokens.
    B, C, num_heads = 2, 256, 2
    L1 = 256
    L2 = IMG_TOKENS + 63

    key = jax.random.PRNGKey(0)
    kp, kx, kc = jax.random.split(key, 3)
    params = init_params(kp, C)
    x = jax.random.normal(kx, (B, L1, C), jnp.float32)
    context = jax.random.normal(kc, (B, L2, C), jnp.float32)
    context_lens = jnp.array([40, 63], jnp.int32)   # valid text-key lengths

    fwd = jax.jit(partial(wan_i2v_cross_attention, num_heads=num_heads))

    # f32 run, checked against the pure-JAX reference.
    out = jax.block_until_ready(fwd(params, x, context, context_lens))
    ref = reference(params, x, context, context_lens, num_heads=num_heads)
    assert out.shape == (B, L1, C)
    err = float(jnp.max(jnp.abs(out - ref)))
    assert jnp.allclose(out, ref, atol=2e-2, rtol=2e-2), err

    # bf16 run (native-dtype MXU operands path); sanity only.
    to_bf16 = lambda t: t.astype(jnp.bfloat16)
    params_bf = jax.tree_util.tree_map(to_bf16, params)
    out_bf = jax.block_until_ready(
        fwd(params_bf, to_bf16(x), to_bf16(context), context_lens))
    assert out_bf.shape == (B, L1, C)
    assert bool(jnp.all(jnp.isfinite(out_bf.astype(jnp.float32))))

    print("KERNEL_OK")
</pallas_src>

<mosaic_0001>
module attributes {stable_mosaic.version = 11 : i64} {
  func.func @kernel(%arg0: i32, %arg1: i32, %arg2: memref<1x128x256xf32, #tpu.memory_space<vmem>>, %arg3: memref<256x256xf32, #tpu.memory_space<vmem>>, %arg4: memref<1x256xf32, #tpu.memory_space<vmem>>, %arg5: memref<1x256xf32, #tpu.memory_space<vmem>>, %arg6: memref<1x128x256xf32, #tpu.memory_space<vmem>>) attributes {dimension_semantics = [#tpu.dimension_semantics<parallel>, #tpu.dimension_semantics<parallel>], iteration_bounds = array<i64: 2, 3>, scalar_prefetch = 0 : i64, scratch_operands = 0 : i64, tpu.core_type = #tpu.core_type<tc>, window_params = [{transform_indices = @transform_0, window_bounds = array<i64: 1, 128, 256>}, {pipeline_mode = #tpu.pipeline_mode<synchronous>, transform_indices = @transform_1, window_bounds = array<i64: 256, 256>}, {pipeline_mode = #tpu.pipeline_mode<synchronous>, transform_indices = @transform_2, window_bounds = array<i64: 1, 256>}, {pipeline_mode = #tpu.pipeline_mode<synchronous>, transform_indices = @transform_3, window_bounds = array<i64: 1, 256>}, {transform_indices = @transform_4, window_bounds = array<i64: 1, 128, 256>}]} {
    %c0 = arith.constant 0 : index
    %c0_0 = arith.constant 0 : index
    %c0_1 = arith.constant 0 : index
    %0 = vector.load %arg2[%c0, %c0_0, %c0_1] : memref<1x128x256xf32, #tpu.memory_space<vmem>>, vector<1x128x256xf32>
    %1 = vector.shape_cast %0 : vector<1x128x256xf32> to vector<128x256xf32>
    %c0_2 = arith.constant 0 : index
    %c0_3 = arith.constant 0 : index
    %2 = vector.load %arg3[%c0_2, %c0_3] : memref<256x256xf32, #tpu.memory_space<vmem>>, vector<256x256xf32>
    %cst = arith.constant dense<0.000000e+00> : vector<128x256xf32>
    %3 = tpu.matmul %1, %2, %cst {dimension_numbers = #tpu.dot_dimension_numbers<[1], [0], [0], [1], [0, 0, 1, 1], [], []>} : vector<128x256xf32>, vector<256x256xf32>, vector<128x256xf32> -> vector<128x256xf32>
    %c0_4 = arith.constant 0 : index
    %c0_5 = arith.constant 0 : index
    %4 = vector.load %arg4[%c0_4, %c0_5] : memref<1x256xf32, #tpu.memory_space<vmem>>, vector<1x256xf32>
    %5 = vector.broadcast %4 : vector<1x256xf32> to vector<128x256xf32>
    %6 = arith.addf %3, %5 : vector<128x256xf32>
    %c0_6 = arith.constant 0 : index
    %c0_7 = arith.constant 0 : index
    %c0_8 = arith.constant 0 : index
    %7 = vector.load %arg6[%c0_6, %c0_7, %c0_8] : memref<1x128x256xf32, #tpu.memory_space<vmem>>, vector<1x128x256xf32>
    %8 = vector.shape_cast %7 : vector<1x128x256xf32> to vector<128x256xf32>
    %9 = vector.shape_cast %6 : vector<128x256xf32> to vector<1x128x256xf32>
    tpu.vector_store %arg6[%c0_6, %c0_7, %c0_8], %9 {strides = array<i32>} : memref<1x128x256xf32, #tpu.memory_space<vmem>>, vector<1x128x256xf32>,
    return
  }
  func.func @transform_0(%arg0: i32, %arg1: i32) -> (i32, i32, i32) {
    %c0_i32 = arith.constant 0 : i32
    %c0_i32_0 = arith.constant 0 : i32
    return %arg0, %arg1, %c0_i32 : i32, i32, i32
  }
  func.func @transform_1(%arg0: i32, %arg1: i32) -> (i32, i32) {
    %c0_i32 = arith.constant 0 : i32
    %c0_i32_0 = arith.constant 0 : i32
    %c0_i32_1 = arith.constant 0 : i32
    return %c0_i32, %c0_i32_0 : i32, i32
  }
  func.func @transform_2(%arg0: i32, %arg1: i32) -> (i32, i32) {
    %c0_i32 = arith.constant 0 : i32
    %c0_i32_0 = arith.constant 0 : i32
    %c0_i32_1 = arith.constant 0 : i32
    return %c0_i32, %c0_i32_0 : i32, i32
  }
  func.func @transform_3(%arg0: i32, %arg1: i32) -> (i32, i32) {
    %c0_i32 = arith.constant 0 : i32
    %c0_i32_0 = arith.constant 0 : i32
    %c0_i32_1 = arith.constant 0 : i32
    return %c0_i32, %c0_i32_0 : i32, i32
  }
  func.func @transform_4(%arg0: i32, %arg1: i32) -> (i32, i32, i32) {
    %c0_i32 = arith.constant 0 : i32
    %c0_i32_0 = arith.constant 0 : i32
    return %arg0, %arg1, %c0_i32 : i32, i32, i32
  }
}

module attributes {stable_mosaic.version = 11 : i64} {
  func.func @kernel(%arg0: i32, %arg1: i32, %arg2: memref<1x128x256xf32, #tpu.memory_space<vmem>>, %arg3: memref<256x256xf32, #tpu.memory_space<vmem>>, %arg4: memref<1x256xf32, #tpu.memory_space<vmem>>, %arg5: memref<1x256xf32, #tpu.memory_space<vmem>>, %arg6: memref<1x128x256xf32, #tpu.memory_space<vmem>>) attributes {dimension_semantics = [#tpu.dimension_semantics<parallel>, #tpu.dimension_semantics<parallel>], iteration_bounds = array<i64: 2, 1>, scalar_prefetch = 0 : i64, scratch_operands = 0 : i64, tpu.core_type = #tpu.core_type<tc>, window_params = [{transform_indices = @transform_0, window_bounds = array<i64: 1, 128, 256>}, {pipeline_mode = #tpu.pipeline_mode<synchronous>, transform_indices = @transform_1, window_bounds = array<i64: 256, 256>}, {pipeline_mode = #tpu.pipeline_mode<synchronous>, transform_indices = @transform_2, window_bounds = array<i64: 1, 256>}, {pipeline_mode = #tpu.pipeline_mode<synchronous>, transform_indices = @transform_3, window_bounds = array<i64: 1, 256>}, {transform_indices = @transform_4, window_bounds = array<i64: 1, 128, 256>}]} {
    %c0 = arith.constant 0 : index
    %c0_0 = arith.constant 0 : index
    %c0_1 = arith.constant 0 : index
    %0 = vector.load %arg2[%c0, %c0_0, %c0_1] : memref<1x128x256xf32, #tpu.memory_space<vmem>>, vector<1x128x256xf32>
    %1 = vector.shape_cast %0 : vector<1x128x256xf32> to vector<128x256xf32>
    %c0_2 = arith.constant 0 : index
    %c0_3 = arith.constant 0 : index
    %2 = vector.load %arg3[%c0_2, %c0_3] : memref<256x256xf32, #tpu.memory_space<vmem>>, vector<256x256xf32>
    %cst = arith.constant dense<0.000000e+00> : vector<128x256xf32>
    %3 = tpu.matmul %1, %2, %cst {dimension_numbers = #tpu.dot_dimension_numbers<[1], [0], [0], [1], [0, 0, 1, 1], [], []>} : vector<128x256xf32>, vector<256x256xf32>, vector<128x256xf32> -> vector<128x256xf32>
    %c0_4 = arith.constant 0 : index
    %c0_5 = arith.constant 0 : index
    %4 = vector.load %arg4[%c0_4, %c0_5] : memref<1x256xf32, #tpu.memory_space<vmem>>, vector<1x256xf32>
    %5 = vector.broadcast %4 : vector<1x256xf32> to vector<128x256xf32>
    %6 = arith.addf %3, %5 : vector<128x256xf32>
    %c0_6 = arith.constant 0 : index
    %c0_7 = arith.constant 0 : index
    %c0_8 = arith.constant 0 : index
    %7 = vector.load %arg6[%c0_6, %c0_7, %c0_8] : memref<1x128x256xf32, #tpu.memory_space<vmem>>, vector<1x128x256xf32>
    %8 = vector.shape_cast %7 : vector<1x128x256xf32> to vector<128x256xf32>
    %9 = vector.shape_cast %6 : vector<128x256xf32> to vector<1x128x256xf32>
    tpu.vector_store %arg6[%c0_6, %c0_7, %c0_8], %9 {strides = array<i32>} : memref<1x128x256xf32, #tpu.memory_space<vmem>>, vector<1x128x256xf32>,
    return
  }
  func.func @transform_0(%arg0: i32, %arg1: i32) -> (i32, i32, i32) {
    %c0_i32 = arith.constant 0 : i32
    %c0_i32_0 = arith.constant 0 : i32
    return %arg0, %arg1, %c0_i32 : i32, i32, i32
  }
  func.func @transform_1(%arg0: i32, %arg1: i32) -> (i32, i32) {
    %c0_i32 = arith.constant 0 : i32
    %c0_i32_0 = arith.constant 0 : i32
    %c0_i32_1 = arith.constant 0 : i32
    return %c0_i32, %c0_i32_0 : i32, i32
  }
  func.func @transform_2(%arg0: i32, %arg1: i32) -> (i32, i32) {
    %c0_i32 = arith.constant 0 : i32
    %c0_i32_0 = arith.constant 0 : i32
    %c0_i32_1 = arith.constant 0 : i32
    return %c0_i32, %c0_i32_0 : i32, i32
  }
  func.func @transform_3(%arg0: i32, %arg1: i32) -> (i32, i32) {
    %c0_i32 = arith.constant 0 : i32
    %c0_i32_0 = arith.constant 0 : i32
    %c0_i32_1 = arith.constant 0 : i32
    return %c0_i32, %c0_i32_0 : i32, i32
  }
  func.func @transform_4(%arg0: i32, %arg1: i32) -> (i32, i32, i32) {
    %c0_i32 = arith.constant 0 : i32
    %c0_i32_0 = arith.constant 0 : i32
    return %arg0, %arg1, %c0_i32 : i32, i32, i32
  }
}

module attributes {stable_mosaic.version = 11 : i64} {
  func.func @kernel(%arg0: i32, %arg1: i32, %arg2: memref<1x128x256xf32, #tpu.memory_space<vmem>>, %arg3: memref<256x256xf32, #tpu.memory_space<vmem>>, %arg4: memref<1x256xf32, #tpu.memory_space<vmem>>, %arg5: memref<1x256xf32, #tpu.memory_space<vmem>>, %arg6: memref<1x128x256xf32, #tpu.memory_space<vmem>>) attributes {dimension_semantics = [#tpu.dimension_semantics<parallel>, #tpu.dimension_semantics<parallel>], iteration_bounds = array<i64: 2, 3>, scalar_prefetch = 0 : i64, scratch_operands = 0 : i64, tpu.core_type = #tpu.core_type<tc>, window_params = [{transform_indices = @transform_0, window_bounds = array<i64: 1, 128, 256>}, {pipeline_mode = #tpu.pipeline_mode<synchronous>, transform_indices = @transform_1, window_bounds = array<i64: 256, 256>}, {pipeline_mode = #tpu.pipeline_mode<synchronous>, transform_indices = @transform_2, window_bounds = array<i64: 1, 256>}, {pipeline_mode = #tpu.pipeline_mode<synchronous>, transform_indices = @transform_3, window_bounds = array<i64: 1, 256>}, {transform_indices = @transform_4, window_bounds = array<i64: 1, 128, 256>}]} {
    %c0 = arith.constant 0 : index
    %c0_0 = arith.constant 0 : index
    %c0_1 = arith.constant 0 : index
    %0 = vector.load %arg2[%c0, %c0_0, %c0_1] : memref<1x128x256xf32, #tpu.memory_space<vmem>>, vector<1x128x256xf32>
    %1 = vector.shape_cast %0 : vector<1x128x256xf32> to vector<128x256xf32>
    %c0_2 = arith.constant 0 : index
    %c0_3 = arith.constant 0 : index
    %2 = vector.load %arg3[%c0_2, %c0_3] : memref<256x256xf32, #tpu.memory_space<vmem>>, vector<256x256xf32>
    %cst = arith.constant dense<0.000000e+00> : vector<128x256xf32>
    %3 = tpu.matmul %1, %2, %cst {dimension_numbers = #tpu.dot_dimension_numbers<[1], [0], [0], [1], [0, 0, 1, 1], [], []>} : vector<128x256xf32>, vector<256x256xf32>, vector<128x256xf32> -> vector<128x256xf32>
    %c0_4 = arith.constant 0 : index
    %c0_5 = arith.constant 0 : index
    %4 = vector.load %arg4[%c0_4, %c0_5] : memref<1x256xf32, #tpu.memory_space<vmem>>, vector<1x256xf32>
    %5 = vector.broadcast %4 : vector<1x256xf32> to vector<128x256xf32>
    %6 = arith.addf %3, %5 : vector<128x256xf32>
    %7 = arith.mulf %6, %6 : vector<128x256xf32>
    %cst_6 = arith.constant dense<0.000000e+00> : vector<128xf32>
    %8 = vector.multi_reduction <add>, %7, %cst_6 [1] : vector<128x256xf32> to vector<128xf32>
    %9 = vector.shape_cast %8 : vector<128xf32> to vector<128x1xf32>
    %cst_7 = arith.constant 2.560000e+02 : f32
    %10 = vector.broadcast %cst_7 : f32 to vector<128x1xf32>
    %11 = arith.divf %9, %10 : vector<128x1xf32>
    %cst_8 = arith.constant 9.99999997E-7 : f32
    %12 = vector.broadcast %cst_8 : f32 to vector<128x1xf32>
    %13 = arith.addf %11, %12 : vector<128x1xf32>
    %14 = math.rsqrt %13 : vector<128x1xf32>
    %15 = vector.broadcast %14 : vector<128x1xf32> to vector<128x256xf32>
    %16 = arith.mulf %6, %15 : vector<128x256xf32>
    %c0_9 = arith.constant 0 : index
    %c0_10 = arith.constant 0 : index
    %17 = vector.load %arg5[%c0_9, %c0_10] : memref<1x256xf32, #tpu.memory_space<vmem>>, vector<1x256xf32>
    %18 = vector.broadcast %17 : vector<1x256xf32> to vector<128x256xf32>
    %19 = arith.mulf %16, %18 : vector<128x256xf32>
    %c0_11 = arith.constant 0 : index
    %c0_12 = arith.constant 0 : index
    %c0_13 = arith.constant 0 : index
    %20 = vector.load %arg6[%c0_11, %c0_12, %c0_13] : memref<1x128x256xf32, #tpu.memory_space<vmem>>, vector<1x128x256xf32>
    %21 = vector.shape_cast %20 : vector<1x128x256xf32> to vector<128x256xf32>
    %22 = vector.shape_cast %19 : vector<128x256xf32> to vector<1x128x256xf32>
    tpu.vector_store %arg6[%c0_11, %c0_12, %c0_13], %22 {strides = array<i32>} : memref<1x128x256xf32, #tpu.memory_space<vmem>>, vector<1x128x256xf32>,
    return
  }
  func.func @transform_0(%arg0: i32, %arg1: i32) -> (i32, i32, i32) {
    %c0_i32 = arith.constant 0 : i32
    %c0_i32_0 = arith.constant 0 : i32
    return %arg0, %arg1, %c0_i32 : i32, i32, i32
  }
  func.func @transform_1(%arg0: i32, %arg1: i32) -> (i32, i32) {
    %c0_i32 = arith.constant 0 : i32
    %c0_i32_0 = arith.constant 0 : i32
    %c0_i32_1 = arith.constant 0 : i32
    return %c0_i32, %c0_i32_0 : i32, i32
  }
  func.func @transform_2(%arg0: i32, %arg1: i32) -> (i32, i32) {
    %c0_i32 = arith.constant 0 : i32
    %c0_i32_0 = arith.constant 0 : i32
    %c0_i32_1 = arith.constant 0 : i32
    return %c0_i32, %c0_i32_0 : i32, i32
  }
  func.func @transform_3(%arg0: i32, %arg1: i32) -> (i32, i32) {
    %c0_i32 = arith.constant 0 : i32
    %c0_i32_0 = arith.constant 0 : i32
    %c0_i32_1 = arith.constant 0 : i32
    return %c0_i32, %c0_i32_0 : i32, i32
  }
  func.func @transform_4(%arg0: i32, %arg1: i32) -> (i32, i32, i32) {
    %c0_i32 = arith.constant 0 : i32
    %c0_i32_0 = arith.constant 0 : i32
    return %arg0, %arg1, %c0_i32 : i32, i32, i32
  }
}

module attributes {stable_mosaic.version = 11 : i64} {
  func.func @kernel(%arg0: i32, %arg1: i32, %arg2: memref<1x128x256xf32, #tpu.memory_space<vmem>>, %arg3: memref<256x256xf32, #tpu.memory_space<vmem>>, %arg4: memref<1x256xf32, #tpu.memory_space<vmem>>, %arg5: memref<1x256xf32, #tpu.memory_space<vmem>>, %arg6: memref<1x128x256xf32, #tpu.memory_space<vmem>>) attributes {dimension_semantics = [#tpu.dimension_semantics<parallel>, #tpu.dimension_semantics<parallel>], iteration_bounds = array<i64: 2, 1>, scalar_prefetch = 0 : i64, scratch_operands = 0 : i64, tpu.core_type = #tpu.core_type<tc>, window_params = [{transform_indices = @transform_0, window_bounds = array<i64: 1, 128, 256>}, {pipeline_mode = #tpu.pipeline_mode<synchronous>, transform_indices = @transform_1, window_bounds = array<i64: 256, 256>}, {pipeline_mode = #tpu.pipeline_mode<synchronous>, transform_indices = @transform_2, window_bounds = array<i64: 1, 256>}, {pipeline_mode = #tpu.pipeline_mode<synchronous>, transform_indices = @transform_3, window_bounds = array<i64: 1, 256>}, {transform_indices = @transform_4, window_bounds = array<i64: 1, 128, 256>}]} {
    %c0 = arith.constant 0 : index
    %c0_0 = arith.constant 0 : index
    %c0_1 = arith.constant 0 : index
    %0 = vector.load %arg2[%c0, %c0_0, %c0_1] : memref<1x128x256xf32, #tpu.memory_space<vmem>>, vector<1x128x256xf32>
    %1 = vector.shape_cast %0 : vector<1x128x256xf32> to vector<128x256xf32>
    %c0_2 = arith.constant 0 : index
    %c0_3 = arith.constant 0 : index
    %2 = vector.load %arg3[%c0_2, %c0_3] : memref<256x256xf32, #tpu.memory_space<vmem>>, vector<256x256xf32>
    %cst = arith.constant dense<0.000000e+00> : vector<128x256xf32>
    %3 = tpu.matmul %1, %2, %cst {dimension_numbers = #tpu.dot_dimension_numbers<[1], [0], [0], [1], [0, 0, 1, 1], [], []>} : vector<128x256xf32>, vector<256x256xf32>, vector<128x256xf32> -> vector<128x256xf32>
    %c0_4 = arith.constant 0 : index
    %c0_5 = arith.constant 0 : index
    %4 = vector.load %arg4[%c0_4, %c0_5] : memref<1x256xf32, #tpu.memory_space<vmem>>, vector<1x256xf32>
    %5 = vector.broadcast %4 : vector<1x256xf32> to vector<128x256xf32>
    %6 = arith.addf %3, %5 : vector<128x256xf32>
    %7 = arith.mulf %6, %6 : vector<128x256xf32>
    %cst_6 = arith.constant dense<0.000000e+00> : vector<128xf32>
    %8 = vector.multi_reduction <add>, %7, %cst_6 [1] : vector<128x256xf32> to vector<128xf32>
    %9 = vector.shape_cast %8 : vector<128xf32> to vector<128x1xf32>
    %cst_7 = arith.constant 2.560000e+02 : f32
    %10 = vector.broadcast %cst_7 : f32 to vector<128x1xf32>
    %11 = arith.divf %9, %10 : vector<128x1xf32>
    %cst_8 = arith.constant 9.99999997E-7 : f32
    %12 = vector.broadcast %cst_8 : f32 to vector<128x1xf32>
    %13 = arith.addf %11, %12 : vector<128x1xf32>
    %14 = math.rsqrt %13 : vector<128x1xf32>
    %15 = vector.broadcast %14 : vector<128x1xf32> to vector<128x256xf32>
    %16 = arith.mulf %6, %15 : vector<128x256xf32>
    %c0_9 = arith.constant 0 : index
    %c0_10 = arith.constant 0 : index
    %17 = vector.load %arg5[%c0_9, %c0_10] : memref<1x256xf32, #tpu.memory_space<vmem>>, vector<1x256xf32>
    %18 = vector.broadcast %17 : vector<1x256xf32> to vector<128x256xf32>
    %19 = arith.mulf %16, %18 : vector<128x256xf32>
    %c0_11 = arith.constant 0 : index
    %c0_12 = arith.constant 0 : index
    %c0_13 = arith.constant 0 : index
    %20 = vector.load %arg6[%c0_11, %c0_12, %c0_13] : memref<1x128x256xf32, #tpu.memory_space<vmem>>, vector<1x128x256xf32>
    %21 = vector.shape_cast %20 : vector<1x128x256xf32> to vector<128x256xf32>
    %22 = vector.shape_cast %19 : vector<128x256xf32> to vector<1x128x256xf32>
    tpu.vector_store %arg6[%c0_11, %c0_12, %c0_13], %22 {strides = array<i32>} : memref<1x128x256xf32, #tpu.memory_space<vmem>>, vector<1x128x256xf32>,
    return
  }
  func.func @transform_0(%arg0: i32, %arg1: i32) -> (i32, i32, i32) {
    %c0_i32 = arith.constant 0 : i32
    %c0_i32_0 = arith.constant 0 : i32
    return %arg0, %arg1, %c0_i32 : i32, i32, i32
  }
  func.func @transform_1(%arg0: i32, %arg1: i32) -> (i32, i32) {
    %c0_i32 = arith.constant 0 : i32
    %c0_i32_0 = arith.constant 0 : i32
    %c0_i32_1 = arith.constant 0 : i32
    return %c0_i32, %c0_i32_0 : i32, i32
  }
  func.func @transform_2(%arg0: i32, %arg1: i32) -> (i32, i32) {
    %c0_i32 = arith.constant 0 : i32
    %c0_i32_0 = arith.constant 0 : i32
    %c0_i32_1 = arith.constant 0 : i32
    return %c0_i32, %c0_i32_0 : i32, i32
  }
  func.func @transform_3(%arg0: i32, %arg1: i32) -> (i32, i32) {
    %c0_i32 = arith.constant 0 : i32
    %c0_i32_0 = arith.constant 0 : i32
    %c0_i32_1 = arith.constant 0 : i32
    return %c0_i32, %c0_i32_0 : i32, i32
  }
  func.func @transform_4(%arg0: i32, %arg1: i32) -> (i32, i32, i32) {
    %c0_i32 = arith.constant 0 : i32
    %c0_i32_0 = arith.constant 0 : i32
    return %arg0, %arg1, %c0_i32 : i32, i32, i32
  }
}

module attributes {stable_mosaic.version = 11 : i64} {
  func.func @kernel(%arg0: i32, %arg1: i32, %arg2: memref<1x256x256xf32, #tpu.memory_space<vmem>>, %arg3: memref<256x256xf32, #tpu.memory_space<vmem>>, %arg4: memref<1x256xf32, #tpu.memory_space<vmem>>, %arg5: memref<1x256xf32, #tpu.memory_space<vmem>>, %arg6: memref<1x256x256xf32, #tpu.memory_space<vmem>>) attributes {dimension_semantics = [#tpu.dimension_semantics<parallel>, #tpu.dimension_semantics<parallel>], iteration_bounds = array<i64: 2, 1>, scalar_prefetch = 0 : i64, scratch_operands = 0 : i64, tpu.core_type = #tpu.core_type<tc>, window_params = [{transform_indices = @transform_0, window_bounds = array<i64: 1, 256, 256>}, {pipeline_mode = #tpu.pipeline_mode<synchronous>, transform_indices = @transform_1, window_bounds = array<i64: 256, 256>}, {pipeline_mode = #tpu.pipeline_mode<synchronous>, transform_indices = @transform_2, window_bounds = array<i64: 1, 256>}, {pipeline_mode = #tpu.pipeline_mode<synchronous>, transform_indices = @transform_3, window_bounds = array<i64: 1, 256>}, {transform_indices = @transform_4, window_bounds = array<i64: 1, 256, 256>}]} {
    %c0 = arith.constant 0 : index
    %c0_0 = arith.constant 0 : index
    %c0_1 = arith.constant 0 : index
    %0 = vector.load %arg2[%c0, %c0_0, %c0_1] : memref<1x256x256xf32, #tpu.memory_space<vmem>>, vector<1x256x256xf32>
    %1 = vector.shape_cast %0 : vector<1x256x256xf32> to vector<256x256xf32>
    %c0_2 = arith.constant 0 : index
    %c0_3 = arith.constant 0 : index
    %2 = vector.load %arg3[%c0_2, %c0_3] : memref<256x256xf32, #tpu.memory_space<vmem>>, vector<256x256xf32>
    %cst = arith.constant dense<0.000000e+00> : vector<256x256xf32>
    %3 = tpu.matmul %1, %2, %cst {dimension_numbers = #tpu.dot_dimension_numbers<[1], [0], [0], [1], [0, 0, 1, 1], [], []>} : vector<256x256xf32>, vector<256x256xf32>, vector<256x256xf32> -> vector<256x256xf32>
    %c0_4 = arith.constant 0 : index
    %c0_5 = arith.constant 0 : index
    %4 = vector.load %arg4[%c0_4, %c0_5] : memref<1x256xf32, #tpu.memory_space<vmem>>, vector<1x256xf32>
    %5 = vector.broadcast %4 : vector<1x256xf32> to vector<256x256xf32>
    %6 = arith.addf %3, %5 : vector<256x256xf32>
    %7 = arith.mulf %6, %6 : vector<256x256xf32>
    %cst_6 = arith.constant dense<0.000000e+00> : vector<256xf32>
    %8 = vector.multi_reduction <add>, %7, %cst_6 [1] : vector<256x256xf32> to vector<256xf32>
    %9 = vector.shape_cast %8 : vector<256xf32> to vector<256x1xf32>
    %cst_7 = arith.constant 2.560000e+02 : f32
    %10 = vector.broadcast %cst_7 : f32 to vector<256x1xf32>
    %11 = arith.divf %9, %10 : vector<256x1xf32>
    %cst_8 = arith.constant 9.99999997E-7 : f32
    %12 = vector.broadcast %cst_8 : f32 to vector<256x1xf32>
    %13 = arith.addf %11, %12 : vector<256x1xf32>
    %14 = math.rsqrt %13 : vector<256x1xf32>
    %15 = vector.broadcast %14 : vector<256x1xf32> to vector<256x256xf32>
    %16 = arith.mulf %6, %15 : vector<256x256xf32>
    %c0_9 = arith.constant 0 : index
    %c0_10 = arith.constant 0 : index
    %17 = vector.load %arg5[%c0_9, %c0_10] : memref<1x256xf32, #tpu.memory_space<vmem>>, vector<1x256xf32>
    %18 = vector.broadcast %17 : vector<1x256xf32> to vector<256x256xf32>
    %19 = arith.mulf %16, %18 : vector<256x256xf32>
    %c0_11 = arith.constant 0 : index
    %c0_12 = arith.constant 0 : index
    %c0_13 = arith.constant 0 : index
    %20 = vector.load %arg6[%c0_11, %c0_12, %c0_13] : memref<1x256x256xf32, #tpu.memory_space<vmem>>, vector<1x256x256xf32>
    %21 = vector.shape_cast %20 : vector<1x256x256xf32> to vector<256x256xf32>
    %22 = vector.shape_cast %19 : vector<256x256xf32> to vector<1x256x256xf32>
    tpu.vector_store %arg6[%c0_11, %c0_12, %c0_13], %22 {strides = array<i32>} : memref<1x256x256xf32, #tpu.memory_space<vmem>>, vector<1x256x256xf32>,
    return
  }
  func.func @transform_0(%arg0: i32, %arg1: i32) -> (i32, i32, i32) {
    %c0_i32 = arith.constant 0 : i32
    %c0_i32_0 = arith.constant 0 : i32
    return %arg0, %arg1, %c0_i32 : i32, i32, i32
  }
  func.func @transform_1(%arg0: i32, %arg1: i32) -> (i32, i32) {
    %c0_i32 = arith.constant 0 : i32
    %c0_i32_0 = arith.constant 0 : i32
    %c0_i32_1 = arith.constant 0 : i32
    return %c0_i32, %c0_i32_0 : i32, i32
  }
  func.func @transform_2(%arg0: i32, %arg1: i32) -> (i32, i32) {
    %c0_i32 = arith.constant 0 : i32
    %c0_i32_0 = arith.constant 0 : i32
    %c0_i32_1 = arith.constant 0 : i32
    return %c0_i32, %c0_i32_0 : i32, i32
  }
  func.func @transform_3(%arg0: i32, %arg1: i32) -> (i32, i32) {
    %c0_i32 = arith.constant 0 : i32
    %c0_i32_0 = arith.constant 0 : i32
    %c0_i32_1 = arith.constant 0 : i32
    return %c0_i32, %c0_i32_0 : i32, i32
  }
  func.func @transform_4(%arg0: i32, %arg1: i32) -> (i32, i32, i32) {
    %c0_i32 = arith.constant 0 : i32
    %c0_i32_0 = arith.constant 0 : i32
    return %arg0, %arg1, %c0_i32 : i32, i32, i32
  }
}

module attributes {stable_mosaic.version = 11 : i64} {
  func.func @_fused_attn_kernel(%arg0: i32, %arg1: i32, %arg2: i32, %arg3: memref<2xi32, #tpu.memory_space<smem>>, %arg4: memref<1x256x128xf32, #tpu.memory_space<vmem>>, %arg5: memref<1x384x128xf32, #tpu.memory_space<vmem>>, %arg6: memref<1x384x128xf32, #tpu.memory_space<vmem>>, %arg7: memref<1x128x128xf32, #tpu.memory_space<vmem>>, %arg8: memref<1x128x128xf32, #tpu.memory_space<vmem>>, %arg9: memref<1x256x128xf32, #tpu.memory_space<vmem>>) attributes {dimension_semantics = [#tpu.dimension_semantics<parallel>, #tpu.dimension_semantics<parallel>, #tpu.dimension_semantics<parallel>], iteration_bounds = array<i64: 2, 2, 1>, scalar_prefetch = 1 : i64, scratch_operands = 0 : i64, tpu.core_type = #tpu.core_type<tc>, window_params = [{transform_indices = @transform_0, window_bounds = array<i64: 1, 256, 128>}, {transform_indices = @transform_1, window_bounds = array<i64: 1, 384, 128>}, {transform_indices = @transform_2, window_bounds = array<i64: 1, 384, 128>}, {transform_indices = @transform_3, window_bounds = array<i64: 1, 128, 128>}, {transform_indices = @transform_4, window_bounds = array<i64: 1, 128, 128>}, {transform_indices = @transform_5, window_bounds = array<i64: 1, 256, 128>}]} {
    %c0 = arith.constant 0 : index
    %c0_0 = arith.constant 0 : index
    %c0_1 = arith.constant 0 : index
    %0 = vector.load %arg4[%c0, %c0_0, %c0_1] : memref<1x256x128xf32, #tpu.memory_space<vmem>>, vector<1x256x128xf32>
    %1 = vector.shape_cast %0 : vector<1x256x128xf32> to vector<256x128xf32>
    %cst = arith.constant 0.0883883461 : f32
    %2 = vector.broadcast %cst : f32 to vector<256x128xf32>
    %3 = arith.mulf %1, %2 : vector<256x128xf32>
    %c0_2 = arith.constant 0 : index
    %c0_3 = arith.constant 0 : index
    %c0_4 = arith.constant 0 : index
    %4 = vector.load %arg5[%c0_2, %c0_3, %c0_4] : memref<1x384x128xf32, #tpu.memory_space<vmem>>, vector<1x384x128xf32>
    %5 = vector.shape_cast %4 : vector<1x384x128xf32> to vector<384x128xf32>
    %cst_5 = arith.constant dense<0.000000e+00> : vector<256x384xf32>
    %6 = tpu.matmul %3, %5, %cst_5 {dimension_numbers = #tpu.dot_dimension_numbers<[1], [1], [0], [0], [0, 0, 1, 0], [], []>} : vector<256x128xf32>, vector<384x128xf32>, vector<256x384xf32> -> vector<256x384xf32>
    %7 = tpu.iota {dimensions = array<i32: 1>} : vector<256x384xi32>
    %c257_i32 = arith.constant 257 : i32
    %8 = vector.broadcast %c257_i32 : i32 to vector<256x384xi32>
    %9 = arith.cmpi slt, %7, %8 : vector<256x384xi32>
    %cst_6 = arith.constant 0xFF800000 : f32
    %10 = vector.broadcast %cst_6 : f32 to vector<256x384xf32>
    %11 = arith.select %9, %6, %10 : vector<256x384xi1>, vector<256x384xf32>
    %cst_7 = arith.constant dense<0xFF800000> : vector<256xf32>
    %12 = vector.multi_reduction <maximumf>, %11, %cst_7 [1] : vector<256x384xf32> to vector<256xf32>
    %13 = vector.shape_cast %12 : vector<256xf32> to vector<256x1xf32>
    %14 = vector.broadcast %13 : vector<256x1xf32> to vector<256x384xf32>
    %15 = arith.subf %11, %14 : vector<256x384xf32>
    %16 = math.exp %15 : vector<256x384xf32>
    %cst_8 = arith.constant dense<0.000000e+00> : vector<256xf32>
    %17 = vector.multi_reduction <add>, %16, %cst_8 [1] : vector<256x384xf32> to vector<256xf32>
    %18 = vector.shape_cast %17 : vector<256xf32> to vector<256x1xf32>
    %c0_9 = arith.constant 0 : index
    %c0_10 = arith.constant 0 : index
    %c0_11 = arith.constant 0 : index
    %19 = vector.load %arg6[%c0_9, %c0_10, %c0_11] : memref<1x384x128xf32, #tpu.memory_space<vmem>>, vector<1x384x128xf32>
    %20 = vector.shape_cast %19 : vector<1x384x128xf32> to vector<384x128xf32>
    %cst_12 = arith.constant dense<0.000000e+00> : vector<256x128xf32>
    %21 = tpu.matmul %16, %20, %cst_12 {dimension_numbers = #tpu.dot_dimension_numbers<[1], [0], [0], [1], [0, 0, 1, 1], [], []>} : vector<256x384xf32>, vector<384x128xf32>, vector<256x128xf32> -> vector<256x128xf32>
    %22 = tpu.reciprocal %18 {approx = true} : vector<256x1xf32> -> vector<256x1xf32>
    %23 = vector.broadcast %22 : vector<256x1xf32> to vector<256x128xf32>
    %24 = arith.mulf %21, %23 : vector<256x128xf32>
    %25 = arith.index_cast %arg0 : i32 to index
    %26 = memref.load %arg3[%25] : memref<2xi32, #tpu.memory_space<smem>>
    %c0_13 = arith.constant 0 : index
    %c0_14 = arith.constant 0 : index
    %c0_15 = arith.constant 0 : index
    %27 = vector.load %arg7[%c0_13, %c0_14, %c0_15] : memref<1x128x128xf32, #tpu.memory_space<vmem>>, vector<1x128x128xf32>
    %28 = vector.shape_cast %27 : vector<1x128x128xf32> to vector<128x128xf32>
    %cst_16 = arith.constant dense<0.000000e+00> : vector<256x128xf32>
    %29 = tpu.matmul %3, %28, %cst_16 {dimension_numbers = #tpu.dot_dimension_numbers<[1], [1], [0], [0], [0, 0, 1, 0], [], []>} : vector<256x128xf32>, vector<128x128xf32>, vector<256x128xf32> -> vector<256x128xf32>
    %30 = tpu.iota {dimensions = array<i32: 1>} : vector<256x128xi32>
    %31 = vector.broadcast %26 : i32 to vector<256x128xi32>
    %32 = arith.cmpi slt, %30, %31 : vector<256x128xi32>
    %cst_17 = arith.constant 0xFF800000 : f32
    %33 = vector.broadcast %cst_17 : f32 to vector<256x128xf32>
    %34 = arith.select %32, %29, %33 : vector<256x128xi1>, vector<256x128xf32>
    %cst_18 = arith.constant dense<0xFF800000> : vector<256xf32>
    %35 = vector.multi_reduction <maximumf>, %34, %cst_18 [1] : vector<256x128xf32> to vector<256xf32>
    %36 = vector.shape_cast %35 : vector<256xf32> to vector<256x1xf32>
    %37 = vector.broadcast %36 : vector<256x1xf32> to vector<256x128xf32>
    %38 = arith.subf %34, %37 : vector<256x128xf32>
    %39 = math.exp %38 : vector<256x128xf32>
    %cst_19 = arith.constant dense<0.000000e+00> : vector<256xf32>
    %40 = vector.multi_reduction <add>, %39, %cst_19 [1] : vector<256x128xf32> to vector<256xf32>
    %41 = vector.shape_cast %40 : vector<256xf32> to vector<256x1xf32>
    %c0_20 = arith.constant 0 : index
    %c0_21 = arith.constant 0 : index
    %c0_22 = arith.constant 0 : index
    %42 = vector.load %arg8[%c0_20, %c0_21, %c0_22] : memref<1x128x128xf32, #tpu.memory_space<vmem>>, vector<1x128x128xf32>
    %43 = vector.shape_cast %42 : vector<1x128x128xf32> to vector<128x128xf32>
    %cst_23 = arith.constant dense<0.000000e+00> : vector<256x128xf32>
    %44 = tpu.matmul %39, %43, %cst_23 {dimension_numbers = #tpu.dot_dimension_numbers<[1], [0], [0], [1], [0, 0, 1, 1], [], []>} : vector<256x128xf32>, vector<128x128xf32>, vector<256x128xf32> -> vector<256x128xf32>
    %45 = tpu.reciprocal %41 {approx = true} : vector<256x1xf32> -> vector<256x1xf32>
    %46 = vector.broadcast %45 : vector<256x1xf32> to vector<256x128xf32>
    %47 = arith.mulf %44, %46 : vector<256x128xf32>
    %48 = arith.addf %24, %47 : vector<256x128xf32>
    %c0_24 = arith.constant 0 : index
    %c0_25 = arith.constant 0 : index
    %c0_26 = arith.constant 0 : index
    %49 = vector.load %arg9[%c0_24, %c0_25, %c0_26] : memref<1x256x128xf32, #tpu.memory_space<vmem>>, vector<1x256x128xf32>
    %50 = vector.shape_cast %49 : vector<1x256x128xf32> to vector<256x128xf32>
    %51 = vector.shape_cast %48 : vector<256x128xf32> to vector<1x256x128xf32>
    tpu.vector_store %arg9[%c0_24, %c0_25, %c0_26], %51 {strides = array<i32>} : memref<1x256x128xf32, #tpu.memory_space<vmem>>, vector<1x256x128xf32>,
    return
  }
  func.func @transform_0(%arg0: i32, %arg1: i32, %arg2: i32, %arg3: memref<2xi32, #tpu.memory_space<smem>>) -> (i32, i32, i32) {
    %c0_i32 = arith.constant 0 : i32
    return %arg0, %arg2, %arg1 : i32, i32, i32
  }
  func.func @transform_1(%arg0: i32, %arg1: i32, %arg2: i32, %arg3: memref<2xi32, #tpu.memory_space<smem>>) -> (i32, i32, i32) {
    %c0_i32 = arith.constant 0 : i32
    %c0_i32_0 = arith.constant 0 : i32
    return %arg0, %c0_i32, %arg1 : i32, i32, i32
  }
  func.func @transform_2(%arg0: i32, %arg1: i32, %arg2: i32, %arg3: memref<2xi32, #tpu.memory_space<smem>>) -> (i32, i32, i32) {
    %c0_i32 = arith.constant 0 : i32
    %c0_i32_0 = arith.constant 0 : i32
    return %arg0, %c0_i32, %arg1 : i32, i32, i32
  }
  func.func @transform_3(%arg0: i32, %arg1: i32, %arg2: i32, %arg3: memref<2xi32, #tpu.memory_space<smem>>) -> (i32, i32, i32) {
    %c0_i32 = arith.constant 0 : i32
    %c0_i32_0 = arith.constant 0 : i32
    return %arg0, %c0_i32, %arg1 : i32, i32, i32
  }
  func.func @transform_4(%arg0: i32, %arg1: i32, %arg2: i32, %arg3: memref<2xi32, #tpu.memory_space<smem>>) -> (i32, i32, i32) {
    %c0_i32 = arith.constant 0 : i32
    %c0_i32_0 = arith.constant 0 : i32
    return %arg0, %c0_i32, %arg1 : i32, i32, i32
  }
  func.func @transform_5(%arg0: i32, %arg1: i32, %arg2: i32, %arg3: memref<2xi32, #tpu.memory_space<smem>>) -> (i32, i32, i32) {
    %c0_i32 = arith.constant 0 : i32
    return %arg0, %arg2, %arg1 : i32, i32, i32
  }
}

module attributes {stable_mosaic.version = 11 : i64} {
  func.func @kernel(%arg0: i32, %arg1: i32, %arg2: memref<1x256x256xf32, #tpu.memory_space<vmem>>, %arg3: memref<256x256xf32, #tpu.memory_space<vmem>>, %arg4: memref<1x256xf32, #tpu.memory_space<vmem>>, %arg5: memref<1x256xf32, #tpu.memory_space<vmem>>, %arg6: memref<1x256x256xf32, #tpu.memory_space<vmem>>) attributes {dimension_semantics = [#tpu.dimension_semantics<parallel>, #tpu.dimension_semantics<parallel>], iteration_bounds = array<i64: 2, 1>, scalar_prefetch = 0 : i64, scratch_operands = 0 : i64, tpu.core_type = #tpu.core_type<tc>, window_params = [{transform_indices = @transform_0, window_bounds = array<i64: 1, 256, 256>}, {pipeline_mode = #tpu.pipeline_mode<synchronous>, transform_indices = @transform_1, window_bounds = array<i64: 256, 256>}, {pipeline_mode = #tpu.pipeline_mode<synchronous>, transform_indices = @transform_2, window_bounds = array<i64: 1, 256>}, {pipeline_mode = #tpu.pipeline_mode<synchronous>, transform_indices = @transform_3, window_bounds = array<i64: 1, 256>}, {transform_indices = @transform_4, window_bounds = array<i64: 1, 256, 256>}]} {
    %c0 = arith.constant 0 : index
    %c0_0 = arith.constant 0 : index
    %c0_1 = arith.constant 0 : index
    %0 = vector.load %arg2[%c0, %c0_0, %c0_1] : memref<1x256x256xf32, #tpu.memory_space<vmem>>, vector<1x256x256xf32>
    %1 = vector.shape_cast %0 : vector<1x256x256xf32> to vector<256x256xf32>
    %c0_2 = arith.constant 0 : index
    %c0_3 = arith.constant 0 : index
    %2 = vector.load %arg3[%c0_2, %c0_3] : memref<256x256xf32, #tpu.memory_space<vmem>>, vector<256x256xf32>
    %cst = arith.constant dense<0.000000e+00> : vector<256x256xf32>
    %3 = tpu.matmul %1, %2, %cst {dimension_numbers = #tpu.dot_dimension_numbers<[1], [0], [0], [1], [0, 0, 1, 1], [], []>} : vector<256x256xf32>, vector<256x256xf32>, vector<256x256xf32> -> vector<256x256xf32>
    %c0_4 = arith.constant 0 : index
    %c0_5 = arith.constant 0 : index
    %4 = vector.load %arg4[%c0_4, %c0_5] : memref<1x256xf32, #tpu.memory_space<vmem>>, vector<1x256xf32>
    %5 = vector.broadcast %4 : vector<1x256xf32> to vector<256x256xf32>
    %6 = arith.addf %3, %5 : vector<256x256xf32>
    %c0_6 = arith.constant 0 : index
    %c0_7 = arith.constant 0 : index
    %c0_8 = arith.constant 0 : index
    %7 = vector.load %arg6[%c0_6, %c0_7, %c0_8] : memref<1x256x256xf32, #tpu.memory_space<vmem>>, vector<1x256x256xf32>
    %8 = vector.shape_cast %7 : vector<1x256x256xf32> to vector<256x256xf32>
    %9 = vector.shape_cast %6 : vector<256x256xf32> to vector<1x256x256xf32>
    tpu.vector_store %arg6[%c0_6, %c0_7, %c0_8], %9 {strides = array<i32>} : memref<1x256x256xf32, #tpu.memory_space<vmem>>, vector<1x256x256xf32>,
    return
  }
  func.func @transform_0(%arg0: i32, %arg1: i32) -> (i32, i32, i32) {
    %c0_i32 = arith.constant 0 : i32
    %c0_i32_0 = arith.constant 0 : i32
    return %arg0, %arg1, %c0_i32 : i32, i32, i32
  }
  func.func @transform_1(%arg0: i32, %arg1: i32) -> (i32, i32) {
    %c0_i32 = arith.constant 0 : i32
    %c0_i32_0 = arith.constant 0 : i32
    %c0_i32_1 = arith.constant 0 : i32
    return %c0_i32, %c0_i32_0 : i32, i32
  }
  func.func @transform_2(%arg0: i32, %arg1: i32) -> (i32, i32) {
    %c0_i32 = arith.constant 0 : i32
    %c0_i32_0 = arith.constant 0 : i32
    %c0_i32_1 = arith.constant 0 : i32
    return %c0_i32, %c0_i32_0 : i32, i32
  }
  func.func @transform_3(%arg0: i32, %arg1: i32) -> (i32, i32) {
    %c0_i32 = arith.constant 0 : i32
    %c0_i32_0 = arith.constant 0 : i32
    %c0_i32_1 = arith.constant 0 : i32
    return %c0_i32, %c0_i32_0 : i32, i32
  }
  func.func @transform_4(%arg0: i32, %arg1: i32) -> (i32, i32, i32) {
    %c0_i32 = arith.constant 0 : i32
    %c0_i32_0 = arith.constant 0 : i32
    return %arg0, %arg1, %c0_i32 : i32, i32, i32
  }
}

</mosaic_0001>

<llo_original>
// kernel: wan_i2v_cross_attention.11
$region0: #{wan_i2v_cross_attention.11}
  #allocation0 [shape = 'u32[]', space=smem, size = 0x4, offset = 0x4, fixed_abs, tag = 'smem constant byte address 0x4 - core index']
  #allocation1 [shape = 'u32[72,128]{1,0:T(1,128)}', space=vmem, size = 0x9000, scoped, tag = 'internal scratch']
  %s0 = inlined_call_operand.vmem [shape: f32[2,384,256], index: 0, kind: input, shape index: {}]
  %s1 = inlined_call_operand.vmem [shape: f32[256,256], index: 1, kind: input, shape index: {}]
  %s2 = inlined_call_operand.vmem [shape: f32[1,256], index: 2, kind: input, shape index: {}]
  %s3 = inlined_call_operand.vmem [shape: f32[1,256], index: 3, kind: input, shape index: {}]
  %s4 = inlined_call_operand.vmem [shape: f32[2,384,256], index: 4, kind: output, shape index: {}]
  %s5 = sld [smem:[#allocation0]]
  $region49: #{wan_i2v_cross_attention.11} parent=0
    _
  %s7 = ssub.s32 1, %s5
  %s8 = scalar_select 0, %s7, %s5
  loop: start=0, step=1, limit=8
  $region2: #{wan_i2v_cross_attention.11} parent=0 // loop_pre_header
    _
  $region3: #{wan_i2v_cross_attention.11} parent=0 // loop_header
    %s10 = sphi 0, %s14
    %p11 = scmp.ge.s32.totalorder %s10, 8
    %s17 = sphi 0, %s29
    %s18 = sphi 0, %s25
    %s19 = sphi 0, %s17
    %s20 = sphi 0, %s18
    %s21 = sphi 0, %s19
    %s22 = sphi 0, %s20
    %s34 = sphi 0, %s36
    %s37 = sphi 0, %s34
    %s38 = sphi 0, %s37
    %s54 = sphi 0, %s38
    %s58 = sphi 0, %s58
    %s60 = sphi 0, %s58
    %s61 = sphi 0, %s60
    %s75 = sphi 0, %s61
    %s79 = sphi 0, %s79
    %s81 = sphi 0, %s79
    %s82 = sphi 0, %s81
    %s96 = sphi 0, %s82
    %s100 = sphi 0, %s100
    %s102 = sphi 0, %s100
    %s103 = sphi 0, %s102
    %s117 = sphi 0, %s103
    %s125 = sphi 0, %s127
    %s128 = sphi 0, %s125
    %s129 = sphi 0, %s128
    %s145 = sphi 0, %s129
  $region4: #{wan_i2v_cross_attention.11} parent=0 // loop_header_branch
    %13 = sbr.rel (%p11) target = $region8
  $region5: #{wan_i2v_cross_attention.11} parent=0 // loop_body
    %s15 = ssub.s32 %s10, 1
    %s16 = ssub.s32 %s10, 2
    %s23 = sadd.s32 1, %s18
    %p24 = scmp.ge.s32.totalorder %s23, 3
    %s25 = scalar_select %p24, 0, %s23
    %s26 = sadd.s32 1, %s17
    %s27 = scalar_select %p24, %s26, %s17
    %p28 = scmp.ge.s32.totalorder %s27, 2
    %s29 = scalar_select %p28, 0, %s27
    %s30 = ssub.s32 %s17, %s29
    %s31 = ssub.s32 %s18, %s25
    %s32 = sor.u32 %s30, %s31
    %p33 = scmp.eq.s32.totalorder %s32, 0
    %s35 = sadd.s32 %s34, 1
    %s36 = scalar_select %p33, %s34, %s35
    %p39 = pneg %p33
    %p40 = scmp.eq.s32.totalorder %s10, 5
    %p41 = por %p39, %p40
    %p42 = scmp.ne.s32.totalorder %s34, %s37
    %p43 = scmp.eq.s32.totalorder %s10, 0
    %p44 = por %p42, %p43
    %p45 = scmp.ne.s32.totalorder %s34, %s37
    %p46 = scmp.eq.s32.totalorder %s15, 5
    %p47 = por %p45, %p46
    %p48 = scmp.ne.s32.totalorder %s37, %s38
    %p49 = scmp.eq.s32.totalorder %s15, 0
    %p50 = por %p48, %p49
    %p51 = scmp.ne.s32.totalorder %s37, %s38
    %p52 = scmp.eq.s32.totalorder %s16, 5
    %p53 = por %p51, %p52
    %p55 = scmp.ne.s32.totalorder %s38, %s54
    %p56 = scmp.eq.s32.totalorder %s16, 0
    %p57 = por %p55, %p56
    %s59 = sadd.s32 %s58, 1
    %p62 = scmp.eq.s32.totalorder %s10, 5
    %p63 = scmp.ne.s32.totalorder %s58, %s60
    %p64 = scmp.eq.s32.totalorder %s10, 0
    %p65 = por %p63, %p64
    %p66 = scmp.ne.s32.totalorder %s58, %s60
    %p67 = scmp.eq.s32.totalorder %s15, 5
    %p68 = por %p66, %p67
    %p69 = scmp.ne.s32.totalorder %s60, %s61
    %p70 = scmp.eq.s32.totalorder %s15, 0
    %p71 = por %p69, %p70
    %p72 = scmp.ne.s32.totalorder %s60, %s61
    %p73 = scmp.eq.s32.totalorder %s16, 5
    %p74 = por %p72, %p73
    %p76 = scmp.ne.s32.totalorder %s61, %s75
    %p77 = scmp.eq.s32.totalorder %s16, 0
    %p78 = por %p76, %p77
    %s80 = sadd.s32 %s79, 1
    %p83 = scmp.eq.s32.totalorder %s10, 5
    %p84 = scmp.ne.s32.totalorder %s79, %s81
    %p85 = scmp.eq.s32.totalorder %s10, 0
    %p86 = por %p84, %p85
    %p87 = scmp.ne.s32.totalorder %s79, %s81
    %p88 = scmp.eq.s32.totalorder %s15, 5
    %p89 = por %p87, %p88
    %p90 = scmp.ne.s32.totalorder %s81, %s82
    %p91 = scmp.eq.s32.totalorder %s15, 0
    %p92 = por %p90, %p91
    %p93 = scmp.ne.s32.totalorder %s81, %s82
    %p94 = scmp.eq.s32.totalorder %s16, 5
    %p95 = por %p93, %p94
    %p97 = scmp.ne.s32.totalorder %s82, %s96
    %p98 = scmp.eq.s32.totalorder %s16, 0
    %p99 = por %p97, %p98
    %s101 = sadd.s32 %s100, 1
    %p104 = scmp.eq.s32.totalorder %s10, 5
    %p105 = scmp.ne.s32.totalorder %s100, %s102
    %p106 = scmp.eq.s32.totalorder %s10, 0
    %p107 = por %p105, %p106
    %p108 = scmp.ne.s32.totalorder %s100, %s102
    %p109 = scmp.eq.s32.totalorder %s15, 5
    %p110 = por %p108, %p109
    %p111 = scmp.ne.s32.totalorder %s102, %s103
    %p112 = scmp.eq.s32.totalorder %s15, 0
    %p113 = por %p111, %p112
    %p114 = scmp.ne.s32.totalorder %s102, %s103
    %p115 = scmp.eq.s32.totalorder %s16, 5
    %p116 = por %p114, %p115
    %p118 = scmp.ne.s32.totalorder %s103, %s117
    %p119 = scmp.eq.s32.totalorder %s16, 0
    %p120 = por %p118, %p119
    %s121 = ssub.s32 %s17, %s29
    %s122 = ssub.s32 %s18, %s25
    %s123 = sor.u32 %s121, %s122
    %p124 = scmp.eq.s32.totalorder %s123, 0
    %s126 = sadd.s32 %s125, 1
    %s127 = scalar_select %p124, %s125, %s126
    %p130 = pneg %p124
    %p131 = scmp.eq.s32.totalorder %s10, 5
    %p132 = por %p130, %p131
    %p133 = scmp.ne.s32.totalorder %s125, %s128
    %p134 = scmp.eq.s32.totalorder %s10, 0
    %p135 = por %p133, %p134
    %p136 = scmp.ne.s32.totalorder %s125, %s128
    %p137 = scmp.eq.s32.totalorder %s15, 5
    %p138 = por %p136, %p137
    %p139 = scmp.ne.s32.totalorder %s128, %s129
    %p140 = scmp.eq.s32.totalorder %s15, 0
    %p141 = por %p139, %p140
    %p142 = scmp.ne.s32.totalorder %s128, %s129
    %p143 = scmp.eq.s32.totalorder %s16, 5
    %p144 = por %p142, %p143
    %p146 = scmp.ne.s32.totalorder %s129, %s145
    %p147 = scmp.eq.s32.totalorder %s16, 0
    %p148 = por %p146, %p147
    %p149 = scmp.le.s32.totalorder 1, %s10
    %p150 = scmp.lt.s32.totalorder %s10, 7
    %p151 = pnand %p149, %p150
    %p152 = pneg %p151
    // Predicated region
    $region9: #{wan_i2v_cross_attention.11} parent=5 // pred_check
      _
    $region10: #{wan_i2v_cross_attention.11} parent=5 // pred_check_branch
      %154 = sbr.rel (%p151) target = $region12
    $region11: #{wan_i2v_cross_attention.11} parent=5 // pred_region
      %s155 = ssub.s32 %s10, 1
      // Predicated region
      $region13: #{wan_i2v_cross_attention.11} parent=11 // pred_check
        %p156 = pneg %p71
      $region14: #{wan_i2v_cross_attention.11} parent=11 // pred_check_branch
        %158 = sbr.rel (%p156) target = $region16
      $region15: #{wan_i2v_cross_attention.11} parent=11 // pred_region
        _
      $region16: #{wan_i2v_cross_attention.11} parent=11 // pred_fallthru
        _
      // Predicated region
      $region17: #{wan_i2v_cross_attention.11} parent=11 // pred_check
        %p159 = pneg %p92
      $region18: #{wan_i2v_cross_attention.11} parent=11 // pred_check_branch
        %161 = sbr.rel (%p159) target = $region20
      $region19: #{wan_i2v_cross_attention.11} parent=11 // pred_region
        _
      $region20: #{wan_i2v_cross_attention.11} parent=11 // pred_fallthru
        _
      // Predicated region
      $region21: #{wan_i2v_cross_attention.11} parent=11 // pred_check
        %p162 = pneg %p113
      $region22: #{wan_i2v_cross_attention.11} parent=11 // pred_check_branch
        %164 = sbr.rel (%p162) target = $region24
      $region23: #{wan_i2v_cross_attention.11} parent=11 // pred_region
        _
      $region24: #{wan_i2v_cross_attention.11} parent=11 // pred_fallthru
        _
    $region12: #{wan_i2v_cross_attention.11} parent=5 // pred_fallthru
      _
    %p165 = scmp.lt.s32.totalorder %s10, 6
    // Predicated region
    $region25: #{wan_i2v_cross_attention.11} parent=5 // pred_check
      %p166 = pneg %p165
    $region26: #{wan_i2v_cross_attention.11} parent=5 // pred_check_branch
      %168 = sbr.rel (%p166) target = $region28
    $region27: #{wan_i2v_cross_attention.11} parent=5 // pred_region
      // Predicated region
      $region29: #{wan_i2v_cross_attention.11} parent=27 // pred_check
        %p169 = pneg %p44
      $region30: #{wan_i2v_cross_attention.11} parent=27 // pred_check_branch
        %171 = sbr.rel (%p169) target = $region32
      $region31: #{wan_i2v_cross_attention.11} parent=27 // pred_region
        %s172 = smul.u32 16, %s18
        %p173 = scmp.lt.s32.totalorder %s17, 1
        %s174 = scalar_select %p173, %s17, 1
        %p175 = scmp.lt.s32.totalorder %s172, 47
        %s176 = scalar_select %p175, %s172, 47
        %s177 = smul.addr %s176, 2
        %s178 = smul.addr %s174, 96
        %s179 = sadd.s32 %s177, %s178
        %s180 = smul.addr %s179, 8
        %s181 = scalar_lea.vmem %s0, %s180
        %s182 = smul.u32 16, %s18
      $region32: #{wan_i2v_cross_attention.11} parent=27 // pred_fallthru
        _
    $region28: #{wan_i2v_cross_attention.11} parent=5 // pred_fallthru
      _
    %p183 = scmp.le.s32.totalorder 1, %s10
    %p184 = scmp.lt.s32.totalorder %s10, 7
    %p185 = pnand %p183, %p184
    %p186 = pneg %p185
    // Predicated region
    $region33: #{wan_i2v_cross_attention.11} parent=5 // pred_check
      _
    $region34: #{wan_i2v_cross_attention.11} parent=5 // pred_check_branch
      %188 = sbr.rel (%p185) target = $region36
    $region35: #{wan_i2v_cross_attention.11} parent=5 // pred_region
      %s189 = ssub.s32 %s10, 1
      %s190 = smul.u32 16, %s20
      %p191 = scmp.lt.s32.totalorder %s19, 1
      %s192 = scalar_select %p191, %s19, 1
      %p193 = scmp.lt.s32.totalorder %s190, 47
      %s194 = scalar_select %p193, %s190, 47
      %s195 = smul.addr %s194, 2
      %s196 = smul.addr %s192, 96
      %s197 = sadd.s32 %s195, %s196
      %s198 = smul.addr %s197, 8
      %s199 = scalar_lea.vmem %s0, %s198
      %p200 = pneg %p50
      %p201 = pneg %p47
      %p202 = pneg %p71
      %p203 = pneg %p68
      %p204 = pneg %p92
      %p205 = pneg %p89
      %p206 = pneg %p113
      %p207 = pneg %p110
      %p208 = pneg %p141
      %p209 = pneg %p138
      %s210 = smul.u32 16, %s20
      %p211 = scmp.lt.s32.totalorder %s19, 1
      %s212 = scalar_select %p211, %s19, 1
      %p213 = scmp.lt.s32.totalorder %s210, 47
      %s214 = scalar_select %p213, %s210, 47
      %s215 = smul.addr %s214, 2
      %s216 = smul.addr %s212, 96
      %s217 = sadd.s32 %s215, %s216
      %s218 = smul.addr %s217, 8
      %s219 = scalar_lea.vmem %s4, %s218
      %s220 = smul.u32 16, %s20
      %p221 = scmp.lt.s32.totalorder %s19, 1
      %s222 = scalar_select %p221, %s19, 1
      %p223 = scmp.lt.s32.totalorder %s220, 47
      %s224 = scalar_select %p223, %s220, 47
      %s225 = smul.addr %s224, 2
      %s226 = smul.addr %s222, 96
      %s227 = sadd.s32 %s225, %s226
      %s228 = smul.addr %s227, 8
      %s229 = scalar_lea.vmem %s0, %s228
      %s230 = smul.u32 16, %s20
      %s231 = smul.u32 16, %s20
      %p232 = scmp.lt.s32.totalorder %s19, 1
      %s233 = scalar_select %p232, %s19, 1
      %p234 = scmp.lt.s32.totalorder %s231, 47
      %s235 = scalar_select %p234, %s231, 47
      %s236 = smul.addr %s235, 2
      %s237 = smul.addr %s233, 96
      %s238 = sadd.s32 %s236, %s237
      %s239 = smul.addr %s238, 8
      %s240 = scalar_lea.vmem %s4, %s239
      %s241 = smul.u32 16, %s20
      %v242 = vld [vmem:[%s229] sm:$0xff]
      %v243 = vld [vmem:[%s229 + $0x8] sm:$0xff]
      %v244 = vld [vmem:[%s229 + $0x10] sm:$0xff]
      %v245 = vld [vmem:[%s229 + $0x18] sm:$0xff]
      %v246 = vld [vmem:[%s229 + $0x20] sm:$0xff]
      %v247 = vld [vmem:[%s229 + $0x28] sm:$0xff]
      %v248 = vld [vmem:[%s229 + $0x30] sm:$0xff]
      %v249 = vld [vmem:[%s229 + $0x38] sm:$0xff]
      %v250 = vld [vmem:[%s229 + $0x40] sm:$0xff]
      %v251 = vld [vmem:[%s229 + $0x48] sm:$0xff]
      %v252 = vld [vmem:[%s229 + $0x50] sm:$0xff]
      %v253 = vld [vmem:[%s229 + $0x58] sm:$0xff]
      %v254 = vld [vmem:[%s229 + $0x60] sm:$0xff]
      %v255 = vld [vmem:[%s229 + $0x68] sm:$0xff]
      %v256 = vld [vmem:[%s229 + $0x70] sm:$0xff]
      %v257 = vld [vmem:[%s229 + $0x78] sm:$0xff]
      %v258 = vld [vmem:[%s229 + $0x80] sm:$0xff]
      %v259 = vld [vmem:[%s229 + $0x88] sm:$0xff]
      %v260 = vld [vmem:[%s229 + $0x90] sm:$0xff]
      %v261 = vld [vmem:[%s229 + $0x98] sm:$0xff]
      %v262 = vld [vmem:[%s229 + $0xa0] sm:$0xff]
      %v263 = vld [vmem:[%s229 + $0xa8] sm:$0xff]
      %v264 = vld [vmem:[%s229 + $0xb0] sm:$0xff]
      %v265 = vld [vmem:[%s229 + $0xb8] sm:$0xff]
      %v266 = vld [vmem:[%s229 + $0xc0] sm:$0xff]
      %v267 = vld [vmem:[%s229 + $0xc8] sm:$0xff]
      %v268 = vld [vmem:[%s229 + $0xd0] sm:$0xff]
      %v269 = vld [vmem:[%s229 + $0xd8] sm:$0xff]
      %v270 = vld [vmem:[%s229 + $0xe0] sm:$0xff]
      %v271 = vld [vmem:[%s229 + $0xe8] sm:$0xff]
      %v272 = vld [vmem:[%s229 + $0xf0] sm:$0xff]
      %v273 = vld [vmem:[%s229 + $0xf8] sm:$0xff]
      %v274 = vld [vmem:[%s1] sm:$0xff]
      %v275 = vld [vmem:[%s1 + $0x8] sm:$0xff]
      %v276 = vld [vmem:[%s1 + $0x10] sm:$0xff]
      %v277 = vld [vmem:[%s1 + $0x18] sm:$0xff]
      %v278 = vld [vmem:[%s1 + $0x20] sm:$0xff]
      %v279 = vld [vmem:[%s1 + $0x28] sm:$0xff]
      %v280 = vld [vmem:[%s1 + $0x30] sm:$0xff]
      %v281 = vld [vmem:[%s1 + $0x38] sm:$0xff]
      %v282 = vld [vmem:[%s1 + $0x40] sm:$0xff]
      %v283 = vld [vmem:[%s1 + $0x48] sm:$0xff]
      %v284 = vld [vmem:[%s1 + $0x50] sm:$0xff]
      %v285 = vld [vmem:[%s1 + $0x58] sm:$0xff]
      %v286 = vld [vmem:[%s1 + $0x60] sm:$0xff]
      %v287 = vld [vmem:[%s1 + $0x68] sm:$0xff]
      %v288 = vld [vmem:[%s1 + $0x70] sm:$0xff]
      %v289 = vld [vmem:[%s1 + $0x78] sm:$0xff]
      %v290 = vld [vmem:[%s1 + $0x80] sm:$0xff]
      %v291 = vld [vmem:[%s1 + $0x88] sm:$0xff]
      %v292 = vld [vmem:[%s1 + $0x90] sm:$0xff]
      %v293 = vld [vmem:[%s1 + $0x98] sm:$0xff]
      %v294 = vld [vmem:[%s1 + $0xa0] sm:$0xff]
      %v295 = vld [vmem:[%s1 + $0xa8] sm:$0xff]
      %v296 = vld [vmem:[%s1 + $0xb0] sm:$0xff]
      %v297 = vld [vmem:[%s1 + $0xb8] sm:$0xff]
      %v298 = vld [vmem:[%s1 + $0xc0] sm:$0xff]
      %v299 = vld [vmem:[%s1 + $0xc8] sm:$0xff]
      %v300 = vld [vmem:[%s1 + $0xd0] sm:$0xff]
      %v301 = vld [vmem:[%s1 + $0xd8] sm:$0xff]
      %v302 = vld [vmem:[%s1 + $0xe0] sm:$0xff]
      %v303 = vld [vmem:[%s1 + $0xe8] sm:$0xff]
      %v304 = vld [vmem:[%s1 + $0xf0] sm:$0xff]
      %v305 = vld [vmem:[%s1 + $0xf8] sm:$0xff]
      %v306 = vld [vmem:[%s1 + $0x100] sm:$0xff]
      %v307 = vld [vmem:[%s1 + $0x108] sm:$0xff]
      %v308 = vld [vmem:[%s1 + $0x110] sm:$0xff]
      %v309 = vld [vmem:[%s1 + $0x118] sm:$0xff]
      %v310 = vld [vmem:[%s1 + $0x120] sm:$0xff]
      %v311 = vld [vmem:[%s1 + $0x128] sm:$0xff]
      %v312 = vld [vmem:[%s1 + $0x130] sm:$0xff]
      %v313 = vld [vmem:[%s1 + $0x138] sm:$0xff]
      %v314 = vld [vmem:[%s1 + $0x140] sm:$0xff]
      %v315 = vld [vmem:[%s1 + $0x148] sm:$0xff]
      %v316 = vld [vmem:[%s1 + $0x150] sm:$0xff]
      %v317 = vld [vmem:[%s1 + $0x158] sm:$0xff]
      %v318 = vld [vmem:[%s1 + $0x160] sm:$0xff]
      %v319 = vld [vmem:[%s1 + $0x168] sm:$0xff]
      %v320 = vld [vmem:[%s1 + $0x170] sm:$0xff]
      %v321 = vld [vmem:[%s1 + $0x178] sm:$0xff]
      %v322 = vld [vmem:[%s1 + $0x180] sm:$0xff]
      %v323 = vld [vmem:[%s1 + $0x188] sm:$0xff]
      %v324 = vld [vmem:[%s1 + $0x190] sm:$0xff]
      %v325 = vld [vmem:[%s1 + $0x198] sm:$0xff]
      %v326 = vld [vmem:[%s1 + $0x1a0] sm:$0xff]
      %v327 = vld [vmem:[%s1 + $0x1a8] sm:$0xff]
      %v328 = vld [vmem:[%s1 + $0x1b0] sm:$0xff]
      %v329 = vld [vmem:[%s1 + $0x1b8] sm:$0xff]
      %v330 = vld [vmem:[%s1 + $0x1c0] sm:$0xff]
      %v331 = vld [vmem:[%s1 + $0x1c8] sm:$0xff]
      %v332 = vld [vmem:[%s1 + $0x1d0] sm:$0xff]
      %v333 = vld [vmem:[%s1 + $0x1d8] sm:$0xff]
      %v334 = vld [vmem:[%s1 + $0x1e0] sm:$0xff]
      %v335 = vld [vmem:[%s1 + $0x1e8] sm:$0xff]
      %v336 = vld [vmem:[%s1 + $0x1f0] sm:$0xff]
      %v337 = vld [vmem:[%s1 + $0x1f8] sm:$0xff]
      %v338 = vld [vmem:[%s2] sm:$0x3]
      %v340 = vperm.slane %v338, 0
      %v341 = vperm.slane %v338, 1
      %344 = vmatpush.msra.mxu0 %v304
      %345 = vmatpush.msra.mxu0 %v302
      %346 = vmatpush.msra.mxu0 %v300
      %347 = vmatpush.msra.mxu0 %v298
      %348 = vmatpush.msra.mxu0 %v296
      %349 = vmatpush.msra.mxu0 %v294
      %350 = vmatpush.msra.mxu0 %v292
      %351 = vmatpush.msra.mxu0 %v290
      %352 = vmatpush.msra.mxu0 %v288
      %353 = vmatpush.msra.mxu0 %v286
      %354 = vmatpush.msra.mxu0 %v284
      %355 = vmatpush.msra.mxu0 %v282
      %356 = vmatpush.msra.mxu0 %v280
      %357 = vmatpush.msra.mxu0 %v278
      %358 = vmatpush.msra.mxu0 %v276
      %359 = vmatpush.msra.mxu0 %v274
      %360 = vmatmul.f32.gmra.mxu0 %v242
      %v361 = vpop.f32.mrf.mxu0
      %v362 = vadd.f32 %v340, %v361
      %363 = vmatmul.f32.gmra.mxu0 %v244
      %v364 = vpop.f32.mrf.mxu0
      %v365 = vadd.f32 %v340, %v364
      %366 = vmatmul.f32.gmra.mxu0 %v246
      %v367 = vpop.f32.mrf.mxu0
      %v368 = vadd.f32 %v340, %v367
      %369 = vmatmul.f32.gmra.mxu0 %v248
      %v370 = vpop.f32.mrf.mxu0
      %v371 = vadd.f32 %v340, %v370
      %372 = vmatmul.f32.gmra.mxu0 %v250
      %v373 = vpop.f32.mrf.mxu0
      %v374 = vadd.f32 %v340, %v373
      %375 = vmatmul.f32.gmra.mxu0 %v252
      %v376 = vpop.f32.mrf.mxu0
      %v377 = vadd.f32 %v340, %v376
      %378 = vmatmul.f32.gmra.mxu0 %v254
      %v379 = vpop.f32.mrf.mxu0
      %v380 = vadd.f32 %v340, %v379
      %381 = vmatmul.f32.gmra.mxu0 %v256
      %v382 = vpop.f32.mrf.mxu0
      %v383 = vadd.f32 %v340, %v382
      %384 = vmatmul.f32.gmra.mxu0 %v258
      %v385 = vpop.f32.mrf.mxu0
      %v386 = vadd.f32 %v340, %v385
      %387 = vmatmul.f32.gmra.mxu0 %v260
      %v388 = vpop.f32.mrf.mxu0
      %v389 = vadd.f32 %v340, %v388
      %390 = vmatmul.f32.gmra.mxu0 %v262
      %v391 = vpop.f32.mrf.mxu0
      %v392 = vadd.f32 %v340, %v391
      %393 = vmatmul.f32.gmra.mxu0 %v264
      %v394 = vpop.f32.mrf.mxu0
      %v395 = vadd.f32 %v340, %v394
      %396 = vmatmul.f32.gmra.mxu0 %v266
      %v397 = vpop.f32.mrf.mxu0
      %v398 = vadd.f32 %v340, %v397
      %399 = vmatmul.f32.gmra.mxu0 %v268
      %v400 = vpop.f32.mrf.mxu0
      %v401 = vadd.f32 %v340, %v400
      %402 = vmatmul.f32.gmra.mxu0 %v270
      %v403 = vpop.f32.mrf.mxu0
      %v404 = vadd.f32 %v340, %v403
      %405 = vmatmul.f32.gmra.mxu0 %v272
      %v406 = vpop.f32.mrf.mxu0
      %v407 = vadd.f32 %v340, %v406
      %408 = vdwg.mxu0
      %409 = vmatpush.msra.mxu0 %v336
      %410 = vmatpush.msra.mxu0 %v334
      %411 = vmatpush.msra.mxu0 %v332
      %412 = vmatpush.msra.mxu0 %v330
      %413 = vmatpush.msra.mxu0 %v328
      %414 = vmatpush.msra.mxu0 %v326
      %415 = vmatpush.msra.mxu0 %v324
      %416 = vmatpush.msra.mxu0 %v322
      %417 = vmatpush.msra.mxu0 %v320
      %418 = vmatpush.msra.mxu0 %v318
      %419 = vmatpush.msra.mxu0 %v316
      %420 = vmatpush.msra.mxu0 %v314
      %421 = vmatpush.msra.mxu0 %v312
      %422 = vmatpush.msra.mxu0 %v310
      %423 = vmatpush.msra.mxu0 %v308
      %424 = vmatpush.msra.mxu0 %v306
      %425 = vmatmul.f32.gmra.mxu0 %v243
      %v426 = vpop.f32.mrf.mxu0
      %v427 = vadd.f32 %v362, %v426
      %428 = vmatmul.f32.gmra.mxu0 %v245
      %v429 = vpop.f32.mrf.mxu0
      %v430 = vadd.f32 %v365, %v429
      %431 = vmatmul.f32.gmra.mxu0 %v247
      %v432 = vpop.f32.mrf.mxu0
      %v433 = vadd.f32 %v368, %v432
      %434 = vmatmul.f32.gmra.mxu0 %v249
      %v435 = vpop.f32.mrf.mxu0
      %v436 = vadd.f32 %v371, %v435
      %437 = vmatmul.f32.gmra.mxu0 %v251
      %v438 = vpop.f32.mrf.mxu0
      %v439 = vadd.f32 %v374, %v438
      %440 = vmatmul.f32.gmra.mxu0 %v253
      %v441 = vpop.f32.mrf.mxu0
      %v442 = vadd.f32 %v377, %v441
      %443 = vmatmul.f32.gmra.mxu0 %v255
      %v444 = vpop.f32.mrf.mxu0
      %v445 = vadd.f32 %v380, %v444
      %446 = vmatmul.f32.gmra.mxu0 %v257
      %v447 = vpop.f32.mrf.mxu0
      %v448 = vadd.f32 %v383, %v447
      %449 = vmatmul.f32.gmra.mxu0 %v259
      %v450 = vpop.f32.mrf.mxu0
      %v451 = vadd.f32 %v386, %v450
      %452 = vmatmul.f32.gmra.mxu0 %v261
      %v453 = vpop.f32.mrf.mxu0
      %v454 = vadd.f32 %v389, %v453
      %455 = vmatmul.f32.gmra.mxu0 %v263
      %v456 = vpop.f32.mrf.mxu0
      %v457 = vadd.f32 %v392, %v456
      %458 = vmatmul.f32.gmra.mxu0 %v265
      %v459 = vpop.f32.mrf.mxu0
      %v460 = vadd.f32 %v395, %v459
      %461 = vmatmul.f32.gmra.mxu0 %v267
      %v462 = vpop.f32.mrf.mxu0
      %v463 = vadd.f32 %v398, %v462
      %464 = vmatmul.f32.gmra.mxu0 %v269
      %v465 = vpop.f32.mrf.mxu0
      %v466 = vadd.f32 %v401, %v465
      %467 = vmatmul.f32.gmra.mxu0 %v271
      %v468 = vpop.f32.mrf.mxu0
      %v469 = vadd.f32 %v404, %v468
      %470 = vmatmul.f32.gmra.mxu0 %v273
      %v471 = vpop.f32.mrf.mxu0
      %v472 = vadd.f32 %v407, %v471
      %473 = vdwg.mxu0
      %474 = vmatpush.msra.mxu0 %v305
      %475 = vmatpush.msra.mxu0 %v303
      %476 = vmatpush.msra.mxu0 %v301
      %477 = vmatpush.msra.mxu0 %v299
      %478 = vmatpush.msra.mxu0 %v297
      %479 = vmatpush.msra.mxu0 %v295
      %480 = vmatpush.msra.mxu0 %v293
      %481 = vmatpush.msra.mxu0 %v291
      %482 = vmatpush.msra.mxu0 %v289
      %483 = vmatpush.msra.mxu0 %v287
      %484 = vmatpush.msra.mxu0 %v285
      %485 = vmatpush.msra.mxu0 %v283
      %486 = vmatpush.msra.mxu0 %v281
      %487 = vmatpush.msra.mxu0 %v279
      %488 = vmatpush.msra.mxu0 %v277
      %489 = vmatpush.msra.mxu0 %v275
      %490 = vmatmul.f32.gmra.mxu0 %v242
      %v491 = vpop.f32.mrf.mxu0
      %v492 = vadd.f32 %v341, %v491
      %493 = vmatmul.f32.gmra.mxu0 %v244
      %v494 = vpop.f32.mrf.mxu0
      %v495 = vadd.f32 %v341, %v494
      %496 = vmatmul.f32.gmra.mxu0 %v246
      %v497 = vpop.f32.mrf.mxu0
      %v498 = vadd.f32 %v341, %v497
      %499 = vmatmul.f32.gmra.mxu0 %v248
      %v500 = vpop.f32.mrf.mxu0
      %v501 = vadd.f32 %v341, %v500
      %502 = vmatmul.f32.gmra.mxu0 %v250
      %v503 = vpop.f32.mrf.mxu0
      %v504 = vadd.f32 %v341, %v503
      %505 = vmatmul.f32.gmra.mxu0 %v252
      %v506 = vpop.f32.mrf.mxu0
      %v507 = vadd.f32 %v341, %v506
      %508 = vmatmul.f32.gmra.mxu0 %v254
      %v509 = vpop.f32.mrf.mxu0
      %v510 = vadd.f32 %v341, %v509
      %511 = vmatmul.f32.gmra.mxu0 %v256
      %v512 = vpop.f32.mrf.mxu0
      %v513 = vadd.f32 %v341, %v512
      %514 = vmatmul.f32.gmra.mxu0 %v258
      %v515 = vpop.f32.mrf.mxu0
      %v516 = vadd.f32 %v341, %v515
      %517 = vmatmul.f32.gmra.mxu0 %v260
      %v518 = vpop.f32.mrf.mxu0
      %v519 = vadd.f32 %v341, %v518
      %520 = vmatmul.f32.gmra.mxu0 %v262
      %v521 = vpop.f32.mrf.mxu0
      %v522 = vadd.f32 %v341, %v521
      %523 = vmatmul.f32.gmra.mxu0 %v264
      %v524 = vpop.f32.mrf.mxu0
      %v525 = vadd.f32 %v341, %v524
      %526 = vmatmul.f32.gmra.mxu0 %v266
      %v527 = vpop.f32.mrf.mxu0
      %v528 = vadd.f32 %v341, %v527
      %529 = vmatmul.f32.gmra.mxu0 %v268
      %v530 = vpop.f32.mrf.mxu0
      %v531 = vadd.f32 %v341, %v530
      %532 = vmatmul.f32.gmra.mxu0 %v270
      %v533 = vpop.f32.mrf.mxu0
      %v534 = vadd.f32 %v341, %v533
      %535 = vmatmul.f32.gmra.mxu0 %v272
      %v536 = vpop.f32.mrf.mxu0
      %v537 = vadd.f32 %v341, %v536
      %538 = vdwg.mxu0
      %539 = vmatpush.msra.mxu0 %v337
      %540 = vmatpush.msra.mxu0 %v335
      %541 = vmatpush.msra.mxu0 %v333
      %542 = vmatpush.msra.mxu0 %v331
      %543 = vmatpush.msra.mxu0 %v329
      %544 = vmatpush.msra.mxu0 %v327
      %545 = vmatpush.msra.mxu0 %v325
      %546 = vmatpush.msra.mxu0 %v323
      %547 = vmatpush.msra.mxu0 %v321
      %548 = vmatpush.msra.mxu0 %v319
      %549 = vmatpush.msra.mxu0 %v317
      %550 = vmatpush.msra.mxu0 %v315
      %551 = vmatpush.msra.mxu0 %v313
      %552 = vmatpush.msra.mxu0 %v311
      %553 = vmatpush.msra.mxu0 %v309
      %554 = vmatpush.msra.mxu0 %v307
      %555 = vmatmul.f32.gmra.mxu0 %v243
      %v556 = vpop.f32.mrf.mxu0
      %v557 = vadd.f32 %v492, %v556
      %558 = vmatmul.f32.gmra.mxu0 %v245
      %v559 = vpop.f32.mrf.mxu0
      %v560 = vadd.f32 %v495, %v559
      %561 = vmatmul.f32.gmra.mxu0 %v247
      %v562 = vpop.f32.mrf.mxu0
      %v563 = vadd.f32 %v498, %v562
      %564 = vmatmul.f32.gmra.mxu0 %v249
      %v565 = vpop.f32.mrf.mxu0
      %v566 = vadd.f32 %v501, %v565
      %567 = vmatmul.f32.gmra.mxu0 %v251
      %v568 = vpop.f32.mrf.mxu0
      %v569 = vadd.f32 %v504, %v568
      %570 = vmatmul.f32.gmra.mxu0 %v253
      %v571 = vpop.f32.mrf.mxu0
      %v572 = vadd.f32 %v507, %v571
      %573 = vmatmul.f32.gmra.mxu0 %v255
      %v574 = vpop.f32.mrf.mxu0
      %v575 = vadd.f32 %v510, %v574
      %576 = vmatmul.f32.gmra.mxu0 %v257
      %v577 = vpop.f32.mrf.mxu0
      %v578 = vadd.f32 %v513, %v577
      %579 = vmatmul.f32.gmra.mxu0 %v259
      %v580 = vpop.f32.mrf.mxu0
      %v581 = vadd.f32 %v516, %v580
      %582 = vmatmul.f32.gmra.mxu0 %v261
      %v583 = vpop.f32.mrf.mxu0
      %v584 = vadd.f32 %v519, %v583
      %585 = vmatmul.f32.gmra.mxu0 %v263
      %v586 = vpop.f32.mrf.mxu0
      %v587 = vadd.f32 %v522, %v586
      %588 = vmatmul.f32.gmra.mxu0 %v265
      %v589 = vpop.f32.mrf.mxu0
      %v590 = vadd.f32 %v525, %v589
      %591 = vmatmul.f32.gmra.mxu0 %v267
      %v592 = vpop.f32.mrf.mxu0
      %v593 = vadd.f32 %v528, %v592
      %594 = vmatmul.f32.gmra.mxu0 %v269
      %v595 = vpop.f32.mrf.mxu0
      %v596 = vadd.f32 %v531, %v595
      %597 = vmatmul.f32.gmra.mxu0 %v271
      %v598 = vpop.f32.mrf.mxu0
      %v599 = vadd.f32 %v534, %v598
      %600 = vmatmul.f32.gmra.mxu0 %v273
      %v601 = vpop.f32.mrf.mxu0
      %v602 = vadd.f32 %v537, %v601
      %603 = vdwg.mxu0
      %604 = vst [vmem:[%s240] sm:$0xff] %v427
      %605 = vst [vmem:[%s240 + $0x8] sm:$0xff] %v557
      %606 = vst [vmem:[%s240 + $0x10] sm:$0xff] %v430
      %607 = vst [vmem:[%s240 + $0x18] sm:$0xff] %v560
      %608 = vst [vmem:[%s240 + $0x20] sm:$0xff] %v433
      %609 = vst [vmem:[%s240 + $0x28] sm:$0xff] %v563
      %610 = vst [vmem:[%s240 + $0x30] sm:$0xff] %v436
      %611 = vst [vmem:[%s240 + $0x38] sm:$0xff] %v566
      %612 = vst [vmem:[%s240 + $0x40] sm:$0xff] %v439
      %613 = vst [vmem:[%s240 + $0x48] sm:$0xff] %v569
      %614 = vst [vmem:[%s240 + $0x50] sm:$0xff] %v442
      %615 = vst [vmem:[%s240 + $0x58] sm:$0xff] %v572
      %616 = vst [vmem:[%s240 + $0x60] sm:$0xff] %v445
      %617 = vst [vmem:[%s240 + $0x68] sm:$0xff] %v575
      %618 = vst [vmem:[%s240 + $0x70] sm:$0xff] %v448
      %619 = vst [vmem:[%s240 + $0x78] sm:$0xff] %v578
      %620 = vst [vmem:[%s240 + $0x80] sm:$0xff] %v451
      %621 = vst [vmem:[%s240 + $0x88] sm:$0xff] %v581
      %622 = vst [vmem:[%s240 + $0x90] sm:$0xff] %v454
      %623 = vst [vmem:[%s240 + $0x98] sm:$0xff] %v584
      %624 = vst [vmem:[%s240 + $0xa0] sm:$0xff] %v457
      %625 = vst [vmem:[%s240 + $0xa8] sm:$0xff] %v587
      %626 = vst [vmem:[%s240 + $0xb0] sm:$0xff] %v460
      %627 = vst [vmem:[%s240 + $0xb8] sm:$0xff] %v590
      %628 = vst [vmem:[%s240 + $0xc0] sm:$0xff] %v463
      %629 = vst [vmem:[%s240 + $0xc8] sm:$0xff] %v593
      %630 = vst [vmem:[%s240 + $0xd0] sm:$0xff] %v466
      %631 = vst [vmem:[%s240 + $0xd8] sm:$0xff] %v596
      %632 = vst [vmem:[%s240 + $0xe0] sm:$0xff] %v469
      %633 = vst [vmem:[%s240 + $0xe8] sm:$0xff] %v599
      %634 = vst [vmem:[%s240 + $0xf0] sm:$0xff] %v472
      %635 = vst [vmem:[%s240 + $0xf8] sm:$0xff] %v602
      %s636 = smul.u32 16, %s20
      %p637 = scmp.lt.s32.totalorder %s19, 1
      %s638 = scalar_select %p637, %s19, 1
      %p639 = scmp.lt.s32.totalorder %s636, 47
      %s640 = scalar_select %p639, %s636, 47
      %s641 = smul.addr %s640, 2
      %s642 = smul.addr %s638, 96
      %s643 = sadd.s32 %s641, %s642
      %s644 = smul.addr %s643, 8
      %s645 = scalar_lea.vmem %s4, %s644
      // Predicated region
      $region37: #{wan_i2v_cross_attention.11} parent=35 // pred_check
        %p646 = pneg %p138
      $region38: #{wan_i2v_cross_attention.11} parent=35 // pred_check_branch
        %648 = sbr.rel (%p646) target = $region40
      $region39: #{wan_i2v_cross_attention.11} parent=35 // pred_region
        %s649 = smul.u32 16, %s20
      $region40: #{wan_i2v_cross_attention.11} parent=35 // pred_fallthru
        _
    $region36: #{wan_i2v_cross_attention.11} parent=5 // pred_fallthru
      _
    %p650 = scmp.le.s32.totalorder 2, %s10
    // Predicated region
    $region41: #{wan_i2v_cross_attention.11} parent=5 // pred_check
      %p651 = pneg %p650
    $region42: #{wan_i2v_cross_attention.11} parent=5 // pred_check_branch
      %653 = sbr.rel (%p651) target = $region44
    $region43: #{wan_i2v_cross_attention.11} parent=5 // pred_region
      %s654 = ssub.s32 %s10, 2
      // Predicated region
      $region45: #{wan_i2v_cross_attention.11} parent=43 // pred_check
        %p655 = pneg %p144
      $region46: #{wan_i2v_cross_attention.11} parent=43 // pred_check_branch
        %657 = sbr.rel (%p655) target = $region48
      $region47: #{wan_i2v_cross_attention.11} parent=43 // pred_region
        %s658 = smul.u32 16, %s22
        %p659 = scmp.lt.s32.totalorder %s21, 1
        %s660 = scalar_select %p659, %s21, 1
        %p661 = scmp.lt.s32.totalorder %s658, 47
        %s662 = scalar_select %p661, %s658, 47
        %s663 = smul.addr %s662, 2
        %s664 = smul.addr %s660, 96
        %s665 = sadd.s32 %s663, %s664
        %s666 = smul.addr %s665, 8
        %s667 = scalar_lea.vmem %s4, %s666
      $region48: #{wan_i2v_cross_attention.11} parent=43 // pred_fallthru
        _
    $region44: #{wan_i2v_cross_attention.11} parent=5 // pred_fallthru
      _
  $region6: #{wan_i2v_cross_attention.11} parent=0 // loop_footer
    %s14 = sadd.s32 1, %s10
  $region7: #{wan_i2v_cross_attention.11} parent=0 // loop_footer_branch
    %9 = sbr.rel target = $region3
  $region8: #{wan_i2v_cross_attention.11} parent=0 // loop_exit
    _

// kernel: wan_i2v_cross_attention.9
$region0: #{wan_i2v_cross_attention.9}
  #allocation0 [shape = 'u32[]', space=smem, size = 0x4, offset = 0x4, fixed_abs, tag = 'smem constant byte address 0x4 - core index']
  #allocation1 [shape = 'u32[72,128]{1,0:T(1,128)}', space=vmem, size = 0x9000, scoped, tag = 'internal scratch']
  %s0 = inlined_call_operand.vmem [shape: f32[2,128,256], index: 0, kind: input, shape index: {}]
  %s1 = inlined_call_operand.vmem [shape: f32[256,256], index: 1, kind: input, shape index: {}]
  %s2 = inlined_call_operand.vmem [shape: f32[1,256], index: 2, kind: input, shape index: {}]
  %s3 = inlined_call_operand.vmem [shape: f32[1,256], index: 3, kind: input, shape index: {}]
  %s4 = inlined_call_operand.vmem [shape: f32[2,128,256], index: 4, kind: output, shape index: {}]
  %s5 = sld [smem:[#allocation0]]
  $region49: #{wan_i2v_cross_attention.9} parent=0
    _
  %s7 = ssub.s32 1, %s5
  %s8 = scalar_select 0, %s7, %s5
  loop: start=0, step=1, limit=4
  $region2: #{wan_i2v_cross_attention.9} parent=0 // loop_pre_header
    _
  $region3: #{wan_i2v_cross_attention.9} parent=0 // loop_header
    %s10 = sphi 0, %s14
    %p11 = scmp.ge.s32.totalorder %s10, 4
    %s17 = sphi 0, %s29
    %s18 = sphi 0, %s25
    %s19 = sphi 0, %s17
    %s20 = sphi 0, %s18
    %s21 = sphi 0, %s19
    %s22 = sphi 0, %s20
    %s34 = sphi 0, %s36
    %s37 = sphi 0, %s34
    %s38 = sphi 0, %s37
    %s54 = sphi 0, %s38
    %s58 = sphi 0, %s58
    %s60 = sphi 0, %s58
    %s61 = sphi 0, %s60
    %s75 = sphi 0, %s61
    %s79 = sphi 0, %s79
    %s81 = sphi 0, %s79
    %s82 = sphi 0, %s81
    %s96 = sphi 0, %s82
    %s100 = sphi 0, %s100
    %s102 = sphi 0, %s100
    %s103 = sphi 0, %s102
    %s117 = sphi 0, %s103
    %s125 = sphi 0, %s127
    %s128 = sphi 0, %s125
    %s129 = sphi 0, %s128
    %s145 = sphi 0, %s129
  $region4: #{wan_i2v_cross_attention.9} parent=0 // loop_header_branch
    %13 = sbr.rel (%p11) target = $region8
  $region5: #{wan_i2v_cross_attention.9} parent=0 // loop_body
    %s15 = ssub.s32 %s10, 1
    %s16 = ssub.s32 %s10, 2
    %s23 = sadd.s32 1, %s18
    %p24 = scmp.ge.s32.totalorder %s23, 1
    %s25 = scalar_select %p24, 0, %s23
    %s26 = sadd.s32 1, %s17
    %s27 = scalar_select %p24, %s26, %s17
    %p28 = scmp.ge.s32.totalorder %s27, 2
    %s29 = scalar_select %p28, 0, %s27
    %s30 = ssub.s32 %s17, %s29
    %s31 = ssub.s32 %s18, %s25
    %s32 = sor.u32 %s30, %s31
    %p33 = scmp.eq.s32.totalorder %s32, 0
    %s35 = sadd.s32 %s34, 1
    %s36 = scalar_select %p33, %s34, %s35
    %p39 = pneg %p33
    %p40 = scmp.eq.s32.totalorder %s10, 1
    %p41 = por %p39, %p40
    %p42 = scmp.ne.s32.totalorder %s34, %s37
    %p43 = scmp.eq.s32.totalorder %s10, 0
    %p44 = por %p42, %p43
    %p45 = scmp.ne.s32.totalorder %s34, %s37
    %p46 = scmp.eq.s32.totalorder %s15, 1
    %p47 = por %p45, %p46
    %p48 = scmp.ne.s32.totalorder %s37, %s38
    %p49 = scmp.eq.s32.totalorder %s15, 0
    %p50 = por %p48, %p49
    %p51 = scmp.ne.s32.totalorder %s37, %s38
    %p52 = scmp.eq.s32.totalorder %s16, 1
    %p53 = por %p51, %p52
    %p55 = scmp.ne.s32.totalorder %s38, %s54
    %p56 = scmp.eq.s32.totalorder %s16, 0
    %p57 = por %p55, %p56
    %s59 = sadd.s32 %s58, 1
    %p62 = scmp.eq.s32.totalorder %s10, 1
    %p63 = scmp.ne.s32.totalorder %s58, %s60
    %p64 = scmp.eq.s32.totalorder %s10, 0
    %p65 = por %p63, %p64
    %p66 = scmp.ne.s32.totalorder %s58, %s60
    %p67 = scmp.eq.s32.totalorder %s15, 1
    %p68 = por %p66, %p67
    %p69 = scmp.ne.s32.totalorder %s60, %s61
    %p70 = scmp.eq.s32.totalorder %s15, 0
    %p71 = por %p69, %p70
    %p72 = scmp.ne.s32.totalorder %s60, %s61
    %p73 = scmp.eq.s32.totalorder %s16, 1
    %p74 = por %p72, %p73
    %p76 = scmp.ne.s32.totalorder %s61, %s75
    %p77 = scmp.eq.s32.totalorder %s16, 0
    %p78 = por %p76, %p77
    %s80 = sadd.s32 %s79, 1
    %p83 = scmp.eq.s32.totalorder %s10, 1
    %p84 = scmp.ne.s32.totalorder %s79, %s81
    %p85 = scmp.eq.s32.totalorder %s10, 0
    %p86 = por %p84, %p85
    %p87 = scmp.ne.s32.totalorder %s79, %s81
    %p88 = scmp.eq.s32.totalorder %s15, 1
    %p89 = por %p87, %p88
    %p90 = scmp.ne.s32.totalorder %s81, %s82
    %p91 = scmp.eq.s32.totalorder %s15, 0
    %p92 = por %p90, %p91
    %p93 = scmp.ne.s32.totalorder %s81, %s82
    %p94 = scmp.eq.s32.totalorder %s16, 1
    %p95 = por %p93, %p94
    %p97 = scmp.ne.s32.totalorder %s82, %s96
    %p98 = scmp.eq.s32.totalorder %s16, 0
    %p99 = por %p97, %p98
    %s101 = sadd.s32 %s100, 1
    %p104 = scmp.eq.s32.totalorder %s10, 1
    %p105 = scmp.ne.s32.totalorder %s100, %s102
    %p106 = scmp.eq.s32.totalorder %s10, 0
    %p107 = por %p105, %p106
    %p108 = scmp.ne.s32.totalorder %s100, %s102
    %p109 = scmp.eq.s32.totalorder %s15, 1
    %p110 = por %p108, %p109
    %p111 = scmp.ne.s32.totalorder %s102, %s103
    %p112 = scmp.eq.s32.totalorder %s15, 0
    %p113 = por %p111, %p112
    %p114 = scmp.ne.s32.totalorder %s102, %s103
    %p115 = scmp.eq.s32.totalorder %s16, 1
    %p116 = por %p114, %p115
    %p118 = scmp.ne.s32.totalorder %s103, %s117
    %p119 = scmp.eq.s32.totalorder %s16, 0
    %p120 = por %p118, %p119
    %s121 = ssub.s32 %s17, %s29
    %s122 = ssub.s32 %s18, %s25
    %s123 = sor.u32 %s121, %s122
    %p124 = scmp.eq.s32.totalorder %s123, 0
    %s126 = sadd.s32 %s125, 1
    %s127 = scalar_select %p124, %s125, %s126
    %p130 = pneg %p124
    %p131 = scmp.eq.s32.totalorder %s10, 1
    %p132 = por %p130, %p131
    %p133 = scmp.ne.s32.totalorder %s125, %s128
    %p134 = scmp.eq.s32.totalorder %s10, 0
    %p135 = por %p133, %p134
    %p136 = scmp.ne.s32.totalorder %s125, %s128
    %p137 = scmp.eq.s32.totalorder %s15, 1
    %p138 = por %p136, %p137
    %p139 = scmp.ne.s32.totalorder %s128, %s129
    %p140 = scmp.eq.s32.totalorder %s15, 0
    %p141 = por %p139, %p140
    %p142 = scmp.ne.s32.totalorder %s128, %s129
    %p143 = scmp.eq.s32.totalorder %s16, 1
    %p144 = por %p142, %p143
    %p146 = scmp.ne.s32.totalorder %s129, %s145
    %p147 = scmp.eq.s32.totalorder %s16, 0
    %p148 = por %p146, %p147
    %p149 = scmp.le.s32.totalorder 1, %s10
    %p150 = scmp.lt.s32.totalorder %s10, 3
    %p151 = pnand %p149, %p150
    %p152 = pneg %p151
    // Predicated region
    $region9: #{wan_i2v_cross_attention.9} parent=5 // pred_check
      _
    $region10: #{wan_i2v_cross_attention.9} parent=5 // pred_check_branch
      %154 = sbr.rel (%p151) target = $region12
    $region11: #{wan_i2v_cross_attention.9} parent=5 // pred_region
      %s155 = ssub.s32 %s10, 1
      // Predicated region
      $region13: #{wan_i2v_cross_attention.9} parent=11 // pred_check
        %p156 = pneg %p71
      $region14: #{wan_i2v_cross_attention.9} parent=11 // pred_check_branch
        %158 = sbr.rel (%p156) target = $region16
      $region15: #{wan_i2v_cross_attention.9} parent=11 // pred_region
        _
      $region16: #{wan_i2v_cross_attention.9} parent=11 // pred_fallthru
        _
      // Predicated region
      $region17: #{wan_i2v_cross_attention.9} parent=11 // pred_check
        %p159 = pneg %p92
      $region18: #{wan_i2v_cross_attention.9} parent=11 // pred_check_branch
        %161 = sbr.rel (%p159) target = $region20
      $region19: #{wan_i2v_cross_attention.9} parent=11 // pred_region
        _
      $region20: #{wan_i2v_cross_attention.9} parent=11 // pred_fallthru
        _
      // Predicated region
      $region21: #{wan_i2v_cross_attention.9} parent=11 // pred_check
        %p162 = pneg %p113
      $region22: #{wan_i2v_cross_attention.9} parent=11 // pred_check_branch
        %164 = sbr.rel (%p162) target = $region24
      $region23: #{wan_i2v_cross_attention.9} parent=11 // pred_region
        _
      $region24: #{wan_i2v_cross_attention.9} parent=11 // pred_fallthru
        _
    $region12: #{wan_i2v_cross_attention.9} parent=5 // pred_fallthru
      _
    %p165 = scmp.lt.s32.totalorder %s10, 2
    // Predicated region
    $region25: #{wan_i2v_cross_attention.9} parent=5 // pred_check
      %p166 = pneg %p165
    $region26: #{wan_i2v_cross_attention.9} parent=5 // pred_check_branch
      %168 = sbr.rel (%p166) target = $region28
    $region27: #{wan_i2v_cross_attention.9} parent=5 // pred_region
      // Predicated region
      $region29: #{wan_i2v_cross_attention.9} parent=27 // pred_check
        %p169 = pneg %p44
      $region30: #{wan_i2v_cross_attention.9} parent=27 // pred_check_branch
        %171 = sbr.rel (%p169) target = $region32
      $region31: #{wan_i2v_cross_attention.9} parent=27 // pred_region
        %s172 = smul.u32 16, %s18
        %p173 = scmp.lt.s32.totalorder %s17, 1
        %s174 = scalar_select %p173, %s17, 1
        %p175 = scmp.lt.s32.totalorder %s172, 15
        %s176 = scalar_select %p175, %s172, 15
        %s177 = smul.addr %s176, 2
        %s178 = smul.addr %s174, 32
        %s179 = sadd.s32 %s177, %s178
        %s180 = smul.addr %s179, 8
        %s181 = scalar_lea.vmem %s0, %s180
        %s182 = smul.u32 16, %s18
      $region32: #{wan_i2v_cross_attention.9} parent=27 // pred_fallthru
        _
    $region28: #{wan_i2v_cross_attention.9} parent=5 // pred_fallthru
      _
    %p183 = scmp.le.s32.totalorder 1, %s10
    %p184 = scmp.lt.s32.totalorder %s10, 3
    %p185 = pnand %p183, %p184
    %p186 = pneg %p185
    // Predicated region
    $region33: #{wan_i2v_cross_attention.9} parent=5 // pred_check
      _
    $region34: #{wan_i2v_cross_attention.9} parent=5 // pred_check_branch
      %188 = sbr.rel (%p185) target = $region36
    $region35: #{wan_i2v_cross_attention.9} parent=5 // pred_region
      %s189 = ssub.s32 %s10, 1
      %s190 = smul.u32 16, %s20
      %p191 = scmp.lt.s32.totalorder %s19, 1
      %s192 = scalar_select %p191, %s19, 1
      %p193 = scmp.lt.s32.totalorder %s190, 15
      %s194 = scalar_select %p193, %s190, 15
      %s195 = smul.addr %s194, 2
      %s196 = smul.addr %s192, 32
      %s197 = sadd.s32 %s195, %s196
      %s198 = smul.addr %s197, 8
      %s199 = scalar_lea.vmem %s0, %s198
      %p200 = pneg %p50
      %p201 = pneg %p47
      %p202 = pneg %p71
      %p203 = pneg %p68
      %p204 = pneg %p92
      %p205 = pneg %p89
      %p206 = pneg %p113
      %p207 = pneg %p110
      %p208 = pneg %p141
      %p209 = pneg %p138
      %s210 = smul.u32 16, %s20
      %p211 = scmp.lt.s32.totalorder %s19, 1
      %s212 = scalar_select %p211, %s19, 1
      %p213 = scmp.lt.s32.totalorder %s210, 15
      %s214 = scalar_select %p213, %s210, 15
      %s215 = smul.addr %s214, 2
      %s216 = smul.addr %s212, 32
      %s217 = sadd.s32 %s215, %s216
      %s218 = smul.addr %s217, 8
      %s219 = scalar_lea.vmem %s4, %s218
      %s220 = smul.u32 16, %s20
      %p221 = scmp.lt.s32.totalorder %s19, 1
      %s222 = scalar_select %p221, %s19, 1
      %p223 = scmp.lt.s32.totalorder %s220, 15
      %s224 = scalar_select %p223, %s220, 15
      %s225 = smul.addr %s224, 2
      %s226 = smul.addr %s222, 32
      %s227 = sadd.s32 %s225, %s226
      %s228 = smul.addr %s227, 8
      %s229 = scalar_lea.vmem %s0, %s228
      %s230 = smul.u32 16, %s20
      %s231 = smul.u32 16, %s20
      %p232 = scmp.lt.s32.totalorder %s19, 1
      %s233 = scalar_select %p232, %s19, 1
      %p234 = scmp.lt.s32.totalorder %s231, 15
      %s235 = scalar_select %p234, %s231, 15
      %s236 = smul.addr %s235, 2
      %s237 = smul.addr %s233, 32
      %s238 = sadd.s32 %s236, %s237
      %s239 = smul.addr %s238, 8
      %s240 = scalar_lea.vmem %s4, %s239
      %s241 = smul.u32 16, %s20
      %v242 = vld [vmem:[%s229] sm:$0xff]
      %v243 = vld [vmem:[%s229 + $0x8] sm:$0xff]
      %v244 = vld [vmem:[%s229 + $0x10] sm:$0xff]
      %v245 = vld [vmem:[%s229 + $0x18] sm:$0xff]
      %v246 = vld [vmem:[%s229 + $0x20] sm:$0xff]
      %v247 = vld [vmem:[%s229 + $0x28] sm:$0xff]
      %v248 = vld [vmem:[%s229 + $0x30] sm:$0xff]
      %v249 = vld [vmem:[%s229 + $0x38] sm:$0xff]
      %v250 = vld [vmem:[%s229 + $0x40] sm:$0xff]
      %v251 = vld [vmem:[%s229 + $0x48] sm:$0xff]
      %v252 = vld [vmem:[%s229 + $0x50] sm:$0xff]
      %v253 = vld [vmem:[%s229 + $0x58] sm:$0xff]
      %v254 = vld [vmem:[%s229 + $0x60] sm:$0xff]
      %v255 = vld [vmem:[%s229 + $0x68] sm:$0xff]
      %v256 = vld [vmem:[%s229 + $0x70] sm:$0xff]
      %v257 = vld [vmem:[%s229 + $0x78] sm:$0xff]
      %v258 = vld [vmem:[%s229 + $0x80] sm:$0xff]
      %v259 = vld [vmem:[%s229 + $0x88] sm:$0xff]
      %v260 = vld [vmem:[%s229 + $0x90] sm:$0xff]
      %v261 = vld [vmem:[%s229 + $0x98] sm:$0xff]
      %v262 = vld [vmem:[%s229 + $0xa0] sm:$0xff]
      %v263 = vld [vmem:[%s229 + $0xa8] sm:$0xff]
      %v264 = vld [vmem:[%s229 + $0xb0] sm:$0xff]
      %v265 = vld [vmem:[%s229 + $0xb8] sm:$0xff]
      %v266 = vld [vmem:[%s229 + $0xc0] sm:$0xff]
      %v267 = vld [vmem:[%s229 + $0xc8] sm:$0xff]
      %v268 = vld [vmem:[%s229 + $0xd0] sm:$0xff]
      %v269 = vld [vmem:[%s229 + $0xd8] sm:$0xff]
      %v270 = vld [vmem:[%s229 + $0xe0] sm:$0xff]
      %v271 = vld [vmem:[%s229 + $0xe8] sm:$0xff]
      %v272 = vld [vmem:[%s229 + $0xf0] sm:$0xff]
      %v273 = vld [vmem:[%s229 + $0xf8] sm:$0xff]
      %v274 = vld [vmem:[%s1] sm:$0xff]
      %v275 = vld [vmem:[%s1 + $0x8] sm:$0xff]
      %v276 = vld [vmem:[%s1 + $0x10] sm:$0xff]
      %v277 = vld [vmem:[%s1 + $0x18] sm:$0xff]
      %v278 = vld [vmem:[%s1 + $0x20] sm:$0xff]
      %v279 = vld [vmem:[%s1 + $0x28] sm:$0xff]
      %v280 = vld [vmem:[%s1 + $0x30] sm:$0xff]
      %v281 = vld [vmem:[%s1 + $0x38] sm:$0xff]
      %v282 = vld [vmem:[%s1 + $0x40] sm:$0xff]
      %v283 = vld [vmem:[%s1 + $0x48] sm:$0xff]
      %v284 = vld [vmem:[%s1 + $0x50] sm:$0xff]
      %v285 = vld [vmem:[%s1 + $0x58] sm:$0xff]
      %v286 = vld [vmem:[%s1 + $0x60] sm:$0xff]
      %v287 = vld [vmem:[%s1 + $0x68] sm:$0xff]
      %v288 = vld [vmem:[%s1 + $0x70] sm:$0xff]
      %v289 = vld [vmem:[%s1 + $0x78] sm:$0xff]
      %v290 = vld [vmem:[%s1 + $0x80] sm:$0xff]
      %v291 = vld [vmem:[%s1 + $0x88] sm:$0xff]
      %v292 = vld [vmem:[%s1 + $0x90] sm:$0xff]
      %v293 = vld [vmem:[%s1 + $0x98] sm:$0xff]
      %v294 = vld [vmem:[%s1 + $0xa0] sm:$0xff]
      %v295 = vld [vmem:[%s1 + $0xa8] sm:$0xff]
      %v296 = vld [vmem:[%s1 + $0xb0] sm:$0xff]
      %v297 = vld [vmem:[%s1 + $0xb8] sm:$0xff]
      %v298 = vld [vmem:[%s1 + $0xc0] sm:$0xff]
      %v299 = vld [vmem:[%s1 + $0xc8] sm:$0xff]
      %v300 = vld [vmem:[%s1 + $0xd0] sm:$0xff]
      %v301 = vld [vmem:[%s1 + $0xd8] sm:$0xff]
      %v302 = vld [vmem:[%s1 + $0xe0] sm:$0xff]
      %v303 = vld [vmem:[%s1 + $0xe8] sm:$0xff]
      %v304 = vld [vmem:[%s1 + $0xf0] sm:$0xff]
      %v305 = vld [vmem:[%s1 + $0xf8] sm:$0xff]
      %v306 = vld [vmem:[%s1 + $0x100] sm:$0xff]
      %v307 = vld [vmem:[%s1 + $0x108] sm:$0xff]
      %v308 = vld [vmem:[%s1 + $0x110] sm:$0xff]
      %v309 = vld [vmem:[%s1 + $0x118] sm:$0xff]
      %v310 = vld [vmem:[%s1 + $0x120] sm:$0xff]
      %v311 = vld [vmem:[%s1 + $0x128] sm:$0xff]
      %v312 = vld [vmem:[%s1 + $0x130] sm:$0xff]
      %v313 = vld [vmem:[%s1 + $0x138] sm:$0xff]
      %v314 = vld [vmem:[%s1 + $0x140] sm:$0xff]
      %v315 = vld [vmem:[%s1 + $0x148] sm:$0xff]
      %v316 = vld [vmem:[%s1 + $0x150] sm:$0xff]
      %v317 = vld [vmem:[%s1 + $0x158] sm:$0xff]
      %v318 = vld [vmem:[%s1 + $0x160] sm:$0xff]
      %v319 = vld [vmem:[%s1 + $0x168] sm:$0xff]
      %v320 = vld [vmem:[%s1 + $0x170] sm:$0xff]
      %v321 = vld [vmem:[%s1 + $0x178] sm:$0xff]
      %v322 = vld [vmem:[%s1 + $0x180] sm:$0xff]
      %v323 = vld [vmem:[%s1 + $0x188] sm:$0xff]
      %v324 = vld [vmem:[%s1 + $0x190] sm:$0xff]
      %v325 = vld [vmem:[%s1 + $0x198] sm:$0xff]
      %v326 = vld [vmem:[%s1 + $0x1a0] sm:$0xff]
      %v327 = vld [vmem:[%s1 + $0x1a8] sm:$0xff]
      %v328 = vld [vmem:[%s1 + $0x1b0] sm:$0xff]
      %v329 = vld [vmem:[%s1 + $0x1b8] sm:$0xff]
      %v330 = vld [vmem:[%s1 + $0x1c0] sm:$0xff]
      %v331 = vld [vmem:[%s1 + $0x1c8] sm:$0xff]
      %v332 = vld [vmem:[%s1 + $0x1d0] sm:$0xff]
      %v333 = vld [vmem:[%s1 + $0x1d8] sm:$0xff]
      %v334 = vld [vmem:[%s1 + $0x1e0] sm:$0xff]
      %v335 = vld [vmem:[%s1 + $0x1e8] sm:$0xff]
      %v336 = vld [vmem:[%s1 + $0x1f0] sm:$0xff]
      %v337 = vld [vmem:[%s1 + $0x1f8] sm:$0xff]
      %v338 = vld [vmem:[%s2] sm:$0x3]
      %v340 = vperm.slane %v338, 0
      %v341 = vperm.slane %v338, 1
      %344 = vmatpush.msra.mxu0 %v304
      %345 = vmatpush.msra.mxu0 %v302
      %346 = vmatpush.msra.mxu0 %v300
      %347 = vmatpush.msra.mxu0 %v298
      %348 = vmatpush.msra.mxu0 %v296
      %349 = vmatpush.msra.mxu0 %v294
      %350 = vmatpush.msra.mxu0 %v292
      %351 = vmatpush.msra.mxu0 %v290
      %352 = vmatpush.msra.mxu0 %v288
      %353 = vmatpush.msra.mxu0 %v286
      %354 = vmatpush.msra.mxu0 %v284
      %355 = vmatpush.msra.mxu0 %v282
      %356 = vmatpush.msra.mxu0 %v280
      %357 = vmatpush.msra.mxu0 %v278
      %358 = vmatpush.msra.mxu0 %v276
      %359 = vmatpush.msra.mxu0 %v274
      %360 = vmatmul.f32.gmra.mxu0 %v242
      %v361 = vpop.f32.mrf.mxu0
      %v362 = vadd.f32 %v340, %v361
      %363 = vmatmul.f32.gmra.mxu0 %v244
      %v364 = vpop.f32.mrf.mxu0
      %v365 = vadd.f32 %v340, %v364
      %366 = vmatmul.f32.gmra.mxu0 %v246
      %v367 = vpop.f32.mrf.mxu0
      %v368 = vadd.f32 %v340, %v367
      %369 = vmatmul.f32.gmra.mxu0 %v248
      %v370 = vpop.f32.mrf.mxu0
      %v371 = vadd.f32 %v340, %v370
      %372 = vmatmul.f32.gmra.mxu0 %v250
      %v373 = vpop.f32.mrf.mxu0
      %v374 = vadd.f32 %v340, %v373
      %375 = vmatmul.f32.gmra.mxu0 %v252
      %v376 = vpop.f32.mrf.mxu0
      %v377 = vadd.f32 %v340, %v376
      %378 = vmatmul.f32.gmra.mxu0 %v254
      %v379 = vpop.f32.mrf.mxu0
      %v380 = vadd.f32 %v340, %v379
      %381 = vmatmul.f32.gmra.mxu0 %v256
      %v382 = vpop.f32.mrf.mxu0
      %v383 = vadd.f32 %v340, %v382
      %384 = vmatmul.f32.gmra.mxu0 %v258
      %v385 = vpop.f32.mrf.mxu0
      %v386 = vadd.f32 %v340, %v385
      %387 = vmatmul.f32.gmra.mxu0 %v260
      %v388 = vpop.f32.mrf.mxu0
      %v389 = vadd.f32 %v340, %v388
      %390 = vmatmul.f32.gmra.mxu0 %v262
      %v391 = vpop.f32.mrf.mxu0
      %v392 = vadd.f32 %v340, %v391
      %393 = vmatmul.f32.gmra.mxu0 %v264
      %v394 = vpop.f32.mrf.mxu0
      %v395 = vadd.f32 %v340, %v394
      %396 = vmatmul.f32.gmra.mxu0 %v266
      %v397 = vpop.f32.mrf.mxu0
      %v398 = vadd.f32 %v340, %v397
      %399 = vmatmul.f32.gmra.mxu0 %v268
      %v400 = vpop.f32.mrf.mxu0
      %v401 = vadd.f32 %v340, %v400
      %402 = vmatmul.f32.gmra.mxu0 %v270
      %v403 = vpop.f32.mrf.mxu0
      %v404 = vadd.f32 %v340, %v403
      %405 = vmatmul.f32.gmra.mxu0 %v272
      %v406 = vpop.f32.mrf.mxu0
      %v407 = vadd.f32 %v340, %v406
      %408 = vdwg.mxu0
      %409 = vmatpush.msra.mxu0 %v336
      %410 = vmatpush.msra.mxu0 %v334
      %411 = vmatpush.msra.mxu0 %v332
      %412 = vmatpush.msra.mxu0 %v330
      %413 = vmatpush.msra.mxu0 %v328
      %414 = vmatpush.msra.mxu0 %v326
      %415 = vmatpush.msra.mxu0 %v324
      %416 = vmatpush.msra.mxu0 %v322
      %417 = vmatpush.msra.mxu0 %v320
      %418 = vmatpush.msra.mxu0 %v318
      %419 = vmatpush.msra.mxu0 %v316
      %420 = vmatpush.msra.mxu0 %v314
      %421 = vmatpush.msra.mxu0 %v312
      %422 = vmatpush.msra.mxu0 %v310
      %423 = vmatpush.msra.mxu0 %v308
      %424 = vmatpush.msra.mxu0 %v306
      %425 = vmatmul.f32.gmra.mxu0 %v243
      %v426 = vpop.f32.mrf.mxu0
      %v427 = vadd.f32 %v362, %v426
      %428 = vmatmul.f32.gmra.mxu0 %v245
      %v429 = vpop.f32.mrf.mxu0
      %v430 = vadd.f32 %v365, %v429
      %431 = vmatmul.f32.gmra.mxu0 %v247
      %v432 = vpop.f32.mrf.mxu0
      %v433 = vadd.f32 %v368, %v432
      %434 = vmatmul.f32.gmra.mxu0 %v249
      %v435 = vpop.f32.mrf.mxu0
      %v436 = vadd.f32 %v371, %v435
      %437 = vmatmul.f32.gmra.mxu0 %v251
      %v438 = vpop.f32.mrf.mxu0
      %v439 = vadd.f32 %v374, %v438
      %440 = vmatmul.f32.gmra.mxu0 %v253
      %v441 = vpop.f32.mrf.mxu0
      %v442 = vadd.f32 %v377, %v441
      %443 = vmatmul.f32.gmra.mxu0 %v255
      %v444 = vpop.f32.mrf.mxu0
      %v445 = vadd.f32 %v380, %v444
      %446 = vmatmul.f32.gmra.mxu0 %v257
      %v447 = vpop.f32.mrf.mxu0
      %v448 = vadd.f32 %v383, %v447
      %449 = vmatmul.f32.gmra.mxu0 %v259
      %v450 = vpop.f32.mrf.mxu0
      %v451 = vadd.f32 %v386, %v450
      %452 = vmatmul.f32.gmra.mxu0 %v261
      %v453 = vpop.f32.mrf.mxu0
      %v454 = vadd.f32 %v389, %v453
      %455 = vmatmul.f32.gmra.mxu0 %v263
      %v456 = vpop.f32.mrf.mxu0
      %v457 = vadd.f32 %v392, %v456
      %458 = vmatmul.f32.gmra.mxu0 %v265
      %v459 = vpop.f32.mrf.mxu0
      %v460 = vadd.f32 %v395, %v459
      %461 = vmatmul.f32.gmra.mxu0 %v267
      %v462 = vpop.f32.mrf.mxu0
      %v463 = vadd.f32 %v398, %v462
      %464 = vmatmul.f32.gmra.mxu0 %v269
      %v465 = vpop.f32.mrf.mxu0
      %v466 = vadd.f32 %v401, %v465
      %467 = vmatmul.f32.gmra.mxu0 %v271
      %v468 = vpop.f32.mrf.mxu0
      %v469 = vadd.f32 %v404, %v468
      %470 = vmatmul.f32.gmra.mxu0 %v273
      %v471 = vpop.f32.mrf.mxu0
      %v472 = vadd.f32 %v407, %v471
      %473 = vdwg.mxu0
      %474 = vmatpush.msra.mxu0 %v305
      %475 = vmatpush.msra.mxu0 %v303
      %476 = vmatpush.msra.mxu0 %v301
      %477 = vmatpush.msra.mxu0 %v299
      %478 = vmatpush.msra.mxu0 %v297
      %479 = vmatpush.msra.mxu0 %v295
      %480 = vmatpush.msra.mxu0 %v293
      %481 = vmatpush.msra.mxu0 %v291
      %482 = vmatpush.msra.mxu0 %v289
      %483 = vmatpush.msra.mxu0 %v287
      %484 = vmatpush.msra.mxu0 %v285
      %485 = vmatpush.msra.mxu0 %v283
      %486 = vmatpush.msra.mxu0 %v281
      %487 = vmatpush.msra.mxu0 %v279
      %488 = vmatpush.msra.mxu0 %v277
      %489 = vmatpush.msra.mxu0 %v275
      %490 = vmatmul.f32.gmra.mxu0 %v242
      %v491 = vpop.f32.mrf.mxu0
      %v492 = vadd.f32 %v341, %v491
      %493 = vmatmul.f32.gmra.mxu0 %v244
      %v494 = vpop.f32.mrf.mxu0
      %v495 = vadd.f32 %v341, %v494
      %496 = vmatmul.f32.gmra.mxu0 %v246
      %v497 = vpop.f32.mrf.mxu0
      %v498 = vadd.f32 %v341, %v497
      %499 = vmatmul.f32.gmra.mxu0 %v248
      %v500 = vpop.f32.mrf.mxu0
      %v501 = vadd.f32 %v341, %v500
      %502 = vmatmul.f32.gmra.mxu0 %v250
      %v503 = vpop.f32.mrf.mxu0
      %v504 = vadd.f32 %v341, %v503
      %505 = vmatmul.f32.gmra.mxu0 %v252
      %v506 = vpop.f32.mrf.mxu0
      %v507 = vadd.f32 %v341, %v506
      %508 = vmatmul.f32.gmra.mxu0 %v254
      %v509 = vpop.f32.mrf.mxu0
      %v510 = vadd.f32 %v341, %v509
      %511 = vmatmul.f32.gmra.mxu0 %v256
      %v512 = vpop.f32.mrf.mxu0
      %v513 = vadd.f32 %v341, %v512
      %514 = vmatmul.f32.gmra.mxu0 %v258
      %v515 = vpop.f32.mrf.mxu0
      %v516 = vadd.f32 %v341, %v515
      %517 = vmatmul.f32.gmra.mxu0 %v260
      %v518 = vpop.f32.mrf.mxu0
      %v519 = vadd.f32 %v341, %v518
      %520 = vmatmul.f32.gmra.mxu0 %v262
      %v521 = vpop.f32.mrf.mxu0
      %v522 = vadd.f32 %v341, %v521
      %523 = vmatmul.f32.gmra.mxu0 %v264
      %v524 = vpop.f32.mrf.mxu0
      %v525 = vadd.f32 %v341, %v524
      %526 = vmatmul.f32.gmra.mxu0 %v266
      %v527 = vpop.f32.mrf.mxu0
      %v528 = vadd.f32 %v341, %v527
      %529 = vmatmul.f32.gmra.mxu0 %v268
      %v530 = vpop.f32.mrf.mxu0
      %v531 = vadd.f32 %v341, %v530
      %532 = vmatmul.f32.gmra.mxu0 %v270
      %v533 = vpop.f32.mrf.mxu0
      %v534 = vadd.f32 %v341, %v533
      %535 = vmatmul.f32.gmra.mxu0 %v272
      %v536 = vpop.f32.mrf.mxu0
      %v537 = vadd.f32 %v341, %v536
      %538 = vdwg.mxu0
      %539 = vmatpush.msra.mxu0 %v337
      %540 = vmatpush.msra.mxu0 %v335
      %541 = vmatpush.msra.mxu0 %v333
      %542 = vmatpush.msra.mxu0 %v331
      %543 = vmatpush.msra.mxu0 %v329
      %544 = vmatpush.msra.mxu0 %v327
      %545 = vmatpush.msra.mxu0 %v325
      %546 = vmatpush.msra.mxu0 %v323
      %547 = vmatpush.msra.mxu0 %v321
      %548 = vmatpush.msra.mxu0 %v319
      %549 = vmatpush.msra.mxu0 %v317
      %550 = vmatpush.msra.mxu0 %v315
      %551 = vmatpush.msra.mxu0 %v313
      %552 = vmatpush.msra.mxu0 %v311
      %553 = vmatpush.msra.mxu0 %v309
      %554 = vmatpush.msra.mxu0 %v307
      %555 = vmatmul.f32.gmra.mxu0 %v243
      %v556 = vpop.f32.mrf.mxu0
      %v557 = vadd.f32 %v492, %v556
      %558 = vmatmul.f32.gmra.mxu0 %v245
      %v559 = vpop.f32.mrf.mxu0
      %v560 = vadd.f32 %v495, %v559
      %561 = vmatmul.f32.gmra.mxu0 %v247
      %v562 = vpop.f32.mrf.mxu0
      %v563 = vadd.f32 %v498, %v562
      %564 = vmatmul.f32.gmra.mxu0 %v249
      %v565 = vpop.f32.mrf.mxu0
      %v566 = vadd.f32 %v501, %v565
      %567 = vmatmul.f32.gmra.mxu0 %v251
      %v568 = vpop.f32.mrf.mxu0
      %v569 = vadd.f32 %v504, %v568
      %570 = vmatmul.f32.gmra.mxu0 %v253
      %v571 = vpop.f32.mrf.mxu0
      %v572 = vadd.f32 %v507, %v571
      %573 = vmatmul.f32.gmra.mxu0 %v255
      %v574 = vpop.f32.mrf.mxu0
      %v575 = vadd.f32 %v510, %v574
      %576 = vmatmul.f32.gmra.mxu0 %v257
      %v577 = vpop.f32.mrf.mxu0
      %v578 = vadd.f32 %v513, %v577
      %579 = vmatmul.f32.gmra.mxu0 %v259
      %v580 = vpop.f32.mrf.mxu0
      %v581 = vadd.f32 %v516, %v580
      %582 = vmatmul.f32.gmra.mxu0 %v261
      %v583 = vpop.f32.mrf.mxu0
      %v584 = vadd.f32 %v519, %v583
      %585 = vmatmul.f32.gmra.mxu0 %v263
      %v586 = vpop.f32.mrf.mxu0
      %v587 = vadd.f32 %v522, %v586
      %588 = vmatmul.f32.gmra.mxu0 %v265
      %v589 = vpop.f32.mrf.mxu0
      %v590 = vadd.f32 %v525, %v589
      %591 = vmatmul.f32.gmra.mxu0 %v267
      %v592 = vpop.f32.mrf.mxu0
      %v593 = vadd.f32 %v528, %v592
      %594 = vmatmul.f32.gmra.mxu0 %v269
      %v595 = vpop.f32.mrf.mxu0
      %v596 = vadd.f32 %v531, %v595
      %597 = vmatmul.f32.gmra.mxu0 %v271
      %v598 = vpop.f32.mrf.mxu0
      %v599 = vadd.f32 %v534, %v598
      %600 = vmatmul.f32.gmra.mxu0 %v273
      %v601 = vpop.f32.mrf.mxu0
      %v602 = vadd.f32 %v537, %v601
      %603 = vdwg.mxu0
      %604 = vst [vmem:[%s240] sm:$0xff] %v427
      %605 = vst [vmem:[%s240 + $0x8] sm:$0xff] %v557
      %606 = vst [vmem:[%s240 + $0x10] sm:$0xff] %v430
      %607 = vst [vmem:[%s240 + $0x18] sm:$0xff] %v560
      %608 = vst [vmem:[%s240 + $0x20] sm:$0xff] %v433
      %609 = vst [vmem:[%s240 + $0x28] sm:$0xff] %v563
      %610 = vst [vmem:[%s240 + $0x30] sm:$0xff] %v436
      %611 = vst [vmem:[%s240 + $0x38] sm:$0xff] %v566
      %612 = vst [vmem:[%s240 + $0x40] sm:$0xff] %v439
      %613 = vst [vmem:[%s240 + $0x48] sm:$0xff] %v569
      %614 = vst [vmem:[%s240 + $0x50] sm:$0xff] %v442
      %615 = vst [vmem:[%s240 + $0x58] sm:$0xff] %v572
      %616 = vst [vmem:[%s240 + $0x60] sm:$0xff] %v445
      %617 = vst [vmem:[%s240 + $0x68] sm:$0xff] %v575
      %618 = vst [vmem:[%s240 + $0x70] sm:$0xff] %v448
      %619 = vst [vmem:[%s240 + $0x78] sm:$0xff] %v578
      %620 = vst [vmem:[%s240 + $0x80] sm:$0xff] %v451
      %621 = vst [vmem:[%s240 + $0x88] sm:$0xff] %v581
      %622 = vst [vmem:[%s240 + $0x90] sm:$0xff] %v454
      %623 = vst [vmem:[%s240 + $0x98] sm:$0xff] %v584
      %624 = vst [vmem:[%s240 + $0xa0] sm:$0xff] %v457
      %625 = vst [vmem:[%s240 + $0xa8] sm:$0xff] %v587
      %626 = vst [vmem:[%s240 + $0xb0] sm:$0xff] %v460
      %627 = vst [vmem:[%s240 + $0xb8] sm:$0xff] %v590
      %628 = vst [vmem:[%s240 + $0xc0] sm:$0xff] %v463
      %629 = vst [vmem:[%s240 + $0xc8] sm:$0xff] %v593
      %630 = vst [vmem:[%s240 + $0xd0] sm:$0xff] %v466
      %631 = vst [vmem:[%s240 + $0xd8] sm:$0xff] %v596
      %632 = vst [vmem:[%s240 + $0xe0] sm:$0xff] %v469
      %633 = vst [vmem:[%s240 + $0xe8] sm:$0xff] %v599
      %634 = vst [vmem:[%s240 + $0xf0] sm:$0xff] %v472
      %635 = vst [vmem:[%s240 + $0xf8] sm:$0xff] %v602
      %s636 = smul.u32 16, %s20
      %p637 = scmp.lt.s32.totalorder %s19, 1
      %s638 = scalar_select %p637, %s19, 1
      %p639 = scmp.lt.s32.totalorder %s636, 15
      %s640 = scalar_select %p639, %s636, 15
      %s641 = smul.addr %s640, 2
      %s642 = smul.addr %s638, 32
      %s643 = sadd.s32 %s641, %s642
      %s644 = smul.addr %s643, 8
      %s645 = scalar_lea.vmem %s4, %s644
      // Predicated region
      $region37: #{wan_i2v_cross_attention.9} parent=35 // pred_check
        %p646 = pneg %p138
      $region38: #{wan_i2v_cross_attention.9} parent=35 // pred_check_branch
        %648 = sbr.rel (%p646) target = $region40
      $region39: #{wan_i2v_cross_attention.9} parent=35 // pred_region
        %s649 = smul.u32 16, %s20
      $region40: #{wan_i2v_cross_attention.9} parent=35 // pred_fallthru
        _
    $region36: #{wan_i2v_cross_attention.9} parent=5 // pred_fallthru
      _
    %p650 = scmp.le.s32.totalorder 2, %s10
    // Predicated region
    $region41: #{wan_i2v_cross_attention.9} parent=5 // pred_check
      %p651 = pneg %p650
    $region42: #{wan_i2v_cross_attention.9} parent=5 // pred_check_branch
      %653 = sbr.rel (%p651) target = $region44
    $region43: #{wan_i2v_cross_attention.9} parent=5 // pred_region
      %s654 = ssub.s32 %s10, 2
      // Predicated region
      $region45: #{wan_i2v_cross_attention.9} parent=43 // pred_check
        %p655 = pneg %p144
      $region46: #{wan_i2v_cross_attention.9} parent=43 // pred_check_branch
        %657 = sbr.rel (%p655) target = $region48
      $region47: #{wan_i2v_cross_attention.9} parent=43 // pred_region
        %s658 = smul.u32 16, %s22
        %p659 = scmp.lt.s32.totalorder %s21, 1
        %s660 = scalar_select %p659, %s21, 1
        %p661 = scmp.lt.s32.totalorder %s658, 15
        %s662 = scalar_select %p661, %s658, 15
        %s663 = smul.addr %s662, 2
        %s664 = smul.addr %s660, 32
        %s665 = sadd.s32 %s663, %s664
        %s666 = smul.addr %s665, 8
        %s667 = scalar_lea.vmem %s4, %s666
      $region48: #{wan_i2v_cross_attention.9} parent=43 // pred_fallthru
        _
    $region44: #{wan_i2v_cross_attention.9} parent=5 // pred_fallthru
      _
  $region6: #{wan_i2v_cross_attention.9} parent=0 // loop_footer
    %s14 = sadd.s32 1, %s10
  $region7: #{wan_i2v_cross_attention.9} parent=0 // loop_footer_branch
    %9 = sbr.rel target = $region3
  $region8: #{wan_i2v_cross_attention.9} parent=0 // loop_exit
    _

// kernel: wan_i2v_cross_attention.10
$region0: #{wan_i2v_cross_attention.10}
  #allocation0 [shape = 'u32[]', space=smem, size = 0x4, offset = 0x4, fixed_abs, tag = 'smem constant byte address 0x4 - core index']
  #allocation1 [shape = 'u32[72,128]{1,0:T(1,128)}', space=vmem, size = 0x9000, scoped, tag = 'internal scratch']
  %s0 = inlined_call_operand.vmem [shape: f32[2,384,256], index: 0, kind: input, shape index: {}]
  %s1 = inlined_call_operand.vmem [shape: f32[256,256], index: 1, kind: input, shape index: {}]
  %s2 = inlined_call_operand.vmem [shape: f32[1,256], index: 2, kind: input, shape index: {}]
  %s3 = inlined_call_operand.vmem [shape: f32[1,256], index: 3, kind: input, shape index: {}]
  %s4 = inlined_call_operand.vmem [shape: f32[2,384,256], index: 4, kind: output, shape index: {}]
  %s5 = sld [smem:[#allocation0]]
  $region49: #{wan_i2v_cross_attention.10} parent=0
    _
  %s7 = ssub.s32 1, %s5
  %s8 = scalar_select 0, %s7, %s5
  loop: start=0, step=1, limit=8
  $region2: #{wan_i2v_cross_attention.10} parent=0 // loop_pre_header
    _
  $region3: #{wan_i2v_cross_attention.10} parent=0 // loop_header
    %s10 = sphi 0, %s14
    %p11 = scmp.ge.s32.totalorder %s10, 8
    %s17 = sphi 0, %s29
    %s18 = sphi 0, %s25
    %s19 = sphi 0, %s17
    %s20 = sphi 0, %s18
    %s21 = sphi 0, %s19
    %s22 = sphi 0, %s20
    %s34 = sphi 0, %s36
    %s37 = sphi 0, %s34
    %s38 = sphi 0, %s37
    %s54 = sphi 0, %s38
    %s58 = sphi 0, %s58
    %s60 = sphi 0, %s58
    %s61 = sphi 0, %s60
    %s75 = sphi 0, %s61
    %s79 = sphi 0, %s79
    %s81 = sphi 0, %s79
    %s82 = sphi 0, %s81
    %s96 = sphi 0, %s82
    %s100 = sphi 0, %s100
    %s102 = sphi 0, %s100
    %s103 = sphi 0, %s102
    %s117 = sphi 0, %s103
    %s125 = sphi 0, %s127
    %s128 = sphi 0, %s125
    %s129 = sphi 0, %s128
    %s145 = sphi 0, %s129
  $region4: #{wan_i2v_cross_attention.10} parent=0 // loop_header_branch
    %13 = sbr.rel (%p11) target = $region8
  $region5: #{wan_i2v_cross_attention.10} parent=0 // loop_body
    %s15 = ssub.s32 %s10, 1
    %s16 = ssub.s32 %s10, 2
    %s23 = sadd.s32 1, %s18
    %p24 = scmp.ge.s32.totalorder %s23, 3
    %s25 = scalar_select %p24, 0, %s23
    %s26 = sadd.s32 1, %s17
    %s27 = scalar_select %p24, %s26, %s17
    %p28 = scmp.ge.s32.totalorder %s27, 2
    %s29 = scalar_select %p28, 0, %s27
    %s30 = ssub.s32 %s17, %s29
    %s31 = ssub.s32 %s18, %s25
    %s32 = sor.u32 %s30, %s31
    %p33 = scmp.eq.s32.totalorder %s32, 0
    %s35 = sadd.s32 %s34, 1
    %s36 = scalar_select %p33, %s34, %s35
    %p39 = pneg %p33
    %p40 = scmp.eq.s32.totalorder %s10, 5
    %p41 = por %p39, %p40
    %p42 = scmp.ne.s32.totalorder %s34, %s37
    %p43 = scmp.eq.s32.totalorder %s10, 0
    %p44 = por %p42, %p43
    %p45 = scmp.ne.s32.totalorder %s34, %s37
    %p46 = scmp.eq.s32.totalorder %s15, 5
    %p47 = por %p45, %p46
    %p48 = scmp.ne.s32.totalorder %s37, %s38
    %p49 = scmp.eq.s32.totalorder %s15, 0
    %p50 = por %p48, %p49
    %p51 = scmp.ne.s32.totalorder %s37, %s38
    %p52 = scmp.eq.s32.totalorder %s16, 5
    %p53 = por %p51, %p52
    %p55 = scmp.ne.s32.totalorder %s38, %s54
    %p56 = scmp.eq.s32.totalorder %s16, 0
    %p57 = por %p55, %p56
    %s59 = sadd.s32 %s58, 1
    %p62 = scmp.eq.s32.totalorder %s10, 5
    %p63 = scmp.ne.s32.totalorder %s58, %s60
    %p64 = scmp.eq.s32.totalorder %s10, 0
    %p65 = por %p63, %p64
    %p66 = scmp.ne.s32.totalorder %s58, %s60
    %p67 = scmp.eq.s32.totalorder %s15, 5
    %p68 = por %p66, %p67
    %p69 = scmp.ne.s32.totalorder %s60, %s61
    %p70 = scmp.eq.s32.totalorder %s15, 0
    %p71 = por %p69, %p70
    %p72 = scmp.ne.s32.totalorder %s60, %s61
    %p73 = scmp.eq.s32.totalorder %s16, 5
    %p74 = por %p72, %p73
    %p76 = scmp.ne.s32.totalorder %s61, %s75
    %p77 = scmp.eq.s32.totalorder %s16, 0
    %p78 = por %p76, %p77
    %s80 = sadd.s32 %s79, 1
    %p83 = scmp.eq.s32.totalorder %s10, 5
    %p84 = scmp.ne.s32.totalorder %s79, %s81
    %p85 = scmp.eq.s32.totalorder %s10, 0
    %p86 = por %p84, %p85
    %p87 = scmp.ne.s32.totalorder %s79, %s81
    %p88 = scmp.eq.s32.totalorder %s15, 5
    %p89 = por %p87, %p88
    %p90 = scmp.ne.s32.totalorder %s81, %s82
    %p91 = scmp.eq.s32.totalorder %s15, 0
    %p92 = por %p90, %p91
    %p93 = scmp.ne.s32.totalorder %s81, %s82
    %p94 = scmp.eq.s32.totalorder %s16, 5
    %p95 = por %p93, %p94
    %p97 = scmp.ne.s32.totalorder %s82, %s96
    %p98 = scmp.eq.s32.totalorder %s16, 0
    %p99 = por %p97, %p98
    %s101 = sadd.s32 %s100, 1
    %p104 = scmp.eq.s32.totalorder %s10, 5
    %p105 = scmp.ne.s32.totalorder %s100, %s102
    %p106 = scmp.eq.s32.totalorder %s10, 0
    %p107 = por %p105, %p106
    %p108 = scmp.ne.s32.totalorder %s100, %s102
    %p109 = scmp.eq.s32.totalorder %s15, 5
    %p110 = por %p108, %p109
    %p111 = scmp.ne.s32.totalorder %s102, %s103
    %p112 = scmp.eq.s32.totalorder %s15, 0
    %p113 = por %p111, %p112
    %p114 = scmp.ne.s32.totalorder %s102, %s103
    %p115 = scmp.eq.s32.totalorder %s16, 5
    %p116 = por %p114, %p115
    %p118 = scmp.ne.s32.totalorder %s103, %s117
    %p119 = scmp.eq.s32.totalorder %s16, 0
    %p120 = por %p118, %p119
    %s121 = ssub.s32 %s17, %s29
    %s122 = ssub.s32 %s18, %s25
    %s123 = sor.u32 %s121, %s122
    %p124 = scmp.eq.s32.totalorder %s123, 0
    %s126 = sadd.s32 %s125, 1
    %s127 = scalar_select %p124, %s125, %s126
    %p130 = pneg %p124
    %p131 = scmp.eq.s32.totalorder %s10, 5
    %p132 = por %p130, %p131
    %p133 = scmp.ne.s32.totalorder %s125, %s128
    %p134 = scmp.eq.s32.totalorder %s10, 0
    %p135 = por %p133, %p134
    %p136 = scmp.ne.s32.totalorder %s125, %s128
    %p137 = scmp.eq.s32.totalorder %s15, 5
    %p138 = por %p136, %p137
    %p139 = scmp.ne.s32.totalorder %s128, %s129
    %p140 = scmp.eq.s32.totalorder %s15, 0
    %p141 = por %p139, %p140
    %p142 = scmp.ne.s32.totalorder %s128, %s129
    %p143 = scmp.eq.s32.totalorder %s16, 5
    %p144 = por %p142, %p143
    %p146 = scmp.ne.s32.totalorder %s129, %s145
    %p147 = scmp.eq.s32.totalorder %s16, 0
    %p148 = por %p146, %p147
    %p149 = scmp.le.s32.totalorder 1, %s10
    %p150 = scmp.lt.s32.totalorder %s10, 7
    %p151 = pnand %p149, %p150
    %p152 = pneg %p151
    // Predicated region
    $region9: #{wan_i2v_cross_attention.10} parent=5 // pred_check
      _
    $region10: #{wan_i2v_cross_attention.10} parent=5 // pred_check_branch
      %154 = sbr.rel (%p151) target = $region12
    $region11: #{wan_i2v_cross_attention.10} parent=5 // pred_region
      %s155 = ssub.s32 %s10, 1
      // Predicated region
      $region13: #{wan_i2v_cross_attention.10} parent=11 // pred_check
        %p156 = pneg %p71
      $region14: #{wan_i2v_cross_attention.10} parent=11 // pred_check_branch
        %158 = sbr.rel (%p156) target = $region16
      $region15: #{wan_i2v_cross_attention.10} parent=11 // pred_region
        _
      $region16: #{wan_i2v_cross_attention.10} parent=11 // pred_fallthru
        _
      // Predicated region
      $region17: #{wan_i2v_cross_attention.10} parent=11 // pred_check
        %p159 = pneg %p92
      $region18: #{wan_i2v_cross_attention.10} parent=11 // pred_check_branch
        %161 = sbr.rel (%p159) target = $region20
      $region19: #{wan_i2v_cross_attention.10} parent=11 // pred_region
        _
      $region20: #{wan_i2v_cross_attention.10} parent=11 // pred_fallthru
        _
      // Predicated region
      $region21: #{wan_i2v_cross_attention.10} parent=11 // pred_check
        %p162 = pneg %p113
      $region22: #{wan_i2v_cross_attention.10} parent=11 // pred_check_branch
        %164 = sbr.rel (%p162) target = $region24
      $region23: #{wan_i2v_cross_attention.10} parent=11 // pred_region
        _
      $region24: #{wan_i2v_cross_attention.10} parent=11 // pred_fallthru
        _
    $region12: #{wan_i2v_cross_attention.10} parent=5 // pred_fallthru
      _
    %p165 = scmp.lt.s32.totalorder %s10, 6
    // Predicated region
    $region25: #{wan_i2v_cross_attention.10} parent=5 // pred_check
      %p166 = pneg %p165
    $region26: #{wan_i2v_cross_attention.10} parent=5 // pred_check_branch
      %168 = sbr.rel (%p166) target = $region28
    $region27: #{wan_i2v_cross_attention.10} parent=5 // pred_region
      // Predicated region
      $region29: #{wan_i2v_cross_attention.10} parent=27 // pred_check
        %p169 = pneg %p44
      $region30: #{wan_i2v_cross_attention.10} parent=27 // pred_check_branch
        %171 = sbr.rel (%p169) target = $region32
      $region31: #{wan_i2v_cross_attention.10} parent=27 // pred_region
        %s172 = smul.u32 16, %s18
        %p173 = scmp.lt.s32.totalorder %s17, 1
        %s174 = scalar_select %p173, %s17, 1
        %p175 = scmp.lt.s32.totalorder %s172, 47
        %s176 = scalar_select %p175, %s172, 47
        %s177 = smul.addr %s176, 2
        %s178 = smul.addr %s174, 96
        %s179 = sadd.s32 %s177, %s178
        %s180 = smul.addr %s179, 8
        %s181 = scalar_lea.vmem %s0, %s180
        %s182 = smul.u32 16, %s18
      $region32: #{wan_i2v_cross_attention.10} parent=27 // pred_fallthru
        _
    $region28: #{wan_i2v_cross_attention.10} parent=5 // pred_fallthru
      _
    %p183 = scmp.le.s32.totalorder 1, %s10
    %p184 = scmp.lt.s32.totalorder %s10, 7
    %p185 = pnand %p183, %p184
    %p186 = pneg %p185
    // Predicated region
    $region33: #{wan_i2v_cross_attention.10} parent=5 // pred_check
      _
    $region34: #{wan_i2v_cross_attention.10} parent=5 // pred_check_branch
      %188 = sbr.rel (%p185) target = $region36
    $region35: #{wan_i2v_cross_attention.10} parent=5 // pred_region
      %s189 = ssub.s32 %s10, 1
      %s190 = smul.u32 16, %s20
      %p191 = scmp.lt.s32.totalorder %s19, 1
      %s192 = scalar_select %p191, %s19, 1
      %p193 = scmp.lt.s32.totalorder %s190, 47
      %s194 = scalar_select %p193, %s190, 47
      %s195 = smul.addr %s194, 2
      %s196 = smul.addr %s192, 96
      %s197 = sadd.s32 %s195, %s196
      %s198 = smul.addr %s197, 8
      %s199 = scalar_lea.vmem %s0, %s198
      %p200 = pneg %p50
      %p201 = pneg %p47
      %p202 = pneg %p71
      %p203 = pneg %p68
      %p204 = pneg %p92
      %p205 = pneg %p89
      %p206 = pneg %p113
      %p207 = pneg %p110
      %p208 = pneg %p141
      %p209 = pneg %p138
      %s210 = smul.u32 16, %s20
      %p211 = scmp.lt.s32.totalorder %s19, 1
      %s212 = scalar_select %p211, %s19, 1
      %p213 = scmp.lt.s32.totalorder %s210, 47
      %s214 = scalar_select %p213, %s210, 47
      %s215 = smul.addr %s214, 2
      %s216 = smul.addr %s212, 96
      %s217 = sadd.s32 %s215, %s216
      %s218 = smul.addr %s217, 8
      %s219 = scalar_lea.vmem %s4, %s218
      %s220 = smul.u32 16, %s20
      %p221 = scmp.lt.s32.totalorder %s19, 1
      %s222 = scalar_select %p221, %s19, 1
      %p223 = scmp.lt.s32.totalorder %s220, 47
      %s224 = scalar_select %p223, %s220, 47
      %s225 = smul.addr %s224, 2
      %s226 = smul.addr %s222, 96
      %s227 = sadd.s32 %s225, %s226
      %s228 = smul.addr %s227, 8
      %s229 = scalar_lea.vmem %s0, %s228
      %s230 = smul.u32 16, %s20
      %s231 = smul.u32 16, %s20
      %p232 = scmp.lt.s32.totalorder %s19, 1
      %s233 = scalar_select %p232, %s19, 1
      %p234 = scmp.lt.s32.totalorder %s231, 47
      %s235 = scalar_select %p234, %s231, 47
      %s236 = smul.addr %s235, 2
      %s237 = smul.addr %s233, 96
      %s238 = sadd.s32 %s236, %s237
      %s239 = smul.addr %s238, 8
      %s240 = scalar_lea.vmem %s4, %s239
      %s241 = smul.u32 16, %s20
      %v242 = vld [vmem:[%s229] sm:$0xff]
      %v243 = vld [vmem:[%s229 + $0x8] sm:$0xff]
      %v244 = vld [vmem:[%s229 + $0x10] sm:$0xff]
      %v245 = vld [vmem:[%s229 + $0x18] sm:$0xff]
      %v246 = vld [vmem:[%s229 + $0x20] sm:$0xff]
      %v247 = vld [vmem:[%s229 + $0x28] sm:$0xff]
      %v248 = vld [vmem:[%s229 + $0x30] sm:$0xff]
      %v249 = vld [vmem:[%s229 + $0x38] sm:$0xff]
      %v250 = vld [vmem:[%s229 + $0x40] sm:$0xff]
      %v251 = vld [vmem:[%s229 + $0x48] sm:$0xff]
      %v252 = vld [vmem:[%s229 + $0x50] sm:$0xff]
      %v253 = vld [vmem:[%s229 + $0x58] sm:$0xff]
      %v254 = vld [vmem:[%s229 + $0x60] sm:$0xff]
      %v255 = vld [vmem:[%s229 + $0x68] sm:$0xff]
      %v256 = vld [vmem:[%s229 + $0x70] sm:$0xff]
      %v257 = vld [vmem:[%s229 + $0x78] sm:$0xff]
      %v258 = vld [vmem:[%s229 + $0x80] sm:$0xff]
      %v259 = vld [vmem:[%s229 + $0x88] sm:$0xff]
      %v260 = vld [vmem:[%s229 + $0x90] sm:$0xff]
      %v261 = vld [vmem:[%s229 + $0x98] sm:$0xff]
      %v262 = vld [vmem:[%s229 + $0xa0] sm:$0xff]
      %v263 = vld [vmem:[%s229 + $0xa8] sm:$0xff]
      %v264 = vld [vmem:[%s229 + $0xb0] sm:$0xff]
      %v265 = vld [vmem:[%s229 + $0xb8] sm:$0xff]
      %v266 = vld [vmem:[%s229 + $0xc0] sm:$0xff]
      %v267 = vld [vmem:[%s229 + $0xc8] sm:$0xff]
      %v268 = vld [vmem:[%s229 + $0xd0] sm:$0xff]
      %v269 = vld [vmem:[%s229 + $0xd8] sm:$0xff]
      %v270 = vld [vmem:[%s229 + $0xe0] sm:$0xff]
      %v271 = vld [vmem:[%s229 + $0xe8] sm:$0xff]
      %v272 = vld [vmem:[%s229 + $0xf0] sm:$0xff]
      %v273 = vld [vmem:[%s229 + $0xf8] sm:$0xff]
      %v274 = vld [vmem:[%s1] sm:$0xff]
      %v275 = vld [vmem:[%s1 + $0x8] sm:$0xff]
      %v276 = vld [vmem:[%s1 + $0x10] sm:$0xff]
      %v277 = vld [vmem:[%s1 + $0x18] sm:$0xff]
      %v278 = vld [vmem:[%s1 + $0x20] sm:$0xff]
      %v279 = vld [vmem:[%s1 + $0x28] sm:$0xff]
      %v280 = vld [vmem:[%s1 + $0x30] sm:$0xff]
      %v281 = vld [vmem:[%s1 + $0x38] sm:$0xff]
      %v282 = vld [vmem:[%s1 + $0x40] sm:$0xff]
      %v283 = vld [vmem:[%s1 + $0x48] sm:$0xff]
      %v284 = vld [vmem:[%s1 + $0x50] sm:$0xff]
      %v285 = vld [vmem:[%s1 + $0x58] sm:$0xff]
      %v286 = vld [vmem:[%s1 + $0x60] sm:$0xff]
      %v287 = vld [vmem:[%s1 + $0x68] sm:$0xff]
      %v288 = vld [vmem:[%s1 + $0x70] sm:$0xff]
      %v289 = vld [vmem:[%s1 + $0x78] sm:$0xff]
      %v290 = vld [vmem:[%s1 + $0x80] sm:$0xff]
      %v291 = vld [vmem:[%s1 + $0x88] sm:$0xff]
      %v292 = vld [vmem:[%s1 + $0x90] sm:$0xff]
      %v293 = vld [vmem:[%s1 + $0x98] sm:$0xff]
      %v294 = vld [vmem:[%s1 + $0xa0] sm:$0xff]
      %v295 = vld [vmem:[%s1 + $0xa8] sm:$0xff]
      %v296 = vld [vmem:[%s1 + $0xb0] sm:$0xff]
      %v297 = vld [vmem:[%s1 + $0xb8] sm:$0xff]
      %v298 = vld [vmem:[%s1 + $0xc0] sm:$0xff]
      %v299 = vld [vmem:[%s1 + $0xc8] sm:$0xff]
      %v300 = vld [vmem:[%s1 + $0xd0] sm:$0xff]
      %v301 = vld [vmem:[%s1 + $0xd8] sm:$0xff]
      %v302 = vld [vmem:[%s1 + $0xe0] sm:$0xff]
      %v303 = vld [vmem:[%s1 + $0xe8] sm:$0xff]
      %v304 = vld [vmem:[%s1 + $0xf0] sm:$0xff]
      %v305 = vld [vmem:[%s1 + $0xf8] sm:$0xff]
      %v306 = vld [vmem:[%s1 + $0x100] sm:$0xff]
      %v307 = vld [vmem:[%s1 + $0x108] sm:$0xff]
      %v308 = vld [vmem:[%s1 + $0x110] sm:$0xff]
      %v309 = vld [vmem:[%s1 + $0x118] sm:$0xff]
      %v310 = vld [vmem:[%s1 + $0x120] sm:$0xff]
      %v311 = vld [vmem:[%s1 + $0x128] sm:$0xff]
      %v312 = vld [vmem:[%s1 + $0x130] sm:$0xff]
      %v313 = vld [vmem:[%s1 + $0x138] sm:$0xff]
      %v314 = vld [vmem:[%s1 + $0x140] sm:$0xff]
      %v315 = vld [vmem:[%s1 + $0x148] sm:$0xff]
      %v316 = vld [vmem:[%s1 + $0x150] sm:$0xff]
      %v317 = vld [vmem:[%s1 + $0x158] sm:$0xff]
      %v318 = vld [vmem:[%s1 + $0x160] sm:$0xff]
      %v319 = vld [vmem:[%s1 + $0x168] sm:$0xff]
      %v320 = vld [vmem:[%s1 + $0x170] sm:$0xff]
      %v321 = vld [vmem:[%s1 + $0x178] sm:$0xff]
      %v322 = vld [vmem:[%s1 + $0x180] sm:$0xff]
      %v323 = vld [vmem:[%s1 + $0x188] sm:$0xff]
      %v324 = vld [vmem:[%s1 + $0x190] sm:$0xff]
      %v325 = vld [vmem:[%s1 + $0x198] sm:$0xff]
      %v326 = vld [vmem:[%s1 + $0x1a0] sm:$0xff]
      %v327 = vld [vmem:[%s1 + $0x1a8] sm:$0xff]
      %v328 = vld [vmem:[%s1 + $0x1b0] sm:$0xff]
      %v329 = vld [vmem:[%s1 + $0x1b8] sm:$0xff]
      %v330 = vld [vmem:[%s1 + $0x1c0] sm:$0xff]
      %v331 = vld [vmem:[%s1 + $0x1c8] sm:$0xff]
      %v332 = vld [vmem:[%s1 + $0x1d0] sm:$0xff]
      %v333 = vld [vmem:[%s1 + $0x1d8] sm:$0xff]
      %v334 = vld [vmem:[%s1 + $0x1e0] sm:$0xff]
      %v335 = vld [vmem:[%s1 + $0x1e8] sm:$0xff]
      %v336 = vld [vmem:[%s1 + $0x1f0] sm:$0xff]
      %v337 = vld [vmem:[%s1 + $0x1f8] sm:$0xff]
      %v338 = vld [vmem:[%s2] sm:$0x3]
      %v340 = vperm.slane %v338, 0
      %v341 = vperm.slane %v338, 1
      %344 = vmatpush.msra.mxu0 %v304
      %345 = vmatpush.msra.mxu0 %v302
      %346 = vmatpush.msra.mxu0 %v300
      %347 = vmatpush.msra.mxu0 %v298
      %348 = vmatpush.msra.mxu0 %v296
      %349 = vmatpush.msra.mxu0 %v294
      %350 = vmatpush.msra.mxu0 %v292
      %351 = vmatpush.msra.mxu0 %v290
      %352 = vmatpush.msra.mxu0 %v288
      %353 = vmatpush.msra.mxu0 %v286
      %354 = vmatpush.msra.mxu0 %v284
      %355 = vmatpush.msra.mxu0 %v282
      %356 = vmatpush.msra.mxu0 %v280
      %357 = vmatpush.msra.mxu0 %v278
      %358 = vmatpush.msra.mxu0 %v276
      %359 = vmatpush.msra.mxu0 %v274
      %360 = vmatmul.f32.gmra.mxu0 %v242
      %v361 = vpop.f32.mrf.mxu0
      %v362 = vadd.f32 %v340, %v361
      %363 = vmatmul.f32.gmra.mxu0 %v244
      %v364 = vpop.f32.mrf.mxu0
      %v365 = vadd.f32 %v340, %v364
      %366 = vmatmul.f32.gmra.mxu0 %v246
      %v367 = vpop.f32.mrf.mxu0
      %v368 = vadd.f32 %v340, %v367
      %369 = vmatmul.f32.gmra.mxu0 %v248
      %v370 = vpop.f32.mrf.mxu0
      %v371 = vadd.f32 %v340, %v370
      %372 = vmatmul.f32.gmra.mxu0 %v250
      %v373 = vpop.f32.mrf.mxu0
      %v374 = vadd.f32 %v340, %v373
      %375 = vmatmul.f32.gmra.mxu0 %v252
      %v376 = vpop.f32.mrf.mxu0
      %v377 = vadd.f32 %v340, %v376
      %378 = vmatmul.f32.gmra.mxu0 %v254
      %v379 = vpop.f32.mrf.mxu0
      %v380 = vadd.f32 %v340, %v379
      %381 = vmatmul.f32.gmra.mxu0 %v256
      %v382 = vpop.f32.mrf.mxu0
      %v383 = vadd.f32 %v340, %v382
      %384 = vmatmul.f32.gmra.mxu0 %v258
      %v385 = vpop.f32.mrf.mxu0
      %v386 = vadd.f32 %v340, %v385
      %387 = vmatmul.f32.gmra.mxu0 %v260
      %v388 = vpop.f32.mrf.mxu0
      %v389 = vadd.f32 %v340, %v388
      %390 = vmatmul.f32.gmra.mxu0 %v262
      %v391 = vpop.f32.mrf.mxu0
      %v392 = vadd.f32 %v340, %v391
      %393 = vmatmul.f32.gmra.mxu0 %v264
      %v394 = vpop.f32.mrf.mxu0
      %v395 = vadd.f32 %v340, %v394
      %396 = vmatmul.f32.gmra.mxu0 %v266
      %v397 = vpop.f32.mrf.mxu0
      %v398 = vadd.f32 %v340, %v397
      %399 = vmatmul.f32.gmra.mxu0 %v268
      %v400 = vpop.f32.mrf.mxu0
      %v401 = vadd.f32 %v340, %v400
      %402 = vmatmul.f32.gmra.mxu0 %v270
      %v403 = vpop.f32.mrf.mxu0
      %v404 = vadd.f32 %v340, %v403
      %405 = vmatmul.f32.gmra.mxu0 %v272
      %v406 = vpop.f32.mrf.mxu0
      %v407 = vadd.f32 %v340, %v406
      %408 = vdwg.mxu0
      %409 = vmatpush.msra.mxu0 %v336
      %410 = vmatpush.msra.mxu0 %v334
      %411 = vmatpush.msra.mxu0 %v332
      %412 = vmatpush.msra.mxu0 %v330
      %413 = vmatpush.msra.mxu0 %v328
      %414 = vmatpush.msra.mxu0 %v326
      %415 = vmatpush.msra.mxu0 %v324
      %416 = vmatpush.msra.mxu0 %v322
      %417 = vmatpush.msra.mxu0 %v320
      %418 = vmatpush.msra.mxu0 %v318
      %419 = vmatpush.msra.mxu0 %v316
      %420 = vmatpush.msra.mxu0 %v314
      %421 = vmatpush.msra.mxu0 %v312
      %422 = vmatpush.msra.mxu0 %v310
      %423 = vmatpush.msra.mxu0 %v308
      %424 = vmatpush.msra.mxu0 %v306
      %425 = vmatmul.f32.gmra.mxu0 %v243
      %v426 = vpop.f32.mrf.mxu0
      %v427 = vadd.f32 %v362, %v426
      %428 = vmatmul.f32.gmra.mxu0 %v245
      %v429 = vpop.f32.mrf.mxu0
      %v430 = vadd.f32 %v365, %v429
      %431 = vmatmul.f32.gmra.mxu0 %v247
      %v432 = vpop.f32.mrf.mxu0
      %v433 = vadd.f32 %v368, %v432
      %434 = vmatmul.f32.gmra.mxu0 %v249
      %v435 = vpop.f32.mrf.mxu0
      %v436 = vadd.f32 %v371, %v435
      %437 = vmatmul.f32.gmra.mxu0 %v251
      %v438 = vpop.f32.mrf.mxu0
      %v439 = vadd.f32 %v374, %v438
      %440 = vmatmul.f32.gmra.mxu0 %v253
      %v441 = vpop.f32.mrf.mxu0
      %v442 = vadd.f32 %v377, %v441
      %443 = vmatmul.f32.gmra.mxu0 %v255
      %v444 = vpop.f32.mrf.mxu0
      %v445 = vadd.f32 %v380, %v444
      %446 = vmatmul.f32.gmra.mxu0 %v257
      %v447 = vpop.f32.mrf.mxu0
      %v448 = vadd.f32 %v383, %v447
      %449 = vmatmul.f32.gmra.mxu0 %v259
      %v450 = vpop.f32.mrf.mxu0
      %v451 = vadd.f32 %v386, %v450
      %452 = vmatmul.f32.gmra.mxu0 %v261
      %v453 = vpop.f32.mrf.mxu0
      %v454 = vadd.f32 %v389, %v453
      %455 = vmatmul.f32.gmra.mxu0 %v263
      %v456 = vpop.f32.mrf.mxu0
      %v457 = vadd.f32 %v392, %v456
      %458 = vmatmul.f32.gmra.mxu0 %v265
      %v459 = vpop.f32.mrf.mxu0
      %v460 = vadd.f32 %v395, %v459
      %461 = vmatmul.f32.gmra.mxu0 %v267
      %v462 = vpop.f32.mrf.mxu0
      %v463 = vadd.f32 %v398, %v462
      %464 = vmatmul.f32.gmra.mxu0 %v269
      %v465 = vpop.f32.mrf.mxu0
      %v466 = vadd.f32 %v401, %v465
      %467 = vmatmul.f32.gmra.mxu0 %v271
      %v468 = vpop.f32.mrf.mxu0
      %v469 = vadd.f32 %v404, %v468
      %470 = vmatmul.f32.gmra.mxu0 %v273
      %v471 = vpop.f32.mrf.mxu0
      %v472 = vadd.f32 %v407, %v471
      %473 = vdwg.mxu0
      %474 = vmatpush.msra.mxu0 %v305
      %475 = vmatpush.msra.mxu0 %v303
      %476 = vmatpush.msra.mxu0 %v301
      %477 = vmatpush.msra.mxu0 %v299
      %478 = vmatpush.msra.mxu0 %v297
      %479 = vmatpush.msra.mxu0 %v295
      %480 = vmatpush.msra.mxu0 %v293
      %481 = vmatpush.msra.mxu0 %v291
      %482 = vmatpush.msra.mxu0 %v289
      %483 = vmatpush.msra.mxu0 %v287
      %484 = vmatpush.msra.mxu0 %v285
      %485 = vmatpush.msra.mxu0 %v283
      %486 = vmatpush.msra.mxu0 %v281
      %487 = vmatpush.msra.mxu0 %v279
      %488 = vmatpush.msra.mxu0 %v277
      %489 = vmatpush.msra.mxu0 %v275
      %490 = vmatmul.f32.gmra.mxu0 %v242
      %v491 = vpop.f32.mrf.mxu0
      %v492 = vadd.f32 %v341, %v491
      %493 = vmatmul.f32.gmra.mxu0 %v244
      %v494 = vpop.f32.mrf.mxu0
      %v495 = vadd.f32 %v341, %v494
      %496 = vmatmul.f32.gmra.mxu0 %v246
      %v497 = vpop.f32.mrf.mxu0
      %v498 = vadd.f32 %v341, %v497
      %499 = vmatmul.f32.gmra.mxu0 %v248
      %v500 = vpop.f32.mrf.mxu0
      %v501 = vadd.f32 %v341, %v500
      %502 = vmatmul.f32.gmra.mxu0 %v250
      %v503 = vpop.f32.mrf.mxu0
      %v504 = vadd.f32 %v341, %v503
      %505 = vmatmul.f32.gmra.mxu0 %v252
      %v506 = vpop.f32.mrf.mxu0
      %v507 = vadd.f32 %v341, %v506
      %508 = vmatmul.f32.gmra.mxu0 %v254
      %v509 = vpop.f32.mrf.mxu0
      %v510 = vadd.f32 %v341, %v509
      %511 = vmatmul.f32.gmra.mxu0 %v256
      %v512 = vpop.f32.mrf.mxu0
      %v513 = vadd.f32 %v341, %v512
      %514 = vmatmul.f32.gmra.mxu0 %v258
      %v515 = vpop.f32.mrf.mxu0
      %v516 = vadd.f32 %v341, %v515
      %517 = vmatmul.f32.gmra.mxu0 %v260
      %v518 = vpop.f32.mrf.mxu0
      %v519 = vadd.f32 %v341, %v518
      %520 = vmatmul.f32.gmra.mxu0 %v262
      %v521 = vpop.f32.mrf.mxu0
      %v522 = vadd.f32 %v341, %v521
      %523 = vmatmul.f32.gmra.mxu0 %v264
      %v524 = vpop.f32.mrf.mxu0
      %v525 = vadd.f32 %v341, %v524
      %526 = vmatmul.f32.gmra.mxu0 %v266
      %v527 = vpop.f32.mrf.mxu0
      %v528 = vadd.f32 %v341, %v527
      %529 = vmatmul.f32.gmra.mxu0 %v268
      %v530 = vpop.f32.mrf.mxu0
      %v531 = vadd.f32 %v341, %v530
      %532 = vmatmul.f32.gmra.mxu0 %v270
      %v533 = vpop.f32.mrf.mxu0
      %v534 = vadd.f32 %v341, %v533
      %535 = vmatmul.f32.gmra.mxu0 %v272
      %v536 = vpop.f32.mrf.mxu0
      %v537 = vadd.f32 %v341, %v536
      %538 = vdwg.mxu0
      %539 = vmatpush.msra.mxu0 %v337
      %540 = vmatpush.msra.mxu0 %v335
      %541 = vmatpush.msra.mxu0 %v333
      %542 = vmatpush.msra.mxu0 %v331
      %543 = vmatpush.msra.mxu0 %v329
      %544 = vmatpush.msra.mxu0 %v327
      %545 = vmatpush.msra.mxu0 %v325
      %546 = vmatpush.msra.mxu0 %v323
      %547 = vmatpush.msra.mxu0 %v321
      %548 = vmatpush.msra.mxu0 %v319
      %549 = vmatpush.msra.mxu0 %v317
      %550 = vmatpush.msra.mxu0 %v315
      %551 = vmatpush.msra.mxu0 %v313
      %552 = vmatpush.msra.mxu0 %v311
      %553 = vmatpush.msra.mxu0 %v309
      %554 = vmatpush.msra.mxu0 %v307
      %555 = vmatmul.f32.gmra.mxu0 %v243
      %v556 = vpop.f32.mrf.mxu0
      %v557 = vadd.f32 %v492, %v556
      %558 = vmatmul.f32.gmra.mxu0 %v245
      %v559 = vpop.f32.mrf.mxu0
      %v560 = vadd.f32 %v495, %v559
      %561 = vmatmul.f32.gmra.mxu0 %v247
      %v562 = vpop.f32.mrf.mxu0
      %v563 = vadd.f32 %v498, %v562
      %564 = vmatmul.f32.gmra.mxu0 %v249
      %v565 = vpop.f32.mrf.mxu0
      %v566 = vadd.f32 %v501, %v565
      %567 = vmatmul.f32.gmra.mxu0 %v251
      %v568 = vpop.f32.mrf.mxu0
      %v569 = vadd.f32 %v504, %v568
      %570 = vmatmul.f32.gmra.mxu0 %v253
      %v571 = vpop.f32.mrf.mxu0
      %v572 = vadd.f32 %v507, %v571
      %573 = vmatmul.f32.gmra.mxu0 %v255
      %v574 = vpop.f32.mrf.mxu0
      %v575 = vadd.f32 %v510, %v574
      %576 = vmatmul.f32.gmra.mxu0 %v257
      %v577 = vpop.f32.mrf.mxu0
      %v578 = vadd.f32 %v513, %v577
      %579 = vmatmul.f32.gmra.mxu0 %v259
      %v580 = vpop.f32.mrf.mxu0
      %v581 = vadd.f32 %v516, %v580
      %582 = vmatmul.f32.gmra.mxu0 %v261
      %v583 = vpop.f32.mrf.mxu0
      %v584 = vadd.f32 %v519, %v583
      %585 = vmatmul.f32.gmra.mxu0 %v263
      %v586 = vpop.f32.mrf.mxu0
      %v587 = vadd.f32 %v522, %v586
      %588 = vmatmul.f32.gmra.mxu0 %v265
      %v589 = vpop.f32.mrf.mxu0
      %v590 = vadd.f32 %v525, %v589
      %591 = vmatmul.f32.gmra.mxu0 %v267
      %v592 = vpop.f32.mrf.mxu0
      %v593 = vadd.f32 %v528, %v592
      %594 = vmatmul.f32.gmra.mxu0 %v269
      %v595 = vpop.f32.mrf.mxu0
      %v596 = vadd.f32 %v531, %v595
      %597 = vmatmul.f32.gmra.mxu0 %v271
      %v598 = vpop.f32.mrf.mxu0
      %v599 = vadd.f32 %v534, %v598
      %600 = vmatmul.f32.gmra.mxu0 %v273
      %v601 = vpop.f32.mrf.mxu0
      %v602 = vadd.f32 %v537, %v601
      %603 = vdwg.mxu0
      %v604 = vmul.f32 %v427, %v427
      %v605 = vmul.f32 %v557, %v557
      %v606 = vmul.f32 %v430, %v430
      %v607 = vmul.f32 %v560, %v560
      %v608 = vmul.f32 %v433, %v433
      %v609 = vmul.f32 %v563, %v563
      %v610 = vmul.f32 %v436, %v436
      %v611 = vmul.f32 %v566, %v566
      %v612 = vmul.f32 %v439, %v439
      %v613 = vmul.f32 %v569, %v569
      %v614 = vmul.f32 %v442, %v442
      %v615 = vmul.f32 %v572, %v572
      %v616 = vmul.f32 %v445, %v445
      %v617 = vmul.f32 %v575, %v575
      %v618 = vmul.f32 %v448, %v448
      %v619 = vmul.f32 %v578, %v578
      %v620 = vmul.f32 %v451, %v451
      %v621 = vmul.f32 %v581, %v581
      %v622 = vmul.f32 %v454, %v454
      %v623 = vmul.f32 %v584, %v584
      %v624 = vmul.f32 %v457, %v457
      %v625 = vmul.f32 %v587, %v587
      %v626 = vmul.f32 %v460, %v460
      %v627 = vmul.f32 %v590, %v590
      %v628 = vmul.f32 %v463, %v463
      %v629 = vmul.f32 %v593, %v593
      %v630 = vmul.f32 %v466, %v466
      %v631 = vmul.f32 %v596, %v596
      %v632 = vmul.f32 %v469, %v469
      %v633 = vmul.f32 %v599, %v599
      %v634 = vmul.f32 %v472, %v472
      %v635 = vmul.f32 %v602, %v602
      %v636 = vadd.f32 %v604, %v605
      %637 = vadd.xlane.f32.xlu0 %v636
      %v638 = vpop.xlane.xlu0 %637
      %v639 = vadd.f32 %v606, %v607
      %640 = vadd.xlane.f32.xlu0 %v639
      %v641 = vpop.xlane.xlu0 %640
      %v642 = vadd.f32 %v608, %v609
      %643 = vadd.xlane.f32.xlu0 %v642
      %v644 = vpop.xlane.xlu0 %643
      %v645 = vadd.f32 %v610, %v611
      %646 = vadd.xlane.f32.xlu0 %v645
      %v647 = vpop.xlane.xlu0 %646
      %v648 = vadd.f32 %v612, %v613
      %649 = vadd.xlane.f32.xlu0 %v648
      %v650 = vpop.xlane.xlu0 %649
      %v651 = vadd.f32 %v614, %v615
      %652 = vadd.xlane.f32.xlu0 %v651
      %v653 = vpop.xlane.xlu0 %652
      %v654 = vadd.f32 %v616, %v617
      %655 = vadd.xlane.f32.xlu0 %v654
      %v656 = vpop.xlane.xlu0 %655
      %v657 = vadd.f32 %v618, %v619
      %658 = vadd.xlane.f32.xlu0 %v657
      %v659 = vpop.xlane.xlu0 %658
      %v660 = vadd.f32 %v620, %v621
      %661 = vadd.xlane.f32.xlu0 %v660
      %v662 = vpop.xlane.xlu0 %661
      %v663 = vadd.f32 %v622, %v623
      %664 = vadd.xlane.f32.xlu0 %v663
      %v665 = vpop.xlane.xlu0 %664
      %v666 = vadd.f32 %v624, %v625
      %667 = vadd.xlane.f32.xlu0 %v666
      %v668 = vpop.xlane.xlu0 %667
      %v669 = vadd.f32 %v626, %v627
      %670 = vadd.xlane.f32.xlu0 %v669
      %v671 = vpop.xlane.xlu0 %670
      %v672 = vadd.f32 %v628, %v629
      %673 = vadd.xlane.f32.xlu0 %v672
      %v674 = vpop.xlane.xlu0 %673
      %v675 = vadd.f32 %v630, %v631
      %676 = vadd.xlane.f32.xlu0 %v675
      %v677 = vpop.xlane.xlu0 %676
      %v678 = vadd.f32 %v632, %v633
      %679 = vadd.xlane.f32.xlu0 %v678
      %v680 = vpop.xlane.xlu0 %679
      %v681 = vadd.f32 %v634, %v635
      %682 = vadd.xlane.f32.xlu0 %v681
      %v683 = vpop.xlane.xlu0 %682
      %v684 = vrcp.pop 256.0
      %v685 = vmul.f32 256.0, %v684
      %v686 = vsub.f32 1.0, %v685
      %v687 = vmul.f32 %v684, %v686
      %v688 = vadd.f32 %v684, %v687
      %vm689 = vweird.f32 %v684
      %v690 = vsel %vm689, %v684, %v688
      %v691 = vmul.f32 %v638, %v690
      %v692 = vmul.f32 %v641, %v690
      %v693 = vmul.f32 %v644, %v690
      %v694 = vmul.f32 %v647, %v690
      %v695 = vmul.f32 %v650, %v690
      %v696 = vmul.f32 %v653, %v690
      %v697 = vmul.f32 %v656, %v690
      %v698 = vmul.f32 %v659, %v690
      %v699 = vmul.f32 %v662, %v690
      %v700 = vmul.f32 %v665, %v690
      %v701 = vmul.f32 %v668, %v690
      %v702 = vmul.f32 %v671, %v690
      %v703 = vmul.f32 %v674, %v690
      %v704 = vmul.f32 %v677, %v690
      %v705 = vmul.f32 %v680, %v690
      %v706 = vmul.f32 %v683, %v690
      %v707 = vadd.f32 %v691, 1e-06
      %v708 = vadd.f32 %v692, 1e-06
      %v709 = vadd.f32 %v693, 1e-06
      %v710 = vadd.f32 %v694, 1e-06
      %v711 = vadd.f32 %v695, 1e-06
      %v712 = vadd.f32 %v696, 1e-06
      %v713 = vadd.f32 %v697, 1e-06
      %v714 = vadd.f32 %v698, 1e-06
      %v715 = vadd.f32 %v699, 1e-06
      %v716 = vadd.f32 %v700, 1e-06
      %v717 = vadd.f32 %v701, 1e-06
      %v718 = vadd.f32 %v702, 1e-06
      %v719 = vadd.f32 %v703, 1e-06
      %v720 = vadd.f32 %v704, 1e-06
      %v721 = vadd.f32 %v705, 1e-06
      %v722 = vadd.f32 %v706, 1e-06
      %v723 = vrsqrt.pop %v707
      %v724 = vmul.f32 %v723, %v707
      %v725 = vmul.f32 %v724, %v723
      %v726 = vmul.f32 0.5, %v725
      %v727 = vsub.f32 1.5, %v726
      %v728 = vmul.f32 %v723, %v727
      %vm729 = vweird.f32 %v707
      %vm730 = vweird.f32 %v723
      %vm731 = vmor %vm729, %vm730
      %v732 = vsel %vm731, %v723, %v728
      %v733 = vrsqrt.pop %v708
      %v734 = vmul.f32 %v733, %v708
      %v735 = vmul.f32 %v734, %v733
      %v736 = vmul.f32 0.5, %v735
      %v737 = vsub.f32 1.5, %v736
      %v738 = vmul.f32 %v733, %v737
      %vm739 = vweird.f32 %v708
      %vm740 = vweird.f32 %v733
      %vm741 = vmor %vm739, %vm740
      %v742 = vsel %vm741, %v733, %v738
      %v743 = vrsqrt.pop %v709
      %v744 = vmul.f32 %v743, %v709
      %v745 = vmul.f32 %v744, %v743
      %v746 = vmul.f32 0.5, %v745
      %v747 = vsub.f32 1.5, %v746
      %v748 = vmul.f32 %v743, %v747
      %vm749 = vweird.f32 %v709
      %vm750 = vweird.f32 %v743
      %vm751 = vmor %vm749, %vm750
      %v752 = vsel %vm751, %v743, %v748
      %v753 = vrsqrt.pop %v710
      %v754 = vmul.f32 %v753, %v710
      %v755 = vmul.f32 %v754, %v753
      %v756 = vmul.f32 0.5, %v755
      %v757 = vsub.f32 1.5, %v756
      %v758 = vmul.f32 %v753, %v757
      %vm759 = vweird.f32 %v710
      %vm760 = vweird.f32 %v753
      %vm761 = vmor %vm759, %vm760
      %v762 = vsel %vm761, %v753, %v758
      %v763 = vrsqrt.pop %v711
      %v764 = vmul.f32 %v763, %v711
      %v765 = vmul.f32 %v764, %v763
      %v766 = vmul.f32 0.5, %v765
      %v767 = vsub.f32 1.5, %v766
      %v768 = vmul.f32 %v763, %v767
      %vm769 = vweird.f32 %v711
      %vm770 = vweird.f32 %v763
      %vm771 = vmor %vm769, %vm770
      %v772 = vsel %vm771, %v763, %v768
      %v773 = vrsqrt.pop %v712
      %v774 = vmul.f32 %v773, %v712
      %v775 = vmul.f32 %v774, %v773
      %v776 = vmul.f32 0.5, %v775
      %v777 = vsub.f32 1.5, %v776
      %v778 = vmul.f32 %v773, %v777
      %vm779 = vweird.f32 %v712
      %vm780 = vweird.f32 %v773
      %vm781 = vmor %vm779, %vm780
      %v782 = vsel %vm781, %v773, %v778
      %v783 = vrsqrt.pop %v713
      %v784 = vmul.f32 %v783, %v713
      %v785 = vmul.f32 %v784, %v783
      %v786 = vmul.f32 0.5, %v785
      %v787 = vsub.f32 1.5, %v786
      %v788 = vmul.f32 %v783, %v787
      %vm789 = vweird.f32 %v713
      %vm790 = vweird.f32 %v783
      %vm791 = vmor %vm789, %vm790
      %v792 = vsel %vm791, %v783, %v788
      %v793 = vrsqrt.pop %v714
      %v794 = vmul.f32 %v793, %v714
      %v795 = vmul.f32 %v794, %v793
      %v796 = vmul.f32 0.5, %v795
      %v797 = vsub.f32 1.5, %v796
      %v798 = vmul.f32 %v793, %v797
      %vm799 = vweird.f32 %v714
      %vm800 = vweird.f32 %v793
      %vm801 = vmor %vm799, %vm800
      %v802 = vsel %vm801, %v793, %v798
      %v803 = vrsqrt.pop %v715
      %v804 = vmul.f32 %v803, %v715
      %v805 = vmul.f32 %v804, %v803
      %v806 = vmul.f32 0.5, %v805
      %v807 = vsub.f32 1.5, %v806
      %v808 = vmul.f32 %v803, %v807
      %vm809 = vweird.f32 %v715
      %vm810 = vweird.f32 %v803
      %vm811 = vmor %vm809, %vm810
      %v812 = vsel %vm811, %v803, %v808
      %v813 = vrsqrt.pop %v716
      %v814 = vmul.f32 %v813, %v716
      %v815 = vmul.f32 %v814, %v813
      %v816 = vmul.f32 0.5, %v815
      %v817 = vsub.f32 1.5, %v816
      %v818 = vmul.f32 %v813, %v817
      %vm819 = vweird.f32 %v716
      %vm820 = vweird.f32 %v813
      %vm821 = vmor %vm819, %vm820
      %v822 = vsel %vm821, %v813, %v818
      %v823 = vrsqrt.pop %v717
      %v824 = vmul.f32 %v823, %v717
      %v825 = vmul.f32 %v824, %v823
      %v826 = vmul.f32 0.5, %v825
      %v827 = vsub.f32 1.5, %v826
      %v828 = vmul.f32 %v823, %v827
      %vm829 = vweird.f32 %v717
      %vm830 = vweird.f32 %v823
      %vm831 = vmor %vm829, %vm830
      %v832 = vsel %vm831, %v823, %v828
      %v833 = vrsqrt.pop %v718
      %v834 = vmul.f32 %v833, %v718
      %v835 = vmul.f32 %v834, %v833
      %v836 = vmul.f32 0.5, %v835
      %v837 = vsub.f32 1.5, %v836
      %v838 = vmul.f32 %v833, %v837
      %vm839 = vweird.f32 %v718
      %vm840 = vweird.f32 %v833
      %vm841 = vmor %vm839, %vm840
      %v842 = vsel %vm841, %v833, %v838
      %v843 = vrsqrt.pop %v719
      %v844 = vmul.f32 %v843, %v719
      %v845 = vmul.f32 %v844, %v843
      %v846 = vmul.f32 0.5, %v845
      %v847 = vsub.f32 1.5, %v846
      %v848 = vmul.f32 %v843, %v847
      %vm849 = vweird.f32 %v719
      %vm850 = vweird.f32 %v843
      %vm851 = vmor %vm849, %vm850
      %v852 = vsel %vm851, %v843, %v848
      %v853 = vrsqrt.pop %v720
      %v854 = vmul.f32 %v853, %v720
      %v855 = vmul.f32 %v854, %v853
      %v856 = vmul.f32 0.5, %v855
      %v857 = vsub.f32 1.5, %v856
      %v858 = vmul.f32 %v853, %v857
      %vm859 = vweird.f32 %v720
      %vm860 = vweird.f32 %v853
      %vm861 = vmor %vm859, %vm860
      %v862 = vsel %vm861, %v853, %v858
      %v863 = vrsqrt.pop %v721
      %v864 = vmul.f32 %v863, %v721
      %v865 = vmul.f32 %v864, %v863
      %v866 = vmul.f32 0.5, %v865
      %v867 = vsub.f32 1.5, %v866
      %v868 = vmul.f32 %v863, %v867
      %vm869 = vweird.f32 %v721
      %vm870 = vweird.f32 %v863
      %vm871 = vmor %vm869, %vm870
      %v872 = vsel %vm871, %v863, %v868
      %v873 = vrsqrt.pop %v722
      %v874 = vmul.f32 %v873, %v722
      %v875 = vmul.f32 %v874, %v873
      %v876 = vmul.f32 0.5, %v875
      %v877 = vsub.f32 1.5, %v876
      %v878 = vmul.f32 %v873, %v877
      %vm879 = vweird.f32 %v722
      %vm880 = vweird.f32 %v873
      %vm881 = vmor %vm879, %vm880
      %v882 = vsel %vm881, %v873, %v878
      %v883 = vmul.f32 %v427, %v732
      %v884 = vmul.f32 %v557, %v732
      %v885 = vmul.f32 %v430, %v742
      %v886 = vmul.f32 %v560, %v742
      %v887 = vmul.f32 %v433, %v752
      %v888 = vmul.f32 %v563, %v752
      %v889 = vmul.f32 %v436, %v762
      %v890 = vmul.f32 %v566, %v762
      %v891 = vmul.f32 %v439, %v772
      %v892 = vmul.f32 %v569, %v772
      %v893 = vmul.f32 %v442, %v782
      %v894 = vmul.f32 %v572, %v782
      %v895 = vmul.f32 %v445, %v792
      %v896 = vmul.f32 %v575, %v792
      %v897 = vmul.f32 %v448, %v802
      %v898 = vmul.f32 %v578, %v802
      %v899 = vmul.f32 %v451, %v812
      %v900 = vmul.f32 %v581, %v812
      %v901 = vmul.f32 %v454, %v822
      %v902 = vmul.f32 %v584, %v822
      %v903 = vmul.f32 %v457, %v832
      %v904 = vmul.f32 %v587, %v832
      %v905 = vmul.f32 %v460, %v842
      %v906 = vmul.f32 %v590, %v842
      %v907 = vmul.f32 %v463, %v852
      %v908 = vmul.f32 %v593, %v852
      %v909 = vmul.f32 %v466, %v862
      %v910 = vmul.f32 %v596, %v862
      %v911 = vmul.f32 %v469, %v872
      %v912 = vmul.f32 %v599, %v872
      %v913 = vmul.f32 %v472, %v882
      %v914 = vmul.f32 %v602, %v882
      %v915 = vld [vmem:[%s3] sm:$0x3]
      %v917 = vperm.slane %v915, 0
      %v918 = vperm.slane %v915, 1
      %v921 = vmul.f32 %v883, %v917
      %v922 = vmul.f32 %v884, %v918
      %v923 = vmul.f32 %v885, %v917
      %v924 = vmul.f32 %v886, %v918
      %v925 = vmul.f32 %v887, %v917
      %v926 = vmul.f32 %v888, %v918
      %v927 = vmul.f32 %v889, %v917
      %v928 = vmul.f32 %v890, %v918
      %v929 = vmul.f32 %v891, %v917
      %v930 = vmul.f32 %v892, %v918
      %v931 = vmul.f32 %v893, %v917
      %v932 = vmul.f32 %v894, %v918
      %v933 = vmul.f32 %v895, %v917
      %v934 = vmul.f32 %v896, %v918
      %v935 = vmul.f32 %v897, %v917
      %v936 = vmul.f32 %v898, %v918
      %v937 = vmul.f32 %v899, %v917
      %v938 = vmul.f32 %v900, %v918
      %v939 = vmul.f32 %v901, %v917
      %v940 = vmul.f32 %v902, %v918
      %v941 = vmul.f32 %v903, %v917
      %v942 = vmul.f32 %v904, %v918
      %v943 = vmul.f32 %v905, %v917
      %v944 = vmul.f32 %v906, %v918
      %v945 = vmul.f32 %v907, %v917
      %v946 = vmul.f32 %v908, %v918
      %v947 = vmul.f32 %v909, %v917
      %v948 = vmul.f32 %v910, %v918
      %v949 = vmul.f32 %v911, %v917
      %v950 = vmul.f32 %v912, %v918
      %v951 = vmul.f32 %v913, %v917
      %v952 = vmul.f32 %v914, %v918
      %953 = vst [vmem:[%s240] sm:$0xff] %v921
      %954 = vst [vmem:[%s240 + $0x8] sm:$0xff] %v922
      %955 = vst [vmem:[%s240 + $0x10] sm:$0xff] %v923
      %956 = vst [vmem:[%s240 + $0x18] sm:$0xff] %v924
      %957 = vst [vmem:[%s240 + $0x20] sm:$0xff] %v925
      %958 = vst [vmem:[%s240 + $0x28] sm:$0xff] %v926
      %959 = vst [vmem:[%s240 + $0x30] sm:$0xff] %v927
      %960 = vst [vmem:[%s240 + $0x38] sm:$0xff] %v928
      %961 = vst [vmem:[%s240 + $0x40] sm:$0xff] %v929
      %962 = vst [vmem:[%s240 + $0x48] sm:$0xff] %v930
      %963 = vst [vmem:[%s240 + $0x50] sm:$0xff] %v931
      %964 = vst [vmem:[%s240 + $0x58] sm:$0xff] %v932
      %965 = vst [vmem:[%s240 + $0x60] sm:$0xff] %v933
      %966 = vst [vmem:[%s240 + $0x68] sm:$0xff] %v934
      %967 = vst [vmem:[%s240 + $0x70] sm:$0xff] %v935
      %968 = vst [vmem:[%s240 + $0x78] sm:$0xff] %v936
      %969 = vst [vmem:[%s240 + $0x80] sm:$0xff] %v937
      %970 = vst [vmem:[%s240 + $0x88] sm:$0xff] %v938
      %971 = vst [vmem:[%s240 + $0x90] sm:$0xff] %v939
      %972 = vst [vmem:[%s240 + $0x98] sm:$0xff] %v940
      %973 = vst [vmem:[%s240 + $0xa0] sm:$0xff] %v941
      %974 = vst [vmem:[%s240 + $0xa8] sm:$0xff] %v942
      %975 = vst [vmem:[%s240 + $0xb0] sm:$0xff] %v943
      %976 = vst [vmem:[%s240 + $0xb8] sm:$0xff] %v944
      %977 = vst [vmem:[%s240 + $0xc0] sm:$0xff] %v945
      %978 = vst [vmem:[%s240 + $0xc8] sm:$0xff] %v946
      %979 = vst [vmem:[%s240 + $0xd0] sm:$0xff] %v947
      %980 = vst [vmem:[%s240 + $0xd8] sm:$0xff] %v948
      %981 = vst [vmem:[%s240 + $0xe0] sm:$0xff] %v949
      %982 = vst [vmem:[%s240 + $0xe8] sm:$0xff] %v950
      %983 = vst [vmem:[%s240 + $0xf0] sm:$0xff] %v951
      %984 = vst [vmem:[%s240 + $0xf8] sm:$0xff] %v952
      %s985 = smul.u32 16, %s20
      %p986 = scmp.lt.s32.totalorder %s19, 1
      %s987 = scalar_select %p986, %s19, 1
      %p988 = scmp.lt.s32.totalorder %s985, 47
      %s989 = scalar_select %p988, %s985, 47
      %s990 = smul.addr %s989, 2
      %s991 = smul.addr %s987, 96
      %s992 = sadd.s32 %s990, %s991
      %s993 = smul.addr %s992, 8
      %s994 = scalar_lea.vmem %s4, %s993
      // Predicated region
      $region37: #{wan_i2v_cross_attention.10} parent=35 // pred_check
        %p995 = pneg %p138
      $region38: #{wan_i2v_cross_attention.10} parent=35 // pred_check_branch
        %997 = sbr.rel (%p995) target = $region40
      $region39: #{wan_i2v_cross_attention.10} parent=35 // pred_region
        %s998 = smul.u32 16, %s20
      $region40: #{wan_i2v_cross_attention.10} parent=35 // pred_fallthru
        _
    $region36: #{wan_i2v_cross_attention.10} parent=5 // pred_fallthru
      _
    %p999 = scmp.le.s32.totalorder 2, %s10
    // Predicated region
    $region41: #{wan_i2v_cross_attention.10} parent=5 // pred_check
      %p1000 = pneg %p999
    $region42: #{wan_i2v_cross_attention.10} parent=5 // pred_check_branch
      %1002 = sbr.rel (%p1000) target = $region44
    $region43: #{wan_i2v_cross_attention.10} parent=5 // pred_region
      %s1003 = ssub.s32 %s10, 2
      // Predicated region
      $region45: #{wan_i2v_cross_attention.10} parent=43 // pred_check
        %p1004 = pneg %p144
      $region46: #{wan_i2v_cross_attention.10} parent=43 // pred_check_branch
        %1006 = sbr.rel (%p1004) target = $region48
      $region47: #{wan_i2v_cross_attention.10} parent=43 // pred_region
        %s1007 = smul.u32 16, %s22
        %p1008 = scmp.lt.s32.totalorder %s21, 1
        %s1009 = scalar_select %p1008, %s21, 1
        %p1010 = scmp.lt.s32.totalorder %s1007, 47
        %s1011 = scalar_select %p1010, %s1007, 47
        %s1012 = smul.addr %s1011, 2
        %s1013 = smul.addr %s1009, 96
        %s1014 = sadd.s32 %s1012, %s1013
        %s1015 = smul.addr %s1014, 8
        %s1016 = scalar_lea.vmem %s4, %s1015
      $region48: #{wan_i2v_cross_attention.10} parent=43 // pred_fallthru
        _
    $region44: #{wan_i2v_cross_attention.10} parent=5 // pred_fallthru
      _
  $region6: #{wan_i2v_cross_attention.10} parent=0 // loop_footer
    %s14 = sadd.s32 1, %s10
  $region7: #{wan_i2v_cross_attention.10} parent=0 // loop_footer_branch
    %9 = sbr.rel target = $region3
  $region8: #{wan_i2v_cross_attention.10} parent=0 // loop_exit
    _

// kernel: wan_i2v_cross_attention.8
$region0: #{wan_i2v_cross_attention.8}
  #allocation0 [shape = 'u32[]', space=smem, size = 0x4, offset = 0x4, fixed_abs, tag = 'smem constant byte address 0x4 - core index']
  #allocation1 [shape = 'u32[72,128]{1,0:T(1,128)}', space=vmem, size = 0x9000, scoped, tag = 'internal scratch']
  %s0 = inlined_call_operand.vmem [shape: f32[2,128,256], index: 0, kind: input, shape index: {}]
  %s1 = inlined_call_operand.vmem [shape: f32[256,256], index: 1, kind: input, shape index: {}]
  %s2 = inlined_call_operand.vmem [shape: f32[1,256], index: 2, kind: input, shape index: {}]
  %s3 = inlined_call_operand.vmem [shape: f32[1,256], index: 3, kind: input, shape index: {}]
  %s4 = inlined_call_operand.vmem [shape: f32[2,128,256], index: 4, kind: output, shape index: {}]
  %s5 = sld [smem:[#allocation0]]
  $region49: #{wan_i2v_cross_attention.8} parent=0
    _
  %s7 = ssub.s32 1, %s5
  %s8 = scalar_select 0, %s7, %s5
  loop: start=0, step=1, limit=4
  $region2: #{wan_i2v_cross_attention.8} parent=0 // loop_pre_header
    _
  $region3: #{wan_i2v_cross_attention.8} parent=0 // loop_header
    %s10 = sphi 0, %s14
    %p11 = scmp.ge.s32.totalorder %s10, 4
    %s17 = sphi 0, %s29
    %s18 = sphi 0, %s25
    %s19 = sphi 0, %s17
    %s20 = sphi 0, %s18
    %s21 = sphi 0, %s19
    %s22 = sphi 0, %s20
    %s34 = sphi 0, %s36
    %s37 = sphi 0, %s34
    %s38 = sphi 0, %s37
    %s54 = sphi 0, %s38
    %s58 = sphi 0, %s58
    %s60 = sphi 0, %s58
    %s61 = sphi 0, %s60
    %s75 = sphi 0, %s61
    %s79 = sphi 0, %s79
    %s81 = sphi 0, %s79
    %s82 = sphi 0, %s81
    %s96 = sphi 0, %s82
    %s100 = sphi 0, %s100
    %s102 = sphi 0, %s100
    %s103 = sphi 0, %s102
    %s117 = sphi 0, %s103
    %s125 = sphi 0, %s127
    %s128 = sphi 0, %s125
    %s129 = sphi 0, %s128
    %s145 = sphi 0, %s129
  $region4: #{wan_i2v_cross_attention.8} parent=0 // loop_header_branch
    %13 = sbr.rel (%p11) target = $region8
  $region5: #{wan_i2v_cross_attention.8} parent=0 // loop_body
    %s15 = ssub.s32 %s10, 1
    %s16 = ssub.s32 %s10, 2
    %s23 = sadd.s32 1, %s18
    %p24 = scmp.ge.s32.totalorder %s23, 1
    %s25 = scalar_select %p24, 0, %s23
    %s26 = sadd.s32 1, %s17
    %s27 = scalar_select %p24, %s26, %s17
    %p28 = scmp.ge.s32.totalorder %s27, 2
    %s29 = scalar_select %p28, 0, %s27
    %s30 = ssub.s32 %s17, %s29
    %s31 = ssub.s32 %s18, %s25
    %s32 = sor.u32 %s30, %s31
    %p33 = scmp.eq.s32.totalorder %s32, 0
    %s35 = sadd.s32 %s34, 1
    %s36 = scalar_select %p33, %s34, %s35
    %p39 = pneg %p33
    %p40 = scmp.eq.s32.totalorder %s10, 1
    %p41 = por %p39, %p40
    %p42 = scmp.ne.s32.totalorder %s34, %s37
    %p43 = scmp.eq.s32.totalorder %s10, 0
    %p44 = por %p42, %p43
    %p45 = scmp.ne.s32.totalorder %s34, %s37
    %p46 = scmp.eq.s32.totalorder %s15, 1
    %p47 = por %p45, %p46
    %p48 = scmp.ne.s32.totalorder %s37, %s38
    %p49 = scmp.eq.s32.totalorder %s15, 0
    %p50 = por %p48, %p49
    %p51 = scmp.ne.s32.totalorder %s37, %s38
    %p52 = scmp.eq.s32.totalorder %s16, 1
    %p53 = por %p51, %p52
    %p55 = scmp.ne.s32.totalorder %s38, %s54
    %p56 = scmp.eq.s32.totalorder %s16, 0
    %p57 = por %p55, %p56
    %s59 = sadd.s32 %s58, 1
    %p62 = scmp.eq.s32.totalorder %s10, 1
    %p63 = scmp.ne.s32.totalorder %s58, %s60
    %p64 = scmp.eq.s32.totalorder %s10, 0
    %p65 = por %p63, %p64
    %p66 = scmp.ne.s32.totalorder %s58, %s60
    %p67 = scmp.eq.s32.totalorder %s15, 1
    %p68 = por %p66, %p67
    %p69 = scmp.ne.s32.totalorder %s60, %s61
    %p70 = scmp.eq.s32.totalorder %s15, 0
    %p71 = por %p69, %p70
    %p72 = scmp.ne.s32.totalorder %s60, %s61
    %p73 = scmp.eq.s32.totalorder %s16, 1
    %p74 = por %p72, %p73
    %p76 = scmp.ne.s32.totalorder %s61, %s75
    %p77 = scmp.eq.s32.totalorder %s16, 0
    %p78 = por %p76, %p77
    %s80 = sadd.s32 %s79, 1
    %p83 = scmp.eq.s32.totalorder %s10, 1
    %p84 = scmp.ne.s32.totalorder %s79, %s81
    %p85 = scmp.eq.s32.totalorder %s10, 0
    %p86 = por %p84, %p85
    %p87 = scmp.ne.s32.totalorder %s79, %s81
    %p88 = scmp.eq.s32.totalorder %s15, 1
    %p89 = por %p87, %p88
    %p90 = scmp.ne.s32.totalorder %s81, %s82
    %p91 = scmp.eq.s32.totalorder %s15, 0
    %p92 = por %p90, %p91
    %p93 = scmp.ne.s32.totalorder %s81, %s82
    %p94 = scmp.eq.s32.totalorder %s16, 1
    %p95 = por %p93, %p94
    %p97 = scmp.ne.s32.totalorder %s82, %s96
    %p98 = scmp.eq.s32.totalorder %s16, 0
    %p99 = por %p97, %p98
    %s101 = sadd.s32 %s100, 1
    %p104 = scmp.eq.s32.totalorder %s10, 1
    %p105 = scmp.ne.s32.totalorder %s100, %s102
    %p106 = scmp.eq.s32.totalorder %s10, 0
    %p107 = por %p105, %p106
    %p108 = scmp.ne.s32.totalorder %s100, %s102
    %p109 = scmp.eq.s32.totalorder %s15, 1
    %p110 = por %p108, %p109
    %p111 = scmp.ne.s32.totalorder %s102, %s103
    %p112 = scmp.eq.s32.totalorder %s15, 0
    %p113 = por %p111, %p112
    %p114 = scmp.ne.s32.totalorder %s102, %s103
    %p115 = scmp.eq.s32.totalorder %s16, 1
    %p116 = por %p114, %p115
    %p118 = scmp.ne.s32.totalorder %s103, %s117
    %p119 = scmp.eq.s32.totalorder %s16, 0
    %p120 = por %p118, %p119
    %s121 = ssub.s32 %s17, %s29
    %s122 = ssub.s32 %s18, %s25
    %s123 = sor.u32 %s121, %s122
    %p124 = scmp.eq.s32.totalorder %s123, 0
    %s126 = sadd.s32 %s125, 1
    %s127 = scalar_select %p124, %s125, %s126
    %p130 = pneg %p124
    %p131 = scmp.eq.s32.totalorder %s10, 1
    %p132 = por %p130, %p131
    %p133 = scmp.ne.s32.totalorder %s125, %s128
    %p134 = scmp.eq.s32.totalorder %s10, 0
    %p135 = por %p133, %p134
    %p136 = scmp.ne.s32.totalorder %s125, %s128
    %p137 = scmp.eq.s32.totalorder %s15, 1
    %p138 = por %p136, %p137
    %p139 = scmp.ne.s32.totalorder %s128, %s129
    %p140 = scmp.eq.s32.totalorder %s15, 0
    %p141 = por %p139, %p140
    %p142 = scmp.ne.s32.totalorder %s128, %s129
    %p143 = scmp.eq.s32.totalorder %s16, 1
    %p144 = por %p142, %p143
    %p146 = scmp.ne.s32.totalorder %s129, %s145
    %p147 = scmp.eq.s32.totalorder %s16, 0
    %p148 = por %p146, %p147
    %p149 = scmp.le.s32.totalorder 1, %s10
    %p150 = scmp.lt.s32.totalorder %s10, 3
    %p151 = pnand %p149, %p150
    %p152 = pneg %p151
    // Predicated region
    $region9: #{wan_i2v_cross_attention.8} parent=5 // pred_check
      _
    $region10: #{wan_i2v_cross_attention.8} parent=5 // pred_check_branch
      %154 = sbr.rel (%p151) target = $region12
    $region11: #{wan_i2v_cross_attention.8} parent=5 // pred_region
      %s155 = ssub.s32 %s10, 1
      // Predicated region
      $region13: #{wan_i2v_cross_attention.8} parent=11 // pred_check
        %p156 = pneg %p71
      $region14: #{wan_i2v_cross_attention.8} parent=11 // pred_check_branch
        %158 = sbr.rel (%p156) target = $region16
      $region15: #{wan_i2v_cross_attention.8} parent=11 // pred_region
        _
      $region16: #{wan_i2v_cross_attention.8} parent=11 // pred_fallthru
        _
      // Predicated region
      $region17: #{wan_i2v_cross_attention.8} parent=11 // pred_check
        %p159 = pneg %p92
      $region18: #{wan_i2v_cross_attention.8} parent=11 // pred_check_branch
        %161 = sbr.rel (%p159) target = $region20
      $region19: #{wan_i2v_cross_attention.8} parent=11 // pred_region
        _
      $region20: #{wan_i2v_cross_attention.8} parent=11 // pred_fallthru
        _
      // Predicated region
      $region21: #{wan_i2v_cross_attention.8} parent=11 // pred_check
        %p162 = pneg %p113
      $region22: #{wan_i2v_cross_attention.8} parent=11 // pred_check_branch
        %164 = sbr.rel (%p162) target = $region24
      $region23: #{wan_i2v_cross_attention.8} parent=11 // pred_region
        _
      $region24: #{wan_i2v_cross_attention.8} parent=11 // pred_fallthru
        _
    $region12: #{wan_i2v_cross_attention.8} parent=5 // pred_fallthru
      _
    %p165 = scmp.lt.s32.totalorder %s10, 2
    // Predicated region
    $region25: #{wan_i2v_cross_attention.8} parent=5 // pred_check
      %p166 = pneg %p165
    $region26: #{wan_i2v_cross_attention.8} parent=5 // pred_check_branch
      %168 = sbr.rel (%p166) target = $region28
    $region27: #{wan_i2v_cross_attention.8} parent=5 // pred_region
      // Predicated region
      $region29: #{wan_i2v_cross_attention.8} parent=27 // pred_check
        %p169 = pneg %p44
      $region30: #{wan_i2v_cross_attention.8} parent=27 // pred_check_branch
        %171 = sbr.rel (%p169) target = $region32
      $region31: #{wan_i2v_cross_attention.8} parent=27 // pred_region
        %s172 = smul.u32 16, %s18
        %p173 = scmp.lt.s32.totalorder %s17, 1
        %s174 = scalar_select %p173, %s17, 1
        %p175 = scmp.lt.s32.totalorder %s172, 15
        %s176 = scalar_select %p175, %s172, 15
        %s177 = smul.addr %s176, 2
        %s178 = smul.addr %s174, 32
        %s179 = sadd.s32 %s177, %s178
        %s180 = smul.addr %s179, 8
        %s181 = scalar_lea.vmem %s0, %s180
        %s182 = smul.u32 16, %s18
      $region32: #{wan_i2v_cross_attention.8} parent=27 // pred_fallthru
        _
    $region28: #{wan_i2v_cross_attention.8} parent=5 // pred_fallthru
      _
    %p183 = scmp.le.s32.totalorder 1, %s10
    %p184 = scmp.lt.s32.totalorder %s10, 3
    %p185 = pnand %p183, %p184
    %p186 = pneg %p185
    // Predicated region
    $region33: #{wan_i2v_cross_attention.8} parent=5 // pred_check
      _
    $region34: #{wan_i2v_cross_attention.8} parent=5 // pred_check_branch
      %188 = sbr.rel (%p185) target = $region36
    $region35: #{wan_i2v_cross_attention.8} parent=5 // pred_region
      %s189 = ssub.s32 %s10, 1
      %s190 = smul.u32 16, %s20
      %p191 = scmp.lt.s32.totalorder %s19, 1
      %s192 = scalar_select %p191, %s19, 1
      %p193 = scmp.lt.s32.totalorder %s190, 15
      %s194 = scalar_select %p193, %s190, 15
      %s195 = smul.addr %s194, 2
      %s196 = smul.addr %s192, 32
      %s197 = sadd.s32 %s195, %s196
      %s198 = smul.addr %s197, 8
      %s199 = scalar_lea.vmem %s0, %s198
      %p200 = pneg %p50
      %p201 = pneg %p47
      %p202 = pneg %p71
      %p203 = pneg %p68
      %p204 = pneg %p92
      %p205 = pneg %p89
      %p206 = pneg %p113
      %p207 = pneg %p110
      %p208 = pneg %p141
      %p209 = pneg %p138
      %s210 = smul.u32 16, %s20
      %p211 = scmp.lt.s32.totalorder %s19, 1
      %s212 = scalar_select %p211, %s19, 1
      %p213 = scmp.lt.s32.totalorder %s210, 15
      %s214 = scalar_select %p213, %s210, 15
      %s215 = smul.addr %s214, 2
      %s216 = smul.addr %s212, 32
      %s217 = sadd.s32 %s215, %s216
      %s218 = smul.addr %s217, 8
      %s219 = scalar_lea.vmem %s4, %s218
      %s220 = smul.u32 16, %s20
      %p221 = scmp.lt.s32.totalorder %s19, 1
      %s222 = scalar_select %p221, %s19, 1
      %p223 = scmp.lt.s32.totalorder %s220, 15
      %s224 = scalar_select %p223, %s220, 15
      %s225 = smul.addr %s224, 2
      %s226 = smul.addr %s222, 32
      %s227 = sadd.s32 %s225, %s226
      %s228 = smul.addr %s227, 8
      %s229 = scalar_lea.vmem %s0, %s228
      %s230 = smul.u32 16, %s20
      %s231 = smul.u32 16, %s20
      %p232 = scmp.lt.s32.totalorder %s19, 1
      %s233 = scalar_select %p232, %s19, 1
      %p234 = scmp.lt.s32.totalorder %s231, 15
      %s235 = scalar_select %p234, %s231, 15
      %s236 = smul.addr %s235, 2
      %s237 = smul.addr %s233, 32
      %s238 = sadd.s32 %s236, %s237
      %s239 = smul.addr %s238, 8
      %s240 = scalar_lea.vmem %s4, %s239
      %s241 = smul.u32 16, %s20
      %v242 = vld [vmem:[%s229] sm:$0xff]
      %v243 = vld [vmem:[%s229 + $0x8] sm:$0xff]
      %v244 = vld [vmem:[%s229 + $0x10] sm:$0xff]
      %v245 = vld [vmem:[%s229 + $0x18] sm:$0xff]
      %v246 = vld [vmem:[%s229 + $0x20] sm:$0xff]
      %v247 = vld [vmem:[%s229 + $0x28] sm:$0xff]
      %v248 = vld [vmem:[%s229 + $0x30] sm:$0xff]
      %v249 = vld [vmem:[%s229 + $0x38] sm:$0xff]
      %v250 = vld [vmem:[%s229 + $0x40] sm:$0xff]
      %v251 = vld [vmem:[%s229 + $0x48] sm:$0xff]
      %v252 = vld [vmem:[%s229 + $0x50] sm:$0xff]
      %v253 = vld [vmem:[%s229 + $0x58] sm:$0xff]
      %v254 = vld [vmem:[%s229 + $0x60] sm:$0xff]
      %v255 = vld [vmem:[%s229 + $0x68] sm:$0xff]
      %v256 = vld [vmem:[%s229 + $0x70] sm:$0xff]
      %v257 = vld [vmem:[%s229 + $0x78] sm:$0xff]
      %v258 = vld [vmem:[%s229 + $0x80] sm:$0xff]
      %v259 = vld [vmem:[%s229 + $0x88] sm:$0xff]
      %v260 = vld [vmem:[%s229 + $0x90] sm:$0xff]
      %v261 = vld [vmem:[%s229 + $0x98] sm:$0xff]
      %v262 = vld [vmem:[%s229 + $0xa0] sm:$0xff]
      %v263 = vld [vmem:[%s229 + $0xa8] sm:$0xff]
      %v264 = vld [vmem:[%s229 + $0xb0] sm:$0xff]
      %v265 = vld [vmem:[%s229 + $0xb8] sm:$0xff]
      %v266 = vld [vmem:[%s229 + $0xc0] sm:$0xff]
      %v267 = vld [vmem:[%s229 + $0xc8] sm:$0xff]
      %v268 = vld [vmem:[%s229 + $0xd0] sm:$0xff]
      %v269 = vld [vmem:[%s229 + $0xd8] sm:$0xff]
      %v270 = vld [vmem:[%s229 + $0xe0] sm:$0xff]
      %v271 = vld [vmem:[%s229 + $0xe8] sm:$0xff]
      %v272 = vld [vmem:[%s229 + $0xf0] sm:$0xff]
      %v273 = vld [vmem:[%s229 + $0xf8] sm:$0xff]
      %v274 = vld [vmem:[%s1] sm:$0xff]
      %v275 = vld [vmem:[%s1 + $0x8] sm:$0xff]
      %v276 = vld [vmem:[%s1 + $0x10] sm:$0xff]
      %v277 = vld [vmem:[%s1 + $0x18] sm:$0xff]
      %v278 = vld [vmem:[%s1 + $0x20] sm:$0xff]
      %v279 = vld [vmem:[%s1 + $0x28] sm:$0xff]
      %v280 = vld [vmem:[%s1 + $0x30] sm:$0xff]
      %v281 = vld [vmem:[%s1 + $0x38] sm:$0xff]
      %v282 = vld [vmem:[%s1 + $0x40] sm:$0xff]
      %v283 = vld [vmem:[%s1 + $0x48] sm:$0xff]
      %v284 = vld [vmem:[%s1 + $0x50] sm:$0xff]
      %v285 = vld [vmem:[%s1 + $0x58] sm:$0xff]
      %v286 = vld [vmem:[%s1 + $0x60] sm:$0xff]
      %v287 = vld [vmem:[%s1 + $0x68] sm:$0xff]
      %v288 = vld [vmem:[%s1 + $0x70] sm:$0xff]
      %v289 = vld [vmem:[%s1 + $0x78] sm:$0xff]
      %v290 = vld [vmem:[%s1 + $0x80] sm:$0xff]
      %v291 = vld [vmem:[%s1 + $0x88] sm:$0xff]
      %v292 = vld [vmem:[%s1 + $0x90] sm:$0xff]
      %v293 = vld [vmem:[%s1 + $0x98] sm:$0xff]
      %v294 = vld [vmem:[%s1 + $0xa0] sm:$0xff]
      %v295 = vld [vmem:[%s1 + $0xa8] sm:$0xff]
      %v296 = vld [vmem:[%s1 + $0xb0] sm:$0xff]
      %v297 = vld [vmem:[%s1 + $0xb8] sm:$0xff]
      %v298 = vld [vmem:[%s1 + $0xc0] sm:$0xff]
      %v299 = vld [vmem:[%s1 + $0xc8] sm:$0xff]
      %v300 = vld [vmem:[%s1 + $0xd0] sm:$0xff]
      %v301 = vld [vmem:[%s1 + $0xd8] sm:$0xff]
      %v302 = vld [vmem:[%s1 + $0xe0] sm:$0xff]
      %v303 = vld [vmem:[%s1 + $0xe8] sm:$0xff]
      %v304 = vld [vmem:[%s1 + $0xf0] sm:$0xff]
      %v305 = vld [vmem:[%s1 + $0xf8] sm:$0xff]
      %v306 = vld [vmem:[%s1 + $0x100] sm:$0xff]
      %v307 = vld [vmem:[%s1 + $0x108] sm:$0xff]
      %v308 = vld [vmem:[%s1 + $0x110] sm:$0xff]
      %v309 = vld [vmem:[%s1 + $0x118] sm:$0xff]
      %v310 = vld [vmem:[%s1 + $0x120] sm:$0xff]
      %v311 = vld [vmem:[%s1 + $0x128] sm:$0xff]
      %v312 = vld [vmem:[%s1 + $0x130] sm:$0xff]
      %v313 = vld [vmem:[%s1 + $0x138] sm:$0xff]
      %v314 = vld [vmem:[%s1 + $0x140] sm:$0xff]
      %v315 = vld [vmem:[%s1 + $0x148] sm:$0xff]
      %v316 = vld [vmem:[%s1 + $0x150] sm:$0xff]
      %v317 = vld [vmem:[%s1 + $0x158] sm:$0xff]
      %v318 = vld [vmem:[%s1 + $0x160] sm:$0xff]
      %v319 = vld [vmem:[%s1 + $0x168] sm:$0xff]
      %v320 = vld [vmem:[%s1 + $0x170] sm:$0xff]
      %v321 = vld [vmem:[%s1 + $0x178] sm:$0xff]
      %v322 = vld [vmem:[%s1 + $0x180] sm:$0xff]
      %v323 = vld [vmem:[%s1 + $0x188] sm:$0xff]
      %v324 = vld [vmem:[%s1 + $0x190] sm:$0xff]
      %v325 = vld [vmem:[%s1 + $0x198] sm:$0xff]
      %v326 = vld [vmem:[%s1 + $0x1a0] sm:$0xff]
      %v327 = vld [vmem:[%s1 + $0x1a8] sm:$0xff]
      %v328 = vld [vmem:[%s1 + $0x1b0] sm:$0xff]
      %v329 = vld [vmem:[%s1 + $0x1b8] sm:$0xff]
      %v330 = vld [vmem:[%s1 + $0x1c0] sm:$0xff]
      %v331 = vld [vmem:[%s1 + $0x1c8] sm:$0xff]
      %v332 = vld [vmem:[%s1 + $0x1d0] sm:$0xff]
      %v333 = vld [vmem:[%s1 + $0x1d8] sm:$0xff]
      %v334 = vld [vmem:[%s1 + $0x1e0] sm:$0xff]
      %v335 = vld [vmem:[%s1 + $0x1e8] sm:$0xff]
      %v336 = vld [vmem:[%s1 + $0x1f0] sm:$0xff]
      %v337 = vld [vmem:[%s1 + $0x1f8] sm:$0xff]
      %v338 = vld [vmem:[%s2] sm:$0x3]
      %v340 = vperm.slane %v338, 0
      %v341 = vperm.slane %v338, 1
      %344 = vmatpush.msra.mxu0 %v304
      %345 = vmatpush.msra.mxu0 %v302
      %346 = vmatpush.msra.mxu0 %v300
      %347 = vmatpush.msra.mxu0 %v298
      %348 = vmatpush.msra.mxu0 %v296
      %349 = vmatpush.msra.mxu0 %v294
      %350 = vmatpush.msra.mxu0 %v292
      %351 = vmatpush.msra.mxu0 %v290
      %352 = vmatpush.msra.mxu0 %v288
      %353 = vmatpush.msra.mxu0 %v286
      %354 = vmatpush.msra.mxu0 %v284
      %355 = vmatpush.msra.mxu0 %v282
      %356 = vmatpush.msra.mxu0 %v280
      %357 = vmatpush.msra.mxu0 %v278
      %358 = vmatpush.msra.mxu0 %v276
      %359 = vmatpush.msra.mxu0 %v274
      %360 = vmatmul.f32.gmra.mxu0 %v242
      %v361 = vpop.f32.mrf.mxu0
      %v362 = vadd.f32 %v340, %v361
      %363 = vmatmul.f32.gmra.mxu0 %v244
      %v364 = vpop.f32.mrf.mxu0
      %v365 = vadd.f32 %v340, %v364
      %366 = vmatmul.f32.gmra.mxu0 %v246
      %v367 = vpop.f32.mrf.mxu0
      %v368 = vadd.f32 %v340, %v367
      %369 = vmatmul.f32.gmra.mxu0 %v248
      %v370 = vpop.f32.mrf.mxu0
      %v371 = vadd.f32 %v340, %v370
      %372 = vmatmul.f32.gmra.mxu0 %v250
      %v373 = vpop.f32.mrf.mxu0
      %v374 = vadd.f32 %v340, %v373
      %375 = vmatmul.f32.gmra.mxu0 %v252
      %v376 = vpop.f32.mrf.mxu0
      %v377 = vadd.f32 %v340, %v376
      %378 = vmatmul.f32.gmra.mxu0 %v254
      %v379 = vpop.f32.mrf.mxu0
      %v380 = vadd.f32 %v340, %v379
      %381 = vmatmul.f32.gmra.mxu0 %v256
      %v382 = vpop.f32.mrf.mxu0
      %v383 = vadd.f32 %v340, %v382
      %384 = vmatmul.f32.gmra.mxu0 %v258
      %v385 = vpop.f32.mrf.mxu0
      %v386 = vadd.f32 %v340, %v385
      %387 = vmatmul.f32.gmra.mxu0 %v260
      %v388 = vpop.f32.mrf.mxu0
      %v389 = vadd.f32 %v340, %v388
      %390 = vmatmul.f32.gmra.mxu0 %v262
      %v391 = vpop.f32.mrf.mxu0
      %v392 = vadd.f32 %v340, %v391
      %393 = vmatmul.f32.gmra.mxu0 %v264
      %v394 = vpop.f32.mrf.mxu0
      %v395 = vadd.f32 %v340, %v394
      %396 = vmatmul.f32.gmra.mxu0 %v266
      %v397 = vpop.f32.mrf.mxu0
      %v398 = vadd.f32 %v340, %v397
      %399 = vmatmul.f32.gmra.mxu0 %v268
      %v400 = vpop.f32.mrf.mxu0
      %v401 = vadd.f32 %v340, %v400
      %402 = vmatmul.f32.gmra.mxu0 %v270
      %v403 = vpop.f32.mrf.mxu0
      %v404 = vadd.f32 %v340, %v403
      %405 = vmatmul.f32.gmra.mxu0 %v272
      %v406 = vpop.f32.mrf.mxu0
      %v407 = vadd.f32 %v340, %v406
      %408 = vdwg.mxu0
      %409 = vmatpush.msra.mxu0 %v336
      %410 = vmatpush.msra.mxu0 %v334
      %411 = vmatpush.msra.mxu0 %v332
      %412 = vmatpush.msra.mxu0 %v330
      %413 = vmatpush.msra.mxu0 %v328
      %414 = vmatpush.msra.mxu0 %v326
      %415 = vmatpush.msra.mxu0 %v324
      %416 = vmatpush.msra.mxu0 %v322
      %417 = vmatpush.msra.mxu0 %v320
      %418 = vmatpush.msra.mxu0 %v318
      %419 = vmatpush.msra.mxu0 %v316
      %420 = vmatpush.msra.mxu0 %v314
      %421 = vmatpush.msra.mxu0 %v312
      %422 = vmatpush.msra.mxu0 %v310
      %423 = vmatpush.msra.mxu0 %v308
      %424 = vmatpush.msra.mxu0 %v306
      %425 = vmatmul.f32.gmra.mxu0 %v243
      %v426 = vpop.f32.mrf.mxu0
      %v427 = vadd.f32 %v362, %v426
      %428 = vmatmul.f32.gmra.mxu0 %v245
      %v429 = vpop.f32.mrf.mxu0
      %v430 = vadd.f32 %v365, %v429
      %431 = vmatmul.f32.gmra.mxu0 %v247
      %v432 = vpop.f32.mrf.mxu0
      %v433 = vadd.f32 %v368, %v432
      %434 = vmatmul.f32.gmra.mxu0 %v249
      %v435 = vpop.f32.mrf.mxu0
      %v436 = vadd.f32 %v371, %v435
      %437 = vmatmul.f32.gmra.mxu0 %v251
      %v438 = vpop.f32.mrf.mxu0
      %v439 = vadd.f32 %v374, %v438
      %440 = vmatmul.f32.gmra.mxu0 %v253
      %v441 = vpop.f32.mrf.mxu0
      %v442 = vadd.f32 %v377, %v441
      %443 = vmatmul.f32.gmra.mxu0 %v255
      %v444 = vpop.f32.mrf.mxu0
      %v445 = vadd.f32 %v380, %v444
      %446 = vmatmul.f32.gmra.mxu0 %v257
      %v447 = vpop.f32.mrf.mxu0
      %v448 = vadd.f32 %v383, %v447
      %449 = vmatmul.f32.gmra.mxu0 %v259
      %v450 = vpop.f32.mrf.mxu0
      %v451 = vadd.f32 %v386, %v450
      %452 = vmatmul.f32.gmra.mxu0 %v261
      %v453 = vpop.f32.mrf.mxu0
      %v454 = vadd.f32 %v389, %v453
      %455 = vmatmul.f32.gmra.mxu0 %v263
      %v456 = vpop.f32.mrf.mxu0
      %v457 = vadd.f32 %v392, %v456
      %458 = vmatmul.f32.gmra.mxu0 %v265
      %v459 = vpop.f32.mrf.mxu0
      %v460 = vadd.f32 %v395, %v459
      %461 = vmatmul.f32.gmra.mxu0 %v267
      %v462 = vpop.f32.mrf.mxu0
      %v463 = vadd.f32 %v398, %v462
      %464 = vmatmul.f32.gmra.mxu0 %v269
      %v465 = vpop.f32.mrf.mxu0
      %v466 = vadd.f32 %v401, %v465
      %467 = vmatmul.f32.gmra.mxu0 %v271
      %v468 = vpop.f32.mrf.mxu0
      %v469 = vadd.f32 %v404, %v468
      %470 = vmatmul.f32.gmra.mxu0 %v273
      %v471 = vpop.f32.mrf.mxu0
      %v472 = vadd.f32 %v407, %v471
      %473 = vdwg.mxu0
      %474 = vmatpush.msra.mxu0 %v305
      %475 = vmatpush.msra.mxu0 %v303
      %476 = vmatpush.msra.mxu0 %v301
      %477 = vmatpush.msra.mxu0 %v299
      %478 = vmatpush.msra.mxu0 %v297
      %479 = vmatpush.msra.mxu0 %v295
      %480 = vmatpush.msra.mxu0 %v293
      %481 = vmatpush.msra.mxu0 %v291
      %482 = vmatpush.msra.mxu0 %v289
      %483 = vmatpush.msra.mxu0 %v287
      %484 = vmatpush.msra.mxu0 %v285
      %485 = vmatpush.msra.mxu0 %v283
      %486 = vmatpush.msra.mxu0 %v281
      %487 = vmatpush.msra.mxu0 %v279
      %488 = vmatpush.msra.mxu0 %v277
      %489 = vmatpush.msra.mxu0 %v275
      %490 = vmatmul.f32.gmra.mxu0 %v242
      %v491 = vpop.f32.mrf.mxu0
      %v492 = vadd.f32 %v341, %v491
      %493 = vmatmul.f32.gmra.mxu0 %v244
      %v494 = vpop.f32.mrf.mxu0
      %v495 = vadd.f32 %v341, %v494
      %496 = vmatmul.f32.gmra.mxu0 %v246
      %v497 = vpop.f32.mrf.mxu0
      %v498 = vadd.f32 %v341, %v497
      %499 = vmatmul.f32.gmra.mxu0 %v248
      %v500 = vpop.f32.mrf.mxu0
      %v501 = vadd.f32 %v341, %v500
      %502 = vmatmul.f32.gmra.mxu0 %v250
      %v503 = vpop.f32.mrf.mxu0
      %v504 = vadd.f32 %v341, %v503
      %505 = vmatmul.f32.gmra.mxu0 %v252
      %v506 = vpop.f32.mrf.mxu0
      %v507 = vadd.f32 %v341, %v506
      %508 = vmatmul.f32.gmra.mxu0 %v254
      %v509 = vpop.f32.mrf.mxu0
      %v510 = vadd.f32 %v341, %v509
      %511 = vmatmul.f32.gmra.mxu0 %v256
      %v512 = vpop.f32.mrf.mxu0
      %v513 = vadd.f32 %v341, %v512
      %514 = vmatmul.f32.gmra.mxu0 %v258
      %v515 = vpop.f32.mrf.mxu0
      %v516 = vadd.f32 %v341, %v515
      %517 = vmatmul.f32.gmra.mxu0 %v260
      %v518 = vpop.f32.mrf.mxu0
      %v519 = vadd.f32 %v341, %v518
      %520 = vmatmul.f32.gmra.mxu0 %v262
      %v521 = vpop.f32.mrf.mxu0
      %v522 = vadd.f32 %v341, %v521
      %523 = vmatmul.f32.gmra.mxu0 %v264
      %v524 = vpop.f32.mrf.mxu0
      %v525 = vadd.f32 %v341, %v524
      %526 = vmatmul.f32.gmra.mxu0 %v266
      %v527 = vpop.f32.mrf.mxu0
      %v528 = vadd.f32 %v341, %v527
      %529 = vmatmul.f32.gmra.mxu0 %v268
      %v530 = vpop.f32.mrf.mxu0
      %v531 = vadd.f32 %v341, %v530
      %532 = vmatmul.f32.gmra.mxu0 %v270
      %v533 = vpop.f32.mrf.mxu0
      %v534 = vadd.f32 %v341, %v533
      %535 = vmatmul.f32.gmra.mxu0 %v272
      %v536 = vpop.f32.mrf.mxu0
      %v537 = vadd.f32 %v341, %v536
      %538 = vdwg.mxu0
      %539 = vmatpush.msra.mxu0 %v337
      %540 = vmatpush.msra.mxu0 %v335
      %541 = vmatpush.msra.mxu0 %v333
      %542 = vmatpush.msra.mxu0 %v331
      %543 = vmatpush.msra.mxu0 %v329
      %544 = vmatpush.msra.mxu0 %v327
      %545 = vmatpush.msra.mxu0 %v325
      %546 = vmatpush.msra.mxu0 %v323
      %547 = vmatpush.msra.mxu0 %v321
      %548 = vmatpush.msra.mxu0 %v319
      %549 = vmatpush.msra.mxu0 %v317
      %550 = vmatpush.msra.mxu0 %v315
      %551 = vmatpush.msra.mxu0 %v313
      %552 = vmatpush.msra.mxu0 %v311
      %553 = vmatpush.msra.mxu0 %v309
      %554 = vmatpush.msra.mxu0 %v307
      %555 = vmatmul.f32.gmra.mxu0 %v243
      %v556 = vpop.f32.mrf.mxu0
      %v557 = vadd.f32 %v492, %v556
      %558 = vmatmul.f32.gmra.mxu0 %v245
      %v559 = vpop.f32.mrf.mxu0
      %v560 = vadd.f32 %v495, %v559
      %561 = vmatmul.f32.gmra.mxu0 %v247
      %v562 = vpop.f32.mrf.mxu0
      %v563 = vadd.f32 %v498, %v562
      %564 = vmatmul.f32.gmra.mxu0 %v249
      %v565 = vpop.f32.mrf.mxu0
      %v566 = vadd.f32 %v501, %v565
      %567 = vmatmul.f32.gmra.mxu0 %v251
      %v568 = vpop.f32.mrf.mxu0
      %v569 = vadd.f32 %v504, %v568
      %570 = vmatmul.f32.gmra.mxu0 %v253
      %v571 = vpop.f32.mrf.mxu0
      %v572 = vadd.f32 %v507, %v571
      %573 = vmatmul.f32.gmra.mxu0 %v255
      %v574 = vpop.f32.mrf.mxu0
      %v575 = vadd.f32 %v510, %v574
      %576 = vmatmul.f32.gmra.mxu0 %v257
      %v577 = vpop.f32.mrf.mxu0
      %v578 = vadd.f32 %v513, %v577
      %579 = vmatmul.f32.gmra.mxu0 %v259
      %v580 = vpop.f32.mrf.mxu0
      %v581 = vadd.f32 %v516, %v580
      %582 = vmatmul.f32.gmra.mxu0 %v261
      %v583 = vpop.f32.mrf.mxu0
      %v584 = vadd.f32 %v519, %v583
      %585 = vmatmul.f32.gmra.mxu0 %v263
      %v586 = vpop.f32.mrf.mxu0
      %v587 = vadd.f32 %v522, %v586
      %588 = vmatmul.f32.gmra.mxu0 %v265
      %v589 = vpop.f32.mrf.mxu0
      %v590 = vadd.f32 %v525, %v589
      %591 = vmatmul.f32.gmra.mxu0 %v267
      %v592 = vpop.f32.mrf.mxu0
      %v593 = vadd.f32 %v528, %v592
      %594 = vmatmul.f32.gmra.mxu0 %v269
      %v595 = vpop.f32.mrf.mxu0
      %v596 = vadd.f32 %v531, %v595
      %597 = vmatmul.f32.gmra.mxu0 %v271
      %v598 = vpop.f32.mrf.mxu0
      %v599 = vadd.f32 %v534, %v598
      %600 = vmatmul.f32.gmra.mxu0 %v273
      %v601 = vpop.f32.mrf.mxu0
      %v602 = vadd.f32 %v537, %v601
      %603 = vdwg.mxu0
      %v604 = vmul.f32 %v427, %v427
      %v605 = vmul.f32 %v557, %v557
      %v606 = vmul.f32 %v430, %v430
      %v607 = vmul.f32 %v560, %v560
      %v608 = vmul.f32 %v433, %v433
      %v609 = vmul.f32 %v563, %v563
      %v610 = vmul.f32 %v436, %v436
      %v611 = vmul.f32 %v566, %v566
      %v612 = vmul.f32 %v439, %v439
      %v613 = vmul.f32 %v569, %v569
      %v614 = vmul.f32 %v442, %v442
      %v615 = vmul.f32 %v572, %v572
      %v616 = vmul.f32 %v445, %v445
      %v617 = vmul.f32 %v575, %v575
      %v618 = vmul.f32 %v448, %v448
      %v619 = vmul.f32 %v578, %v578
      %v620 = vmul.f32 %v451, %v451
      %v621 = vmul.f32 %v581, %v581
      %v622 = vmul.f32 %v454, %v454
      %v623 = vmul.f32 %v584, %v584
      %v624 = vmul.f32 %v457, %v457
      %v625 = vmul.f32 %v587, %v587
      %v626 = vmul.f32 %v460, %v460
      %v627 = vmul.f32 %v590, %v590
      %v628 = vmul.f32 %v463, %v463
      %v629 = vmul.f32 %v593, %v593
      %v630 = vmul.f32 %v466, %v466
      %v631 = vmul.f32 %v596, %v596
      %v632 = vmul.f32 %v469, %v469
      %v633 = vmul.f32 %v599, %v599
      %v634 = vmul.f32 %v472, %v472
      %v635 = vmul.f32 %v602, %v602
      %v636 = vadd.f32 %v604, %v605
      %637 = vadd.xlane.f32.xlu0 %v636
      %v638 = vpop.xlane.xlu0 %637
      %v639 = vadd.f32 %v606, %v607
      %640 = vadd.xlane.f32.xlu0 %v639
      %v641 = vpop.xlane.xlu0 %640
      %v642 = vadd.f32 %v608, %v609
      %643 = vadd.xlane.f32.xlu0 %v642
      %v644 = vpop.xlane.xlu0 %643
      %v645 = vadd.f32 %v610, %v611
      %646 = vadd.xlane.f32.xlu0 %v645
      %v647 = vpop.xlane.xlu0 %646
      %v648 = vadd.f32 %v612, %v613
      %649 = vadd.xlane.f32.xlu0 %v648
      %v650 = vpop.xlane.xlu0 %649
      %v651 = vadd.f32 %v614, %v615
      %652 = vadd.xlane.f32.xlu0 %v651
      %v653 = vpop.xlane.xlu0 %652
      %v654 = vadd.f32 %v616, %v617
      %655 = vadd.xlane.f32.xlu0 %v654
      %v656 = vpop.xlane.xlu0 %655
      %v657 = vadd.f32 %v618, %v619
      %658 = vadd.xlane.f32.xlu0 %v657
      %v659 = vpop.xlane.xlu0 %658
      %v660 = vadd.f32 %v620, %v621
      %661 = vadd.xlane.f32.xlu0 %v660
      %v662 = vpop.xlane.xlu0 %661
      %v663 = vadd.f32 %v622, %v623
      %664 = vadd.xlane.f32.xlu0 %v663
      %v665 = vpop.xlane.xlu0 %664
      %v666 = vadd.f32 %v624, %v625
      %667 = vadd.xlane.f32.xlu0 %v666
      %v668 = vpop.xlane.xlu0 %667
      %v669 = vadd.f32 %v626, %v627
      %670 = vadd.xlane.f32.xlu0 %v669
      %v671 = vpop.xlane.xlu0 %670
      %v672 = vadd.f32 %v628, %v629
      %673 = vadd.xlane.f32.xlu0 %v672
      %v674 = vpop.xlane.xlu0 %673
      %v675 = vadd.f32 %v630, %v631
      %676 = vadd.xlane.f32.xlu0 %v675
      %v677 = vpop.xlane.xlu0 %676
      %v678 = vadd.f32 %v632, %v633
      %679 = vadd.xlane.f32.xlu0 %v678
      %v680 = vpop.xlane.xlu0 %679
      %v681 = vadd.f32 %v634, %v635
      %682 = vadd.xlane.f32.xlu0 %v681
      %v683 = vpop.xlane.xlu0 %682
      %v684 = vrcp.pop 256.0
      %v685 = vmul.f32 256.0, %v684
      %v686 = vsub.f32 1.0, %v685
      %v687 = vmul.f32 %v684, %v686
      %v688 = vadd.f32 %v684, %v687
      %vm689 = vweird.f32 %v684
      %v690 = vsel %vm689, %v684, %v688
      %v691 = vmul.f32 %v638, %v690
      %v692 = vmul.f32 %v641, %v690
      %v693 = vmul.f32 %v644, %v690
      %v694 = vmul.f32 %v647, %v690
      %v695 = vmul.f32 %v650, %v690
      %v696 = vmul.f32 %v653, %v690
      %v697 = vmul.f32 %v656, %v690
      %v698 = vmul.f32 %v659, %v690
      %v699 = vmul.f32 %v662, %v690
      %v700 = vmul.f32 %v665, %v690
      %v701 = vmul.f32 %v668, %v690
      %v702 = vmul.f32 %v671, %v690
      %v703 = vmul.f32 %v674, %v690
      %v704 = vmul.f32 %v677, %v690
      %v705 = vmul.f32 %v680, %v690
      %v706 = vmul.f32 %v683, %v690
      %v707 = vadd.f32 %v691, 1e-06
      %v708 = vadd.f32 %v692, 1e-06
      %v709 = vadd.f32 %v693, 1e-06
      %v710 = vadd.f32 %v694, 1e-06
      %v711 = vadd.f32 %v695, 1e-06
      %v712 = vadd.f32 %v696, 1e-06
      %v713 = vadd.f32 %v697, 1e-06
      %v714 = vadd.f32 %v698, 1e-06
      %v715 = vadd.f32 %v699, 1e-06
      %v716 = vadd.f32 %v700, 1e-06
      %v717 = vadd.f32 %v701, 1e-06
      %v718 = vadd.f32 %v702, 1e-06
      %v719 = vadd.f32 %v703, 1e-06
      %v720 = vadd.f32 %v704, 1e-06
      %v721 = vadd.f32 %v705, 1e-06
      %v722 = vadd.f32 %v706, 1e-06
      %v723 = vrsqrt.pop %v707
      %v724 = vmul.f32 %v723, %v707
      %v725 = vmul.f32 %v724, %v723
      %v726 = vmul.f32 0.5, %v725
      %v727 = vsub.f32 1.5, %v726
      %v728 = vmul.f32 %v723, %v727
      %vm729 = vweird.f32 %v707
      %vm730 = vweird.f32 %v723
      %vm731 = vmor %vm729, %vm730
      %v732 = vsel %vm731, %v723, %v728
      %v733 = vrsqrt.pop %v708
      %v734 = vmul.f32 %v733, %v708
      %v735 = vmul.f32 %v734, %v733
      %v736 = vmul.f32 0.5, %v735
      %v737 = vsub.f32 1.5, %v736
      %v738 = vmul.f32 %v733, %v737
      %vm739 = vweird.f32 %v708
      %vm740 = vweird.f32 %v733
      %vm741 = vmor %vm739, %vm740
      %v742 = vsel %vm741, %v733, %v738
      %v743 = vrsqrt.pop %v709
      %v744 = vmul.f32 %v743, %v709
      %v745 = vmul.f32 %v744, %v743
      %v746 = vmul.f32 0.5, %v745
      %v747 = vsub.f32 1.5, %v746
      %v748 = vmul.f32 %v743, %v747
      %vm749 = vweird.f32 %v709
      %vm750 = vweird.f32 %v743
      %vm751 = vmor %vm749, %vm750
      %v752 = vsel %vm751, %v743, %v748
      %v753 = vrsqrt.pop %v710
      %v754 = vmul.f32 %v753, %v710
      %v755 = vmul.f32 %v754, %v753
      %v756 = vmul.f32 0.5, %v755
      %v757 = vsub.f32 1.5, %v756
      %v758 = vmul.f32 %v753, %v757
      %vm759 = vweird.f32 %v710
      %vm760 = vweird.f32 %v753
      %vm761 = vmor %vm759, %vm760
      %v762 = vsel %vm761, %v753, %v758
      %v763 = vrsqrt.pop %v711
      %v764 = vmul.f32 %v763, %v711
      %v765 = vmul.f32 %v764, %v763
      %v766 = vmul.f32 0.5, %v765
      %v767 = vsub.f32 1.5, %v766
      %v768 = vmul.f32 %v763, %v767
      %vm769 = vweird.f32 %v711
      %vm770 = vweird.f32 %v763
      %vm771 = vmor %vm769, %vm770
      %v772 = vsel %vm771, %v763, %v768
      %v773 = vrsqrt.pop %v712
      %v774 = vmul.f32 %v773, %v712
      %v775 = vmul.f32 %v774, %v773
      %v776 = vmul.f32 0.5, %v775
      %v777 = vsub.f32 1.5, %v776
      %v778 = vmul.f32 %v773, %v777
      %vm779 = vweird.f32 %v712
      %vm780 = vweird.f32 %v773
      %vm781 = vmor %vm779, %vm780
      %v782 = vsel %vm781, %v773, %v778
      %v783 = vrsqrt.pop %v713
      %v784 = vmul.f32 %v783, %v713
      %v785 = vmul.f32 %v784, %v783
      %v786 = vmul.f32 0.5, %v785
      %v787 = vsub.f32 1.5, %v786
      %v788 = vmul.f32 %v783, %v787
      %vm789 = vweird.f32 %v713
      %vm790 = vweird.f32 %v783
      %vm791 = vmor %vm789, %vm790
      %v792 = vsel %vm791, %v783, %v788
      %v793 = vrsqrt.pop %v714
      %v794 = vmul.f32 %v793, %v714
      %v795 = vmul.f32 %v794, %v793
      %v796 = vmul.f32 0.5, %v795
      %v797 = vsub.f32 1.5, %v796
      %v798 = vmul.f32 %v793, %v797
      %vm799 = vweird.f32 %v714
      %vm800 = vweird.f32 %v793
      %vm801 = vmor %vm799, %vm800
      %v802 = vsel %vm801, %v793, %v798
      %v803 = vrsqrt.pop %v715
      %v804 = vmul.f32 %v803, %v715
      %v805 = vmul.f32 %v804, %v803
      %v806 = vmul.f32 0.5, %v805
      %v807 = vsub.f32 1.5, %v806
      %v808 = vmul.f32 %v803, %v807
      %vm809 = vweird.f32 %v715
      %vm810 = vweird.f32 %v803
      %vm811 = vmor %vm809, %vm810
      %v812 = vsel %vm811, %v803, %v808
      %v813 = vrsqrt.pop %v716
      %v814 = vmul.f32 %v813, %v716
      %v815 = vmul.f32 %v814, %v813
      %v816 = vmul.f32 0.5, %v815
      %v817 = vsub.f32 1.5, %v816
      %v818 = vmul.f32 %v813, %v817
      %vm819 = vweird.f32 %v716
      %vm820 = vweird.f32 %v813
      %vm821 = vmor %vm819, %vm820
      %v822 = vsel %vm821, %v813, %v818
      %v823 = vrsqrt.pop %v717
      %v824 = vmul.f32 %v823, %v717
      %v825 = vmul.f32 %v824, %v823
      %v826 = vmul.f32 0.5, %v825
      %v827 = vsub.f32 1.5, %v826
      %v828 = vmul.f32 %v823, %v827
      %vm829 = vweird.f32 %v717
      %vm830 = vweird.f32 %v823
      %vm831 = vmor %vm829, %vm830
      %v832 = vsel %vm831, %v823, %v828
      %v833 = vrsqrt.pop %v718
      %v834 = vmul.f32 %v833, %v718
      %v835 = vmul.f32 %v834, %v833
      %v836 = vmul.f32 0.5, %v835
      %v837 = vsub.f32 1.5, %v836
      %v838 = vmul.f32 %v833, %v837
      %vm839 = vweird.f32 %v718
      %vm840 = vweird.f32 %v833
      %vm841 = vmor %vm839, %vm840
      %v842 = vsel %vm841, %v833, %v838
      %v843 = vrsqrt.pop %v719
      %v844 = vmul.f32 %v843, %v719
      %v845 = vmul.f32 %v844, %v843
      %v846 = vmul.f32 0.5, %v845
      %v847 = vsub.f32 1.5, %v846
      %v848 = vmul.f32 %v843, %v847
      %vm849 = vweird.f32 %v719
      %vm850 = vweird.f32 %v843
      %vm851 = vmor %vm849, %vm850
      %v852 = vsel %vm851, %v843, %v848
      %v853 = vrsqrt.pop %v720
      %v854 = vmul.f32 %v853, %v720
      %v855 = vmul.f32 %v854, %v853
      %v856 = vmul.f32 0.5, %v855
      %v857 = vsub.f32 1.5, %v856
      %v858 = vmul.f32 %v853, %v857
      %vm859 = vweird.f32 %v720
      %vm860 = vweird.f32 %v853
      %vm861 = vmor %vm859, %vm860
      %v862 = vsel %vm861, %v853, %v858
      %v863 = vrsqrt.pop %v721
      %v864 = vmul.f32 %v863, %v721
      %v865 = vmul.f32 %v864, %v863
      %v866 = vmul.f32 0.5, %v865
      %v867 = vsub.f32 1.5, %v866
      %v868 = vmul.f32 %v863, %v867
      %vm869 = vweird.f32 %v721
      %vm870 = vweird.f32 %v863
      %vm871 = vmor %vm869, %vm870
      %v872 = vsel %vm871, %v863, %v868
      %v873 = vrsqrt.pop %v722
      %v874 = vmul.f32 %v873, %v722
      %v875 = vmul.f32 %v874, %v873
      %v876 = vmul.f32 0.5, %v875
      %v877 = vsub.f32 1.5, %v876
      %v878 = vmul.f32 %v873, %v877
      %vm879 = vweird.f32 %v722
      %vm880 = vweird.f32 %v873
      %vm881 = vmor %vm879, %vm880
      %v882 = vsel %vm881, %v873, %v878
      %v883 = vmul.f32 %v427, %v732
      %v884 = vmul.f32 %v557, %v732
      %v885 = vmul.f32 %v430, %v742
      %v886 = vmul.f32 %v560, %v742
      %v887 = vmul.f32 %v433, %v752
      %v888 = vmul.f32 %v563, %v752
      %v889 = vmul.f32 %v436, %v762
      %v890 = vmul.f32 %v566, %v762
      %v891 = vmul.f32 %v439, %v772
      %v892 = vmul.f32 %v569, %v772
      %v893 = vmul.f32 %v442, %v782
      %v894 = vmul.f32 %v572, %v782
      %v895 = vmul.f32 %v445, %v792
      %v896 = vmul.f32 %v575, %v792
      %v897 = vmul.f32 %v448, %v802
      %v898 = vmul.f32 %v578, %v802
      %v899 = vmul.f32 %v451, %v812
      %v900 = vmul.f32 %v581, %v812
      %v901 = vmul.f32 %v454, %v822
      %v902 = vmul.f32 %v584, %v822
      %v903 = vmul.f32 %v457, %v832
      %v904 = vmul.f32 %v587, %v832
      %v905 = vmul.f32 %v460, %v842
      %v906 = vmul.f32 %v590, %v842
      %v907 = vmul.f32 %v463, %v852
      %v908 = vmul.f32 %v593, %v852
      %v909 = vmul.f32 %v466, %v862
      %v910 = vmul.f32 %v596, %v862
      %v911 = vmul.f32 %v469, %v872
      %v912 = vmul.f32 %v599, %v872
      %v913 = vmul.f32 %v472, %v882
      %v914 = vmul.f32 %v602, %v882
      %v915 = vld [vmem:[%s3] sm:$0x3]
      %v917 = vperm.slane %v915, 0
      %v918 = vperm.slane %v915, 1
      %v921 = vmul.f32 %v883, %v917
      %v922 = vmul.f32 %v884, %v918
      %v923 = vmul.f32 %v885, %v917
      %v924 = vmul.f32 %v886, %v918
      %v925 = vmul.f32 %v887, %v917
      %v926 = vmul.f32 %v888, %v918
      %v927 = vmul.f32 %v889, %v917
      %v928 = vmul.f32 %v890, %v918
      %v929 = vmul.f32 %v891, %v917
      %v930 = vmul.f32 %v892, %v918
      %v931 = vmul.f32 %v893, %v917
      %v932 = vmul.f32 %v894, %v918
      %v933 = vmul.f32 %v895, %v917
      %v934 = vmul.f32 %v896, %v918
      %v935 = vmul.f32 %v897, %v917
      %v936 = vmul.f32 %v898, %v918
      %v937 = vmul.f32 %v899, %v917
      %v938 = vmul.f32 %v900, %v918
      %v939 = vmul.f32 %v901, %v917
      %v940 = vmul.f32 %v902, %v918
      %v941 = vmul.f32 %v903, %v917
      %v942 = vmul.f32 %v904, %v918
      %v943 = vmul.f32 %v905, %v917
      %v944 = vmul.f32 %v906, %v918
      %v945 = vmul.f32 %v907, %v917
      %v946 = vmul.f32 %v908, %v918
      %v947 = vmul.f32 %v909, %v917
      %v948 = vmul.f32 %v910, %v918
      %v949 = vmul.f32 %v911, %v917
      %v950 = vmul.f32 %v912, %v918
      %v951 = vmul.f32 %v913, %v917
      %v952 = vmul.f32 %v914, %v918
      %953 = vst [vmem:[%s240] sm:$0xff] %v921
      %954 = vst [vmem:[%s240 + $0x8] sm:$0xff] %v922
      %955 = vst [vmem:[%s240 + $0x10] sm:$0xff] %v923
      %956 = vst [vmem:[%s240 + $0x18] sm:$0xff] %v924
      %957 = vst [vmem:[%s240 + $0x20] sm:$0xff] %v925
      %958 = vst [vmem:[%s240 + $0x28] sm:$0xff] %v926
      %959 = vst [vmem:[%s240 + $0x30] sm:$0xff] %v927
      %960 = vst [vmem:[%s240 + $0x38] sm:$0xff] %v928
      %961 = vst [vmem:[%s240 + $0x40] sm:$0xff] %v929
      %962 = vst [vmem:[%s240 + $0x48] sm:$0xff] %v930
      %963 = vst [vmem:[%s240 + $0x50] sm:$0xff] %v931
      %964 = vst [vmem:[%s240 + $0x58] sm:$0xff] %v932
      %965 = vst [vmem:[%s240 + $0x60] sm:$0xff] %v933
      %966 = vst [vmem:[%s240 + $0x68] sm:$0xff] %v934
      %967 = vst [vmem:[%s240 + $0x70] sm:$0xff] %v935
      %968 = vst [vmem:[%s240 + $0x78] sm:$0xff] %v936
      %969 = vst [vmem:[%s240 + $0x80] sm:$0xff] %v937
      %970 = vst [vmem:[%s240 + $0x88] sm:$0xff] %v938
      %971 = vst [vmem:[%s240 + $0x90] sm:$0xff] %v939
      %972 = vst [vmem:[%s240 + $0x98] sm:$0xff] %v940
      %973 = vst [vmem:[%s240 + $0xa0] sm:$0xff] %v941
      %974 = vst [vmem:[%s240 + $0xa8] sm:$0xff] %v942
      %975 = vst [vmem:[%s240 + $0xb0] sm:$0xff] %v943
      %976 = vst [vmem:[%s240 + $0xb8] sm:$0xff] %v944
      %977 = vst [vmem:[%s240 + $0xc0] sm:$0xff] %v945
      %978 = vst [vmem:[%s240 + $0xc8] sm:$0xff] %v946
      %979 = vst [vmem:[%s240 + $0xd0] sm:$0xff] %v947
      %980 = vst [vmem:[%s240 + $0xd8] sm:$0xff] %v948
      %981 = vst [vmem:[%s240 + $0xe0] sm:$0xff] %v949
      %982 = vst [vmem:[%s240 + $0xe8] sm:$0xff] %v950
      %983 = vst [vmem:[%s240 + $0xf0] sm:$0xff] %v951
      %984 = vst [vmem:[%s240 + $0xf8] sm:$0xff] %v952
      %s985 = smul.u32 16, %s20
      %p986 = scmp.lt.s32.totalorder %s19, 1
      %s987 = scalar_select %p986, %s19, 1
      %p988 = scmp.lt.s32.totalorder %s985, 15
      %s989 = scalar_select %p988, %s985, 15
      %s990 = smul.addr %s989, 2
      %s991 = smul.addr %s987, 32
      %s992 = sadd.s32 %s990, %s991
      %s993 = smul.addr %s992, 8
      %s994 = scalar_lea.vmem %s4, %s993
      // Predicated region
      $region37: #{wan_i2v_cross_attention.8} parent=35 // pred_check
        %p995 = pneg %p138
      $region38: #{wan_i2v_cross_attention.8} parent=35 // pred_check_branch
        %997 = sbr.rel (%p995) target = $region40
      $region39: #{wan_i2v_cross_attention.8} parent=35 // pred_region
        %s998 = smul.u32 16, %s20
      $region40: #{wan_i2v_cross_attention.8} parent=35 // pred_fallthru
        _
    $region36: #{wan_i2v_cross_attention.8} parent=5 // pred_fallthru
      _
    %p999 = scmp.le.s32.totalorder 2, %s10
    // Predicated region
    $region41: #{wan_i2v_cross_attention.8} parent=5 // pred_check
      %p1000 = pneg %p999
    $region42: #{wan_i2v_cross_attention.8} parent=5 // pred_check_branch
      %1002 = sbr.rel (%p1000) target = $region44
    $region43: #{wan_i2v_cross_attention.8} parent=5 // pred_region
      %s1003 = ssub.s32 %s10, 2
      // Predicated region
      $region45: #{wan_i2v_cross_attention.8} parent=43 // pred_check
        %p1004 = pneg %p144
      $region46: #{wan_i2v_cross_attention.8} parent=43 // pred_check_branch
        %1006 = sbr.rel (%p1004) target = $region48
      $region47: #{wan_i2v_cross_attention.8} parent=43 // pred_region
        %s1007 = smul.u32 16, %s22
        %p1008 = scmp.lt.s32.totalorder %s21, 1
        %s1009 = scalar_select %p1008, %s21, 1
        %p1010 = scmp.lt.s32.totalorder %s1007, 15
        %s1011 = scalar_select %p1010, %s1007, 15
        %s1012 = smul.addr %s1011, 2
        %s1013 = smul.addr %s1009, 32
        %s1014 = sadd.s32 %s1012, %s1013
        %s1015 = smul.addr %s1014, 8
        %s1016 = scalar_lea.vmem %s4, %s1015
      $region48: #{wan_i2v_cross_attention.8} parent=43 // pred_fallthru
        _
    $region44: #{wan_i2v_cross_attention.8} parent=5 // pred_fallthru
      _
  $region6: #{wan_i2v_cross_attention.8} parent=0 // loop_footer
    %s14 = sadd.s32 1, %s10
  $region7: #{wan_i2v_cross_attention.8} parent=0 // loop_footer_branch
    %9 = sbr.rel target = $region3
  $region8: #{wan_i2v_cross_attention.8} parent=0 // loop_exit
    _

// kernel: wan_i2v_cross_attention.7
$region0: #{wan_i2v_cross_attention.7}
  #allocation0 [shape = 'u32[]', space=smem, size = 0x4, offset = 0x4, fixed_abs, tag = 'smem constant byte address 0x4 - core index']
  #allocation1 [shape = 'u32[72,128]{1,0:T(1,128)}', space=vmem, size = 0x9000, scoped, tag = 'internal scratch']
  %s0 = inlined_call_operand.vmem [shape: f32[2,256,256], index: 0, kind: input, shape index: {}]
  %s1 = inlined_call_operand.vmem [shape: f32[256,256], index: 1, kind: input, shape index: {}]
  %s2 = inlined_call_operand.vmem [shape: f32[1,256], index: 2, kind: input, shape index: {}]
  %s3 = inlined_call_operand.vmem [shape: f32[1,256], index: 3, kind: input, shape index: {}]
  %s4 = inlined_call_operand.vmem [shape: f32[2,256,256], index: 4, kind: output, shape index: {}]
  %s5 = sld [smem:[#allocation0]]
  $region49: #{wan_i2v_cross_attention.7} parent=0
    _
  %s7 = ssub.s32 1, %s5
  %s8 = scalar_select 0, %s7, %s5
  loop: start=0, step=1, limit=4
  $region2: #{wan_i2v_cross_attention.7} parent=0 // loop_pre_header
    _
  $region3: #{wan_i2v_cross_attention.7} parent=0 // loop_header
    %s10 = sphi 0, %s14
    %p11 = scmp.ge.s32.totalorder %s10, 4
    %s17 = sphi 0, %s29
    %s18 = sphi 0, %s25
    %s19 = sphi 0, %s17
    %s20 = sphi 0, %s18
    %s21 = sphi 0, %s19
    %s22 = sphi 0, %s20
    %s34 = sphi 0, %s36
    %s37 = sphi 0, %s34
    %s38 = sphi 0, %s37
    %s54 = sphi 0, %s38
    %s58 = sphi 0, %s58
    %s60 = sphi 0, %s58
    %s61 = sphi 0, %s60
    %s75 = sphi 0, %s61
    %s79 = sphi 0, %s79
    %s81 = sphi 0, %s79
    %s82 = sphi 0, %s81
    %s96 = sphi 0, %s82
    %s100 = sphi 0, %s100
    %s102 = sphi 0, %s100
    %s103 = sphi 0, %s102
    %s117 = sphi 0, %s103
    %s125 = sphi 0, %s127
    %s128 = sphi 0, %s125
    %s129 = sphi 0, %s128
    %s145 = sphi 0, %s129
  $region4: #{wan_i2v_cross_attention.7} parent=0 // loop_header_branch
    %13 = sbr.rel (%p11) target = $region8
  $region5: #{wan_i2v_cross_attention.7} parent=0 // loop_body
    %s15 = ssub.s32 %s10, 1
    %s16 = ssub.s32 %s10, 2
    %s23 = sadd.s32 1, %s18
    %p24 = scmp.ge.s32.totalorder %s23, 1
    %s25 = scalar_select %p24, 0, %s23
    %s26 = sadd.s32 1, %s17
    %s27 = scalar_select %p24, %s26, %s17
    %p28 = scmp.ge.s32.totalorder %s27, 2
    %s29 = scalar_select %p28, 0, %s27
    %s30 = ssub.s32 %s17, %s29
    %s31 = ssub.s32 %s18, %s25
    %s32 = sor.u32 %s30, %s31
    %p33 = scmp.eq.s32.totalorder %s32, 0
    %s35 = sadd.s32 %s34, 1
    %s36 = scalar_select %p33, %s34, %s35
    %p39 = pneg %p33
    %p40 = scmp.eq.s32.totalorder %s10, 1
    %p41 = por %p39, %p40
    %p42 = scmp.ne.s32.totalorder %s34, %s37
    %p43 = scmp.eq.s32.totalorder %s10, 0
    %p44 = por %p42, %p43
    %p45 = scmp.ne.s32.totalorder %s34, %s37
    %p46 = scmp.eq.s32.totalorder %s15, 1
    %p47 = por %p45, %p46
    %p48 = scmp.ne.s32.totalorder %s37, %s38
    %p49 = scmp.eq.s32.totalorder %s15, 0
    %p50 = por %p48, %p49
    %p51 = scmp.ne.s32.totalorder %s37, %s38
    %p52 = scmp.eq.s32.totalorder %s16, 1
    %p53 = por %p51, %p52
    %p55 = scmp.ne.s32.totalorder %s38, %s54
    %p56 = scmp.eq.s32.totalorder %s16, 0
    %p57 = por %p55, %p56
    %s59 = sadd.s32 %s58, 1
    %p62 = scmp.eq.s32.totalorder %s10, 1
    %p63 = scmp.ne.s32.totalorder %s58, %s60
    %p64 = scmp.eq.s32.totalorder %s10, 0
    %p65 = por %p63, %p64
    %p66 = scmp.ne.s32.totalorder %s58, %s60
    %p67 = scmp.eq.s32.totalorder %s15, 1
    %p68 = por %p66, %p67
    %p69 = scmp.ne.s32.totalorder %s60, %s61
    %p70 = scmp.eq.s32.totalorder %s15, 0
    %p71 = por %p69, %p70
    %p72 = scmp.ne.s32.totalorder %s60, %s61
    %p73 = scmp.eq.s32.totalorder %s16, 1
    %p74 = por %p72, %p73
    %p76 = scmp.ne.s32.totalorder %s61, %s75
    %p77 = scmp.eq.s32.totalorder %s16, 0
    %p78 = por %p76, %p77
    %s80 = sadd.s32 %s79, 1
    %p83 = scmp.eq.s32.totalorder %s10, 1
    %p84 = scmp.ne.s32.totalorder %s79, %s81
    %p85 = scmp.eq.s32.totalorder %s10, 0
    %p86 = por %p84, %p85
    %p87 = scmp.ne.s32.totalorder %s79, %s81
    %p88 = scmp.eq.s32.totalorder %s15, 1
    %p89 = por %p87, %p88
    %p90 = scmp.ne.s32.totalorder %s81, %s82
    %p91 = scmp.eq.s32.totalorder %s15, 0
    %p92 = por %p90, %p91
    %p93 = scmp.ne.s32.totalorder %s81, %s82
    %p94 = scmp.eq.s32.totalorder %s16, 1
    %p95 = por %p93, %p94
    %p97 = scmp.ne.s32.totalorder %s82, %s96
    %p98 = scmp.eq.s32.totalorder %s16, 0
    %p99 = por %p97, %p98
    %s101 = sadd.s32 %s100, 1
    %p104 = scmp.eq.s32.totalorder %s10, 1
    %p105 = scmp.ne.s32.totalorder %s100, %s102
    %p106 = scmp.eq.s32.totalorder %s10, 0
    %p107 = por %p105, %p106
    %p108 = scmp.ne.s32.totalorder %s100, %s102
    %p109 = scmp.eq.s32.totalorder %s15, 1
    %p110 = por %p108, %p109
    %p111 = scmp.ne.s32.totalorder %s102, %s103
    %p112 = scmp.eq.s32.totalorder %s15, 0
    %p113 = por %p111, %p112
    %p114 = scmp.ne.s32.totalorder %s102, %s103
    %p115 = scmp.eq.s32.totalorder %s16, 1
    %p116 = por %p114, %p115
    %p118 = scmp.ne.s32.totalorder %s103, %s117
    %p119 = scmp.eq.s32.totalorder %s16, 0
    %p120 = por %p118, %p119
    %s121 = ssub.s32 %s17, %s29
    %s122 = ssub.s32 %s18, %s25
    %s123 = sor.u32 %s121, %s122
    %p124 = scmp.eq.s32.totalorder %s123, 0
    %s126 = sadd.s32 %s125, 1
    %s127 = scalar_select %p124, %s125, %s126
    %p130 = pneg %p124
    %p131 = scmp.eq.s32.totalorder %s10, 1
    %p132 = por %p130, %p131
    %p133 = scmp.ne.s32.totalorder %s125, %s128
    %p134 = scmp.eq.s32.totalorder %s10, 0
    %p135 = por %p133, %p134
    %p136 = scmp.ne.s32.totalorder %s125, %s128
    %p137 = scmp.eq.s32.totalorder %s15, 1
    %p138 = por %p136, %p137
    %p139 = scmp.ne.s32.totalorder %s128, %s129
    %p140 = scmp.eq.s32.totalorder %s15, 0
    %p141 = por %p139, %p140
    %p142 = scmp.ne.s32.totalorder %s128, %s129
    %p143 = scmp.eq.s32.totalorder %s16, 1
    %p144 = por %p142, %p143
    %p146 = scmp.ne.s32.totalorder %s129, %s145
    %p147 = scmp.eq.s32.totalorder %s16, 0
    %p148 = por %p146, %p147
    %p149 = scmp.le.s32.totalorder 1, %s10
    %p150 = scmp.lt.s32.totalorder %s10, 3
    %p151 = pnand %p149, %p150
    %p152 = pneg %p151
    // Predicated region
    $region9: #{wan_i2v_cross_attention.7} parent=5 // pred_check
      _
    $region10: #{wan_i2v_cross_attention.7} parent=5 // pred_check_branch
      %154 = sbr.rel (%p151) target = $region12
    $region11: #{wan_i2v_cross_attention.7} parent=5 // pred_region
      %s155 = ssub.s32 %s10, 1
      // Predicated region
      $region13: #{wan_i2v_cross_attention.7} parent=11 // pred_check
        %p156 = pneg %p71
      $region14: #{wan_i2v_cross_attention.7} parent=11 // pred_check_branch
        %158 = sbr.rel (%p156) target = $region16
      $region15: #{wan_i2v_cross_attention.7} parent=11 // pred_region
        _
      $region16: #{wan_i2v_cross_attention.7} parent=11 // pred_fallthru
        _
      // Predicated region
      $region17: #{wan_i2v_cross_attention.7} parent=11 // pred_check
        %p159 = pneg %p92
      $region18: #{wan_i2v_cross_attention.7} parent=11 // pred_check_branch
        %161 = sbr.rel (%p159) target = $region20
      $region19: #{wan_i2v_cross_attention.7} parent=11 // pred_region
        _
      $region20: #{wan_i2v_cross_attention.7} parent=11 // pred_fallthru
        _
      // Predicated region
      $region21: #{wan_i2v_cross_attention.7} parent=11 // pred_check
        %p162 = pneg %p113
      $region22: #{wan_i2v_cross_attention.7} parent=11 // pred_check_branch
        %164 = sbr.rel (%p162) target = $region24
      $region23: #{wan_i2v_cross_attention.7} parent=11 // pred_region
        _
      $region24: #{wan_i2v_cross_attention.7} parent=11 // pred_fallthru
        _
    $region12: #{wan_i2v_cross_attention.7} parent=5 // pred_fallthru
      _
    %p165 = scmp.lt.s32.totalorder %s10, 2
    // Predicated region
    $region25: #{wan_i2v_cross_attention.7} parent=5 // pred_check
      %p166 = pneg %p165
    $region26: #{wan_i2v_cross_attention.7} parent=5 // pred_check_branch
      %168 = sbr.rel (%p166) target = $region28
    $region27: #{wan_i2v_cross_attention.7} parent=5 // pred_region
      // Predicated region
      $region29: #{wan_i2v_cross_attention.7} parent=27 // pred_check
        %p169 = pneg %p44
      $region30: #{wan_i2v_cross_attention.7} parent=27 // pred_check_branch
        %171 = sbr.rel (%p169) target = $region32
      $region31: #{wan_i2v_cross_attention.7} parent=27 // pred_region
        %s172 = smul.u32 32, %s18
        %p173 = scmp.lt.s32.totalorder %s17, 1
        %s174 = scalar_select %p173, %s17, 1
        %p175 = scmp.lt.s32.totalorder %s172, 31
        %s176 = scalar_select %p175, %s172, 31
        %s177 = smul.addr %s176, 2
        %s178 = smul.addr %s174, 64
        %s179 = sadd.s32 %s177, %s178
        %s180 = smul.addr %s179, 8
        %s181 = scalar_lea.vmem %s0, %s180
        %s182 = smul.u32 32, %s18
      $region32: #{wan_i2v_cross_attention.7} parent=27 // pred_fallthru
        _
    $region28: #{wan_i2v_cross_attention.7} parent=5 // pred_fallthru
      _
    %p183 = scmp.le.s32.totalorder 1, %s10
    %p184 = scmp.lt.s32.totalorder %s10, 3
    %p185 = pnand %p183, %p184
    %p186 = pneg %p185
    // Predicated region
    $region33: #{wan_i2v_cross_attention.7} parent=5 // pred_check
      _
    $region34: #{wan_i2v_cross_attention.7} parent=5 // pred_check_branch
      %188 = sbr.rel (%p185) target = $region36
    $region35: #{wan_i2v_cross_attention.7} parent=5 // pred_region
      %s189 = ssub.s32 %s10, 1
      %s190 = smul.u32 32, %s20
      %p191 = scmp.lt.s32.totalorder %s19, 1
      %s192 = scalar_select %p191, %s19, 1
      %p193 = scmp.lt.s32.totalorder %s190, 31
      %s194 = scalar_select %p193, %s190, 31
      %s195 = smul.addr %s194, 2
      %s196 = smul.addr %s192, 64
      %s197 = sadd.s32 %s195, %s196
      %s198 = smul.addr %s197, 8
      %s199 = scalar_lea.vmem %s0, %s198
      %p200 = pneg %p50
      %p201 = pneg %p47
      %p202 = pneg %p71
      %p203 = pneg %p68
      %p204 = pneg %p92
      %p205 = pneg %p89
      %p206 = pneg %p113
      %p207 = pneg %p110
      %p208 = pneg %p141
      %p209 = pneg %p138
      %s210 = smul.u32 32, %s20
      %p211 = scmp.lt.s32.totalorder %s19, 1
      %s212 = scalar_select %p211, %s19, 1
      %p213 = scmp.lt.s32.totalorder %s210, 31
      %s214 = scalar_select %p213, %s210, 31
      %s215 = smul.addr %s214, 2
      %s216 = smul.addr %s212, 64
      %s217 = sadd.s32 %s215, %s216
      %s218 = smul.addr %s217, 8
      %s219 = scalar_lea.vmem %s4, %s218
      %s220 = smul.u32 32, %s20
      %p221 = scmp.lt.s32.totalorder %s19, 1
      %s222 = scalar_select %p221, %s19, 1
      %p223 = scmp.lt.s32.totalorder %s220, 31
      %s224 = scalar_select %p223, %s220, 31
      %s225 = smul.addr %s224, 2
      %s226 = smul.addr %s222, 64
      %s227 = sadd.s32 %s225, %s226
      %s228 = smul.addr %s227, 8
      %s229 = scalar_lea.vmem %s0, %s228
      %s230 = smul.u32 32, %s20
      %s231 = smul.u32 32, %s20
      %p232 = scmp.lt.s32.totalorder %s19, 1
      %s233 = scalar_select %p232, %s19, 1
      %p234 = scmp.lt.s32.totalorder %s231, 31
      %s235 = scalar_select %p234, %s231, 31
      %s236 = smul.addr %s235, 2
      %s237 = smul.addr %s233, 64
      %s238 = sadd.s32 %s236, %s237
      %s239 = smul.addr %s238, 8
      %s240 = scalar_lea.vmem %s4, %s239
      %s241 = smul.u32 32, %s20
      %v242 = vld [vmem:[%s229] sm:$0xff]
      %v243 = vld [vmem:[%s229 + $0x8] sm:$0xff]
      %v244 = vld [vmem:[%s229 + $0x10] sm:$0xff]
      %v245 = vld [vmem:[%s229 + $0x18] sm:$0xff]
      %v246 = vld [vmem:[%s229 + $0x20] sm:$0xff]
      %v247 = vld [vmem:[%s229 + $0x28] sm:$0xff]
      %v248 = vld [vmem:[%s229 + $0x30] sm:$0xff]
      %v249 = vld [vmem:[%s229 + $0x38] sm:$0xff]
      %v250 = vld [vmem:[%s229 + $0x40] sm:$0xff]
      %v251 = vld [vmem:[%s229 + $0x48] sm:$0xff]
      %v252 = vld [vmem:[%s229 + $0x50] sm:$0xff]
      %v253 = vld [vmem:[%s229 + $0x58] sm:$0xff]
      %v254 = vld [vmem:[%s229 + $0x60] sm:$0xff]
      %v255 = vld [vmem:[%s229 + $0x68] sm:$0xff]
      %v256 = vld [vmem:[%s229 + $0x70] sm:$0xff]
      %v257 = vld [vmem:[%s229 + $0x78] sm:$0xff]
      %v258 = vld [vmem:[%s229 + $0x80] sm:$0xff]
      %v259 = vld [vmem:[%s229 + $0x88] sm:$0xff]
      %v260 = vld [vmem:[%s229 + $0x90] sm:$0xff]
      %v261 = vld [vmem:[%s229 + $0x98] sm:$0xff]
      %v262 = vld [vmem:[%s229 + $0xa0] sm:$0xff]
      %v263 = vld [vmem:[%s229 + $0xa8] sm:$0xff]
      %v264 = vld [vmem:[%s229 + $0xb0] sm:$0xff]
      %v265 = vld [vmem:[%s229 + $0xb8] sm:$0xff]
      %v266 = vld [vmem:[%s229 + $0xc0] sm:$0xff]
      %v267 = vld [vmem:[%s229 + $0xc8] sm:$0xff]
      %v268 = vld [vmem:[%s229 + $0xd0] sm:$0xff]
      %v269 = vld [vmem:[%s229 + $0xd8] sm:$0xff]
      %v270 = vld [vmem:[%s229 + $0xe0] sm:$0xff]
      %v271 = vld [vmem:[%s229 + $0xe8] sm:$0xff]
      %v272 = vld [vmem:[%s229 + $0xf0] sm:$0xff]
      %v273 = vld [vmem:[%s229 + $0xf8] sm:$0xff]
      %v274 = vld [vmem:[%s229 + $0x100] sm:$0xff]
      %v275 = vld [vmem:[%s229 + $0x108] sm:$0xff]
      %v276 = vld [vmem:[%s229 + $0x110] sm:$0xff]
      %v277 = vld [vmem:[%s229 + $0x118] sm:$0xff]
      %v278 = vld [vmem:[%s229 + $0x120] sm:$0xff]
      %v279 = vld [vmem:[%s229 + $0x128] sm:$0xff]
      %v280 = vld [vmem:[%s229 + $0x130] sm:$0xff]
      %v281 = vld [vmem:[%s229 + $0x138] sm:$0xff]
      %v282 = vld [vmem:[%s229 + $0x140] sm:$0xff]
      %v283 = vld [vmem:[%s229 + $0x148] sm:$0xff]
      %v284 = vld [vmem:[%s229 + $0x150] sm:$0xff]
      %v285 = vld [vmem:[%s229 + $0x158] sm:$0xff]
      %v286 = vld [vmem:[%s229 + $0x160] sm:$0xff]
      %v287 = vld [vmem:[%s229 + $0x168] sm:$0xff]
      %v288 = vld [vmem:[%s229 + $0x170] sm:$0xff]
      %v289 = vld [vmem:[%s229 + $0x178] sm:$0xff]
      %v290 = vld [vmem:[%s229 + $0x180] sm:$0xff]
      %v291 = vld [vmem:[%s229 + $0x188] sm:$0xff]
      %v292 = vld [vmem:[%s229 + $0x190] sm:$0xff]
      %v293 = vld [vmem:[%s229 + $0x198] sm:$0xff]
      %v294 = vld [vmem:[%s229 + $0x1a0] sm:$0xff]
      %v295 = vld [vmem:[%s229 + $0x1a8] sm:$0xff]
      %v296 = vld [vmem:[%s229 + $0x1b0] sm:$0xff]
      %v297 = vld [vmem:[%s229 + $0x1b8] sm:$0xff]
      %v298 = vld [vmem:[%s229 + $0x1c0] sm:$0xff]
      %v299 = vld [vmem:[%s229 + $0x1c8] sm:$0xff]
      %v300 = vld [vmem:[%s229 + $0x1d0] sm:$0xff]
      %v301 = vld [vmem:[%s229 + $0x1d8] sm:$0xff]
      %v302 = vld [vmem:[%s229 + $0x1e0] sm:$0xff]
      %v303 = vld [vmem:[%s229 + $0x1e8] sm:$0xff]
      %v304 = vld [vmem:[%s229 + $0x1f0] sm:$0xff]
      %v305 = vld [vmem:[%s229 + $0x1f8] sm:$0xff]
      %v306 = vld [vmem:[%s1] sm:$0xff]
      %v307 = vld [vmem:[%s1 + $0x8] sm:$0xff]
      %v308 = vld [vmem:[%s1 + $0x10] sm:$0xff]
      %v309 = vld [vmem:[%s1 + $0x18] sm:$0xff]
      %v310 = vld [vmem:[%s1 + $0x20] sm:$0xff]
      %v311 = vld [vmem:[%s1 + $0x28] sm:$0xff]
      %v312 = vld [vmem:[%s1 + $0x30] sm:$0xff]
      %v313 = vld [vmem:[%s1 + $0x38] sm:$0xff]
      %v314 = vld [vmem:[%s1 + $0x40] sm:$0xff]
      %v315 = vld [vmem:[%s1 + $0x48] sm:$0xff]
      %v316 = vld [vmem:[%s1 + $0x50] sm:$0xff]
      %v317 = vld [vmem:[%s1 + $0x58] sm:$0xff]
      %v318 = vld [vmem:[%s1 + $0x60] sm:$0xff]
      %v319 = vld [vmem:[%s1 + $0x68] sm:$0xff]
      %v320 = vld [vmem:[%s1 + $0x70] sm:$0xff]
      %v321 = vld [vmem:[%s1 + $0x78] sm:$0xff]
      %v322 = vld [vmem:[%s1 + $0x80] sm:$0xff]
      %v323 = vld [vmem:[%s1 + $0x88] sm:$0xff]
      %v324 = vld [vmem:[%s1 + $0x90] sm:$0xff]
      %v325 = vld [vmem:[%s1 + $0x98] sm:$0xff]
      %v326 = vld [vmem:[%s1 + $0xa0] sm:$0xff]
      %v327 = vld [vmem:[%s1 + $0xa8] sm:$0xff]
      %v328 = vld [vmem:[%s1 + $0xb0] sm:$0xff]
      %v329 = vld [vmem:[%s1 + $0xb8] sm:$0xff]
      %v330 = vld [vmem:[%s1 + $0xc0] sm:$0xff]
      %v331 = vld [vmem:[%s1 + $0xc8] sm:$0xff]
      %v332 = vld [vmem:[%s1 + $0xd0] sm:$0xff]
      %v333 = vld [vmem:[%s1 + $0xd8] sm:$0xff]
      %v334 = vld [vmem:[%s1 + $0xe0] sm:$0xff]
      %v335 = vld [vmem:[%s1 + $0xe8] sm:$0xff]
      %v336 = vld [vmem:[%s1 + $0xf0] sm:$0xff]
      %v337 = vld [vmem:[%s1 + $0xf8] sm:$0xff]
      %v338 = vld [vmem:[%s1 + $0x100] sm:$0xff]
      %v339 = vld [vmem:[%s1 + $0x108] sm:$0xff]
      %v340 = vld [vmem:[%s1 + $0x110] sm:$0xff]
      %v341 = vld [vmem:[%s1 + $0x118] sm:$0xff]
      %v342 = vld [vmem:[%s1 + $0x120] sm:$0xff]
      %v343 = vld [vmem:[%s1 + $0x128] sm:$0xff]
      %v344 = vld [vmem:[%s1 + $0x130] sm:$0xff]
      %v345 = vld [vmem:[%s1 + $0x138] sm:$0xff]
      %v346 = vld [vmem:[%s1 + $0x140] sm:$0xff]
      %v347 = vld [vmem:[%s1 + $0x148] sm:$0xff]
      %v348 = vld [vmem:[%s1 + $0x150] sm:$0xff]
      %v349 = vld [vmem:[%s1 + $0x158] sm:$0xff]
      %v350 = vld [vmem:[%s1 + $0x160] sm:$0xff]
      %v351 = vld [vmem:[%s1 + $0x168] sm:$0xff]
      %v352 = vld [vmem:[%s1 + $0x170] sm:$0xff]
      %v353 = vld [vmem:[%s1 + $0x178] sm:$0xff]
      %v354 = vld [vmem:[%s1 + $0x180] sm:$0xff]
      %v355 = vld [vmem:[%s1 + $0x188] sm:$0xff]
      %v356 = vld [vmem:[%s1 + $0x190] sm:$0xff]
      %v357 = vld [vmem:[%s1 + $0x198] sm:$0xff]
      %v358 = vld [vmem:[%s1 + $0x1a0] sm:$0xff]
      %v359 = vld [vmem:[%s1 + $0x1a8] sm:$0xff]
      %v360 = vld [vmem:[%s1 + $0x1b0] sm:$0xff]
      %v361 = vld [vmem:[%s1 + $0x1b8] sm:$0xff]
      %v362 = vld [vmem:[%s1 + $0x1c0] sm:$0xff]
      %v363 = vld [vmem:[%s1 + $0x1c8] sm:$0xff]
      %v364 = vld [vmem:[%s1 + $0x1d0] sm:$0xff]
      %v365 = vld [vmem:[%s1 + $0x1d8] sm:$0xff]
      %v366 = vld [vmem:[%s1 + $0x1e0] sm:$0xff]
      %v367 = vld [vmem:[%s1 + $0x1e8] sm:$0xff]
      %v368 = vld [vmem:[%s1 + $0x1f0] sm:$0xff]
      %v369 = vld [vmem:[%s1 + $0x1f8] sm:$0xff]
      %v370 = vld [vmem:[%s2] sm:$0x3]
      %v372 = vperm.slane %v370, 0
      %v373 = vperm.slane %v370, 1
      %376 = vmatpush.msra.mxu0 %v336
      %377 = vmatpush.msra.mxu0 %v334
      %378 = vmatpush.msra.mxu0 %v332
      %379 = vmatpush.msra.mxu0 %v330
      %380 = vmatpush.msra.mxu0 %v328
      %381 = vmatpush.msra.mxu0 %v326
      %382 = vmatpush.msra.mxu0 %v324
      %383 = vmatpush.msra.mxu0 %v322
      %384 = vmatpush.msra.mxu0 %v320
      %385 = vmatpush.msra.mxu0 %v318
      %386 = vmatpush.msra.mxu0 %v316
      %387 = vmatpush.msra.mxu0 %v314
      %388 = vmatpush.msra.mxu0 %v312
      %389 = vmatpush.msra.mxu0 %v310
      %390 = vmatpush.msra.mxu0 %v308
      %391 = vmatpush.msra.mxu0 %v306
      %392 = vmatmul.f32.gmra.mxu0 %v242
      %v393 = vpop.f32.mrf.mxu0
      %v394 = vadd.f32 %v372, %v393
      %395 = vmatmul.f32.gmra.mxu0 %v244
      %v396 = vpop.f32.mrf.mxu0
      %v397 = vadd.f32 %v372, %v396
      %398 = vmatmul.f32.gmra.mxu0 %v246
      %v399 = vpop.f32.mrf.mxu0
      %v400 = vadd.f32 %v372, %v399
      %401 = vmatmul.f32.gmra.mxu0 %v248
      %v402 = vpop.f32.mrf.mxu0
      %v403 = vadd.f32 %v372, %v402
      %404 = vmatmul.f32.gmra.mxu0 %v250
      %v405 = vpop.f32.mrf.mxu0
      %v406 = vadd.f32 %v372, %v405
      %407 = vmatmul.f32.gmra.mxu0 %v252
      %v408 = vpop.f32.mrf.mxu0
      %v409 = vadd.f32 %v372, %v408
      %410 = vmatmul.f32.gmra.mxu0 %v254
      %v411 = vpop.f32.mrf.mxu0
      %v412 = vadd.f32 %v372, %v411
      %413 = vmatmul.f32.gmra.mxu0 %v256
      %v414 = vpop.f32.mrf.mxu0
      %v415 = vadd.f32 %v372, %v414
      %416 = vmatmul.f32.gmra.mxu0 %v258
      %v417 = vpop.f32.mrf.mxu0
      %v418 = vadd.f32 %v372, %v417
      %419 = vmatmul.f32.gmra.mxu0 %v260
      %v420 = vpop.f32.mrf.mxu0
      %v421 = vadd.f32 %v372, %v420
      %422 = vmatmul.f32.gmra.mxu0 %v262
      %v423 = vpop.f32.mrf.mxu0
      %v424 = vadd.f32 %v372, %v423
      %425 = vmatmul.f32.gmra.mxu0 %v264
      %v426 = vpop.f32.mrf.mxu0
      %v427 = vadd.f32 %v372, %v426
      %428 = vmatmul.f32.gmra.mxu0 %v266
      %v429 = vpop.f32.mrf.mxu0
      %v430 = vadd.f32 %v372, %v429
      %431 = vmatmul.f32.gmra.mxu0 %v268
      %v432 = vpop.f32.mrf.mxu0
      %v433 = vadd.f32 %v372, %v432
      %434 = vmatmul.f32.gmra.mxu0 %v270
      %v435 = vpop.f32.mrf.mxu0
      %v436 = vadd.f32 %v372, %v435
      %437 = vmatmul.f32.gmra.mxu0 %v272
      %v438 = vpop.f32.mrf.mxu0
      %v439 = vadd.f32 %v372, %v438
      %440 = vmatmul.f32.gmra.mxu0 %v274
      %v441 = vpop.f32.mrf.mxu0
      %v442 = vadd.f32 %v372, %v441
      %443 = vmatmul.f32.gmra.mxu0 %v276
      %v444 = vpop.f32.mrf.mxu0
      %v445 = vadd.f32 %v372, %v444
      %446 = vmatmul.f32.gmra.mxu0 %v278
      %v447 = vpop.f32.mrf.mxu0
      %v448 = vadd.f32 %v372, %v447
      %449 = vmatmul.f32.gmra.mxu0 %v280
      %v450 = vpop.f32.mrf.mxu0
      %v451 = vadd.f32 %v372, %v450
      %452 = vmatmul.f32.gmra.mxu0 %v282
      %v453 = vpop.f32.mrf.mxu0
      %v454 = vadd.f32 %v372, %v453
      %455 = vmatmul.f32.gmra.mxu0 %v284
      %v456 = vpop.f32.mrf.mxu0
      %v457 = vadd.f32 %v372, %v456
      %458 = vmatmul.f32.gmra.mxu0 %v286
      %v459 = vpop.f32.mrf.mxu0
      %v460 = vadd.f32 %v372, %v459
      %461 = vmatmul.f32.gmra.mxu0 %v288
      %v462 = vpop.f32.mrf.mxu0
      %v463 = vadd.f32 %v372, %v462
      %464 = vmatmul.f32.gmra.mxu0 %v290
      %v465 = vpop.f32.mrf.mxu0
      %v466 = vadd.f32 %v372, %v465
      %467 = vmatmul.f32.gmra.mxu0 %v292
      %v468 = vpop.f32.mrf.mxu0
      %v469 = vadd.f32 %v372, %v468
      %470 = vmatmul.f32.gmra.mxu0 %v294
      %v471 = vpop.f32.mrf.mxu0
      %v472 = vadd.f32 %v372, %v471
      %473 = vmatmul.f32.gmra.mxu0 %v296
      %v474 = vpop.f32.mrf.mxu0
      %v475 = vadd.f32 %v372, %v474
      %476 = vmatmul.f32.gmra.mxu0 %v298
      %v477 = vpop.f32.mrf.mxu0
      %v478 = vadd.f32 %v372, %v477
      %479 = vmatmul.f32.gmra.mxu0 %v300
      %v480 = vpop.f32.mrf.mxu0
      %v481 = vadd.f32 %v372, %v480
      %482 = vmatmul.f32.gmra.mxu0 %v302
      %v483 = vpop.f32.mrf.mxu0
      %v484 = vadd.f32 %v372, %v483
      %485 = vmatmul.f32.gmra.mxu0 %v304
      %v486 = vpop.f32.mrf.mxu0
      %v487 = vadd.f32 %v372, %v486
      %488 = vdwg.mxu0
      %489 = vmatpush.msra.mxu0 %v368
      %490 = vmatpush.msra.mxu0 %v366
      %491 = vmatpush.msra.mxu0 %v364
      %492 = vmatpush.msra.mxu0 %v362
      %493 = vmatpush.msra.mxu0 %v360
      %494 = vmatpush.msra.mxu0 %v358
      %495 = vmatpush.msra.mxu0 %v356
      %496 = vmatpush.msra.mxu0 %v354
      %497 = vmatpush.msra.mxu0 %v352
      %498 = vmatpush.msra.mxu0 %v350
      %499 = vmatpush.msra.mxu0 %v348
      %500 = vmatpush.msra.mxu0 %v346
      %501 = vmatpush.msra.mxu0 %v344
      %502 = vmatpush.msra.mxu0 %v342
      %503 = vmatpush.msra.mxu0 %v340
      %504 = vmatpush.msra.mxu0 %v338
      %505 = vmatmul.f32.gmra.mxu0 %v243
      %v506 = vpop.f32.mrf.mxu0
      %v507 = vadd.f32 %v394, %v506
      %508 = vmatmul.f32.gmra.mxu0 %v245
      %v509 = vpop.f32.mrf.mxu0
      %v510 = vadd.f32 %v397, %v509
      %511 = vmatmul.f32.gmra.mxu0 %v247
      %v512 = vpop.f32.mrf.mxu0
      %v513 = vadd.f32 %v400, %v512
      %514 = vmatmul.f32.gmra.mxu0 %v249
      %v515 = vpop.f32.mrf.mxu0
      %v516 = vadd.f32 %v403, %v515
      %517 = vmatmul.f32.gmra.mxu0 %v251
      %v518 = vpop.f32.mrf.mxu0
      %v519 = vadd.f32 %v406, %v518
      %520 = vmatmul.f32.gmra.mxu0 %v253
      %v521 = vpop.f32.mrf.mxu0
      %v522 = vadd.f32 %v409, %v521
      %523 = vmatmul.f32.gmra.mxu0 %v255
      %v524 = vpop.f32.mrf.mxu0
      %v525 = vadd.f32 %v412, %v524
      %526 = vmatmul.f32.gmra.mxu0 %v257
      %v527 = vpop.f32.mrf.mxu0
      %v528 = vadd.f32 %v415, %v527
      %529 = vmatmul.f32.gmra.mxu0 %v259
      %v530 = vpop.f32.mrf.mxu0
      %v531 = vadd.f32 %v418, %v530
      %532 = vmatmul.f32.gmra.mxu0 %v261
      %v533 = vpop.f32.mrf.mxu0
      %v534 = vadd.f32 %v421, %v533
      %535 = vmatmul.f32.gmra.mxu0 %v263
      %v536 = vpop.f32.mrf.mxu0
      %v537 = vadd.f32 %v424, %v536
      %538 = vmatmul.f32.gmra.mxu0 %v265
      %v539 = vpop.f32.mrf.mxu0
      %v540 = vadd.f32 %v427, %v539
      %541 = vmatmul.f32.gmra.mxu0 %v267
      %v542 = vpop.f32.mrf.mxu0
      %v543 = vadd.f32 %v430, %v542
      %544 = vmatmul.f32.gmra.mxu0 %v269
      %v545 = vpop.f32.mrf.mxu0
      %v546 = vadd.f32 %v433, %v545
      %547 = vmatmul.f32.gmra.mxu0 %v271
      %v548 = vpop.f32.mrf.mxu0
      %v549 = vadd.f32 %v436, %v548
      %550 = vmatmul.f32.gmra.mxu0 %v273
      %v551 = vpop.f32.mrf.mxu0
      %v552 = vadd.f32 %v439, %v551
      %553 = vmatmul.f32.gmra.mxu0 %v275
      %v554 = vpop.f32.mrf.mxu0
      %v555 = vadd.f32 %v442, %v554
      %556 = vmatmul.f32.gmra.mxu0 %v277
      %v557 = vpop.f32.mrf.mxu0
      %v558 = vadd.f32 %v445, %v557
      %559 = vmatmul.f32.gmra.mxu0 %v279
      %v560 = vpop.f32.mrf.mxu0
      %v561 = vadd.f32 %v448, %v560
      %562 = vmatmul.f32.gmra.mxu0 %v281
      %v563 = vpop.f32.mrf.mxu0
      %v564 = vadd.f32 %v451, %v563
      %565 = vmatmul.f32.gmra.mxu0 %v283
      %v566 = vpop.f32.mrf.mxu0
      %v567 = vadd.f32 %v454, %v566
      %568 = vmatmul.f32.gmra.mxu0 %v285
      %v569 = vpop.f32.mrf.mxu0
      %v570 = vadd.f32 %v457, %v569
      %571 = vmatmul.f32.gmra.mxu0 %v287
      %v572 = vpop.f32.mrf.mxu0
      %v573 = vadd.f32 %v460, %v572
      %574 = vmatmul.f32.gmra.mxu0 %v289
      %v575 = vpop.f32.mrf.mxu0
      %v576 = vadd.f32 %v463, %v575
      %577 = vmatmul.f32.gmra.mxu0 %v291
      %v578 = vpop.f32.mrf.mxu0
      %v579 = vadd.f32 %v466, %v578
      %580 = vmatmul.f32.gmra.mxu0 %v293
      %v581 = vpop.f32.mrf.mxu0
      %v582 = vadd.f32 %v469, %v581
      %583 = vmatmul.f32.gmra.mxu0 %v295
      %v584 = vpop.f32.mrf.mxu0
      %v585 = vadd.f32 %v472, %v584
      %586 = vmatmul.f32.gmra.mxu0 %v297
      %v587 = vpop.f32.mrf.mxu0
      %v588 = vadd.f32 %v475, %v587
      %589 = vmatmul.f32.gmra.mxu0 %v299
      %v590 = vpop.f32.mrf.mxu0
      %v591 = vadd.f32 %v478, %v590
      %592 = vmatmul.f32.gmra.mxu0 %v301
      %v593 = vpop.f32.mrf.mxu0
      %v594 = vadd.f32 %v481, %v593
      %595 = vmatmul.f32.gmra.mxu0 %v303
      %v596 = vpop.f32.mrf.mxu0
      %v597 = vadd.f32 %v484, %v596
      %598 = vmatmul.f32.gmra.mxu0 %v305
      %v599 = vpop.f32.mrf.mxu0
      %v600 = vadd.f32 %v487, %v599
      %601 = vdwg.mxu0
      %602 = vmatpush.msra.mxu0 %v337
      %603 = vmatpush.msra.mxu0 %v335
      %604 = vmatpush.msra.mxu0 %v333
      %605 = vmatpush.msra.mxu0 %v331
      %606 = vmatpush.msra.mxu0 %v329
      %607 = vmatpush.msra.mxu0 %v327
      %608 = vmatpush.msra.mxu0 %v325
      %609 = vmatpush.msra.mxu0 %v323
      %610 = vmatpush.msra.mxu0 %v321
      %611 = vmatpush.msra.mxu0 %v319
      %612 = vmatpush.msra.mxu0 %v317
      %613 = vmatpush.msra.mxu0 %v315
      %614 = vmatpush.msra.mxu0 %v313
      %615 = vmatpush.msra.mxu0 %v311
      %616 = vmatpush.msra.mxu0 %v309
      %617 = vmatpush.msra.mxu0 %v307
      %618 = vmatmul.f32.gmra.mxu0 %v242
      %v619 = vpop.f32.mrf.mxu0
      %v620 = vadd.f32 %v373, %v619
      %621 = vmatmul.f32.gmra.mxu0 %v244
      %v622 = vpop.f32.mrf.mxu0
      %v623 = vadd.f32 %v373, %v622
      %624 = vmatmul.f32.gmra.mxu0 %v246
      %v625 = vpop.f32.mrf.mxu0
      %v626 = vadd.f32 %v373, %v625
      %627 = vmatmul.f32.gmra.mxu0 %v248
      %v628 = vpop.f32.mrf.mxu0
      %v629 = vadd.f32 %v373, %v628
      %630 = vmatmul.f32.gmra.mxu0 %v250
      %v631 = vpop.f32.mrf.mxu0
      %v632 = vadd.f32 %v373, %v631
      %633 = vmatmul.f32.gmra.mxu0 %v252
      %v634 = vpop.f32.mrf.mxu0
      %v635 = vadd.f32 %v373, %v634
      %636 = vmatmul.f32.gmra.mxu0 %v254
      %v637 = vpop.f32.mrf.mxu0
      %v638 = vadd.f32 %v373, %v637
      %639 = vmatmul.f32.gmra.mxu0 %v256
      %v640 = vpop.f32.mrf.mxu0
      %v641 = vadd.f32 %v373, %v640
      %642 = vmatmul.f32.gmra.mxu0 %v258
      %v643 = vpop.f32.mrf.mxu0
      %v644 = vadd.f32 %v373, %v643
      %645 = vmatmul.f32.gmra.mxu0 %v260
      %v646 = vpop.f32.mrf.mxu0
      %v647 = vadd.f32 %v373, %v646
      %648 = vmatmul.f32.gmra.mxu0 %v262
      %v649 = vpop.f32.mrf.mxu0
      %v650 = vadd.f32 %v373, %v649
      %651 = vmatmul.f32.gmra.mxu0 %v264
      %v652 = vpop.f32.mrf.mxu0
      %v653 = vadd.f32 %v373, %v652
      %654 = vmatmul.f32.gmra.mxu0 %v266
      %v655 = vpop.f32.mrf.mxu0
      %v656 = vadd.f32 %v373, %v655
      %657 = vmatmul.f32.gmra.mxu0 %v268
      %v658 = vpop.f32.mrf.mxu0
      %v659 = vadd.f32 %v373, %v658
      %660 = vmatmul.f32.gmra.mxu0 %v270
      %v661 = vpop.f32.mrf.mxu0
      %v662 = vadd.f32 %v373, %v661
      %663 = vmatmul.f32.gmra.mxu0 %v272
      %v664 = vpop.f32.mrf.mxu0
      %v665 = vadd.f32 %v373, %v664
      %666 = vmatmul.f32.gmra.mxu0 %v274
      %v667 = vpop.f32.mrf.mxu0
      %v668 = vadd.f32 %v373, %v667
      %669 = vmatmul.f32.gmra.mxu0 %v276
      %v670 = vpop.f32.mrf.mxu0
      %v671 = vadd.f32 %v373, %v670
      %672 = vmatmul.f32.gmra.mxu0 %v278
      %v673 = vpop.f32.mrf.mxu0
      %v674 = vadd.f32 %v373, %v673
      %675 = vmatmul.f32.gmra.mxu0 %v280
      %v676 = vpop.f32.mrf.mxu0
      %v677 = vadd.f32 %v373, %v676
      %678 = vmatmul.f32.gmra.mxu0 %v282
      %v679 = vpop.f32.mrf.mxu0
      %v680 = vadd.f32 %v373, %v679
      %681 = vmatmul.f32.gmra.mxu0 %v284
      %v682 = vpop.f32.mrf.mxu0
      %v683 = vadd.f32 %v373, %v682
      %684 = vmatmul.f32.gmra.mxu0 %v286
      %v685 = vpop.f32.mrf.mxu0
      %v686 = vadd.f32 %v373, %v685
      %687 = vmatmul.f32.gmra.mxu0 %v288
      %v688 = vpop.f32.mrf.mxu0
      %v689 = vadd.f32 %v373, %v688
      %690 = vmatmul.f32.gmra.mxu0 %v290
      %v691 = vpop.f32.mrf.mxu0
      %v692 = vadd.f32 %v373, %v691
      %693 = vmatmul.f32.gmra.mxu0 %v292
      %v694 = vpop.f32.mrf.mxu0
      %v695 = vadd.f32 %v373, %v694
      %696 = vmatmul.f32.gmra.mxu0 %v294
      %v697 = vpop.f32.mrf.mxu0
      %v698 = vadd.f32 %v373, %v697
      %699 = vmatmul.f32.gmra.mxu0 %v296
      %v700 = vpop.f32.mrf.mxu0
      %v701 = vadd.f32 %v373, %v700
      %702 = vmatmul.f32.gmra.mxu0 %v298
      %v703 = vpop.f32.mrf.mxu0
      %v704 = vadd.f32 %v373, %v703
      %705 = vmatmul.f32.gmra.mxu0 %v300
      %v706 = vpop.f32.mrf.mxu0
      %v707 = vadd.f32 %v373, %v706
      %708 = vmatmul.f32.gmra.mxu0 %v302
      %v709 = vpop.f32.mrf.mxu0
      %v710 = vadd.f32 %v373, %v709
      %711 = vmatmul.f32.gmra.mxu0 %v304
      %v712 = vpop.f32.mrf.mxu0
      %v713 = vadd.f32 %v373, %v712
      %714 = vdwg.mxu0
      %715 = vmatpush.msra.mxu0 %v369
      %716 = vmatpush.msra.mxu0 %v367
      %717 = vmatpush.msra.mxu0 %v365
      %718 = vmatpush.msra.mxu0 %v363
      %719 = vmatpush.msra.mxu0 %v361
      %720 = vmatpush.msra.mxu0 %v359
      %721 = vmatpush.msra.mxu0 %v357
      %722 = vmatpush.msra.mxu0 %v355
      %723 = vmatpush.msra.mxu0 %v353
      %724 = vmatpush.msra.mxu0 %v351
      %725 = vmatpush.msra.mxu0 %v349
      %726 = vmatpush.msra.mxu0 %v347
      %727 = vmatpush.msra.mxu0 %v345
      %728 = vmatpush.msra.mxu0 %v343
      %729 = vmatpush.msra.mxu0 %v341
      %730 = vmatpush.msra.mxu0 %v339
      %731 = vmatmul.f32.gmra.mxu0 %v243
      %v732 = vpop.f32.mrf.mxu0
      %v733 = vadd.f32 %v620, %v732
      %734 = vmatmul.f32.gmra.mxu0 %v245
      %v735 = vpop.f32.mrf.mxu0
      %v736 = vadd.f32 %v623, %v735
      %737 = vmatmul.f32.gmra.mxu0 %v247
      %v738 = vpop.f32.mrf.mxu0
      %v739 = vadd.f32 %v626, %v738
      %740 = vmatmul.f32.gmra.mxu0 %v249
      %v741 = vpop.f32.mrf.mxu0
      %v742 = vadd.f32 %v629, %v741
      %743 = vmatmul.f32.gmra.mxu0 %v251
      %v744 = vpop.f32.mrf.mxu0
      %v745 = vadd.f32 %v632, %v744
      %746 = vmatmul.f32.gmra.mxu0 %v253
      %v747 = vpop.f32.mrf.mxu0
      %v748 = vadd.f32 %v635, %v747
      %749 = vmatmul.f32.gmra.mxu0 %v255
      %v750 = vpop.f32.mrf.mxu0
      %v751 = vadd.f32 %v638, %v750
      %752 = vmatmul.f32.gmra.mxu0 %v257
      %v753 = vpop.f32.mrf.mxu0
      %v754 = vadd.f32 %v641, %v753
      %755 = vmatmul.f32.gmra.mxu0 %v259
      %v756 = vpop.f32.mrf.mxu0
      %v757 = vadd.f32 %v644, %v756
      %758 = vmatmul.f32.gmra.mxu0 %v261
      %v759 = vpop.f32.mrf.mxu0
      %v760 = vadd.f32 %v647, %v759
      %761 = vmatmul.f32.gmra.mxu0 %v263
      %v762 = vpop.f32.mrf.mxu0
      %v763 = vadd.f32 %v650, %v762
      %764 = vmatmul.f32.gmra.mxu0 %v265
      %v765 = vpop.f32.mrf.mxu0
      %v766 = vadd.f32 %v653, %v765
      %767 = vmatmul.f32.gmra.mxu0 %v267
      %v768 = vpop.f32.mrf.mxu0
      %v769 = vadd.f32 %v656, %v768
      %770 = vmatmul.f32.gmra.mxu0 %v269
      %v771 = vpop.f32.mrf.mxu0
      %v772 = vadd.f32 %v659, %v771
      %773 = vmatmul.f32.gmra.mxu0 %v271
      %v774 = vpop.f32.mrf.mxu0
      %v775 = vadd.f32 %v662, %v774
      %776 = vmatmul.f32.gmra.mxu0 %v273
      %v777 = vpop.f32.mrf.mxu0
      %v778 = vadd.f32 %v665, %v777
      %779 = vmatmul.f32.gmra.mxu0 %v275
      %v780 = vpop.f32.mrf.mxu0
      %v781 = vadd.f32 %v668, %v780
      %782 = vmatmul.f32.gmra.mxu0 %v277
      %v783 = vpop.f32.mrf.mxu0
      %v784 = vadd.f32 %v671, %v783
      %785 = vmatmul.f32.gmra.mxu0 %v279
      %v786 = vpop.f32.mrf.mxu0
      %v787 = vadd.f32 %v674, %v786
      %788 = vmatmul.f32.gmra.mxu0 %v281
      %v789 = vpop.f32.mrf.mxu0
      %v790 = vadd.f32 %v677, %v789
      %791 = vmatmul.f32.gmra.mxu0 %v283
      %v792 = vpop.f32.mrf.mxu0
      %v793 = vadd.f32 %v680, %v792
      %794 = vmatmul.f32.gmra.mxu0 %v285
      %v795 = vpop.f32.mrf.mxu0
      %v796 = vadd.f32 %v683, %v795
      %797 = vmatmul.f32.gmra.mxu0 %v287
      %v798 = vpop.f32.mrf.mxu0
      %v799 = vadd.f32 %v686, %v798
      %800 = vmatmul.f32.gmra.mxu0 %v289
      %v801 = vpop.f32.mrf.mxu0
      %v802 = vadd.f32 %v689, %v801
      %803 = vmatmul.f32.gmra.mxu0 %v291
      %v804 = vpop.f32.mrf.mxu0
      %v805 = vadd.f32 %v692, %v804
      %806 = vmatmul.f32.gmra.mxu0 %v293
      %v807 = vpop.f32.mrf.mxu0
      %v808 = vadd.f32 %v695, %v807
      %809 = vmatmul.f32.gmra.mxu0 %v295
      %v810 = vpop.f32.mrf.mxu0
      %v811 = vadd.f32 %v698, %v810
      %812 = vmatmul.f32.gmra.mxu0 %v297
      %v813 = vpop.f32.mrf.mxu0
      %v814 = vadd.f32 %v701, %v813
      %815 = vmatmul.f32.gmra.mxu0 %v299
      %v816 = vpop.f32.mrf.mxu0
      %v817 = vadd.f32 %v704, %v816
      %818 = vmatmul.f32.gmra.mxu0 %v301
      %v819 = vpop.f32.mrf.mxu0
      %v820 = vadd.f32 %v707, %v819
      %821 = vmatmul.f32.gmra.mxu0 %v303
      %v822 = vpop.f32.mrf.mxu0
      %v823 = vadd.f32 %v710, %v822
      %824 = vmatmul.f32.gmra.mxu0 %v305
      %v825 = vpop.f32.mrf.mxu0
      %v826 = vadd.f32 %v713, %v825
      %827 = vdwg.mxu0
      %v828 = vmul.f32 %v507, %v507
      %v829 = vmul.f32 %v733, %v733
      %v830 = vmul.f32 %v510, %v510
      %v831 = vmul.f32 %v736, %v736
      %v832 = vmul.f32 %v513, %v513
      %v833 = vmul.f32 %v739, %v739
      %v834 = vmul.f32 %v516, %v516
      %v835 = vmul.f32 %v742, %v742
      %v836 = vmul.f32 %v519, %v519
      %v837 = vmul.f32 %v745, %v745
      %v838 = vmul.f32 %v522, %v522
      %v839 = vmul.f32 %v748, %v748
      %v840 = vmul.f32 %v525, %v525
      %v841 = vmul.f32 %v751, %v751
      %v842 = vmul.f32 %v528, %v528
      %v843 = vmul.f32 %v754, %v754
      %v844 = vmul.f32 %v531, %v531
      %v845 = vmul.f32 %v757, %v757
      %v846 = vmul.f32 %v534, %v534
      %v847 = vmul.f32 %v760, %v760
      %v848 = vmul.f32 %v537, %v537
      %v849 = vmul.f32 %v763, %v763
      %v850 = vmul.f32 %v540, %v540
      %v851 = vmul.f32 %v766, %v766
      %v852 = vmul.f32 %v543, %v543
      %v853 = vmul.f32 %v769, %v769
      %v854 = vmul.f32 %v546, %v546
      %v855 = vmul.f32 %v772, %v772
      %v856 = vmul.f32 %v549, %v549
      %v857 = vmul.f32 %v775, %v775
      %v858 = vmul.f32 %v552, %v552
      %v859 = vmul.f32 %v778, %v778
      %v860 = vmul.f32 %v555, %v555
      %v861 = vmul.f32 %v781, %v781
      %v862 = vmul.f32 %v558, %v558
      %v863 = vmul.f32 %v784, %v784
      %v864 = vmul.f32 %v561, %v561
      %v865 = vmul.f32 %v787, %v787
      %v866 = vmul.f32 %v564, %v564
      %v867 = vmul.f32 %v790, %v790
      %v868 = vmul.f32 %v567, %v567
      %v869 = vmul.f32 %v793, %v793
      %v870 = vmul.f32 %v570, %v570
      %v871 = vmul.f32 %v796, %v796
      %v872 = vmul.f32 %v573, %v573
      %v873 = vmul.f32 %v799, %v799
      %v874 = vmul.f32 %v576, %v576
      %v875 = vmul.f32 %v802, %v802
      %v876 = vmul.f32 %v579, %v579
      %v877 = vmul.f32 %v805, %v805
      %v878 = vmul.f32 %v582, %v582
      %v879 = vmul.f32 %v808, %v808
      %v880 = vmul.f32 %v585, %v585
      %v881 = vmul.f32 %v811, %v811
      %v882 = vmul.f32 %v588, %v588
      %v883 = vmul.f32 %v814, %v814
      %v884 = vmul.f32 %v591, %v591
      %v885 = vmul.f32 %v817, %v817
      %v886 = vmul.f32 %v594, %v594
      %v887 = vmul.f32 %v820, %v820
      %v888 = vmul.f32 %v597, %v597
      %v889 = vmul.f32 %v823, %v823
      %v890 = vmul.f32 %v600, %v600
      %v891 = vmul.f32 %v826, %v826
      %v892 = vadd.f32 %v828, %v829
      %893 = vadd.xlane.f32.xlu0 %v892
      %v894 = vpop.xlane.xlu0 %893
      %v895 = vadd.f32 %v830, %v831
      %896 = vadd.xlane.f32.xlu0 %v895
      %v897 = vpop.xlane.xlu0 %896
      %v898 = vadd.f32 %v832, %v833
      %899 = vadd.xlane.f32.xlu0 %v898
      %v900 = vpop.xlane.xlu0 %899
      %v901 = vadd.f32 %v834, %v835
      %902 = vadd.xlane.f32.xlu0 %v901
      %v903 = vpop.xlane.xlu0 %902
      %v904 = vadd.f32 %v836, %v837
      %905 = vadd.xlane.f32.xlu0 %v904
      %v906 = vpop.xlane.xlu0 %905
      %v907 = vadd.f32 %v838, %v839
      %908 = vadd.xlane.f32.xlu0 %v907
      %v909 = vpop.xlane.xlu0 %908
      %v910 = vadd.f32 %v840, %v841
      %911 = vadd.xlane.f32.xlu0 %v910
      %v912 = vpop.xlane.xlu0 %911
      %v913 = vadd.f32 %v842, %v843
      %914 = vadd.xlane.f32.xlu0 %v913
      %v915 = vpop.xlane.xlu0 %914
      %v916 = vadd.f32 %v844, %v845
      %917 = vadd.xlane.f32.xlu0 %v916
      %v918 = vpop.xlane.xlu0 %917
      %v919 = vadd.f32 %v846, %v847
      %920 = vadd.xlane.f32.xlu0 %v919
      %v921 = vpop.xlane.xlu0 %920
      %v922 = vadd.f32 %v848, %v849
      %923 = vadd.xlane.f32.xlu0 %v922
      %v924 = vpop.xlane.xlu0 %923
      %v925 = vadd.f32 %v850, %v851
      %926 = vadd.xlane.f32.xlu0 %v925
      %v927 = vpop.xlane.xlu0 %926
      %v928 = vadd.f32 %v852, %v853
      %929 = vadd.xlane.f32.xlu0 %v928
      %v930 = vpop.xlane.xlu0 %929
      %v931 = vadd.f32 %v854, %v855
      %932 = vadd.xlane.f32.xlu0 %v931
      %v933 = vpop.xlane.xlu0 %932
      %v934 = vadd.f32 %v856, %v857
      %935 = vadd.xlane.f32.xlu0 %v934
      %v936 = vpop.xlane.xlu0 %935
      %v937 = vadd.f32 %v858, %v859
      %938 = vadd.xlane.f32.xlu0 %v937
      %v939 = vpop.xlane.xlu0 %938
      %v940 = vadd.f32 %v860, %v861
      %941 = vadd.xlane.f32.xlu0 %v940
      %v942 = vpop.xlane.xlu0 %941
      %v943 = vadd.f32 %v862, %v863
      %944 = vadd.xlane.f32.xlu0 %v943
      %v945 = vpop.xlane.xlu0 %944
      %v946 = vadd.f32 %v864, %v865
      %947 = vadd.xlane.f32.xlu0 %v946
      %v948 = vpop.xlane.xlu0 %947
      %v949 = vadd.f32 %v866, %v867
      %950 = vadd.xlane.f32.xlu0 %v949
      %v951 = vpop.xlane.xlu0 %950
      %v952 = vadd.f32 %v868, %v869
      %953 = vadd.xlane.f32.xlu0 %v952
      %v954 = vpop.xlane.xlu0 %953
      %v955 = vadd.f32 %v870, %v871
      %956 = vadd.xlane.f32.xlu0 %v955
      %v957 = vpop.xlane.xlu0 %956
      %v958 = vadd.f32 %v872, %v873
      %959 = vadd.xlane.f32.xlu0 %v958
      %v960 = vpop.xlane.xlu0 %959
      %v961 = vadd.f32 %v874, %v875
      %962 = vadd.xlane.f32.xlu0 %v961
      %v963 = vpop.xlane.xlu0 %962
      %v964 = vadd.f32 %v876, %v877
      %965 = vadd.xlane.f32.xlu0 %v964
      %v966 = vpop.xlane.xlu0 %965
      %v967 = vadd.f32 %v878, %v879
      %968 = vadd.xlane.f32.xlu0 %v967
      %v969 = vpop.xlane.xlu0 %968
      %v970 = vadd.f32 %v880, %v881
      %971 = vadd.xlane.f32.xlu0 %v970
      %v972 = vpop.xlane.xlu0 %971
      %v973 = vadd.f32 %v882, %v883
      %974 = vadd.xlane.f32.xlu0 %v973
      %v975 = vpop.xlane.xlu0 %974
      %v976 = vadd.f32 %v884, %v885
      %977 = vadd.xlane.f32.xlu0 %v976
      %v978 = vpop.xlane.xlu0 %977
      %v979 = vadd.f32 %v886, %v887
      %980 = vadd.xlane.f32.xlu0 %v979
      %v981 = vpop.xlane.xlu0 %980
      %v982 = vadd.f32 %v888, %v889
      %983 = vadd.xlane.f32.xlu0 %v982
      %v984 = vpop.xlane.xlu0 %983
      %v985 = vadd.f32 %v890, %v891
      %986 = vadd.xlane.f32.xlu0 %v985
      %v987 = vpop.xlane.xlu0 %986
      %v988 = vrcp.pop 256.0
      %v989 = vmul.f32 256.0, %v988
      %v990 = vsub.f32 1.0, %v989
      %v991 = vmul.f32 %v988, %v990
      %v992 = vadd.f32 %v988, %v991
      %vm993 = vweird.f32 %v988
      %v994 = vsel %vm993, %v988, %v992
      %v995 = vmul.f32 %v894, %v994
      %v996 = vmul.f32 %v897, %v994
      %v997 = vmul.f32 %v900, %v994
      %v998 = vmul.f32 %v903, %v994
      %v999 = vmul.f32 %v906, %v994
      %v1000 = vmul.f32 %v909, %v994
      %v1001 = vmul.f32 %v912, %v994
      %v1002 = vmul.f32 %v915, %v994
      %v1003 = vmul.f32 %v918, %v994
      %v1004 = vmul.f32 %v921, %v994
      %v1005 = vmul.f32 %v924, %v994
      %v1006 = vmul.f32 %v927, %v994
      %v1007 = vmul.f32 %v930, %v994
      %v1008 = vmul.f32 %v933, %v994
      %v1009 = vmul.f32 %v936, %v994
      %v1010 = vmul.f32 %v939, %v994
      %v1011 = vmul.f32 %v942, %v994
      %v1012 = vmul.f32 %v945, %v994
      %v1013 = vmul.f32 %v948, %v994
      %v1014 = vmul.f32 %v951, %v994
      %v1015 = vmul.f32 %v954, %v994
      %v1016 = vmul.f32 %v957, %v994
      %v1017 = vmul.f32 %v960, %v994
      %v1018 = vmul.f32 %v963, %v994
      %v1019 = vmul.f32 %v966, %v994
      %v1020 = vmul.f32 %v969, %v994
      %v1021 = vmul.f32 %v972, %v994
      %v1022 = vmul.f32 %v975, %v994
      %v1023 = vmul.f32 %v978, %v994
      %v1024 = vmul.f32 %v981, %v994
      %v1025 = vmul.f32 %v984, %v994
      %v1026 = vmul.f32 %v987, %v994
      %v1027 = vadd.f32 %v995, 1e-06
      %v1028 = vadd.f32 %v996, 1e-06
      %v1029 = vadd.f32 %v997, 1e-06
      %v1030 = vadd.f32 %v998, 1e-06
      %v1031 = vadd.f32 %v999, 1e-06
      %v1032 = vadd.f32 %v1000, 1e-06
      %v1033 = vadd.f32 %v1001, 1e-06
      %v1034 = vadd.f32 %v1002, 1e-06
      %v1035 = vadd.f32 %v1003, 1e-06
      %v1036 = vadd.f32 %v1004, 1e-06
      %v1037 = vadd.f32 %v1005, 1e-06
      %v1038 = vadd.f32 %v1006, 1e-06
      %v1039 = vadd.f32 %v1007, 1e-06
      %v1040 = vadd.f32 %v1008, 1e-06
      %v1041 = vadd.f32 %v1009, 1e-06
      %v1042 = vadd.f32 %v1010, 1e-06
      %v1043 = vadd.f32 %v1011, 1e-06
      %v1044 = vadd.f32 %v1012, 1e-06
      %v1045 = vadd.f32 %v1013, 1e-06
      %v1046 = vadd.f32 %v1014, 1e-06
      %v1047 = vadd.f32 %v1015, 1e-06
      %v1048 = vadd.f32 %v1016, 1e-06
      %v1049 = vadd.f32 %v1017, 1e-06
      %v1050 = vadd.f32 %v1018, 1e-06
      %v1051 = vadd.f32 %v1019, 1e-06
      %v1052 = vadd.f32 %v1020, 1e-06
      %v1053 = vadd.f32 %v1021, 1e-06
      %v1054 = vadd.f32 %v1022, 1e-06
      %v1055 = vadd.f32 %v1023, 1e-06
      %v1056 = vadd.f32 %v1024, 1e-06
      %v1057 = vadd.f32 %v1025, 1e-06
      %v1058 = vadd.f32 %v1026, 1e-06
      %v1059 = vrsqrt.pop %v1027
      %v1060 = vmul.f32 %v1059, %v1027
      %v1061 = vmul.f32 %v1060, %v1059
      %v1062 = vmul.f32 0.5, %v1061
      %v1063 = vsub.f32 1.5, %v1062
      %v1064 = vmul.f32 %v1059, %v1063
      %vm1065 = vweird.f32 %v1027
      %vm1066 = vweird.f32 %v1059
      %vm1067 = vmor %vm1065, %vm1066
      %v1068 = vsel %vm1067, %v1059, %v1064
      %v1069 = vrsqrt.pop %v1028
      %v1070 = vmul.f32 %v1069, %v1028
      %v1071 = vmul.f32 %v1070, %v1069
      %v1072 = vmul.f32 0.5, %v1071
      %v1073 = vsub.f32 1.5, %v1072
      %v1074 = vmul.f32 %v1069, %v1073
      %vm1075 = vweird.f32 %v1028
      %vm1076 = vweird.f32 %v1069
      %vm1077 = vmor %vm1075, %vm1076
      %v1078 = vsel %vm1077, %v1069, %v1074
      %v1079 = vrsqrt.pop %v1029
      %v1080 = vmul.f32 %v1079, %v1029
      %v1081 = vmul.f32 %v1080, %v1079
      %v1082 = vmul.f32 0.5, %v1081
      %v1083 = vsub.f32 1.5, %v1082
      %v1084 = vmul.f32 %v1079, %v1083
      %vm1085 = vweird.f32 %v1029
      %vm1086 = vweird.f32 %v1079
      %vm1087 = vmor %vm1085, %vm1086
      %v1088 = vsel %vm1087, %v1079, %v1084
      %v1089 = vrsqrt.pop %v1030
      %v1090 = vmul.f32 %v1089, %v1030
      %v1091 = vmul.f32 %v1090, %v1089
      %v1092 = vmul.f32 0.5, %v1091
      %v1093 = vsub.f32 1.5, %v1092
      %v1094 = vmul.f32 %v1089, %v1093
      %vm1095 = vweird.f32 %v1030
      %vm1096 = vweird.f32 %v1089
      %vm1097 = vmor %vm1095, %vm1096
      %v1098 = vsel %vm1097, %v1089, %v1094
      %v1099 = vrsqrt.pop %v1031
      %v1100 = vmul.f32 %v1099, %v1031
      %v1101 = vmul.f32 %v1100, %v1099
      %v1102 = vmul.f32 0.5, %v1101
      %v1103 = vsub.f32 1.5, %v1102
      %v1104 = vmul.f32 %v1099, %v1103
      %vm1105 = vweird.f32 %v1031
      %vm1106 = vweird.f32 %v1099
      %vm1107 = vmor %vm1105, %vm1106
      %v1108 = vsel %vm1107, %v1099, %v1104
      %v1109 = vrsqrt.pop %v1032
      %v1110 = vmul.f32 %v1109, %v1032
      %v1111 = vmul.f32 %v1110, %v1109
      %v1112 = vmul.f32 0.5, %v1111
      %v1113 = vsub.f32 1.5, %v1112
      %v1114 = vmul.f32 %v1109, %v1113
      %vm1115 = vweird.f32 %v1032
      %vm1116 = vweird.f32 %v1109
      %vm1117 = vmor %vm1115, %vm1116
      %v1118 = vsel %vm1117, %v1109, %v1114
      %v1119 = vrsqrt.pop %v1033
      %v1120 = vmul.f32 %v1119, %v1033
      %v1121 = vmul.f32 %v1120, %v1119
      %v1122 = vmul.f32 0.5, %v1121
      %v1123 = vsub.f32 1.5, %v1122
      %v1124 = vmul.f32 %v1119, %v1123
      %vm1125 = vweird.f32 %v1033
      %vm1126 = vweird.f32 %v1119
      %vm1127 = vmor %vm1125, %vm1126
      %v1128 = vsel %vm1127, %v1119, %v1124
      %v1129 = vrsqrt.pop %v1034
      %v1130 = vmul.f32 %v1129, %v1034
      %v1131 = vmul.f32 %v1130, %v1129
      %v1132 = vmul.f32 0.5, %v1131
      %v1133 = vsub.f32 1.5, %v1132
      %v1134 = vmul.f32 %v1129, %v1133
      %vm1135 = vweird.f32 %v1034
      %vm1136 = vweird.f32 %v1129
      %vm1137 = vmor %vm1135, %vm1136
      %v1138 = vsel %vm1137, %v1129, %v1134
      %v1139 = vrsqrt.pop %v1035
      %v1140 = vmul.f32 %v1139, %v1035
      %v1141 = vmul.f32 %v1140, %v1139
      %v1142 = vmul.f32 0.5, %v1141
      %v1143 = vsub.f32 1.5, %v1142
      %v1144 = vmul.f32 %v1139, %v1143
      %vm1145 = vweird.f32 %v1035
      %vm1146 = vweird.f32 %v1139
      %vm1147 = vmor %vm1145, %vm1146
      %v1148 = vsel %vm1147, %v1139, %v1144
      %v1149 = vrsqrt.pop %v1036
      %v1150 = vmul.f32 %v1149, %v1036
      %v1151 = vmul.f32 %v1150, %v1149
      %v1152 = vmul.f32 0.5, %v1151
      %v1153 = vsub.f32 1.5, %v1152
      %v1154 = vmul.f32 %v1149, %v1153
      %vm1155 = vweird.f32 %v1036
      %vm1156 = vweird.f32 %v1149
      %vm1157 = vmor %vm1155, %vm1156
      %v1158 = vsel %vm1157, %v1149, %v1154
      %v1159 = vrsqrt.pop %v1037
      %v1160 = vmul.f32 %v1159, %v1037
      %v1161 = vmul.f32 %v1160, %v1159
      %v1162 = vmul.f32 0.5, %v1161
      %v1163 = vsub.f32 1.5, %v1162
      %v1164 = vmul.f32 %v1159, %v1163
      %vm1165 = vweird.f32 %v1037
      %vm1166 = vweird.f32 %v1159
      %vm1167 = vmor %vm1165, %vm1166
      %v1168 = vsel %vm1167, %v1159, %v1164
      %v1169 = vrsqrt.pop %v1038
      %v1170 = vmul.f32 %v1169, %v1038
      %v1171 = vmul.f32 %v1170, %v1169
      %v1172 = vmul.f32 0.5, %v1171
      %v1173 = vsub.f32 1.5, %v1172
      %v1174 = vmul.f32 %v1169, %v1173
      %vm1175 = vweird.f32 %v1038
      %vm1176 = vweird.f32 %v1169
      %vm1177 = vmor %vm1175, %vm1176
      %v1178 = vsel %vm1177, %v1169, %v1174
      %v1179 = vrsqrt.pop %v1039
      %v1180 = vmul.f32 %v1179, %v1039
      %v1181 = vmul.f32 %v1180, %v1179
      %v1182 = vmul.f32 0.5, %v1181
      %v1183 = vsub.f32 1.5, %v1182
      %v1184 = vmul.f32 %v1179, %v1183
      %vm1185 = vweird.f32 %v1039
      %vm1186 = vweird.f32 %v1179
      %vm1187 = vmor %vm1185, %vm1186
      %v1188 = vsel %vm1187, %v1179, %v1184
      %v1189 = vrsqrt.pop %v1040
      %v1190 = vmul.f32 %v1189, %v1040
      %v1191 = vmul.f32 %v1190, %v1189
      %v1192 = vmul.f32 0.5, %v1191
      %v1193 = vsub.f32 1.5, %v1192
      %v1194 = vmul.f32 %v1189, %v1193
      %vm1195 = vweird.f32 %v1040
      %vm1196 = vweird.f32 %v1189
      %vm1197 = vmor %vm1195, %vm1196
      %v1198 = vsel %vm1197, %v1189, %v1194
      %v1199 = vrsqrt.pop %v1041
      %v1200 = vmul.f32 %v1199, %v1041
      %v1201 = vmul.f32 %v1200, %v1199
      %v1202 = vmul.f32 0.5, %v1201
      %v1203 = vsub.f32 1.5, %v1202
      %v1204 = vmul.f32 %v1199, %v1203
      %vm1205 = vweird.f32 %v1041
      %vm1206 = vweird.f32 %v1199
      %vm1207 = vmor %vm1205, %vm1206
      %v1208 = vsel %vm1207, %v1199, %v1204
      %v1209 = vrsqrt.pop %v1042
      %v1210 = vmul.f32 %v1209, %v1042
      %v1211 = vmul.f32 %v1210, %v1209
      %v1212 = vmul.f32 0.5, %v1211
      %v1213 = vsub.f32 1.5, %v1212
      %v1214 = vmul.f32 %v1209, %v1213
      %vm1215 = vweird.f32 %v1042
      %vm1216 = vweird.f32 %v1209
      %vm1217 = vmor %vm1215, %vm1216
      %v1218 = vsel %vm1217, %v1209, %v1214
      %v1219 = vrsqrt.pop %v1043
      %v1220 = vmul.f32 %v1219, %v1043
      %v1221 = vmul.f32 %v1220, %v1219
      %v1222 = vmul.f32 0.5, %v1221
      %v1223 = vsub.f32 1.5, %v1222
      %v1224 = vmul.f32 %v1219, %v1223
      %vm1225 = vweird.f32 %v1043
      %vm1226 = vweird.f32 %v1219
      %vm1227 = vmor %vm1225, %vm1226
      %v1228 = vsel %vm1227, %v1219, %v1224
      %v1229 = vrsqrt.pop %v1044
      %v1230 = vmul.f32 %v1229, %v1044
      %v1231 = vmul.f32 %v1230, %v1229
      %v1232 = vmul.f32 0.5, %v1231
      %v1233 = vsub.f32 1.5, %v1232
      %v1234 = vmul.f32 %v1229, %v1233
      %vm1235 = vweird.f32 %v1044
      %vm1236 = vweird.f32 %v1229
      %vm1237 = vmor %vm1235, %vm1236
      %v1238 = vsel %vm1237, %v1229, %v1234
      %v1239 = vrsqrt.pop %v1045
      %v1240 = vmul.f32 %v1239, %v1045
      %v1241 = vmul.f32 %v1240, %v1239
      %v1242 = vmul.f32 0.5, %v1241
      %v1243 = vsub.f32 1.5, %v1242
      %v1244 = vmul.f32 %v1239, %v1243
      %vm1245 = vweird.f32 %v1045
      %vm1246 = vweird.f32 %v1239
      %vm1247 = vmor %vm1245, %vm1246
      %v1248 = vsel %vm1247, %v1239, %v1244
      %v1249 = vrsqrt.pop %v1046
      %v1250 = vmul.f32 %v1249, %v1046
      %v1251 = vmul.f32 %v1250, %v1249
      %v1252 = vmul.f32 0.5, %v1251
      %v1253 = vsub.f32 1.5, %v1252
      %v1254 = vmul.f32 %v1249, %v1253
      %vm1255 = vweird.f32 %v1046
      %vm1256 = vweird.f32 %v1249
      %vm1257 = vmor %vm1255, %vm1256
      %v1258 = vsel %vm1257, %v1249, %v1254
      %v1259 = vrsqrt.pop %v1047
      %v1260 = vmul.f32 %v1259, %v1047
      %v1261 = vmul.f32 %v1260, %v1259
      %v1262 = vmul.f32 0.5, %v1261
      %v1263 = vsub.f32 1.5, %v1262
      %v1264 = vmul.f32 %v1259, %v1263
      %vm1265 = vweird.f32 %v1047
      %vm1266 = vweird.f32 %v1259
      %vm1267 = vmor %vm1265, %vm1266
      %v1268 = vsel %vm1267, %v1259, %v1264
      %v1269 = vrsqrt.pop %v1048
      %v1270 = vmul.f32 %v1269, %v1048
      %v1271 = vmul.f32 %v1270, %v1269
      %v1272 = vmul.f32 0.5, %v1271
      %v1273 = vsub.f32 1.5, %v1272
      %v1274 = vmul.f32 %v1269, %v1273
      %vm1275 = vweird.f32 %v1048
      %vm1276 = vweird.f32 %v1269
      %vm1277 = vmor %vm1275, %vm1276
      %v1278 = vsel %vm1277, %v1269, %v1274
      %v1279 = vrsqrt.pop %v1049
      %v1280 = vmul.f32 %v1279, %v1049
      %v1281 = vmul.f32 %v1280, %v1279
      %v1282 = vmul.f32 0.5, %v1281
      %v1283 = vsub.f32 1.5, %v1282
      %v1284 = vmul.f32 %v1279, %v1283
      %vm1285 = vweird.f32 %v1049
      %vm1286 = vweird.f32 %v1279
      %vm1287 = vmor %vm1285, %vm1286
      %v1288 = vsel %vm1287, %v1279, %v1284
      %v1289 = vrsqrt.pop %v1050
      %v1290 = vmul.f32 %v1289, %v1050
      %v1291 = vmul.f32 %v1290, %v1289
      %v1292 = vmul.f32 0.5, %v1291
      %v1293 = vsub.f32 1.5, %v1292
      %v1294 = vmul.f32 %v1289, %v1293
      %vm1295 = vweird.f32 %v1050
      %vm1296 = vweird.f32 %v1289
      %vm1297 = vmor %vm1295, %vm1296
      %v1298 = vsel %vm1297, %v1289, %v1294
      %v1299 = vrsqrt.pop %v1051
      %v1300 = vmul.f32 %v1299, %v1051
      %v1301 = vmul.f32 %v1300, %v1299
      %v1302 = vmul.f32 0.5, %v1301
      %v1303 = vsub.f32 1.5, %v1302
      %v1304 = vmul.f32 %v1299, %v1303
      %vm1305 = vweird.f32 %v1051
      %vm1306 = vweird.f32 %v1299
      %vm1307 = vmor %vm1305, %vm1306
      %v1308 = vsel %vm1307, %v1299, %v1304
      %v1309 = vrsqrt.pop %v1052
      %v1310 = vmul.f32 %v1309, %v1052
      %v1311 = vmul.f32 %v1310, %v1309
      %v1312 = vmul.f32 0.5, %v1311
      %v1313 = vsub.f32 1.5, %v1312
      %v1314 = vmul.f32 %v1309, %v1313
      %vm1315 = vweird.f32 %v1052
      %vm1316 = vweird.f32 %v1309
      %vm1317 = vmor %vm1315, %vm1316
      %v1318 = vsel %vm1317, %v1309, %v1314
      %v1319 = vrsqrt.pop %v1053
      %v1320 = vmul.f32 %v1319, %v1053
      %v1321 = vmul.f32 %v1320, %v1319
      %v1322 = vmul.f32 0.5, %v1321
      %v1323 = vsub.f32 1.5, %v1322
      %v1324 = vmul.f32 %v1319, %v1323
      %vm1325 = vweird.f32 %v1053
      %vm1326 = vweird.f32 %v1319
      %vm1327 = vmor %vm1325, %vm1326
      %v1328 = vsel %vm1327, %v1319, %v1324
      %v1329 = vrsqrt.pop %v1054
      %v1330 = vmul.f32 %v1329, %v1054
      %v1331 = vmul.f32 %v1330, %v1329
      %v1332 = vmul.f32 0.5, %v1331
      %v1333 = vsub.f32 1.5, %v1332
      %v1334 = vmul.f32 %v1329, %v1333
      %vm1335 = vweird.f32 %v1054
      %vm1336 = vweird.f32 %v1329
      %vm1337 = vmor %vm1335, %vm1336
      %v1338 = vsel %vm1337, %v1329, %v1334
      %v1339 = vrsqrt.pop %v1055
      %v1340 = vmul.f32 %v1339, %v1055
      %v1341 = vmul.f32 %v1340, %v1339
      %v1342 = vmul.f32 0.5, %v1341
      %v1343 = vsub.f32 1.5, %v1342
      %v1344 = vmul.f32 %v1339, %v1343
      %vm1345 = vweird.f32 %v1055
      %vm1346 = vweird.f32 %v1339
      %vm1347 = vmor %vm1345, %vm1346
      %v1348 = vsel %vm1347, %v1339, %v1344
      %v1349 = vrsqrt.pop %v1056
      %v1350 = vmul.f32 %v1349, %v1056
      %v1351 = vmul.f32 %v1350, %v1349
      %v1352 = vmul.f32 0.5, %v1351
      %v1353 = vsub.f32 1.5, %v1352
      %v1354 = vmul.f32 %v1349, %v1353
      %vm1355 = vweird.f32 %v1056
      %vm1356 = vweird.f32 %v1349
      %vm1357 = vmor %vm1355, %vm1356
      %v1358 = vsel %vm1357, %v1349, %v1354
      %v1359 = vrsqrt.pop %v1057
      %v1360 = vmul.f32 %v1359, %v1057
      %v1361 = vmul.f32 %v1360, %v1359
      %v1362 = vmul.f32 0.5, %v1361
      %v1363 = vsub.f32 1.5, %v1362
      %v1364 = vmul.f32 %v1359, %v1363
      %vm1365 = vweird.f32 %v1057
      %vm1366 = vweird.f32 %v1359
      %vm1367 = vmor %vm1365, %vm1366
      %v1368 = vsel %vm1367, %v1359, %v1364
      %v1369 = vrsqrt.pop %v1058
      %v1370 = vmul.f32 %v1369, %v1058
      %v1371 = vmul.f32 %v1370, %v1369
      %v1372 = vmul.f32 0.5, %v1371
      %v1373 = vsub.f32 1.5, %v1372
      %v1374 = vmul.f32 %v1369, %v1373
      %vm1375 = vweird.f32 %v1058
      %vm1376 = vweird.f32 %v1369
      %vm1377 = vmor %vm1375, %vm1376
      %v1378 = vsel %vm1377, %v1369, %v1374
      %v1379 = vmul.f32 %v507, %v1068
      %v1380 = vmul.f32 %v733, %v1068
      %v1381 = vmul.f32 %v510, %v1078
      %v1382 = vmul.f32 %v736, %v1078
      %v1383 = vmul.f32 %v513, %v1088
      %v1384 = vmul.f32 %v739, %v1088
      %v1385 = vmul.f32 %v516, %v1098
      %v1386 = vmul.f32 %v742, %v1098
      %v1387 = vmul.f32 %v519, %v1108
      %v1388 = vmul.f32 %v745, %v1108
      %v1389 = vmul.f32 %v522, %v1118
      %v1390 = vmul.f32 %v748, %v1118
      %v1391 = vmul.f32 %v525, %v1128
      %v1392 = vmul.f32 %v751, %v1128
      %v1393 = vmul.f32 %v528, %v1138
      %v1394 = vmul.f32 %v754, %v1138
      %v1395 = vmul.f32 %v531, %v1148
      %v1396 = vmul.f32 %v757, %v1148
      %v1397 = vmul.f32 %v534, %v1158
      %v1398 = vmul.f32 %v760, %v1158
      %v1399 = vmul.f32 %v537, %v1168
      %v1400 = vmul.f32 %v763, %v1168
      %v1401 = vmul.f32 %v540, %v1178
      %v1402 = vmul.f32 %v766, %v1178
      %v1403 = vmul.f32 %v543, %v1188
      %v1404 = vmul.f32 %v769, %v1188
      %v1405 = vmul.f32 %v546, %v1198
      %v1406 = vmul.f32 %v772, %v1198
      %v1407 = vmul.f32 %v549, %v1208
      %v1408 = vmul.f32 %v775, %v1208
      %v1409 = vmul.f32 %v552, %v1218
      %v1410 = vmul.f32 %v778, %v1218
      %v1411 = vmul.f32 %v555, %v1228
      %v1412 = vmul.f32 %v781, %v1228
      %v1413 = vmul.f32 %v558, %v1238
      %v1414 = vmul.f32 %v784, %v1238
      %v1415 = vmul.f32 %v561, %v1248
      %v1416 = vmul.f32 %v787, %v1248
      %v1417 = vmul.f32 %v564, %v1258
      %v1418 = vmul.f32 %v790, %v1258
      %v1419 = vmul.f32 %v567, %v1268
      %v1420 = vmul.f32 %v793, %v1268
      %v1421 = vmul.f32 %v570, %v1278
      %v1422 = vmul.f32 %v796, %v1278
      %v1423 = vmul.f32 %v573, %v1288
      %v1424 = vmul.f32 %v799, %v1288
      %v1425 = vmul.f32 %v576, %v1298
      %v1426 = vmul.f32 %v802, %v1298
      %v1427 = vmul.f32 %v579, %v1308
      %v1428 = vmul.f32 %v805, %v1308
      %v1429 = vmul.f32 %v582, %v1318
      %v1430 = vmul.f32 %v808, %v1318
      %v1431 = vmul.f32 %v585, %v1328
      %v1432 = vmul.f32 %v811, %v1328
      %v1433 = vmul.f32 %v588, %v1338
      %v1434 = vmul.f32 %v814, %v1338
      %v1435 = vmul.f32 %v591, %v1348
      %v1436 = vmul.f32 %v817, %v1348
      %v1437 = vmul.f32 %v594, %v1358
      %v1438 = vmul.f32 %v820, %v1358
      %v1439 = vmul.f32 %v597, %v1368
      %v1440 = vmul.f32 %v823, %v1368
      %v1441 = vmul.f32 %v600, %v1378
      %v1442 = vmul.f32 %v826, %v1378
      %v1443 = vld [vmem:[%s3] sm:$0x3]
      %v1445 = vperm.slane %v1443, 0
      %v1446 = vperm.slane %v1443, 1
      %v1449 = vmul.f32 %v1379, %v1445
      %v1450 = vmul.f32 %v1380, %v1446
      %v1451 = vmul.f32 %v1381, %v1445
      %v1452 = vmul.f32 %v1382, %v1446
      %v1453 = vmul.f32 %v1383, %v1445
      %v1454 = vmul.f32 %v1384, %v1446
      %v1455 = vmul.f32 %v1385, %v1445
      %v1456 = vmul.f32 %v1386, %v1446
      %v1457 = vmul.f32 %v1387, %v1445
      %v1458 = vmul.f32 %v1388, %v1446
      %v1459 = vmul.f32 %v1389, %v1445
      %v1460 = vmul.f32 %v1390, %v1446
      %v1461 = vmul.f32 %v1391, %v1445
      %v1462 = vmul.f32 %v1392, %v1446
      %v1463 = vmul.f32 %v1393, %v1445
      %v1464 = vmul.f32 %v1394, %v1446
      %v1465 = vmul.f32 %v1395, %v1445
      %v1466 = vmul.f32 %v1396, %v1446
      %v1467 = vmul.f32 %v1397, %v1445
      %v1468 = vmul.f32 %v1398, %v1446
      %v1469 = vmul.f32 %v1399, %v1445
      %v1470 = vmul.f32 %v1400, %v1446
      %v1471 = vmul.f32 %v1401, %v1445
      %v1472 = vmul.f32 %v1402, %v1446
      %v1473 = vmul.f32 %v1403, %v1445
      %v1474 = vmul.f32 %v1404, %v1446
      %v1475 = vmul.f32 %v1405, %v1445
      %v1476 = vmul.f32 %v1406, %v1446
      %v1477 = vmul.f32 %v1407, %v1445
      %v1478 = vmul.f32 %v1408, %v1446
      %v1479 = vmul.f32 %v1409, %v1445
      %v1480 = vmul.f32 %v1410, %v1446
      %v1481 = vmul.f32 %v1411, %v1445
      %v1482 = vmul.f32 %v1412, %v1446
      %v1483 = vmul.f32 %v1413, %v1445
      %v1484 = vmul.f32 %v1414, %v1446
      %v1485 = vmul.f32 %v1415, %v1445
      %v1486 = vmul.f32 %v1416, %v1446
      %v1487 = vmul.f32 %v1417, %v1445
      %v1488 = vmul.f32 %v1418, %v1446
      %v1489 = vmul.f32 %v1419, %v1445
      %v1490 = vmul.f32 %v1420, %v1446
      %v1491 = vmul.f32 %v1421, %v1445
      %v1492 = vmul.f32 %v1422, %v1446
      %v1493 = vmul.f32 %v1423, %v1445
      %v1494 = vmul.f32 %v1424, %v1446
      %v1495 = vmul.f32 %v1425, %v1445
      %v1496 = vmul.f32 %v1426, %v1446
      %v1497 = vmul.f32 %v1427, %v1445
      %v1498 = vmul.f32 %v1428, %v1446
      %v1499 = vmul.f32 %v1429, %v1445
      %v1500 = vmul.f32 %v1430, %v1446
      %v1501 = vmul.f32 %v1431, %v1445
      %v1502 = vmul.f32 %v1432, %v1446
      %v1503 = vmul.f32 %v1433, %v1445
      %v1504 = vmul.f32 %v1434, %v1446
      %v1505 = vmul.f32 %v1435, %v1445
      %v1506 = vmul.f32 %v1436, %v1446
      %v1507 = vmul.f32 %v1437, %v1445
      %v1508 = vmul.f32 %v1438, %v1446
      %v1509 = vmul.f32 %v1439, %v1445
      %v1510 = vmul.f32 %v1440, %v1446
      %v1511 = vmul.f32 %v1441, %v1445
      %v1512 = vmul.f32 %v1442, %v1446
      %1513 = vst [vmem:[%s240] sm:$0xff] %v1449
      %1514 = vst [vmem:[%s240 + $0x8] sm:$0xff] %v1450
      %1515 = vst [vmem:[%s240 + $0x10] sm:$0xff] %v1451
      %1516 = vst [vmem:[%s240 + $0x18] sm:$0xff] %v1452
      %1517 = vst [vmem:[%s240 + $0x20] sm:$0xff] %v1453
      %1518 = vst [vmem:[%s240 + $0x28] sm:$0xff] %v1454
      %1519 = vst [vmem:[%s240 + $0x30] sm:$0xff] %v1455
      %1520 = vst [vmem:[%s240 + $0x38] sm:$0xff] %v1456
      %1521 = vst [vmem:[%s240 + $0x40] sm:$0xff] %v1457
      %1522 = vst [vmem:[%s240 + $0x48] sm:$0xff] %v1458
      %1523 = vst [vmem:[%s240 + $0x50] sm:$0xff] %v1459
      %1524 = vst [vmem:[%s240 + $0x58] sm:$0xff] %v1460
      %1525 = vst [vmem:[%s240 + $0x60] sm:$0xff] %v1461
      %1526 = vst [vmem:[%s240 + $0x68] sm:$0xff] %v1462
      %1527 = vst [vmem:[%s240 + $0x70] sm:$0xff] %v1463
      %1528 = vst [vmem:[%s240 + $0x78] sm:$0xff] %v1464
      %1529 = vst [vmem:[%s240 + $0x80] sm:$0xff] %v1465
      %1530 = vst [vmem:[%s240 + $0x88] sm:$0xff] %v1466
      %1531 = vst [vmem:[%s240 + $0x90] sm:$0xff] %v1467
      %1532 = vst [vmem:[%s240 + $0x98] sm:$0xff] %v1468
      %1533 = vst [vmem:[%s240 + $0xa0] sm:$0xff] %v1469
      %1534 = vst [vmem:[%s240 + $0xa8] sm:$0xff] %v1470
      %1535 = vst [vmem:[%s240 + $0xb0] sm:$0xff] %v1471
      %1536 = vst [vmem:[%s240 + $0xb8] sm:$0xff] %v1472
      %1537 = vst [vmem:[%s240 + $0xc0] sm:$0xff] %v1473
      %1538 = vst [vmem:[%s240 + $0xc8] sm:$0xff] %v1474
      %1539 = vst [vmem:[%s240 + $0xd0] sm:$0xff] %v1475
      %1540 = vst [vmem:[%s240 + $0xd8] sm:$0xff] %v1476
      %1541 = vst [vmem:[%s240 + $0xe0] sm:$0xff] %v1477
      %1542 = vst [vmem:[%s240 + $0xe8] sm:$0xff] %v1478
      %1543 = vst [vmem:[%s240 + $0xf0] sm:$0xff] %v1479
      %1544 = vst [vmem:[%s240 + $0xf8] sm:$0xff] %v1480
      %1545 = vst [vmem:[%s240 + $0x100] sm:$0xff] %v1481
      %1546 = vst [vmem:[%s240 + $0x108] sm:$0xff] %v1482
      %1547 = vst [vmem:[%s240 + $0x110] sm:$0xff] %v1483
      %1548 = vst [vmem:[%s240 + $0x118] sm:$0xff] %v1484
      %1549 = vst [vmem:[%s240 + $0x120] sm:$0xff] %v1485
      %1550 = vst [vmem:[%s240 + $0x128] sm:$0xff] %v1486
      %1551 = vst [vmem:[%s240 + $0x130] sm:$0xff] %v1487
      %1552 = vst [vmem:[%s240 + $0x138] sm:$0xff] %v1488
      %1553 = vst [vmem:[%s240 + $0x140] sm:$0xff] %v1489
      %1554 = vst [vmem:[%s240 + $0x148] sm:$0xff] %v1490
      %1555 = vst [vmem:[%s240 + $0x150] sm:$0xff] %v1491
      %1556 = vst [vmem:[%s240 + $0x158] sm:$0xff] %v1492
      %1557 = vst [vmem:[%s240 + $0x160] sm:$0xff] %v1493
      %1558 = vst [vmem:[%s240 + $0x168] sm:$0xff] %v1494
      %1559 = vst [vmem:[%s240 + $0x170] sm:$0xff] %v1495
      %1560 = vst [vmem:[%s240 + $0x178] sm:$0xff] %v1496
      %1561 = vst [vmem:[%s240 + $0x180] sm:$0xff] %v1497
      %1562 = vst [vmem:[%s240 + $0x188] sm:$0xff] %v1498
      %1563 = vst [vmem:[%s240 + $0x190] sm:$0xff] %v1499
      %1564 = vst [vmem:[%s240 + $0x198] sm:$0xff] %v1500
      %1565 = vst [vmem:[%s240 + $0x1a0] sm:$0xff] %v1501
      %1566 = vst [vmem:[%s240 + $0x1a8] sm:$0xff] %v1502
      %1567 = vst [vmem:[%s240 + $0x1b0] sm:$0xff] %v1503
      %1568 = vst [vmem:[%s240 + $0x1b8] sm:$0xff] %v1504
      %1569 = vst [vmem:[%s240 + $0x1c0] sm:$0xff] %v1505
      %1570 = vst [vmem:[%s240 + $0x1c8] sm:$0xff] %v1506
      %1571 = vst [vmem:[%s240 + $0x1d0] sm:$0xff] %v1507
      %1572 = vst [vmem:[%s240 + $0x1d8] sm:$0xff] %v1508
      %1573 = vst [vmem:[%s240 + $0x1e0] sm:$0xff] %v1509
      %1574 = vst [vmem:[%s240 + $0x1e8] sm:$0xff] %v1510
      %1575 = vst [vmem:[%s240 + $0x1f0] sm:$0xff] %v1511
      %1576 = vst [vmem:[%s240 + $0x1f8] sm:$0xff] %v1512
      %s1577 = smul.u32 32, %s20
      %p1578 = scmp.lt.s32.totalorder %s19, 1
      %s1579 = scalar_select %p1578, %s19, 1
      %p1580 = scmp.lt.s32.totalorder %s1577, 31
      %s1581 = scalar_select %p1580, %s1577, 31
      %s1582 = smul.addr %s1581, 2
      %s1583 = smul.addr %s1579, 64
      %s1584 = sadd.s32 %s1582, %s1583
      %s1585 = smul.addr %s1584, 8
      %s1586 = scalar_lea.vmem %s4, %s1585
      // Predicated region
      $region37: #{wan_i2v_cross_attention.7} parent=35 // pred_check
        %p1587 = pneg %p138
      $region38: #{wan_i2v_cross_attention.7} parent=35 // pred_check_branch
        %1589 = sbr.rel (%p1587) target = $region40
      $region39: #{wan_i2v_cross_attention.7} parent=35 // pred_region
        %s1590 = smul.u32 32, %s20
      $region40: #{wan_i2v_cross_attention.7} parent=35 // pred_fallthru
        _
    $region36: #{wan_i2v_cross_attention.7} parent=5 // pred_fallthru
      _
    %p1591 = scmp.le.s32.totalorder 2, %s10
    // Predicated region
    $region41: #{wan_i2v_cross_attention.7} parent=5 // pred_check
      %p1592 = pneg %p1591
    $region42: #{wan_i2v_cross_attention.7} parent=5 // pred_check_branch
      %1594 = sbr.rel (%p1592) target = $region44
    $region43: #{wan_i2v_cross_attention.7} parent=5 // pred_region
      %s1595 = ssub.s32 %s10, 2
      // Predicated region
      $region45: #{wan_i2v_cross_attention.7} parent=43 // pred_check
        %p1596 = pneg %p144
      $region46: #{wan_i2v_cross_attention.7} parent=43 // pred_check_branch
        %1598 = sbr.rel (%p1596) target = $region48
      $region47: #{wan_i2v_cross_attention.7} parent=43 // pred_region
        %s1599 = smul.u32 32, %s22
        %p1600 = scmp.lt.s32.totalorder %s21, 1
        %s1601 = scalar_select %p1600, %s21, 1
        %p1602 = scmp.lt.s32.totalorder %s1599, 31
        %s1603 = scalar_select %p1602, %s1599, 31
        %s1604 = smul.addr %s1603, 2
        %s1605 = smul.addr %s1601, 64
        %s1606 = sadd.s32 %s1604, %s1605
        %s1607 = smul.addr %s1606, 8
        %s1608 = scalar_lea.vmem %s4, %s1607
      $region48: #{wan_i2v_cross_attention.7} parent=43 // pred_fallthru
        _
    $region44: #{wan_i2v_cross_attention.7} parent=5 // pred_fallthru
      _
  $region6: #{wan_i2v_cross_attention.7} parent=0 // loop_footer
    %s14 = sadd.s32 1, %s10
  $region7: #{wan_i2v_cross_attention.7} parent=0 // loop_footer_branch
    %9 = sbr.rel target = $region3
  $region8: #{wan_i2v_cross_attention.7} parent=0 // loop_exit
    _

// kernel: wan_i2v_cross_attention.13
$region0: #{wan_i2v_cross_attention.13}
  #allocation0 [shape = 'u32[]', space=smem, size = 0x4, offset = 0x4, fixed_abs, tag = 'smem constant byte address 0x4 - core index']
  #allocation1 [shape = 'u32[72,128]{1,0:T(1,128)}', space=vmem, size = 0x9000, scoped, tag = 'internal scratch']
  %s0 = inlined_call_operand.vmem [shape: f32[2,256,256], index: 0, kind: input, shape index: {}]
  %s1 = inlined_call_operand.hbm [shape: f32[256,256], index: 1, kind: input, shape index: {}]
  %s2 = inlined_call_operand.vmem [shape: f32[1,256], index: 2, kind: input, shape index: {}]
  %s3 = inlined_call_operand.vmem [shape: f32[1,256], index: 3, kind: input, shape index: {}]
  %s4 = inlined_call_operand.hbm [shape: f32[2,256,256], index: 4, kind: output, shape index: {}]
  %s5 = sld [smem:[#allocation0]]
  $region53: #{wan_i2v_cross_attention.13} parent=0
    _
  %s7 = ssub.s32 1, %s5
  %s8 = scalar_select 0, %s7, %s5
  $region1: #{wan_i2v_cross_attention.13} parent=0
    #allocation2 [shape = 'u8[262144]{0}', space=vmem, size = 0x40000, scoped, tag = 'input window, operand 1, single buffered']
    #allocation3 [shape = 's32[2]{0}', space=sflag, size = 0x8, scoped, tag = 'scoped memory for wan_i2v_cross_attention.13']
    #allocation4 [shape = 's32[2]{0}', space=sflag, size = 0x8, scoped, tag = 'scoped memory for wan_i2v_cross_attention.13']
    #allocation5 [shape = 'u8[524288]{0}', space=vmem, size = 0x80000, scoped, tag = 'output window, operand 0']
    %9 = vsyncpa [#allocation3], 0
    %10 = vsyncpa [#allocation4], 0
    %s11 = scalar_lea.sflag [#allocation4], 1
    %12 = vsyncpa %s11, 0
    loop: start=0, step=1, limit=4
    $region2: #{wan_i2v_cross_attention.13} parent=1 // loop_pre_header
      _
    $region3: #{wan_i2v_cross_attention.13} parent=1 // loop_header
      %s14 = sphi 0, %s18
      %p15 = scmp.ge.s32.totalorder %s14, 4
      %s21 = sphi 0, %s33
      %s22 = sphi 0, %s29
      %s23 = sphi 0, %s21
      %s24 = sphi 0, %s22
      %s25 = sphi 0, %s23
      %s26 = sphi 0, %s24
      %s38 = sphi 0, %s40
      %s41 = sphi 0, %s38
      %s42 = sphi 0, %s41
      %s58 = sphi 0, %s42
      %s62 = sphi 0, %s62
      %s64 = sphi 0, %s62
      %s65 = sphi 0, %s64
      %s79 = sphi 0, %s65
      %s83 = sphi 0, %s83
      %s85 = sphi 0, %s83
      %s86 = sphi 0, %s85
      %s100 = sphi 0, %s86
      %s104 = sphi 0, %s104
      %s106 = sphi 0, %s104
      %s107 = sphi 0, %s106
      %s121 = sphi 0, %s107
      %s129 = sphi 0, %s131
      %s132 = sphi 0, %s129
      %s133 = sphi 0, %s132
      %s149 = sphi 0, %s133
    $region4: #{wan_i2v_cross_attention.13} parent=1 // loop_header_branch
      %17 = sbr.rel (%p15) target = $region8
    $region5: #{wan_i2v_cross_attention.13} parent=1 // loop_body
      %s19 = ssub.s32 %s14, 1
      %s20 = ssub.s32 %s14, 2
      %s27 = sadd.s32 1, %s22
      %p28 = scmp.ge.s32.totalorder %s27, 1
      %s29 = scalar_select %p28, 0, %s27
      %s30 = sadd.s32 1, %s21
      %s31 = scalar_select %p28, %s30, %s21
      %p32 = scmp.ge.s32.totalorder %s31, 2
      %s33 = scalar_select %p32, 0, %s31
      %s34 = ssub.s32 %s21, %s33
      %s35 = ssub.s32 %s22, %s29
      %s36 = sor.u32 %s34, %s35
      %p37 = scmp.eq.s32.totalorder %s36, 0
      %s39 = sadd.s32 %s38, 1
      %s40 = scalar_select %p37, %s38, %s39
      %p43 = pneg %p37
      %p44 = scmp.eq.s32.totalorder %s14, 1
      %p45 = por %p43, %p44
      %p46 = scmp.ne.s32.totalorder %s38, %s41
      %p47 = scmp.eq.s32.totalorder %s14, 0
      %p48 = por %p46, %p47
      %p49 = scmp.ne.s32.totalorder %s38, %s41
      %p50 = scmp.eq.s32.totalorder %s19, 1
      %p51 = por %p49, %p50
      %p52 = scmp.ne.s32.totalorder %s41, %s42
      %p53 = scmp.eq.s32.totalorder %s19, 0
      %p54 = por %p52, %p53
      %p55 = scmp.ne.s32.totalorder %s41, %s42
      %p56 = scmp.eq.s32.totalorder %s20, 1
      %p57 = por %p55, %p56
      %p59 = scmp.ne.s32.totalorder %s42, %s58
      %p60 = scmp.eq.s32.totalorder %s20, 0
      %p61 = por %p59, %p60
      %s63 = sadd.s32 %s62, 1
      %p66 = scmp.eq.s32.totalorder %s14, 1
      %p67 = scmp.ne.s32.totalorder %s62, %s64
      %p68 = scmp.eq.s32.totalorder %s14, 0
      %p69 = por %p67, %p68
      %p70 = scmp.ne.s32.totalorder %s62, %s64
      %p71 = scmp.eq.s32.totalorder %s19, 1
      %p72 = por %p70, %p71
      %p73 = scmp.ne.s32.totalorder %s64, %s65
      %p74 = scmp.eq.s32.totalorder %s19, 0
      %p75 = por %p73, %p74
      %p76 = scmp.ne.s32.totalorder %s64, %s65
      %p77 = scmp.eq.s32.totalorder %s20, 1
      %p78 = por %p76, %p77
      %p80 = scmp.ne.s32.totalorder %s65, %s79
      %p81 = scmp.eq.s32.totalorder %s20, 0
      %p82 = por %p80, %p81
      %s84 = sadd.s32 %s83, 1
      %p87 = scmp.eq.s32.totalorder %s14, 1
      %p88 = scmp.ne.s32.totalorder %s83, %s85
      %p89 = scmp.eq.s32.totalorder %s14, 0
      %p90 = por %p88, %p89
      %p91 = scmp.ne.s32.totalorder %s83, %s85
      %p92 = scmp.eq.s32.totalorder %s19, 1
      %p93 = por %p91, %p92
      %p94 = scmp.ne.s32.totalorder %s85, %s86
      %p95 = scmp.eq.s32.totalorder %s19, 0
      %p96 = por %p94, %p95
      %p97 = scmp.ne.s32.totalorder %s85, %s86
      %p98 = scmp.eq.s32.totalorder %s20, 1
      %p99 = por %p97, %p98
      %p101 = scmp.ne.s32.totalorder %s86, %s100
      %p102 = scmp.eq.s32.totalorder %s20, 0
      %p103 = por %p101, %p102
      %s105 = sadd.s32 %s104, 1
      %p108 = scmp.eq.s32.totalorder %s14, 1
      %p109 = scmp.ne.s32.totalorder %s104, %s106
      %p110 = scmp.eq.s32.totalorder %s14, 0
      %p111 = por %p109, %p110
      %p112 = scmp.ne.s32.totalorder %s104, %s106
      %p113 = scmp.eq.s32.totalorder %s19, 1
      %p114 = por %p112, %p113
      %p115 = scmp.ne.s32.totalorder %s106, %s107
      %p116 = scmp.eq.s32.totalorder %s19, 0
      %p117 = por %p115, %p116
      %p118 = scmp.ne.s32.totalorder %s106, %s107
      %p119 = scmp.eq.s32.totalorder %s20, 1
      %p120 = por %p118, %p119
      %p122 = scmp.ne.s32.totalorder %s107, %s121
      %p123 = scmp.eq.s32.totalorder %s20, 0
      %p124 = por %p122, %p123
      %s125 = ssub.s32 %s21, %s33
      %s126 = ssub.s32 %s22, %s29
      %s127 = sor.u32 %s125, %s126
      %p128 = scmp.eq.s32.totalorder %s127, 0
      %s130 = sadd.s32 %s129, 1
      %s131 = scalar_select %p128, %s129, %s130
      %p134 = pneg %p128
      %p135 = scmp.eq.s32.totalorder %s14, 1
      %p136 = por %p134, %p135
      %p137 = scmp.ne.s32.totalorder %s129, %s132
      %p138 = scmp.eq.s32.totalorder %s14, 0
      %p139 = por %p137, %p138
      %p140 = scmp.ne.s32.totalorder %s129, %s132
      %p141 = scmp.eq.s32.totalorder %s19, 1
      %p142 = por %p140, %p141
      %p143 = scmp.ne.s32.totalorder %s132, %s133
      %p144 = scmp.eq.s32.totalorder %s19, 0
      %p145 = por %p143, %p144
      %p146 = scmp.ne.s32.totalorder %s132, %s133
      %p147 = scmp.eq.s32.totalorder %s20, 1
      %p148 = por %p146, %p147
      %p150 = scmp.ne.s32.totalorder %s133, %s149
      %p151 = scmp.eq.s32.totalorder %s20, 0
      %p152 = por %p150, %p151
      %p153 = scmp.le.s32.totalorder 1, %s14
      %p154 = scmp.lt.s32.totalorder %s14, 3
      %p155 = pnand %p153, %p154
      %p156 = pneg %p155
      // Predicated region
      $region9: #{wan_i2v_cross_attention.13} parent=5 // pred_check
        _
      $region10: #{wan_i2v_cross_attention.13} parent=5 // pred_check_branch
        %158 = sbr.rel (%p155) target = $region12
      $region11: #{wan_i2v_cross_attention.13} parent=5 // pred_region
        %s159 = ssub.s32 %s14, 1
        // Predicated region
        $region13: #{wan_i2v_cross_attention.13} parent=11 // pred_check
          %p160 = pneg %p75
        $region14: #{wan_i2v_cross_attention.13} parent=11 // pred_check_branch
          %162 = sbr.rel (%p160) target = $region16
        $region15: #{wan_i2v_cross_attention.13} parent=11 // pred_region
          %164 = vsyncadd [#allocation3], 0
          %s165 = sshll.u32 %s1, 4
          %s166 = int_to_ptr.hbm [resolvable:$true] %s165
          %s167 = sshll.u32 [#allocation2], 4
          %s168 = int_to_ptr.vmem [resolvable:$true] %s167
          %173 = dma.hbm_to_vmem [thread:$0]  %s166, 8192, %s168, [#allocation3], 256, 256, 16
        $region16: #{wan_i2v_cross_attention.13} parent=11 // pred_fallthru
          _
        // Predicated region
        $region17: #{wan_i2v_cross_attention.13} parent=11 // pred_check
          %p174 = pneg %p96
        $region18: #{wan_i2v_cross_attention.13} parent=11 // pred_check_branch
          %176 = sbr.rel (%p174) target = $region20
        $region19: #{wan_i2v_cross_attention.13} parent=11 // pred_region
          _
        $region20: #{wan_i2v_cross_attention.13} parent=11 // pred_fallthru
          _
        // Predicated region
        $region21: #{wan_i2v_cross_attention.13} parent=11 // pred_check
          %p177 = pneg %p117
        $region22: #{wan_i2v_cross_attention.13} parent=11 // pred_check_branch
          %179 = sbr.rel (%p177) target = $region24
        $region23: #{wan_i2v_cross_attention.13} parent=11 // pred_region
          _
        $region24: #{wan_i2v_cross_attention.13} parent=11 // pred_fallthru
          _
      $region12: #{wan_i2v_cross_attention.13} parent=5 // pred_fallthru
        _
      %p180 = scmp.lt.s32.totalorder %s14, 2
      // Predicated region
      $region25: #{wan_i2v_cross_attention.13} parent=5 // pred_check
        %p181 = pneg %p180
      $region26: #{wan_i2v_cross_attention.13} parent=5 // pred_check_branch
        %183 = sbr.rel (%p181) target = $region28
      $region27: #{wan_i2v_cross_attention.13} parent=5 // pred_region
        // Predicated region
        $region29: #{wan_i2v_cross_attention.13} parent=27 // pred_check
          %p184 = pneg %p48
        $region30: #{wan_i2v_cross_attention.13} parent=27 // pred_check_branch
          %186 = sbr.rel (%p184) target = $region32
        $region31: #{wan_i2v_cross_attention.13} parent=27 // pred_region
          %s187 = smul.u32 32, %s22
          %p188 = scmp.lt.s32.totalorder %s21, 1
          %s189 = scalar_select %p188, %s21, 1
          %p190 = scmp.lt.s32.totalorder %s187, 31
          %s191 = scalar_select %p190, %s187, 31
          %s192 = smul.addr %s191, 2
          %s193 = smul.addr %s189, 64
          %s194 = sadd.s32 %s192, %s193
          %s195 = smul.addr %s194, 8
          %s196 = scalar_lea.vmem %s0, %s195
          %s197 = smul.u32 32, %s22
        $region32: #{wan_i2v_cross_attention.13} parent=27 // pred_fallthru
          _
      $region28: #{wan_i2v_cross_attention.13} parent=5 // pred_fallthru
        _
      %p198 = scmp.le.s32.totalorder 1, %s14
      %p199 = scmp.lt.s32.totalorder %s14, 3
      %p200 = pnand %p198, %p199
      %p201 = pneg %p200
      // Predicated region
      $region33: #{wan_i2v_cross_attention.13} parent=5 // pred_check
        _
      $region34: #{wan_i2v_cross_attention.13} parent=5 // pred_check_branch
        %203 = sbr.rel (%p200) target = $region36
      $region35: #{wan_i2v_cross_attention.13} parent=5 // pred_region
        %s204 = ssub.s32 %s14, 1
        // Predicated region
        $region37: #{wan_i2v_cross_attention.13} parent=35 // pred_check
          %p205 = pneg %p75
        $region38: #{wan_i2v_cross_attention.13} parent=35 // pred_check_branch
          %207 = sbr.rel (%p205) target = $region40
        $region39: #{wan_i2v_cross_attention.13} parent=35 // pred_region
          %209 = dma.done [#allocation3], 8192
        $region40: #{wan_i2v_cross_attention.13} parent=35 // pred_fallthru
          _
        %s210 = smul.u32 32, %s24
        %p211 = scmp.lt.s32.totalorder %s23, 1
        %s212 = scalar_select %p211, %s23, 1
        %p213 = scmp.lt.s32.totalorder %s210, 31
        %s214 = scalar_select %p213, %s210, 31
        %s215 = smul.addr %s214, 2
        %s216 = smul.addr %s212, 64
        %s217 = sadd.s32 %s215, %s216
        %s218 = smul.addr %s217, 8
        %s219 = scalar_lea.vmem %s0, %s218
        %p220 = pneg %p54
        %p221 = pneg %p51
        %p222 = pneg %p75
        %p223 = pneg %p72
        %p224 = pneg %p96
        %p225 = pneg %p93
        %p226 = pneg %p117
        %p227 = pneg %p114
        %p228 = pneg %p145
        %p229 = pneg %p142
        %s230 = sand.u32 %s132, 1
        %s231 = scalar_lea.sflag [#allocation4], %s230
        %s232 = sand.u32 %s132, 1
        %s233 = smul.addr %s232, 512
        %s234 = scalar_lea.vmem [#allocation5], %s233
        %s235 = smul.u32 32, %s24
        %p236 = scmp.lt.s32.totalorder %s23, 1
        %s237 = scalar_select %p236, %s23, 1
        %p238 = scmp.lt.s32.totalorder %s235, 31
        %s239 = scalar_select %p238, %s235, 31
        %s240 = smul.addr %s239, 2
        %s241 = smul.addr %s237, 64
        %s242 = sadd.s32 %s240, %s241
        %s243 = smul.addr %s242, 8
        %s244 = scalar_lea.vmem %s0, %s243
        %s245 = smul.u32 32, %s24
        %s246 = smul.u32 32, %s24
        %v247 = vld [vmem:[%s244] sm:$0xff]
        %v248 = vld [vmem:[%s244 + $0x8] sm:$0xff]
        %v249 = vld [vmem:[%s244 + $0x10] sm:$0xff]
        %v250 = vld [vmem:[%s244 + $0x18] sm:$0xff]
        %v251 = vld [vmem:[%s244 + $0x20] sm:$0xff]
        %v252 = vld [vmem:[%s244 + $0x28] sm:$0xff]
        %v253 = vld [vmem:[%s244 + $0x30] sm:$0xff]
        %v254 = vld [vmem:[%s244 + $0x38] sm:$0xff]
        %v255 = vld [vmem:[%s244 + $0x40] sm:$0xff]
        %v256 = vld [vmem:[%s244 + $0x48] sm:$0xff]
        %v257 = vld [vmem:[%s244 + $0x50] sm:$0xff]
        %v258 = vld [vmem:[%s244 + $0x58] sm:$0xff]
        %v259 = vld [vmem:[%s244 + $0x60] sm:$0xff]
        %v260 = vld [vmem:[%s244 + $0x68] sm:$0xff]
        %v261 = vld [vmem:[%s244 + $0x70] sm:$0xff]
        %v262 = vld [vmem:[%s244 + $0x78] sm:$0xff]
        %v263 = vld [vmem:[%s244 + $0x80] sm:$0xff]
        %v264 = vld [vmem:[%s244 + $0x88] sm:$0xff]
        %v265 = vld [vmem:[%s244 + $0x90] sm:$0xff]
        %v266 = vld [vmem:[%s244 + $0x98] sm:$0xff]
        %v267 = vld [vmem:[%s244 + $0xa0] sm:$0xff]
        %v268 = vld [vmem:[%s244 + $0xa8] sm:$0xff]
        %v269 = vld [vmem:[%s244 + $0xb0] sm:$0xff]
        %v270 = vld [vmem:[%s244 + $0xb8] sm:$0xff]
        %v271 = vld [vmem:[%s244 + $0xc0] sm:$0xff]
        %v272 = vld [vmem:[%s244 + $0xc8] sm:$0xff]
        %v273 = vld [vmem:[%s244 + $0xd0] sm:$0xff]
        %v274 = vld [vmem:[%s244 + $0xd8] sm:$0xff]
        %v275 = vld [vmem:[%s244 + $0xe0] sm:$0xff]
        %v276 = vld [vmem:[%s244 + $0xe8] sm:$0xff]
        %v277 = vld [vmem:[%s244 + $0xf0] sm:$0xff]
        %v278 = vld [vmem:[%s244 + $0xf8] sm:$0xff]
        %v279 = vld [vmem:[%s244 + $0x100] sm:$0xff]
        %v280 = vld [vmem:[%s244 + $0x108] sm:$0xff]
        %v281 = vld [vmem:[%s244 + $0x110] sm:$0xff]
        %v282 = vld [vmem:[%s244 + $0x118] sm:$0xff]
        %v283 = vld [vmem:[%s244 + $0x120] sm:$0xff]
        %v284 = vld [vmem:[%s244 + $0x128] sm:$0xff]
        %v285 = vld [vmem:[%s244 + $0x130] sm:$0xff]
        %v286 = vld [vmem:[%s244 + $0x138] sm:$0xff]
        %v287 = vld [vmem:[%s244 + $0x140] sm:$0xff]
        %v288 = vld [vmem:[%s244 + $0x148] sm:$0xff]
        %v289 = vld [vmem:[%s244 + $0x150] sm:$0xff]
        %v290 = vld [vmem:[%s244 + $0x158] sm:$0xff]
        %v291 = vld [vmem:[%s244 + $0x160] sm:$0xff]
        %v292 = vld [vmem:[%s244 + $0x168] sm:$0xff]
        %v293 = vld [vmem:[%s244 + $0x170] sm:$0xff]
        %v294 = vld [vmem:[%s244 + $0x178] sm:$0xff]
        %v295 = vld [vmem:[%s244 + $0x180] sm:$0xff]
        %v296 = vld [vmem:[%s244 + $0x188] sm:$0xff]
        %v297 = vld [vmem:[%s244 + $0x190] sm:$0xff]
        %v298 = vld [vmem:[%s244 + $0x198] sm:$0xff]
        %v299 = vld [vmem:[%s244 + $0x1a0] sm:$0xff]
        %v300 = vld [vmem:[%s244 + $0x1a8] sm:$0xff]
        %v301 = vld [vmem:[%s244 + $0x1b0] sm:$0xff]
        %v302 = vld [vmem:[%s244 + $0x1b8] sm:$0xff]
        %v303 = vld [vmem:[%s244 + $0x1c0] sm:$0xff]
        %v304 = vld [vmem:[%s244 + $0x1c8] sm:$0xff]
        %v305 = vld [vmem:[%s244 + $0x1d0] sm:$0xff]
        %v306 = vld [vmem:[%s244 + $0x1d8] sm:$0xff]
        %v307 = vld [vmem:[%s244 + $0x1e0] sm:$0xff]
        %v308 = vld [vmem:[%s244 + $0x1e8] sm:$0xff]
        %v309 = vld [vmem:[%s244 + $0x1f0] sm:$0xff]
        %v310 = vld [vmem:[%s244 + $0x1f8] sm:$0xff]
        %v311 = vld [vmem:[#allocation2] sm:$0xff]
        %v312 = vld [vmem:[#allocation2 + $0x8] sm:$0xff]
        %v313 = vld [vmem:[#allocation2 + $0x10] sm:$0xff]
        %v314 = vld [vmem:[#allocation2 + $0x18] sm:$0xff]
        %v315 = vld [vmem:[#allocation2 + $0x20] sm:$0xff]
        %v316 = vld [vmem:[#allocation2 + $0x28] sm:$0xff]
        %v317 = vld [vmem:[#allocation2 + $0x30] sm:$0xff]
        %v318 = vld [vmem:[#allocation2 + $0x38] sm:$0xff]
        %v319 = vld [vmem:[#allocation2 + $0x40] sm:$0xff]
        %v320 = vld [vmem:[#allocation2 + $0x48] sm:$0xff]
        %v321 = vld [vmem:[#allocation2 + $0x50] sm:$0xff]
        %v322 = vld [vmem:[#allocation2 + $0x58] sm:$0xff]
        %v323 = vld [vmem:[#allocation2 + $0x60] sm:$0xff]
        %v324 = vld [vmem:[#allocation2 + $0x68] sm:$0xff]
        %v325 = vld [vmem:[#allocation2 + $0x70] sm:$0xff]
        %v326 = vld [vmem:[#allocation2 + $0x78] sm:$0xff]
        %v327 = vld [vmem:[#allocation2 + $0x80] sm:$0xff]
        %v328 = vld [vmem:[#allocation2 + $0x88] sm:$0xff]
        %v329 = vld [vmem:[#allocation2 + $0x90] sm:$0xff]
        %v330 = vld [vmem:[#allocation2 + $0x98] sm:$0xff]
        %v331 = vld [vmem:[#allocation2 + $0xa0] sm:$0xff]
        %v332 = vld [vmem:[#allocation2 + $0xa8] sm:$0xff]
        %v333 = vld [vmem:[#allocation2 + $0xb0] sm:$0xff]
        %v334 = vld [vmem:[#allocation2 + $0xb8] sm:$0xff]
        %v335 = vld [vmem:[#allocation2 + $0xc0] sm:$0xff]
        %v336 = vld [vmem:[#allocation2 + $0xc8] sm:$0xff]
        %v337 = vld [vmem:[#allocation2 + $0xd0] sm:$0xff]
        %v338 = vld [vmem:[#allocation2 + $0xd8] sm:$0xff]
        %v339 = vld [vmem:[#allocation2 + $0xe0] sm:$0xff]
        %v340 = vld [vmem:[#allocation2 + $0xe8] sm:$0xff]
        %v341 = vld [vmem:[#allocation2 + $0xf0] sm:$0xff]
        %v342 = vld [vmem:[#allocation2 + $0xf8] sm:$0xff]
        %v343 = vld [vmem:[#allocation2 + $0x100] sm:$0xff]
        %v344 = vld [vmem:[#allocation2 + $0x108] sm:$0xff]
        %v345 = vld [vmem:[#allocation2 + $0x110] sm:$0xff]
        %v346 = vld [vmem:[#allocation2 + $0x118] sm:$0xff]
        %v347 = vld [vmem:[#allocation2 + $0x120] sm:$0xff]
        %v348 = vld [vmem:[#allocation2 + $0x128] sm:$0xff]
        %v349 = vld [vmem:[#allocation2 + $0x130] sm:$0xff]
        %v350 = vld [vmem:[#allocation2 + $0x138] sm:$0xff]
        %v351 = vld [vmem:[#allocation2 + $0x140] sm:$0xff]
        %v352 = vld [vmem:[#allocation2 + $0x148] sm:$0xff]
        %v353 = vld [vmem:[#allocation2 + $0x150] sm:$0xff]
        %v354 = vld [vmem:[#allocation2 + $0x158] sm:$0xff]
        %v355 = vld [vmem:[#allocation2 + $0x160] sm:$0xff]
        %v356 = vld [vmem:[#allocation2 + $0x168] sm:$0xff]
        %v357 = vld [vmem:[#allocation2 + $0x170] sm:$0xff]
        %v358 = vld [vmem:[#allocation2 + $0x178] sm:$0xff]
        %v359 = vld [vmem:[#allocation2 + $0x180] sm:$0xff]
        %v360 = vld [vmem:[#allocation2 + $0x188] sm:$0xff]
        %v361 = vld [vmem:[#allocation2 + $0x190] sm:$0xff]
        %v362 = vld [vmem:[#allocation2 + $0x198] sm:$0xff]
        %v363 = vld [vmem:[#allocation2 + $0x1a0] sm:$0xff]
        %v364 = vld [vmem:[#allocation2 + $0x1a8] sm:$0xff]
        %v365 = vld [vmem:[#allocation2 + $0x1b0] sm:$0xff]
        %v366 = vld [vmem:[#allocation2 + $0x1b8] sm:$0xff]
        %v367 = vld [vmem:[#allocation2 + $0x1c0] sm:$0xff]
        %v368 = vld [vmem:[#allocation2 + $0x1c8] sm:$0xff]
        %v369 = vld [vmem:[#allocation2 + $0x1d0] sm:$0xff]
        %v370 = vld [vmem:[#allocation2 + $0x1d8] sm:$0xff]
        %v371 = vld [vmem:[#allocation2 + $0x1e0] sm:$0xff]
        %v372 = vld [vmem:[#allocation2 + $0x1e8] sm:$0xff]
        %v373 = vld [vmem:[#allocation2 + $0x1f0] sm:$0xff]
        %v374 = vld [vmem:[#allocation2 + $0x1f8] sm:$0xff]
        %v375 = vld [vmem:[%s2] sm:$0x3]
        %v377 = vperm.slane %v375, 0
        %v378 = vperm.slane %v375, 1
        %381 = vmatpush.msra.mxu0 %v341
        %382 = vmatpush.msra.mxu0 %v339
        %383 = vmatpush.msra.mxu0 %v337
        %384 = vmatpush.msra.mxu0 %v335
        %385 = vmatpush.msra.mxu0 %v333
        %386 = vmatpush.msra.mxu0 %v331
        %387 = vmatpush.msra.mxu0 %v329
        %388 = vmatpush.msra.mxu0 %v327
        %389 = vmatpush.msra.mxu0 %v325
        %390 = vmatpush.msra.mxu0 %v323
        %391 = vmatpush.msra.mxu0 %v321
        %392 = vmatpush.msra.mxu0 %v319
        %393 = vmatpush.msra.mxu0 %v317
        %394 = vmatpush.msra.mxu0 %v315
        %395 = vmatpush.msra.mxu0 %v313
        %396 = vmatpush.msra.mxu0 %v311
        %397 = vmatmul.f32.gmra.mxu0 %v247
        %v398 = vpop.f32.mrf.mxu0
        %v399 = vadd.f32 %v377, %v398
        %400 = vmatmul.f32.gmra.mxu0 %v249
        %v401 = vpop.f32.mrf.mxu0
        %v402 = vadd.f32 %v377, %v401
        %403 = vmatmul.f32.gmra.mxu0 %v251
        %v404 = vpop.f32.mrf.mxu0
        %v405 = vadd.f32 %v377, %v404
        %406 = vmatmul.f32.gmra.mxu0 %v253
        %v407 = vpop.f32.mrf.mxu0
        %v408 = vadd.f32 %v377, %v407
        %409 = vmatmul.f32.gmra.mxu0 %v255
        %v410 = vpop.f32.mrf.mxu0
        %v411 = vadd.f32 %v377, %v410
        %412 = vmatmul.f32.gmra.mxu0 %v257
        %v413 = vpop.f32.mrf.mxu0
        %v414 = vadd.f32 %v377, %v413
        %415 = vmatmul.f32.gmra.mxu0 %v259
        %v416 = vpop.f32.mrf.mxu0
        %v417 = vadd.f32 %v377, %v416
        %418 = vmatmul.f32.gmra.mxu0 %v261
        %v419 = vpop.f32.mrf.mxu0
        %v420 = vadd.f32 %v377, %v419
        %421 = vmatmul.f32.gmra.mxu0 %v263
        %v422 = vpop.f32.mrf.mxu0
        %v423 = vadd.f32 %v377, %v422
        %424 = vmatmul.f32.gmra.mxu0 %v265
        %v425 = vpop.f32.mrf.mxu0
        %v426 = vadd.f32 %v377, %v425
        %427 = vmatmul.f32.gmra.mxu0 %v267
        %v428 = vpop.f32.mrf.mxu0
        %v429 = vadd.f32 %v377, %v428
        %430 = vmatmul.f32.gmra.mxu0 %v269
        %v431 = vpop.f32.mrf.mxu0
        %v432 = vadd.f32 %v377, %v431
        %433 = vmatmul.f32.gmra.mxu0 %v271
        %v434 = vpop.f32.mrf.mxu0
        %v435 = vadd.f32 %v377, %v434
        %436 = vmatmul.f32.gmra.mxu0 %v273
        %v437 = vpop.f32.mrf.mxu0
        %v438 = vadd.f32 %v377, %v437
        %439 = vmatmul.f32.gmra.mxu0 %v275
        %v440 = vpop.f32.mrf.mxu0
        %v441 = vadd.f32 %v377, %v440
        %442 = vmatmul.f32.gmra.mxu0 %v277
        %v443 = vpop.f32.mrf.mxu0
        %v444 = vadd.f32 %v377, %v443
        %445 = vmatmul.f32.gmra.mxu0 %v279
        %v446 = vpop.f32.mrf.mxu0
        %v447 = vadd.f32 %v377, %v446
        %448 = vmatmul.f32.gmra.mxu0 %v281
        %v449 = vpop.f32.mrf.mxu0
        %v450 = vadd.f32 %v377, %v449
        %451 = vmatmul.f32.gmra.mxu0 %v283
        %v452 = vpop.f32.mrf.mxu0
        %v453 = vadd.f32 %v377, %v452
        %454 = vmatmul.f32.gmra.mxu0 %v285
        %v455 = vpop.f32.mrf.mxu0
        %v456 = vadd.f32 %v377, %v455
        %457 = vmatmul.f32.gmra.mxu0 %v287
        %v458 = vpop.f32.mrf.mxu0
        %v459 = vadd.f32 %v377, %v458
        %460 = vmatmul.f32.gmra.mxu0 %v289
        %v461 = vpop.f32.mrf.mxu0
        %v462 = vadd.f32 %v377, %v461
        %463 = vmatmul.f32.gmra.mxu0 %v291
        %v464 = vpop.f32.mrf.mxu0
        %v465 = vadd.f32 %v377, %v464
        %466 = vmatmul.f32.gmra.mxu0 %v293
        %v467 = vpop.f32.mrf.mxu0
        %v468 = vadd.f32 %v377, %v467
        %469 = vmatmul.f32.gmra.mxu0 %v295
        %v470 = vpop.f32.mrf.mxu0
        %v471 = vadd.f32 %v377, %v470
        %472 = vmatmul.f32.gmra.mxu0 %v297
        %v473 = vpop.f32.mrf.mxu0
        %v474 = vadd.f32 %v377, %v473
        %475 = vmatmul.f32.gmra.mxu0 %v299
        %v476 = vpop.f32.mrf.mxu0
        %v477 = vadd.f32 %v377, %v476
        %478 = vmatmul.f32.gmra.mxu0 %v301
        %v479 = vpop.f32.mrf.mxu0
        %v480 = vadd.f32 %v377, %v479
        %481 = vmatmul.f32.gmra.mxu0 %v303
        %v482 = vpop.f32.mrf.mxu0
        %v483 = vadd.f32 %v377, %v482
        %484 = vmatmul.f32.gmra.mxu0 %v305
        %v485 = vpop.f32.mrf.mxu0
        %v486 = vadd.f32 %v377, %v485
        %487 = vmatmul.f32.gmra.mxu0 %v307
        %v488 = vpop.f32.mrf.mxu0
        %v489 = vadd.f32 %v377, %v488
        %490 = vmatmul.f32.gmra.mxu0 %v309
        %v491 = vpop.f32.mrf.mxu0
        %v492 = vadd.f32 %v377, %v491
        %493 = vdwg.mxu0
        %494 = vmatpush.msra.mxu0 %v373
        %495 = vmatpush.msra.mxu0 %v371
        %496 = vmatpush.msra.mxu0 %v369
        %497 = vmatpush.msra.mxu0 %v367
        %498 = vmatpush.msra.mxu0 %v365
        %499 = vmatpush.msra.mxu0 %v363
        %500 = vmatpush.msra.mxu0 %v361
        %501 = vmatpush.msra.mxu0 %v359
        %502 = vmatpush.msra.mxu0 %v357
        %503 = vmatpush.msra.mxu0 %v355
        %504 = vmatpush.msra.mxu0 %v353
        %505 = vmatpush.msra.mxu0 %v351
        %506 = vmatpush.msra.mxu0 %v349
        %507 = vmatpush.msra.mxu0 %v347
        %508 = vmatpush.msra.mxu0 %v345
        %509 = vmatpush.msra.mxu0 %v343
        %510 = vmatmul.f32.gmra.mxu0 %v248
        %v511 = vpop.f32.mrf.mxu0
        %v512 = vadd.f32 %v399, %v511
        %513 = vmatmul.f32.gmra.mxu0 %v250
        %v514 = vpop.f32.mrf.mxu0
        %v515 = vadd.f32 %v402, %v514
        %516 = vmatmul.f32.gmra.mxu0 %v252
        %v517 = vpop.f32.mrf.mxu0
        %v518 = vadd.f32 %v405, %v517
        %519 = vmatmul.f32.gmra.mxu0 %v254
        %v520 = vpop.f32.mrf.mxu0
        %v521 = vadd.f32 %v408, %v520
        %522 = vmatmul.f32.gmra.mxu0 %v256
        %v523 = vpop.f32.mrf.mxu0
        %v524 = vadd.f32 %v411, %v523
        %525 = vmatmul.f32.gmra.mxu0 %v258
        %v526 = vpop.f32.mrf.mxu0
        %v527 = vadd.f32 %v414, %v526
        %528 = vmatmul.f32.gmra.mxu0 %v260
        %v529 = vpop.f32.mrf.mxu0
        %v530 = vadd.f32 %v417, %v529
        %531 = vmatmul.f32.gmra.mxu0 %v262
        %v532 = vpop.f32.mrf.mxu0
        %v533 = vadd.f32 %v420, %v532
        %534 = vmatmul.f32.gmra.mxu0 %v264
        %v535 = vpop.f32.mrf.mxu0
        %v536 = vadd.f32 %v423, %v535
        %537 = vmatmul.f32.gmra.mxu0 %v266
        %v538 = vpop.f32.mrf.mxu0
        %v539 = vadd.f32 %v426, %v538
        %540 = vmatmul.f32.gmra.mxu0 %v268
        %v541 = vpop.f32.mrf.mxu0
        %v542 = vadd.f32 %v429, %v541
        %543 = vmatmul.f32.gmra.mxu0 %v270
        %v544 = vpop.f32.mrf.mxu0
        %v545 = vadd.f32 %v432, %v544
        %546 = vmatmul.f32.gmra.mxu0 %v272
        %v547 = vpop.f32.mrf.mxu0
        %v548 = vadd.f32 %v435, %v547
        %549 = vmatmul.f32.gmra.mxu0 %v274
        %v550 = vpop.f32.mrf.mxu0
        %v551 = vadd.f32 %v438, %v550
        %552 = vmatmul.f32.gmra.mxu0 %v276
        %v553 = vpop.f32.mrf.mxu0
        %v554 = vadd.f32 %v441, %v553
        %555 = vmatmul.f32.gmra.mxu0 %v278
        %v556 = vpop.f32.mrf.mxu0
        %v557 = vadd.f32 %v444, %v556
        %558 = vmatmul.f32.gmra.mxu0 %v280
        %v559 = vpop.f32.mrf.mxu0
        %v560 = vadd.f32 %v447, %v559
        %561 = vmatmul.f32.gmra.mxu0 %v282
        %v562 = vpop.f32.mrf.mxu0
        %v563 = vadd.f32 %v450, %v562
        %564 = vmatmul.f32.gmra.mxu0 %v284
        %v565 = vpop.f32.mrf.mxu0
        %v566 = vadd.f32 %v453, %v565
        %567 = vmatmul.f32.gmra.mxu0 %v286
        %v568 = vpop.f32.mrf.mxu0
        %v569 = vadd.f32 %v456, %v568
        %570 = vmatmul.f32.gmra.mxu0 %v288
        %v571 = vpop.f32.mrf.mxu0
        %v572 = vadd.f32 %v459, %v571
        %573 = vmatmul.f32.gmra.mxu0 %v290
        %v574 = vpop.f32.mrf.mxu0
        %v575 = vadd.f32 %v462, %v574
        %576 = vmatmul.f32.gmra.mxu0 %v292
        %v577 = vpop.f32.mrf.mxu0
        %v578 = vadd.f32 %v465, %v577
        %579 = vmatmul.f32.gmra.mxu0 %v294
        %v580 = vpop.f32.mrf.mxu0
        %v581 = vadd.f32 %v468, %v580
        %582 = vmatmul.f32.gmra.mxu0 %v296
        %v583 = vpop.f32.mrf.mxu0
        %v584 = vadd.f32 %v471, %v583
        %585 = vmatmul.f32.gmra.mxu0 %v298
        %v586 = vpop.f32.mrf.mxu0
        %v587 = vadd.f32 %v474, %v586
        %588 = vmatmul.f32.gmra.mxu0 %v300
        %v589 = vpop.f32.mrf.mxu0
        %v590 = vadd.f32 %v477, %v589
        %591 = vmatmul.f32.gmra.mxu0 %v302
        %v592 = vpop.f32.mrf.mxu0
        %v593 = vadd.f32 %v480, %v592
        %594 = vmatmul.f32.gmra.mxu0 %v304
        %v595 = vpop.f32.mrf.mxu0
        %v596 = vadd.f32 %v483, %v595
        %597 = vmatmul.f32.gmra.mxu0 %v306
        %v598 = vpop.f32.mrf.mxu0
        %v599 = vadd.f32 %v486, %v598
        %600 = vmatmul.f32.gmra.mxu0 %v308
        %v601 = vpop.f32.mrf.mxu0
        %v602 = vadd.f32 %v489, %v601
        %603 = vmatmul.f32.gmra.mxu0 %v310
        %v604 = vpop.f32.mrf.mxu0
        %v605 = vadd.f32 %v492, %v604
        %606 = vdwg.mxu0
        %607 = vmatpush.msra.mxu0 %v342
        %608 = vmatpush.msra.mxu0 %v340
        %609 = vmatpush.msra.mxu0 %v338
        %610 = vmatpush.msra.mxu0 %v336
        %611 = vmatpush.msra.mxu0 %v334
        %612 = vmatpush.msra.mxu0 %v332
        %613 = vmatpush.msra.mxu0 %v330
        %614 = vmatpush.msra.mxu0 %v328
        %615 = vmatpush.msra.mxu0 %v326
        %616 = vmatpush.msra.mxu0 %v324
        %617 = vmatpush.msra.mxu0 %v322
        %618 = vmatpush.msra.mxu0 %v320
        %619 = vmatpush.msra.mxu0 %v318
        %620 = vmatpush.msra.mxu0 %v316
        %621 = vmatpush.msra.mxu0 %v314
        %622 = vmatpush.msra.mxu0 %v312
        %623 = vmatmul.f32.gmra.mxu0 %v247
        %v624 = vpop.f32.mrf.mxu0
        %v625 = vadd.f32 %v378, %v624
        %626 = vmatmul.f32.gmra.mxu0 %v249
        %v627 = vpop.f32.mrf.mxu0
        %v628 = vadd.f32 %v378, %v627
        %629 = vmatmul.f32.gmra.mxu0 %v251
        %v630 = vpop.f32.mrf.mxu0
        %v631 = vadd.f32 %v378, %v630
        %632 = vmatmul.f32.gmra.mxu0 %v253
        %v633 = vpop.f32.mrf.mxu0
        %v634 = vadd.f32 %v378, %v633
        %635 = vmatmul.f32.gmra.mxu0 %v255
        %v636 = vpop.f32.mrf.mxu0
        %v637 = vadd.f32 %v378, %v636
        %638 = vmatmul.f32.gmra.mxu0 %v257
        %v639 = vpop.f32.mrf.mxu0
        %v640 = vadd.f32 %v378, %v639
        %641 = vmatmul.f32.gmra.mxu0 %v259
        %v642 = vpop.f32.mrf.mxu0
        %v643 = vadd.f32 %v378, %v642
        %644 = vmatmul.f32.gmra.mxu0 %v261
        %v645 = vpop.f32.mrf.mxu0
        %v646 = vadd.f32 %v378, %v645
        %647 = vmatmul.f32.gmra.mxu0 %v263
        %v648 = vpop.f32.mrf.mxu0
        %v649 = vadd.f32 %v378, %v648
        %650 = vmatmul.f32.gmra.mxu0 %v265
        %v651 = vpop.f32.mrf.mxu0
        %v652 = vadd.f32 %v378, %v651
        %653 = vmatmul.f32.gmra.mxu0 %v267
        %v654 = vpop.f32.mrf.mxu0
        %v655 = vadd.f32 %v378, %v654
        %656 = vmatmul.f32.gmra.mxu0 %v269
        %v657 = vpop.f32.mrf.mxu0
        %v658 = vadd.f32 %v378, %v657
        %659 = vmatmul.f32.gmra.mxu0 %v271
        %v660 = vpop.f32.mrf.mxu0
        %v661 = vadd.f32 %v378, %v660
        %662 = vmatmul.f32.gmra.mxu0 %v273
        %v663 = vpop.f32.mrf.mxu0
        %v664 = vadd.f32 %v378, %v663
        %665 = vmatmul.f32.gmra.mxu0 %v275
        %v666 = vpop.f32.mrf.mxu0
        %v667 = vadd.f32 %v378, %v666
        %668 = vmatmul.f32.gmra.mxu0 %v277
        %v669 = vpop.f32.mrf.mxu0
        %v670 = vadd.f32 %v378, %v669
        %671 = vmatmul.f32.gmra.mxu0 %v279
        %v672 = vpop.f32.mrf.mxu0
        %v673 = vadd.f32 %v378, %v672
        %674 = vmatmul.f32.gmra.mxu0 %v281
        %v675 = vpop.f32.mrf.mxu0
        %v676 = vadd.f32 %v378, %v675
        %677 = vmatmul.f32.gmra.mxu0 %v283
        %v678 = vpop.f32.mrf.mxu0
        %v679 = vadd.f32 %v378, %v678
        %680 = vmatmul.f32.gmra.mxu0 %v285
        %v681 = vpop.f32.mrf.mxu0
        %v682 = vadd.f32 %v378, %v681
        %683 = vmatmul.f32.gmra.mxu0 %v287
        %v684 = vpop.f32.mrf.mxu0
        %v685 = vadd.f32 %v378, %v684
        %686 = vmatmul.f32.gmra.mxu0 %v289
        %v687 = vpop.f32.mrf.mxu0
        %v688 = vadd.f32 %v378, %v687
        %689 = vmatmul.f32.gmra.mxu0 %v291
        %v690 = vpop.f32.mrf.mxu0
        %v691 = vadd.f32 %v378, %v690
        %692 = vmatmul.f32.gmra.mxu0 %v293
        %v693 = vpop.f32.mrf.mxu0
        %v694 = vadd.f32 %v378, %v693
        %695 = vmatmul.f32.gmra.mxu0 %v295
        %v696 = vpop.f32.mrf.mxu0
        %v697 = vadd.f32 %v378, %v696
        %698 = vmatmul.f32.gmra.mxu0 %v297
        %v699 = vpop.f32.mrf.mxu0
        %v700 = vadd.f32 %v378, %v699
        %701 = vmatmul.f32.gmra.mxu0 %v299
        %v702 = vpop.f32.mrf.mxu0
        %v703 = vadd.f32 %v378, %v702
        %704 = vmatmul.f32.gmra.mxu0 %v301
        %v705 = vpop.f32.mrf.mxu0
        %v706 = vadd.f32 %v378, %v705
        %707 = vmatmul.f32.gmra.mxu0 %v303
        %v708 = vpop.f32.mrf.mxu0
        %v709 = vadd.f32 %v378, %v708
        %710 = vmatmul.f32.gmra.mxu0 %v305
        %v711 = vpop.f32.mrf.mxu0
        %v712 = vadd.f32 %v378, %v711
        %713 = vmatmul.f32.gmra.mxu0 %v307
        %v714 = vpop.f32.mrf.mxu0
        %v715 = vadd.f32 %v378, %v714
        %716 = vmatmul.f32.gmra.mxu0 %v309
        %v717 = vpop.f32.mrf.mxu0
        %v718 = vadd.f32 %v378, %v717
        %719 = vdwg.mxu0
        %720 = vmatpush.msra.mxu0 %v374
        %721 = vmatpush.msra.mxu0 %v372
        %722 = vmatpush.msra.mxu0 %v370
        %723 = vmatpush.msra.mxu0 %v368
        %724 = vmatpush.msra.mxu0 %v366
        %725 = vmatpush.msra.mxu0 %v364
        %726 = vmatpush.msra.mxu0 %v362
        %727 = vmatpush.msra.mxu0 %v360
        %728 = vmatpush.msra.mxu0 %v358
        %729 = vmatpush.msra.mxu0 %v356
        %730 = vmatpush.msra.mxu0 %v354
        %731 = vmatpush.msra.mxu0 %v352
        %732 = vmatpush.msra.mxu0 %v350
        %733 = vmatpush.msra.mxu0 %v348
        %734 = vmatpush.msra.mxu0 %v346
        %735 = vmatpush.msra.mxu0 %v344
        %736 = vmatmul.f32.gmra.mxu0 %v248
        %v737 = vpop.f32.mrf.mxu0
        %v738 = vadd.f32 %v625, %v737
        %739 = vmatmul.f32.gmra.mxu0 %v250
        %v740 = vpop.f32.mrf.mxu0
        %v741 = vadd.f32 %v628, %v740
        %742 = vmatmul.f32.gmra.mxu0 %v252
        %v743 = vpop.f32.mrf.mxu0
        %v744 = vadd.f32 %v631, %v743
        %745 = vmatmul.f32.gmra.mxu0 %v254
        %v746 = vpop.f32.mrf.mxu0
        %v747 = vadd.f32 %v634, %v746
        %748 = vmatmul.f32.gmra.mxu0 %v256
        %v749 = vpop.f32.mrf.mxu0
        %v750 = vadd.f32 %v637, %v749
        %751 = vmatmul.f32.gmra.mxu0 %v258
        %v752 = vpop.f32.mrf.mxu0
        %v753 = vadd.f32 %v640, %v752
        %754 = vmatmul.f32.gmra.mxu0 %v260
        %v755 = vpop.f32.mrf.mxu0
        %v756 = vadd.f32 %v643, %v755
        %757 = vmatmul.f32.gmra.mxu0 %v262
        %v758 = vpop.f32.mrf.mxu0
        %v759 = vadd.f32 %v646, %v758
        %760 = vmatmul.f32.gmra.mxu0 %v264
        %v761 = vpop.f32.mrf.mxu0
        %v762 = vadd.f32 %v649, %v761
        %763 = vmatmul.f32.gmra.mxu0 %v266
        %v764 = vpop.f32.mrf.mxu0
        %v765 = vadd.f32 %v652, %v764
        %766 = vmatmul.f32.gmra.mxu0 %v268
        %v767 = vpop.f32.mrf.mxu0
        %v768 = vadd.f32 %v655, %v767
        %769 = vmatmul.f32.gmra.mxu0 %v270
        %v770 = vpop.f32.mrf.mxu0
        %v771 = vadd.f32 %v658, %v770
        %772 = vmatmul.f32.gmra.mxu0 %v272
        %v773 = vpop.f32.mrf.mxu0
        %v774 = vadd.f32 %v661, %v773
        %775 = vmatmul.f32.gmra.mxu0 %v274
        %v776 = vpop.f32.mrf.mxu0
        %v777 = vadd.f32 %v664, %v776
        %778 = vmatmul.f32.gmra.mxu0 %v276
        %v779 = vpop.f32.mrf.mxu0
        %v780 = vadd.f32 %v667, %v779
        %781 = vmatmul.f32.gmra.mxu0 %v278
        %v782 = vpop.f32.mrf.mxu0
        %v783 = vadd.f32 %v670, %v782
        %784 = vmatmul.f32.gmra.mxu0 %v280
        %v785 = vpop.f32.mrf.mxu0
        %v786 = vadd.f32 %v673, %v785
        %787 = vmatmul.f32.gmra.mxu0 %v282
        %v788 = vpop.f32.mrf.mxu0
        %v789 = vadd.f32 %v676, %v788
        %790 = vmatmul.f32.gmra.mxu0 %v284
        %v791 = vpop.f32.mrf.mxu0
        %v792 = vadd.f32 %v679, %v791
        %793 = vmatmul.f32.gmra.mxu0 %v286
        %v794 = vpop.f32.mrf.mxu0
        %v795 = vadd.f32 %v682, %v794
        %796 = vmatmul.f32.gmra.mxu0 %v288
        %v797 = vpop.f32.mrf.mxu0
        %v798 = vadd.f32 %v685, %v797
        %799 = vmatmul.f32.gmra.mxu0 %v290
        %v800 = vpop.f32.mrf.mxu0
        %v801 = vadd.f32 %v688, %v800
        %802 = vmatmul.f32.gmra.mxu0 %v292
        %v803 = vpop.f32.mrf.mxu0
        %v804 = vadd.f32 %v691, %v803
        %805 = vmatmul.f32.gmra.mxu0 %v294
        %v806 = vpop.f32.mrf.mxu0
        %v807 = vadd.f32 %v694, %v806
        %808 = vmatmul.f32.gmra.mxu0 %v296
        %v809 = vpop.f32.mrf.mxu0
        %v810 = vadd.f32 %v697, %v809
        %811 = vmatmul.f32.gmra.mxu0 %v298
        %v812 = vpop.f32.mrf.mxu0
        %v813 = vadd.f32 %v700, %v812
        %814 = vmatmul.f32.gmra.mxu0 %v300
        %v815 = vpop.f32.mrf.mxu0
        %v816 = vadd.f32 %v703, %v815
        %817 = vmatmul.f32.gmra.mxu0 %v302
        %v818 = vpop.f32.mrf.mxu0
        %v819 = vadd.f32 %v706, %v818
        %820 = vmatmul.f32.gmra.mxu0 %v304
        %v821 = vpop.f32.mrf.mxu0
        %v822 = vadd.f32 %v709, %v821
        %823 = vmatmul.f32.gmra.mxu0 %v306
        %v824 = vpop.f32.mrf.mxu0
        %v825 = vadd.f32 %v712, %v824
        %826 = vmatmul.f32.gmra.mxu0 %v308
        %v827 = vpop.f32.mrf.mxu0
        %v828 = vadd.f32 %v715, %v827
        %829 = vmatmul.f32.gmra.mxu0 %v310
        %v830 = vpop.f32.mrf.mxu0
        %v831 = vadd.f32 %v718, %v830
        %832 = vdwg.mxu0
        %833 = vst [vmem:[%s234] sm:$0xff] %v512
        %834 = vst [vmem:[%s234 + $0x8] sm:$0xff] %v738
        %835 = vst [vmem:[%s234 + $0x10] sm:$0xff] %v515
        %836 = vst [vmem:[%s234 + $0x18] sm:$0xff] %v741
        %837 = vst [vmem:[%s234 + $0x20] sm:$0xff] %v518
        %838 = vst [vmem:[%s234 + $0x28] sm:$0xff] %v744
        %839 = vst [vmem:[%s234 + $0x30] sm:$0xff] %v521
        %840 = vst [vmem:[%s234 + $0x38] sm:$0xff] %v747
        %841 = vst [vmem:[%s234 + $0x40] sm:$0xff] %v524
        %842 = vst [vmem:[%s234 + $0x48] sm:$0xff] %v750
        %843 = vst [vmem:[%s234 + $0x50] sm:$0xff] %v527
        %844 = vst [vmem:[%s234 + $0x58] sm:$0xff] %v753
        %845 = vst [vmem:[%s234 + $0x60] sm:$0xff] %v530
        %846 = vst [vmem:[%s234 + $0x68] sm:$0xff] %v756
        %847 = vst [vmem:[%s234 + $0x70] sm:$0xff] %v533
        %848 = vst [vmem:[%s234 + $0x78] sm:$0xff] %v759
        %849 = vst [vmem:[%s234 + $0x80] sm:$0xff] %v536
        %850 = vst [vmem:[%s234 + $0x88] sm:$0xff] %v762
        %851 = vst [vmem:[%s234 + $0x90] sm:$0xff] %v539
        %852 = vst [vmem:[%s234 + $0x98] sm:$0xff] %v765
        %853 = vst [vmem:[%s234 + $0xa0] sm:$0xff] %v542
        %854 = vst [vmem:[%s234 + $0xa8] sm:$0xff] %v768
        %855 = vst [vmem:[%s234 + $0xb0] sm:$0xff] %v545
        %856 = vst [vmem:[%s234 + $0xb8] sm:$0xff] %v771
        %857 = vst [vmem:[%s234 + $0xc0] sm:$0xff] %v548
        %858 = vst [vmem:[%s234 + $0xc8] sm:$0xff] %v774
        %859 = vst [vmem:[%s234 + $0xd0] sm:$0xff] %v551
        %860 = vst [vmem:[%s234 + $0xd8] sm:$0xff] %v777
        %861 = vst [vmem:[%s234 + $0xe0] sm:$0xff] %v554
        %862 = vst [vmem:[%s234 + $0xe8] sm:$0xff] %v780
        %863 = vst [vmem:[%s234 + $0xf0] sm:$0xff] %v557
        %864 = vst [vmem:[%s234 + $0xf8] sm:$0xff] %v783
        %865 = vst [vmem:[%s234 + $0x100] sm:$0xff] %v560
        %866 = vst [vmem:[%s234 + $0x108] sm:$0xff] %v786
        %867 = vst [vmem:[%s234 + $0x110] sm:$0xff] %v563
        %868 = vst [vmem:[%s234 + $0x118] sm:$0xff] %v789
        %869 = vst [vmem:[%s234 + $0x120] sm:$0xff] %v566
        %870 = vst [vmem:[%s234 + $0x128] sm:$0xff] %v792
        %871 = vst [vmem:[%s234 + $0x130] sm:$0xff] %v569
        %872 = vst [vmem:[%s234 + $0x138] sm:$0xff] %v795
        %873 = vst [vmem:[%s234 + $0x140] sm:$0xff] %v572
        %874 = vst [vmem:[%s234 + $0x148] sm:$0xff] %v798
        %875 = vst [vmem:[%s234 + $0x150] sm:$0xff] %v575
        %876 = vst [vmem:[%s234 + $0x158] sm:$0xff] %v801
        %877 = vst [vmem:[%s234 + $0x160] sm:$0xff] %v578
        %878 = vst [vmem:[%s234 + $0x168] sm:$0xff] %v804
        %879 = vst [vmem:[%s234 + $0x170] sm:$0xff] %v581
        %880 = vst [vmem:[%s234 + $0x178] sm:$0xff] %v807
        %881 = vst [vmem:[%s234 + $0x180] sm:$0xff] %v584
        %882 = vst [vmem:[%s234 + $0x188] sm:$0xff] %v810
        %883 = vst [vmem:[%s234 + $0x190] sm:$0xff] %v587
        %884 = vst [vmem:[%s234 + $0x198] sm:$0xff] %v813
        %885 = vst [vmem:[%s234 + $0x1a0] sm:$0xff] %v590
        %886 = vst [vmem:[%s234 + $0x1a8] sm:$0xff] %v816
        %887 = vst [vmem:[%s234 + $0x1b0] sm:$0xff] %v593
        %888 = vst [vmem:[%s234 + $0x1b8] sm:$0xff] %v819
        %889 = vst [vmem:[%s234 + $0x1c0] sm:$0xff] %v596
        %890 = vst [vmem:[%s234 + $0x1c8] sm:$0xff] %v822
        %891 = vst [vmem:[%s234 + $0x1d0] sm:$0xff] %v599
        %892 = vst [vmem:[%s234 + $0x1d8] sm:$0xff] %v825
        %893 = vst [vmem:[%s234 + $0x1e0] sm:$0xff] %v602
        %894 = vst [vmem:[%s234 + $0x1e8] sm:$0xff] %v828
        %895 = vst [vmem:[%s234 + $0x1f0] sm:$0xff] %v605
        %896 = vst [vmem:[%s234 + $0x1f8] sm:$0xff] %v831
        %s897 = sand.u32 %s132, 1
        %s898 = scalar_lea.sflag [#allocation4], %s897
        %s899 = sand.u32 %s132, 1
        %s900 = smul.addr %s899, 512
        %s901 = scalar_lea.vmem [#allocation5], %s900
        // Predicated region
        $region41: #{wan_i2v_cross_attention.13} parent=35 // pred_check
          %p902 = pneg %p142
        $region42: #{wan_i2v_cross_attention.13} parent=35 // pred_check_branch
          %904 = sbr.rel (%p902) target = $region44
        $region43: #{wan_i2v_cross_attention.13} parent=35 // pred_region
          %s905 = smul.u32 32, %s24
          %907 = vsyncadd %s898, 0
          %s908 = smul.addr %s905, 2
          %s909 = smul.addr %s23, 64
          %s910 = sadd.s32 %s908, %s909
          %s911 = smul.addr %s910, 8
          %s912 = scalar_lea.hbm %s4, %s911
          %s913 = sshll.u32 %s901, 4
          %s914 = int_to_ptr.vmem [resolvable:$true] %s913
          %s915 = sshll.u32 %s912, 4
          %s916 = int_to_ptr.hbm [resolvable:$true] %s915
          %921 = dma.vmem_to_hbm [thread:$0]  %s914, 8192, %s916, %s898, 256, 256, 16
        $region44: #{wan_i2v_cross_attention.13} parent=35 // pred_fallthru
          _
      $region36: #{wan_i2v_cross_attention.13} parent=5 // pred_fallthru
        _
      %p922 = scmp.le.s32.totalorder 2, %s14
      // Predicated region
      $region45: #{wan_i2v_cross_attention.13} parent=5 // pred_check
        %p923 = pneg %p922
      $region46: #{wan_i2v_cross_attention.13} parent=5 // pred_check_branch
        %925 = sbr.rel (%p923) target = $region48
      $region47: #{wan_i2v_cross_attention.13} parent=5 // pred_region
        %s926 = ssub.s32 %s14, 2
        // Predicated region
        $region49: #{wan_i2v_cross_attention.13} parent=47 // pred_check
          %p927 = pneg %p148
        $region50: #{wan_i2v_cross_attention.13} parent=47 // pred_check_branch
          %929 = sbr.rel (%p927) target = $region52
        $region51: #{wan_i2v_cross_attention.13} parent=47 // pred_region
          %s930 = sand.u32 %s133, 1
          %s931 = scalar_lea.sflag [#allocation4], %s930
          %s932 = sand.u32 %s133, 1
          %s933 = smul.addr %s932, 512
          %s934 = scalar_lea.vmem [#allocation5], %s933
          %936 = dma.done %s931, 8192
        $region52: #{wan_i2v_cross_attention.13} parent=47 // pred_fallthru
          _
      $region48: #{wan_i2v_cross_attention.13} parent=5 // pred_fallthru
        _
    $region6: #{wan_i2v_cross_attention.13} parent=1 // loop_footer
      %s18 = sadd.s32 1, %s14
    $region7: #{wan_i2v_cross_attention.13} parent=1 // loop_footer_branch
      %13 = sbr.rel target = $region3
    $region8: #{wan_i2v_cross_attention.13} parent=1 // loop_exit
      _
    %937 = vsyncpa [#allocation3], 1
    %s938 = scalar_lea.sflag [#allocation3], 1
    %939 = vsyncpa %s938, 1
    %940 = vsyncpa [#allocation4], 1
    %s941 = scalar_lea.sflag [#allocation4], 1
    %942 = vsyncpa %s941, 1

// kernel: wan_i2v_cross_attention.12
$region0: #{wan_i2v_cross_attention.12}
  #allocation0 [shape = 'u32[]', space=smem, size = 0x4, offset = 0x4, fixed_abs, tag = 'smem constant byte address 0x4 - core index']
  #allocation1 [shape = 'u32[72,128]{1,0:T(1,128)}', space=vmem, size = 0x9000, scoped, tag = 'internal scratch']
  #allocation2 [shape = 's32[1]{0}', space=sflag, size = 0x4, scoped, tag = 'scoped memory for wan_i2v_cross_attention.12']
  #allocation3 [shape = 'u8[512]{0}', space=smem, size = 0x200, scoped, tag = 'prefetched SMEM operand 0']
  %s0 = inlined_call_operand.vmem [shape: s32[2], index: 0, kind: input, shape index: {}]
  %s1 = inlined_call_operand.vmem [shape: f32[2,256,256], index: 1, kind: input, shape index: {}]
  %s2 = inlined_call_operand.vmem [shape: f32[2,384,256], index: 2, kind: input, shape index: {}]
  %s3 = inlined_call_operand.vmem [shape: f32[2,384,256], index: 3, kind: input, shape index: {}]
  %s4 = inlined_call_operand.vmem [shape: f32[2,128,256], index: 4, kind: input, shape index: {}]
  %s5 = inlined_call_operand.vmem [shape: f32[2,128,256], index: 5, kind: input, shape index: {}]
  %s6 = inlined_call_operand.vmem [shape: f32[2,256,256], index: 6, kind: output, shape index: {}]
  %s7 = sld [smem:[#allocation0]]
  $region277: #{wan_i2v_cross_attention.12} parent=0
    _
  %s9 = ssub.s32 1, %s7
  %s10 = scalar_select 0, %s9, %s7
  %s12 = sshll.u32 %s0, 4
  %s13 = int_to_ptr.vmem [resolvable:$true] %s12
  %15 = dma.vmem_to_smem %s13, 16, [#allocation3], [#allocation2]
  %17 = dma.done [#allocation2], 16
  %18 = sfence
  $region1: #{wan_i2v_cross_attention.12} parent=0
    #allocation4 [shape = 'u8[262144]{0}', space=vmem, size = 0x40000, scoped, tag = 'input window, operand 1']
    #allocation5 [shape = 'u8[393216]{0}', space=vmem, size = 0x60000, scoped, tag = 'input window, operand 2']
    #allocation6 [shape = 'u8[393216]{0}', space=vmem, size = 0x60000, scoped, tag = 'input window, operand 3']
    #allocation7 [shape = 'u8[131072]{0}', space=vmem, size = 0x20000, scoped, tag = 'input window, operand 4']
    #allocation8 [shape = 'u8[131072]{0}', space=vmem, size = 0x20000, scoped, tag = 'input window, operand 5']
    #allocation9 [shape = 'u8[262144]{0}', space=vmem, size = 0x40000, scoped, tag = 'output window, operand 0']
    loop: start=0, step=1, limit=6
    $region2: #{wan_i2v_cross_attention.12} parent=1 // loop_pre_header
      _
    $region3: #{wan_i2v_cross_attention.12} parent=1 // loop_header
      %s20 = sphi 0, %s24
      %p21 = scmp.ge.s32.totalorder %s20, 6
      %s27 = sphi 0, %s46
      %s28 = sphi 0, %s42
      %s29 = sphi 0, %s38
      %s30 = sphi 0, %s27
      %s31 = sphi 0, %s28
      %s32 = sphi 0, %s29
      %s33 = sphi 0, %s30
      %s34 = sphi 0, %s31
      %s35 = sphi 0, %s32
      %s53 = sphi 0, %s55
      %s56 = sphi 0, %s53
      %s57 = sphi 0, %s56
      %s73 = sphi 0, %s57
      %s81 = sphi 0, %s83
      %s84 = sphi 0, %s81
      %s85 = sphi 0, %s84
      %s101 = sphi 0, %s85
      %s109 = sphi 0, %s111
      %s112 = sphi 0, %s109
      %s113 = sphi 0, %s112
      %s129 = sphi 0, %s113
      %s137 = sphi 0, %s139
      %s140 = sphi 0, %s137
      %s141 = sphi 0, %s140
      %s157 = sphi 0, %s141
      %s165 = sphi 0, %s167
      %s168 = sphi 0, %s165
      %s169 = sphi 0, %s168
      %s185 = sphi 0, %s169
      %s195 = sphi 0, %s197
      %s198 = sphi 0, %s195
      %s199 = sphi 0, %s198
      %s215 = sphi 0, %s199
    $region4: #{wan_i2v_cross_attention.12} parent=1 // loop_header_branch
      %23 = sbr.rel (%p21) target = $region8
    $region5: #{wan_i2v_cross_attention.12} parent=1 // loop_body
      %s25 = ssub.s32 %s20, 1
      %s26 = ssub.s32 %s20, 2
      %s36 = sadd.s32 1, %s29
      %p37 = scmp.ge.s32.totalorder %s36, 1
      %s38 = scalar_select %p37, 0, %s36
      %s39 = sadd.s32 1, %s28
      %s40 = scalar_select %p37, %s39, %s28
      %p41 = scmp.ge.s32.totalorder %s40, 2
      %s42 = scalar_select %p41, 0, %s40
      %s43 = sadd.s32 1, %s27
      %s44 = scalar_select %p41, %s43, %s27
      %p45 = scmp.ge.s32.totalorder %s44, 2
      %s46 = scalar_select %p45, 0, %s44
      %s47 = ssub.s32 %s27, %s46
      %s48 = ssub.s32 %s29, %s38
      %s49 = sor.u32 %s47, %s48
      %s50 = ssub.s32 %s28, %s42
      %s51 = sor.u32 %s49, %s50
      %p52 = scmp.eq.s32.totalorder %s51, 0
      %s54 = sadd.s32 %s53, 1
      %s55 = scalar_select %p52, %s53, %s54
      %p58 = pneg %p52
      %p59 = scmp.eq.s32.totalorder %s20, 3
      %p60 = por %p58, %p59
      %p61 = scmp.ne.s32.totalorder %s53, %s56
      %p62 = scmp.eq.s32.totalorder %s20, 0
      %p63 = por %p61, %p62
      %p64 = scmp.ne.s32.totalorder %s53, %s56
      %p65 = scmp.eq.s32.totalorder %s25, 3
      %p66 = por %p64, %p65
      %p67 = scmp.ne.s32.totalorder %s56, %s57
      %p68 = scmp.eq.s32.totalorder %s25, 0
      %p69 = por %p67, %p68
      %p70 = scmp.ne.s32.totalorder %s56, %s57
      %p71 = scmp.eq.s32.totalorder %s26, 3
      %p72 = por %p70, %p71
      %p74 = scmp.ne.s32.totalorder %s57, %s73
      %p75 = scmp.eq.s32.totalorder %s26, 0
      %p76 = por %p74, %p75
      %s77 = ssub.s32 %s27, %s46
      %s78 = ssub.s32 %s28, %s42
      %s79 = sor.u32 %s77, %s78
      %p80 = scmp.eq.s32.totalorder %s79, 0
      %s82 = sadd.s32 %s81, 1
      %s83 = scalar_select %p80, %s81, %s82
      %p86 = pneg %p80
      %p87 = scmp.eq.s32.totalorder %s20, 3
      %p88 = por %p86, %p87
      %p89 = scmp.ne.s32.totalorder %s81, %s84
      %p90 = scmp.eq.s32.totalorder %s20, 0
      %p91 = por %p89, %p90
      %p92 = scmp.ne.s32.totalorder %s81, %s84
      %p93 = scmp.eq.s32.totalorder %s25, 3
      %p94 = por %p92, %p93
      %p95 = scmp.ne.s32.totalorder %s84, %s85
      %p96 = scmp.eq.s32.totalorder %s25, 0
      %p97 = por %p95, %p96
      %p98 = scmp.ne.s32.totalorder %s84, %s85
      %p99 = scmp.eq.s32.totalorder %s26, 3
      %p100 = por %p98, %p99
      %p102 = scmp.ne.s32.totalorder %s85, %s101
      %p103 = scmp.eq.s32.totalorder %s26, 0
      %p104 = por %p102, %p103
      %s105 = ssub.s32 %s27, %s46
      %s106 = ssub.s32 %s28, %s42
      %s107 = sor.u32 %s105, %s106
      %p108 = scmp.eq.s32.totalorder %s107, 0
      %s110 = sadd.s32 %s109, 1
      %s111 = scalar_select %p108, %s109, %s110
      %p114 = pneg %p108
      %p115 = scmp.eq.s32.totalorder %s20, 3
      %p116 = por %p114, %p115
      %p117 = scmp.ne.s32.totalorder %s109, %s112
      %p118 = scmp.eq.s32.totalorder %s20, 0
      %p119 = por %p117, %p118
      %p120 = scmp.ne.s32.totalorder %s109, %s112
      %p121 = scmp.eq.s32.totalorder %s25, 3
      %p122 = por %p120, %p121
      %p123 = scmp.ne.s32.totalorder %s112, %s113
      %p124 = scmp.eq.s32.totalorder %s25, 0
      %p125 = por %p123, %p124
      %p126 = scmp.ne.s32.totalorder %s112, %s113
      %p127 = scmp.eq.s32.totalorder %s26, 3
      %p128 = por %p126, %p127
      %p130 = scmp.ne.s32.totalorder %s113, %s129
      %p131 = scmp.eq.s32.totalorder %s26, 0
      %p132 = por %p130, %p131
      %s133 = ssub.s32 %s27, %s46
      %s134 = ssub.s32 %s28, %s42
      %s135 = sor.u32 %s133, %s134
      %p136 = scmp.eq.s32.totalorder %s135, 0
      %s138 = sadd.s32 %s137, 1
      %s139 = scalar_select %p136, %s137, %s138
      %p142 = pneg %p136
      %p143 = scmp.eq.s32.totalorder %s20, 3
      %p144 = por %p142, %p143
      %p145 = scmp.ne.s32.totalorder %s137, %s140
      %p146 = scmp.eq.s32.totalorder %s20, 0
      %p147 = por %p145, %p146
      %p148 = scmp.ne.s32.totalorder %s137, %s140
      %p149 = scmp.eq.s32.totalorder %s25, 3
      %p150 = por %p148, %p149
      %p151 = scmp.ne.s32.totalorder %s140, %s141
      %p152 = scmp.eq.s32.totalorder %s25, 0
      %p153 = por %p151, %p152
      %p154 = scmp.ne.s32.totalorder %s140, %s141
      %p155 = scmp.eq.s32.totalorder %s26, 3
      %p156 = por %p154, %p155
      %p158 = scmp.ne.s32.totalorder %s141, %s157
      %p159 = scmp.eq.s32.totalorder %s26, 0
      %p160 = por %p158, %p159
      %s161 = ssub.s32 %s27, %s46
      %s162 = ssub.s32 %s28, %s42
      %s163 = sor.u32 %s161, %s162
      %p164 = scmp.eq.s32.totalorder %s163, 0
      %s166 = sadd.s32 %s165, 1
      %s167 = scalar_select %p164, %s165, %s166
      %p170 = pneg %p164
      %p171 = scmp.eq.s32.totalorder %s20, 3
      %p172 = por %p170, %p171
      %p173 = scmp.ne.s32.totalorder %s165, %s168
      %p174 = scmp.eq.s32.totalorder %s20, 0
      %p175 = por %p173, %p174
      %p176 = scmp.ne.s32.totalorder %s165, %s168
      %p177 = scmp.eq.s32.totalorder %s25, 3
      %p178 = por %p176, %p177
      %p179 = scmp.ne.s32.totalorder %s168, %s169
      %p180 = scmp.eq.s32.totalorder %s25, 0
      %p181 = por %p179, %p180
      %p182 = scmp.ne.s32.totalorder %s168, %s169
      %p183 = scmp.eq.s32.totalorder %s26, 3
      %p184 = por %p182, %p183
      %p186 = scmp.ne.s32.totalorder %s169, %s185
      %p187 = scmp.eq.s32.totalorder %s26, 0
      %p188 = por %p186, %p187
      %s189 = ssub.s32 %s27, %s46
      %s190 = ssub.s32 %s29, %s38
      %s191 = sor.u32 %s189, %s190
      %s192 = ssub.s32 %s28, %s42
      %s193 = sor.u32 %s191, %s192
      %p194 = scmp.eq.s32.totalorder %s193, 0
      %s196 = sadd.s32 %s195, 1
      %s197 = scalar_select %p194, %s195, %s196
      %p200 = pneg %p194
      %p201 = scmp.eq.s32.totalorder %s20, 3
      %p202 = por %p200, %p201
      %p203 = scmp.ne.s32.totalorder %s195, %s198
      %p204 = scmp.eq.s32.totalorder %s20, 0
      %p205 = por %p203, %p204
      %p206 = scmp.ne.s32.totalorder %s195, %s198
      %p207 = scmp.eq.s32.totalorder %s25, 3
      %p208 = por %p206, %p207
      %p209 = scmp.ne.s32.totalorder %s198, %s199
      %p210 = scmp.eq.s32.totalorder %s25, 0
      %p211 = por %p209, %p210
      %p212 = scmp.ne.s32.totalorder %s198, %s199
      %p213 = scmp.eq.s32.totalorder %s26, 3
      %p214 = por %p212, %p213
      %p216 = scmp.ne.s32.totalorder %s199, %s215
      %p217 = scmp.eq.s32.totalorder %s26, 0
      %p218 = por %p216, %p217
      %p219 = scmp.le.s32.totalorder 1, %s20
      %p220 = scmp.lt.s32.totalorder %s20, 5
      %p221 = pnand %p219, %p220
      %p222 = pneg %p221
      // Predicated region
      $region9: #{wan_i2v_cross_attention.12} parent=5 // pred_check
        _
      $region10: #{wan_i2v_cross_attention.12} parent=5 // pred_check_branch
        %224 = sbr.rel (%p221) target = $region12
      $region11: #{wan_i2v_cross_attention.12} parent=5 // pred_region
        %s225 = ssub.s32 %s20, 1
      $region12: #{wan_i2v_cross_attention.12} parent=5 // pred_fallthru
        _
      %p226 = scmp.lt.s32.totalorder %s20, 4
      // Predicated region
      $region13: #{wan_i2v_cross_attention.12} parent=5 // pred_check
        %p227 = pneg %p226
      $region14: #{wan_i2v_cross_attention.12} parent=5 // pred_check_branch
        %229 = sbr.rel (%p227) target = $region16
      $region15: #{wan_i2v_cross_attention.12} parent=5 // pred_region
        // Predicated region
        $region17: #{wan_i2v_cross_attention.12} parent=15 // pred_check
          %p230 = pneg %p63
        $region18: #{wan_i2v_cross_attention.12} parent=15 // pred_check_branch
          %232 = sbr.rel (%p230) target = $region20
        $region19: #{wan_i2v_cross_attention.12} parent=15 // pred_region
          %s233 = sand.u32 %s53, 1
          %s234 = sand.u32 %s53, 1
          %s235 = smul.addr %s234, 256
          %s236 = scalar_lea.vmem [#allocation4], %s235
          %s237 = smul.u32 32, %s29
          %s238 = smul.addr %s237, 2
          %s239 = sadd.s32 %s28, %s238
          %s240 = smul.addr %s27, 64
          %s241 = sadd.s32 %s239, %s240
          %s242 = smul.addr %s241, 8
          %s243 = scalar_lea.vmem %s1, %s242
          // Predicated region
          $region21: #{wan_i2v_cross_attention.12} parent=19 // pred_check
            _
          $region22: #{wan_i2v_cross_attention.12} parent=19 // pred_check_branch
            %245 = sbr.rel (0) target = $region24
          $region23: #{wan_i2v_cross_attention.12} parent=19 // pred_region
            // Predicated region
            $region25: #{wan_i2v_cross_attention.12} parent=23 // pred_check
              _
            $region26: #{wan_i2v_cross_attention.12} parent=23 // pred_check_branch
              %247 = sbr.rel (0) target = $region28
            $region27: #{wan_i2v_cross_attention.12} parent=23 // pred_region
              // Predicated region
              $region40: #{wan_i2v_cross_attention.12} parent=27 // pred_check
                _
              $region41: #{wan_i2v_cross_attention.12} parent=27 // pred_check_branch
                %325 = sbr.rel (0) target = $region43
              $region42: #{wan_i2v_cross_attention.12} parent=27 // pred_region
                loop: start=0, step=1, limit=1
                $region44: #{wan_i2v_cross_attention.12} parent=42 // loop_pre_header
                  _
                $region45: #{wan_i2v_cross_attention.12} parent=42 // loop_header
                  %s327 = sphi 0, %s331
                  %p328 = scmp.ge.s32.totalorder %s327, 1
                  %s332 = sphi %s243, %s243
                  %s333 = sphi %s236, %s236
                $region46: #{wan_i2v_cross_attention.12} parent=42 // loop_header_branch
                  %330 = sbr.rel (%p328) target = $region50
                $region47: #{wan_i2v_cross_attention.12} parent=42 // loop_body
                  %v334 = vld [vmem:[%s332] sm:$0xff]
                  %335 = vst [vmem:[%s333] sm:$0xff] %v334
                  %v336 = vld [vmem:[%s332 + $0x10] sm:$0xff]
                  %337 = vst [vmem:[%s333 + $0x8] sm:$0xff] %v336
                  %v338 = vld [vmem:[%s332 + $0x20] sm:$0xff]
                  %339 = vst [vmem:[%s333 + $0x10] sm:$0xff] %v338
                  %v340 = vld [vmem:[%s332 + $0x30] sm:$0xff]
                  %341 = vst [vmem:[%s333 + $0x18] sm:$0xff] %v340
                  %v342 = vld [vmem:[%s332 + $0x40] sm:$0xff]
                  %343 = vst [vmem:[%s333 + $0x20] sm:$0xff] %v342
                  %v344 = vld [vmem:[%s332 + $0x50] sm:$0xff]
                  %345 = vst [vmem:[%s333 + $0x28] sm:$0xff] %v344
                  %v346 = vld [vmem:[%s332 + $0x60] sm:$0xff]
                  %347 = vst [vmem:[%s333 + $0x30] sm:$0xff] %v346
                  %v348 = vld [vmem:[%s332 + $0x70] sm:$0xff]
                  %349 = vst [vmem:[%s333 + $0x38] sm:$0xff] %v348
                  %v350 = vld [vmem:[%s332 + $0x80] sm:$0xff]
                  %351 = vst [vmem:[%s333 + $0x40] sm:$0xff] %v350
                  %v352 = vld [vmem:[%s332 + $0x90] sm:$0xff]
                  %353 = vst [vmem:[%s333 + $0x48] sm:$0xff] %v352
                  %v354 = vld [vmem:[%s332 + $0xa0] sm:$0xff]
                  %355 = vst [vmem:[%s333 + $0x50] sm:$0xff] %v354
                  %v356 = vld [vmem:[%s332 + $0xb0] sm:$0xff]
                  %357 = vst [vmem:[%s333 + $0x58] sm:$0xff] %v356
                  %v358 = vld [vmem:[%s332 + $0xc0] sm:$0xff]
                  %359 = vst [vmem:[%s333 + $0x60] sm:$0xff] %v358
                  %v360 = vld [vmem:[%s332 + $0xd0] sm:$0xff]
                  %361 = vst [vmem:[%s333 + $0x68] sm:$0xff] %v360
                  %v362 = vld [vmem:[%s332 + $0xe0] sm:$0xff]
                  %363 = vst [vmem:[%s333 + $0x70] sm:$0xff] %v362
                  %v364 = vld [vmem:[%s332 + $0xf0] sm:$0xff]
                  %365 = vst [vmem:[%s333 + $0x78] sm:$0xff] %v364
                  %v366 = vld [vmem:[%s332 + $0x100] sm:$0xff]
                  %367 = vst [vmem:[%s333 + $0x80] sm:$0xff] %v366
                  %v368 = vld [vmem:[%s332 + $0x110] sm:$0xff]
                  %369 = vst [vmem:[%s333 + $0x88] sm:$0xff] %v368
                  %v370 = vld [vmem:[%s332 + $0x120] sm:$0xff]
                  %371 = vst [vmem:[%s333 + $0x90] sm:$0xff] %v370
                  %v372 = vld [vmem:[%s332 + $0x130] sm:$0xff]
                  %373 = vst [vmem:[%s333 + $0x98] sm:$0xff] %v372
                  %v374 = vld [vmem:[%s332 + $0x140] sm:$0xff]
                  %375 = vst [vmem:[%s333 + $0xa0] sm:$0xff] %v374
                  %v376 = vld [vmem:[%s332 + $0x150] sm:$0xff]
                  %377 = vst [vmem:[%s333 + $0xa8] sm:$0xff] %v376
                  %v378 = vld [vmem:[%s332 + $0x160] sm:$0xff]
                  %379 = vst [vmem:[%s333 + $0xb0] sm:$0xff] %v378
                  %v380 = vld [vmem:[%s332 + $0x170] sm:$0xff]
                  %381 = vst [vmem:[%s333 + $0xb8] sm:$0xff] %v380
                  %v382 = vld [vmem:[%s332 + $0x180] sm:$0xff]
                  %383 = vst [vmem:[%s333 + $0xc0] sm:$0xff] %v382
                  %v384 = vld [vmem:[%s332 + $0x190] sm:$0xff]
                  %385 = vst [vmem:[%s333 + $0xc8] sm:$0xff] %v384
                  %v386 = vld [vmem:[%s332 + $0x1a0] sm:$0xff]
                  %387 = vst [vmem:[%s333 + $0xd0] sm:$0xff] %v386
                  %v388 = vld [vmem:[%s332 + $0x1b0] sm:$0xff]
                  %389 = vst [vmem:[%s333 + $0xd8] sm:$0xff] %v388
                  %v390 = vld [vmem:[%s332 + $0x1c0] sm:$0xff]
                  %391 = vst [vmem:[%s333 + $0xe0] sm:$0xff] %v390
                  %v392 = vld [vmem:[%s332 + $0x1d0] sm:$0xff]
                  %393 = vst [vmem:[%s333 + $0xe8] sm:$0xff] %v392
                  %v394 = vld [vmem:[%s332 + $0x1e0] sm:$0xff]
                  %395 = vst [vmem:[%s333 + $0xf0] sm:$0xff] %v394
                  %v396 = vld [vmem:[%s332 + $0x1f0] sm:$0xff]
                  %397 = vst [vmem:[%s333 + $0xf8] sm:$0xff] %v396
                $region48: #{wan_i2v_cross_attention.12} parent=42 // loop_footer
                  %s331 = sadd.s32 1, %s327
                $region49: #{wan_i2v_cross_attention.12} parent=42 // loop_footer_branch
                  %326 = sbr.rel target = $region45
                $region50: #{wan_i2v_cross_attention.12} parent=42 // loop_exit
                  _
              $region43: #{wan_i2v_cross_attention.12} parent=27 // pred_fallthru
                _
              // Predicated region
              $region51: #{wan_i2v_cross_attention.12} parent=27 // pred_check
                _
              $region52: #{wan_i2v_cross_attention.12} parent=27 // pred_check_branch
                %399 = sbr.rel target = $region54
              $region53: #{wan_i2v_cross_attention.12} parent=27 // pred_region
                _
              $region54: #{wan_i2v_cross_attention.12} parent=27 // pred_fallthru
                _
            $region28: #{wan_i2v_cross_attention.12} parent=23 // pred_fallthru
              _
            // Predicated region
            $region29: #{wan_i2v_cross_attention.12} parent=23 // pred_check
              _
            $region30: #{wan_i2v_cross_attention.12} parent=23 // pred_check_branch
              %249 = sbr.rel target = $region32
            $region31: #{wan_i2v_cross_attention.12} parent=23 // pred_region
              %s251 = ssub.s32 256, 1
              loop: start=0, step=1, limit=1
              $region33: #{wan_i2v_cross_attention.12} parent=31 // loop_pre_header
                _
              $region34: #{wan_i2v_cross_attention.12} parent=31 // loop_header
                %s253 = sphi 0, %s257
                %p254 = scmp.ge.s32.totalorder %s253, 1
                %s258 = sphi %s243, %s243
                %s259 = sphi %s236, %s236
              $region35: #{wan_i2v_cross_attention.12} parent=31 // loop_header_branch
                %256 = sbr.rel (%p254) target = $region39
              $region36: #{wan_i2v_cross_attention.12} parent=31 // loop_body
                %v260 = vld [vmem:[%s258] sm:%s251]
                %261 = vst [vmem:[%s259] sm:%s251] %v260
                %v262 = vld [vmem:[%s258 + $0x10] sm:%s251]
                %263 = vst [vmem:[%s259 + $0x8] sm:%s251] %v262
                %v264 = vld [vmem:[%s258 + $0x20] sm:%s251]
                %265 = vst [vmem:[%s259 + $0x10] sm:%s251] %v264
                %v266 = vld [vmem:[%s258 + $0x30] sm:%s251]
                %267 = vst [vmem:[%s259 + $0x18] sm:%s251] %v266
                %v268 = vld [vmem:[%s258 + $0x40] sm:%s251]
                %269 = vst [vmem:[%s259 + $0x20] sm:%s251] %v268
                %v270 = vld [vmem:[%s258 + $0x50] sm:%s251]
                %271 = vst [vmem:[%s259 + $0x28] sm:%s251] %v270
                %v272 = vld [vmem:[%s258 + $0x60] sm:%s251]
                %273 = vst [vmem:[%s259 + $0x30] sm:%s251] %v272
                %v274 = vld [vmem:[%s258 + $0x70] sm:%s251]
                %275 = vst [vmem:[%s259 + $0x38] sm:%s251] %v274
                %v276 = vld [vmem:[%s258 + $0x80] sm:%s251]
                %277 = vst [vmem:[%s259 + $0x40] sm:%s251] %v276
                %v278 = vld [vmem:[%s258 + $0x90] sm:%s251]
                %279 = vst [vmem:[%s259 + $0x48] sm:%s251] %v278
                %v280 = vld [vmem:[%s258 + $0xa0] sm:%s251]
                %281 = vst [vmem:[%s259 + $0x50] sm:%s251] %v280
                %v282 = vld [vmem:[%s258 + $0xb0] sm:%s251]
                %283 = vst [vmem:[%s259 + $0x58] sm:%s251] %v282
                %v284 = vld [vmem:[%s258 + $0xc0] sm:%s251]
                %285 = vst [vmem:[%s259 + $0x60] sm:%s251] %v284
                %v286 = vld [vmem:[%s258 + $0xd0] sm:%s251]
                %287 = vst [vmem:[%s259 + $0x68] sm:%s251] %v286
                %v288 = vld [vmem:[%s258 + $0xe0] sm:%s251]
                %289 = vst [vmem:[%s259 + $0x70] sm:%s251] %v288
                %v290 = vld [vmem:[%s258 + $0xf0] sm:%s251]
                %291 = vst [vmem:[%s259 + $0x78] sm:%s251] %v290
                %v292 = vld [vmem:[%s258 + $0x100] sm:%s251]
                %293 = vst [vmem:[%s259 + $0x80] sm:%s251] %v292
                %v294 = vld [vmem:[%s258 + $0x110] sm:%s251]
                %295 = vst [vmem:[%s259 + $0x88] sm:%s251] %v294
                %v296 = vld [vmem:[%s258 + $0x120] sm:%s251]
                %297 = vst [vmem:[%s259 + $0x90] sm:%s251] %v296
                %v298 = vld [vmem:[%s258 + $0x130] sm:%s251]
                %299 = vst [vmem:[%s259 + $0x98] sm:%s251] %v298
                %v300 = vld [vmem:[%s258 + $0x140] sm:%s251]
                %301 = vst [vmem:[%s259 + $0xa0] sm:%s251] %v300
                %v302 = vld [vmem:[%s258 + $0x150] sm:%s251]
                %303 = vst [vmem:[%s259 + $0xa8] sm:%s251] %v302
                %v304 = vld [vmem:[%s258 + $0x160] sm:%s251]
                %305 = vst [vmem:[%s259 + $0xb0] sm:%s251] %v304
                %v306 = vld [vmem:[%s258 + $0x170] sm:%s251]
                %307 = vst [vmem:[%s259 + $0xb8] sm:%s251] %v306
                %v308 = vld [vmem:[%s258 + $0x180] sm:%s251]
                %309 = vst [vmem:[%s259 + $0xc0] sm:%s251] %v308
                %v310 = vld [vmem:[%s258 + $0x190] sm:%s251]
                %311 = vst [vmem:[%s259 + $0xc8] sm:%s251] %v310
                %v312 = vld [vmem:[%s258 + $0x1a0] sm:%s251]
                %313 = vst [vmem:[%s259 + $0xd0] sm:%s251] %v312
                %v314 = vld [vmem:[%s258 + $0x1b0] sm:%s251]
                %315 = vst [vmem:[%s259 + $0xd8] sm:%s251] %v314
                %v316 = vld [vmem:[%s258 + $0x1c0] sm:%s251]
                %317 = vst [vmem:[%s259 + $0xe0] sm:%s251] %v316
                %v318 = vld [vmem:[%s258 + $0x1d0] sm:%s251]
                %319 = vst [vmem:[%s259 + $0xe8] sm:%s251] %v318
                %v320 = vld [vmem:[%s258 + $0x1e0] sm:%s251]
                %321 = vst [vmem:[%s259 + $0xf0] sm:%s251] %v320
                %v322 = vld [vmem:[%s258 + $0x1f0] sm:%s251]
                %323 = vst [vmem:[%s259 + $0xf8] sm:%s251] %v322
              $region37: #{wan_i2v_cross_attention.12} parent=31 // loop_footer
                %s257 = sadd.s32 1, %s253
              $region38: #{wan_i2v_cross_attention.12} parent=31 // loop_footer_branch
                %252 = sbr.rel target = $region34
              $region39: #{wan_i2v_cross_attention.12} parent=31 // loop_exit
                _
            $region32: #{wan_i2v_cross_attention.12} parent=23 // pred_fallthru
              _
          $region24: #{wan_i2v_cross_attention.12} parent=19 // pred_fallthru
            _
          %400 = vnop
        $region20: #{wan_i2v_cross_attention.12} parent=15 // pred_fallthru
          _
        // Predicated region
        $region55: #{wan_i2v_cross_attention.12} parent=15 // pred_check
          %p401 = pneg %p91
        $region56: #{wan_i2v_cross_attention.12} parent=15 // pred_check_branch
          %403 = sbr.rel (%p401) target = $region58
        $region57: #{wan_i2v_cross_attention.12} parent=15 // pred_region
          %s404 = sand.u32 %s81, 1
          %s405 = sand.u32 %s81, 1
          %s406 = smul.addr %s405, 384
          %s407 = scalar_lea.vmem [#allocation5], %s406
          %s408 = smul.addr %s27, 96
          %s409 = sadd.s32 %s28, %s408
          %s410 = smul.addr %s409, 8
          %s411 = scalar_lea.vmem %s2, %s410
          // Predicated region
          $region59: #{wan_i2v_cross_attention.12} parent=57 // pred_check
            _
          $region60: #{wan_i2v_cross_attention.12} parent=57 // pred_check_branch
            %413 = sbr.rel (0) target = $region62
          $region61: #{wan_i2v_cross_attention.12} parent=57 // pred_region
            // Predicated region
            $region63: #{wan_i2v_cross_attention.12} parent=61 // pred_check
              _
            $region64: #{wan_i2v_cross_attention.12} parent=61 // pred_check_branch
              %415 = sbr.rel (0) target = $region66
            $region65: #{wan_i2v_cross_attention.12} parent=61 // pred_region
              // Predicated region
              $region78: #{wan_i2v_cross_attention.12} parent=65 // pred_check
                _
              $region79: #{wan_i2v_cross_attention.12} parent=65 // pred_check_branch
                %525 = sbr.rel (0) target = $region81
              $region80: #{wan_i2v_cross_attention.12} parent=65 // pred_region
                loop: start=0, step=1, limit=1
                $region82: #{wan_i2v_cross_attention.12} parent=80 // loop_pre_header
                  _
                $region83: #{wan_i2v_cross_attention.12} parent=80 // loop_header
                  %s527 = sphi 0, %s531
                  %p528 = scmp.ge.s32.totalorder %s527, 1
                  %s532 = sphi %s411, %s411
                  %s533 = sphi %s407, %s407
                $region84: #{wan_i2v_cross_attention.12} parent=80 // loop_header_branch
                  %530 = sbr.rel (%p528) target = $region88
                $region85: #{wan_i2v_cross_attention.12} parent=80 // loop_body
                  %v534 = vld [vmem:[%s532] sm:$0xff]
                  %535 = vst [vmem:[%s533] sm:$0xff] %v534
                  %v536 = vld [vmem:[%s532 + $0x10] sm:$0xff]
                  %537 = vst [vmem:[%s533 + $0x8] sm:$0xff] %v536
                  %v538 = vld [vmem:[%s532 + $0x20] sm:$0xff]
                  %539 = vst [vmem:[%s533 + $0x10] sm:$0xff] %v538
                  %v540 = vld [vmem:[%s532 + $0x30] sm:$0xff]
                  %541 = vst [vmem:[%s533 + $0x18] sm:$0xff] %v540
                  %v542 = vld [vmem:[%s532 + $0x40] sm:$0xff]
                  %543 = vst [vmem:[%s533 + $0x20] sm:$0xff] %v542
                  %v544 = vld [vmem:[%s532 + $0x50] sm:$0xff]
                  %545 = vst [vmem:[%s533 + $0x28] sm:$0xff] %v544
                  %v546 = vld [vmem:[%s532 + $0x60] sm:$0xff]
                  %547 = vst [vmem:[%s533 + $0x30] sm:$0xff] %v546
                  %v548 = vld [vmem:[%s532 + $0x70] sm:$0xff]
                  %549 = vst [vmem:[%s533 + $0x38] sm:$0xff] %v548
                  %v550 = vld [vmem:[%s532 + $0x80] sm:$0xff]
                  %551 = vst [vmem:[%s533 + $0x40] sm:$0xff] %v550
                  %v552 = vld [vmem:[%s532 + $0x90] sm:$0xff]
                  %553 = vst [vmem:[%s533 + $0x48] sm:$0xff] %v552
                  %v554 = vld [vmem:[%s532 + $0xa0] sm:$0xff]
                  %555 = vst [vmem:[%s533 + $0x50] sm:$0xff] %v554
                  %v556 = vld [vmem:[%s532 + $0xb0] sm:$0xff]
                  %557 = vst [vmem:[%s533 + $0x58] sm:$0xff] %v556
                  %v558 = vld [vmem:[%s532 + $0xc0] sm:$0xff]
                  %559 = vst [vmem:[%s533 + $0x60] sm:$0xff] %v558
                  %v560 = vld [vmem:[%s532 + $0xd0] sm:$0xff]
                  %561 = vst [vmem:[%s533 + $0x68] sm:$0xff] %v560
                  %v562 = vld [vmem:[%s532 + $0xe0] sm:$0xff]
                  %563 = vst [vmem:[%s533 + $0x70] sm:$0xff] %v562
                  %v564 = vld [vmem:[%s532 + $0xf0] sm:$0xff]
                  %565 = vst [vmem:[%s533 + $0x78] sm:$0xff] %v564
                  %v566 = vld [vmem:[%s532 + $0x100] sm:$0xff]
                  %567 = vst [vmem:[%s533 + $0x80] sm:$0xff] %v566
                  %v568 = vld [vmem:[%s532 + $0x110] sm:$0xff]
                  %569 = vst [vmem:[%s533 + $0x88] sm:$0xff] %v568
                  %v570 = vld [vmem:[%s532 + $0x120] sm:$0xff]
                  %571 = vst [vmem:[%s533 + $0x90] sm:$0xff] %v570
                  %v572 = vld [vmem:[%s532 + $0x130] sm:$0xff]
                  %573 = vst [vmem:[%s533 + $0x98] sm:$0xff] %v572
                  %v574 = vld [vmem:[%s532 + $0x140] sm:$0xff]
                  %575 = vst [vmem:[%s533 + $0xa0] sm:$0xff] %v574
                  %v576 = vld [vmem:[%s532 + $0x150] sm:$0xff]
                  %577 = vst [vmem:[%s533 + $0xa8] sm:$0xff] %v576
                  %v578 = vld [vmem:[%s532 + $0x160] sm:$0xff]
                  %579 = vst [vmem:[%s533 + $0xb0] sm:$0xff] %v578
                  %v580 = vld [vmem:[%s532 + $0x170] sm:$0xff]
                  %581 = vst [vmem:[%s533 + $0xb8] sm:$0xff] %v580
                  %v582 = vld [vmem:[%s532 + $0x180] sm:$0xff]
                  %583 = vst [vmem:[%s533 + $0xc0] sm:$0xff] %v582
                  %v584 = vld [vmem:[%s532 + $0x190] sm:$0xff]
                  %585 = vst [vmem:[%s533 + $0xc8] sm:$0xff] %v584
                  %v586 = vld [vmem:[%s532 + $0x1a0] sm:$0xff]
                  %587 = vst [vmem:[%s533 + $0xd0] sm:$0xff] %v586
                  %v588 = vld [vmem:[%s532 + $0x1b0] sm:$0xff]
                  %589 = vst [vmem:[%s533 + $0xd8] sm:$0xff] %v588
                  %v590 = vld [vmem:[%s532 + $0x1c0] sm:$0xff]
                  %591 = vst [vmem:[%s533 + $0xe0] sm:$0xff] %v590
                  %v592 = vld [vmem:[%s532 + $0x1d0] sm:$0xff]
                  %593 = vst [vmem:[%s533 + $0xe8] sm:$0xff] %v592
                  %v594 = vld [vmem:[%s532 + $0x1e0] sm:$0xff]
                  %595 = vst [vmem:[%s533 + $0xf0] sm:$0xff] %v594
                  %v596 = vld [vmem:[%s532 + $0x1f0] sm:$0xff]
                  %597 = vst [vmem:[%s533 + $0xf8] sm:$0xff] %v596
                  %v598 = vld [vmem:[%s532 + $0x200] sm:$0xff]
                  %599 = vst [vmem:[%s533 + $0x100] sm:$0xff] %v598
                  %v600 = vld [vmem:[%s532 + $0x210] sm:$0xff]
                  %601 = vst [vmem:[%s533 + $0x108] sm:$0xff] %v600
                  %v602 = vld [vmem:[%s532 + $0x220] sm:$0xff]
                  %603 = vst [vmem:[%s533 + $0x110] sm:$0xff] %v602
                  %v604 = vld [vmem:[%s532 + $0x230] sm:$0xff]
                  %605 = vst [vmem:[%s533 + $0x118] sm:$0xff] %v604
                  %v606 = vld [vmem:[%s532 + $0x240] sm:$0xff]
                  %607 = vst [vmem:[%s533 + $0x120] sm:$0xff] %v606
                  %v608 = vld [vmem:[%s532 + $0x250] sm:$0xff]
                  %609 = vst [vmem:[%s533 + $0x128] sm:$0xff] %v608
                  %v610 = vld [vmem:[%s532 + $0x260] sm:$0xff]
                  %611 = vst [vmem:[%s533 + $0x130] sm:$0xff] %v610
                  %v612 = vld [vmem:[%s532 + $0x270] sm:$0xff]
                  %613 = vst [vmem:[%s533 + $0x138] sm:$0xff] %v612
                  %v614 = vld [vmem:[%s532 + $0x280] sm:$0xff]
                  %615 = vst [vmem:[%s533 + $0x140] sm:$0xff] %v614
                  %v616 = vld [vmem:[%s532 + $0x290] sm:$0xff]
                  %617 = vst [vmem:[%s533 + $0x148] sm:$0xff] %v616
                  %v618 = vld [vmem:[%s532 + $0x2a0] sm:$0xff]
                  %619 = vst [vmem:[%s533 + $0x150] sm:$0xff] %v618
                  %v620 = vld [vmem:[%s532 + $0x2b0] sm:$0xff]
                  %621 = vst [vmem:[%s533 + $0x158] sm:$0xff] %v620
                  %v622 = vld [vmem:[%s532 + $0x2c0] sm:$0xff]
                  %623 = vst [vmem:[%s533 + $0x160] sm:$0xff] %v622
                  %v624 = vld [vmem:[%s532 + $0x2d0] sm:$0xff]
                  %625 = vst [vmem:[%s533 + $0x168] sm:$0xff] %v624
                  %v626 = vld [vmem:[%s532 + $0x2e0] sm:$0xff]
                  %627 = vst [vmem:[%s533 + $0x170] sm:$0xff] %v626
                  %v628 = vld [vmem:[%s532 + $0x2f0] sm:$0xff]
                  %629 = vst [vmem:[%s533 + $0x178] sm:$0xff] %v628
                $region86: #{wan_i2v_cross_attention.12} parent=80 // loop_footer
                  %s531 = sadd.s32 1, %s527
                $region87: #{wan_i2v_cross_attention.12} parent=80 // loop_footer_branch
                  %526 = sbr.rel target = $region83
                $region88: #{wan_i2v_cross_attention.12} parent=80 // loop_exit
                  _
              $region81: #{wan_i2v_cross_attention.12} parent=65 // pred_fallthru
                _
              // Predicated region
              $region89: #{wan_i2v_cross_attention.12} parent=65 // pred_check
                _
              $region90: #{wan_i2v_cross_attention.12} parent=65 // pred_check_branch
                %631 = sbr.rel target = $region92
              $region91: #{wan_i2v_cross_attention.12} parent=65 // pred_region
                _
              $region92: #{wan_i2v_cross_attention.12} parent=65 // pred_fallthru
                _
            $region66: #{wan_i2v_cross_attention.12} parent=61 // pred_fallthru
              _
            // Predicated region
            $region67: #{wan_i2v_cross_attention.12} parent=61 // pred_check
              _
            $region68: #{wan_i2v_cross_attention.12} parent=61 // pred_check_branch
              %417 = sbr.rel target = $region70
            $region69: #{wan_i2v_cross_attention.12} parent=61 // pred_region
              %s419 = ssub.s32 256, 1
              loop: start=0, step=1, limit=1
              $region71: #{wan_i2v_cross_attention.12} parent=69 // loop_pre_header
                _
              $region72: #{wan_i2v_cross_attention.12} parent=69 // loop_header
                %s421 = sphi 0, %s425
                %p422 = scmp.ge.s32.totalorder %s421, 1
                %s426 = sphi %s411, %s411
                %s427 = sphi %s407, %s407
              $region73: #{wan_i2v_cross_attention.12} parent=69 // loop_header_branch
                %424 = sbr.rel (%p422) target = $region77
              $region74: #{wan_i2v_cross_attention.12} parent=69 // loop_body
                %v428 = vld [vmem:[%s426] sm:%s419]
                %429 = vst [vmem:[%s427] sm:%s419] %v428
                %v430 = vld [vmem:[%s426 + $0x10] sm:%s419]
                %431 = vst [vmem:[%s427 + $0x8] sm:%s419] %v430
                %v432 = vld [vmem:[%s426 + $0x20] sm:%s419]
                %433 = vst [vmem:[%s427 + $0x10] sm:%s419] %v432
                %v434 = vld [vmem:[%s426 + $0x30] sm:%s419]
                %435 = vst [vmem:[%s427 + $0x18] sm:%s419] %v434
                %v436 = vld [vmem:[%s426 + $0x40] sm:%s419]
                %437 = vst [vmem:[%s427 + $0x20] sm:%s419] %v436
                %v438 = vld [vmem:[%s426 + $0x50] sm:%s419]
                %439 = vst [vmem:[%s427 + $0x28] sm:%s419] %v438
                %v440 = vld [vmem:[%s426 + $0x60] sm:%s419]
                %441 = vst [vmem:[%s427 + $0x30] sm:%s419] %v440
                %v442 = vld [vmem:[%s426 + $0x70] sm:%s419]
                %443 = vst [vmem:[%s427 + $0x38] sm:%s419] %v442
                %v444 = vld [vmem:[%s426 + $0x80] sm:%s419]
                %445 = vst [vmem:[%s427 + $0x40] sm:%s419] %v444
                %v446 = vld [vmem:[%s426 + $0x90] sm:%s419]
                %447 = vst [vmem:[%s427 + $0x48] sm:%s419] %v446
                %v448 = vld [vmem:[%s426 + $0xa0] sm:%s419]
                %449 = vst [vmem:[%s427 + $0x50] sm:%s419] %v448
                %v450 = vld [vmem:[%s426 + $0xb0] sm:%s419]
                %451 = vst [vmem:[%s427 + $0x58] sm:%s419] %v450
                %v452 = vld [vmem:[%s426 + $0xc0] sm:%s419]
                %453 = vst [vmem:[%s427 + $0x60] sm:%s419] %v452
                %v454 = vld [vmem:[%s426 + $0xd0] sm:%s419]
                %455 = vst [vmem:[%s427 + $0x68] sm:%s419] %v454
                %v456 = vld [vmem:[%s426 + $0xe0] sm:%s419]
                %457 = vst [vmem:[%s427 + $0x70] sm:%s419] %v456
                %v458 = vld [vmem:[%s426 + $0xf0] sm:%s419]
                %459 = vst [vmem:[%s427 + $0x78] sm:%s419] %v458
                %v460 = vld [vmem:[%s426 + $0x100] sm:%s419]
                %461 = vst [vmem:[%s427 + $0x80] sm:%s419] %v460
                %v462 = vld [vmem:[%s426 + $0x110] sm:%s419]
                %463 = vst [vmem:[%s427 + $0x88] sm:%s419] %v462
                %v464 = vld [vmem:[%s426 + $0x120] sm:%s419]
                %465 = vst [vmem:[%s427 + $0x90] sm:%s419] %v464
                %v466 = vld [vmem:[%s426 + $0x130] sm:%s419]
                %467 = vst [vmem:[%s427 + $0x98] sm:%s419] %v466
                %v468 = vld [vmem:[%s426 + $0x140] sm:%s419]
                %469 = vst [vmem:[%s427 + $0xa0] sm:%s419] %v468
                %v470 = vld [vmem:[%s426 + $0x150] sm:%s419]
                %471 = vst [vmem:[%s427 + $0xa8] sm:%s419] %v470
                %v472 = vld [vmem:[%s426 + $0x160] sm:%s419]
                %473 = vst [vmem:[%s427 + $0xb0] sm:%s419] %v472
                %v474 = vld [vmem:[%s426 + $0x170] sm:%s419]
                %475 = vst [vmem:[%s427 + $0xb8] sm:%s419] %v474
                %v476 = vld [vmem:[%s426 + $0x180] sm:%s419]
                %477 = vst [vmem:[%s427 + $0xc0] sm:%s419] %v476
                %v478 = vld [vmem:[%s426 + $0x190] sm:%s419]
                %479 = vst [vmem:[%s427 + $0xc8] sm:%s419] %v478
                %v480 = vld [vmem:[%s426 + $0x1a0] sm:%s419]
                %481 = vst [vmem:[%s427 + $0xd0] sm:%s419] %v480
                %v482 = vld [vmem:[%s426 + $0x1b0] sm:%s419]
                %483 = vst [vmem:[%s427 + $0xd8] sm:%s419] %v482
                %v484 = vld [vmem:[%s426 + $0x1c0] sm:%s419]
                %485 = vst [vmem:[%s427 + $0xe0] sm:%s419] %v484
                %v486 = vld [vmem:[%s426 + $0x1d0] sm:%s419]
                %487 = vst [vmem:[%s427 + $0xe8] sm:%s419] %v486
                %v488 = vld [vmem:[%s426 + $0x1e0] sm:%s419]
                %489 = vst [vmem:[%s427 + $0xf0] sm:%s419] %v488
                %v490 = vld [vmem:[%s426 + $0x1f0] sm:%s419]
                %491 = vst [vmem:[%s427 + $0xf8] sm:%s419] %v490
                %v492 = vld [vmem:[%s426 + $0x200] sm:%s419]
                %493 = vst [vmem:[%s427 + $0x100] sm:%s419] %v492
                %v494 = vld [vmem:[%s426 + $0x210] sm:%s419]
                %495 = vst [vmem:[%s427 + $0x108] sm:%s419] %v494
                %v496 = vld [vmem:[%s426 + $0x220] sm:%s419]
                %497 = vst [vmem:[%s427 + $0x110] sm:%s419] %v496
                %v498 = vld [vmem:[%s426 + $0x230] sm:%s419]
                %499 = vst [vmem:[%s427 + $0x118] sm:%s419] %v498
                %v500 = vld [vmem:[%s426 + $0x240] sm:%s419]
                %501 = vst [vmem:[%s427 + $0x120] sm:%s419] %v500
                %v502 = vld [vmem:[%s426 + $0x250] sm:%s419]
                %503 = vst [vmem:[%s427 + $0x128] sm:%s419] %v502
                %v504 = vld [vmem:[%s426 + $0x260] sm:%s419]
                %505 = vst [vmem:[%s427 + $0x130] sm:%s419] %v504
                %v506 = vld [vmem:[%s426 + $0x270] sm:%s419]
                %507 = vst [vmem:[%s427 + $0x138] sm:%s419] %v506
                %v508 = vld [vmem:[%s426 + $0x280] sm:%s419]
                %509 = vst [vmem:[%s427 + $0x140] sm:%s419] %v508
                %v510 = vld [vmem:[%s426 + $0x290] sm:%s419]
                %511 = vst [vmem:[%s427 + $0x148] sm:%s419] %v510
                %v512 = vld [vmem:[%s426 + $0x2a0] sm:%s419]
                %513 = vst [vmem:[%s427 + $0x150] sm:%s419] %v512
                %v514 = vld [vmem:[%s426 + $0x2b0] sm:%s419]
                %515 = vst [vmem:[%s427 + $0x158] sm:%s419] %v514
                %v516 = vld [vmem:[%s426 + $0x2c0] sm:%s419]
                %517 = vst [vmem:[%s427 + $0x160] sm:%s419] %v516
                %v518 = vld [vmem:[%s426 + $0x2d0] sm:%s419]
                %519 = vst [vmem:[%s427 + $0x168] sm:%s419] %v518
                %v520 = vld [vmem:[%s426 + $0x2e0] sm:%s419]
                %521 = vst [vmem:[%s427 + $0x170] sm:%s419] %v520
                %v522 = vld [vmem:[%s426 + $0x2f0] sm:%s419]
                %523 = vst [vmem:[%s427 + $0x178] sm:%s419] %v522
              $region75: #{wan_i2v_cross_attention.12} parent=69 // loop_footer
                %s425 = sadd.s32 1, %s421
              $region76: #{wan_i2v_cross_attention.12} parent=69 // loop_footer_branch
                %420 = sbr.rel target = $region72
              $region77: #{wan_i2v_cross_attention.12} parent=69 // loop_exit
                _
            $region70: #{wan_i2v_cross_attention.12} parent=61 // pred_fallthru
              _
          $region62: #{wan_i2v_cross_attention.12} parent=57 // pred_fallthru
            _
          %632 = vnop
        $region58: #{wan_i2v_cross_attention.12} parent=15 // pred_fallthru
          _
        // Predicated region
        $region93: #{wan_i2v_cross_attention.12} parent=15 // pred_check
          %p633 = pneg %p119
        $region94: #{wan_i2v_cross_attention.12} parent=15 // pred_check_branch
          %635 = sbr.rel (%p633) target = $region96
        $region95: #{wan_i2v_cross_attention.12} parent=15 // pred_region
          %s636 = sand.u32 %s109, 1
          %s637 = sand.u32 %s109, 1
          %s638 = smul.addr %s637, 384
          %s639 = scalar_lea.vmem [#allocation6], %s638
          %s640 = smul.addr %s27, 96
          %s641 = sadd.s32 %s28, %s640
          %s642 = smul.addr %s641, 8
          %s643 = scalar_lea.vmem %s3, %s642
          // Predicated region
          $region97: #{wan_i2v_cross_attention.12} parent=95 // pred_check
            _
          $region98: #{wan_i2v_cross_attention.12} parent=95 // pred_check_branch
            %645 = sbr.rel (0) target = $region100
          $region99: #{wan_i2v_cross_attention.12} parent=95 // pred_region
            // Predicated region
            $region101: #{wan_i2v_cross_attention.12} parent=99 // pred_check
              _
            $region102: #{wan_i2v_cross_attention.12} parent=99 // pred_check_branch
              %647 = sbr.rel (0) target = $region104
            $region103: #{wan_i2v_cross_attention.12} parent=99 // pred_region
              // Predicated region
              $region116: #{wan_i2v_cross_attention.12} parent=103 // pred_check
                _
              $region117: #{wan_i2v_cross_attention.12} parent=103 // pred_check_branch
                %757 = sbr.rel (0) target = $region119
              $region118: #{wan_i2v_cross_attention.12} parent=103 // pred_region
                loop: start=0, step=1, limit=1
                $region120: #{wan_i2v_cross_attention.12} parent=118 // loop_pre_header
                  _
                $region121: #{wan_i2v_cross_attention.12} parent=118 // loop_header
                  %s759 = sphi 0, %s763
                  %p760 = scmp.ge.s32.totalorder %s759, 1
                  %s764 = sphi %s643, %s643
                  %s765 = sphi %s639, %s639
                $region122: #{wan_i2v_cross_attention.12} parent=118 // loop_header_branch
                  %762 = sbr.rel (%p760) target = $region126
                $region123: #{wan_i2v_cross_attention.12} parent=118 // loop_body
                  %v766 = vld [vmem:[%s764] sm:$0xff]
                  %767 = vst [vmem:[%s765] sm:$0xff] %v766
                  %v768 = vld [vmem:[%s764 + $0x10] sm:$0xff]
                  %769 = vst [vmem:[%s765 + $0x8] sm:$0xff] %v768
                  %v770 = vld [vmem:[%s764 + $0x20] sm:$0xff]
                  %771 = vst [vmem:[%s765 + $0x10] sm:$0xff] %v770
                  %v772 = vld [vmem:[%s764 + $0x30] sm:$0xff]
                  %773 = vst [vmem:[%s765 + $0x18] sm:$0xff] %v772
                  %v774 = vld [vmem:[%s764 + $0x40] sm:$0xff]
                  %775 = vst [vmem:[%s765 + $0x20] sm:$0xff] %v774
                  %v776 = vld [vmem:[%s764 + $0x50] sm:$0xff]
                  %777 = vst [vmem:[%s765 + $0x28] sm:$0xff] %v776
                  %v778 = vld [vmem:[%s764 + $0x60] sm:$0xff]
                  %779 = vst [vmem:[%s765 + $0x30] sm:$0xff] %v778
                  %v780 = vld [vmem:[%s764 + $0x70] sm:$0xff]
                  %781 = vst [vmem:[%s765 + $0x38] sm:$0xff] %v780
                  %v782 = vld [vmem:[%s764 + $0x80] sm:$0xff]
                  %783 = vst [vmem:[%s765 + $0x40] sm:$0xff] %v782
                  %v784 = vld [vmem:[%s764 + $0x90] sm:$0xff]
                  %785 = vst [vmem:[%s765 + $0x48] sm:$0xff] %v784
                  %v786 = vld [vmem:[%s764 + $0xa0] sm:$0xff]
                  %787 = vst [vmem:[%s765 + $0x50] sm:$0xff] %v786
                  %v788 = vld [vmem:[%s764 + $0xb0] sm:$0xff]
                  %789 = vst [vmem:[%s765 + $0x58] sm:$0xff] %v788
                  %v790 = vld [vmem:[%s764 + $0xc0] sm:$0xff]
                  %791 = vst [vmem:[%s765 + $0x60] sm:$0xff] %v790
                  %v792 = vld [vmem:[%s764 + $0xd0] sm:$0xff]
                  %793 = vst [vmem:[%s765 + $0x68] sm:$0xff] %v792
                  %v794 = vld [vmem:[%s764 + $0xe0] sm:$0xff]
                  %795 = vst [vmem:[%s765 + $0x70] sm:$0xff] %v794
                  %v796 = vld [vmem:[%s764 + $0xf0] sm:$0xff]
                  %797 = vst [vmem:[%s765 + $0x78] sm:$0xff] %v796
                  %v798 = vld [vmem:[%s764 + $0x100] sm:$0xff]
                  %799 = vst [vmem:[%s765 + $0x80] sm:$0xff] %v798
                  %v800 = vld [vmem:[%s764 + $0x110] sm:$0xff]
                  %801 = vst [vmem:[%s765 + $0x88] sm:$0xff] %v800
                  %v802 = vld [vmem:[%s764 + $0x120] sm:$0xff]
                  %803 = vst [vmem:[%s765 + $0x90] sm:$0xff] %v802
                  %v804 = vld [vmem:[%s764 + $0x130] sm:$0xff]
                  %805 = vst [vmem:[%s765 + $0x98] sm:$0xff] %v804
                  %v806 = vld [vmem:[%s764 + $0x140] sm:$0xff]
                  %807 = vst [vmem:[%s765 + $0xa0] sm:$0xff] %v806
                  %v808 = vld [vmem:[%s764 + $0x150] sm:$0xff]
                  %809 = vst [vmem:[%s765 + $0xa8] sm:$0xff] %v808
                  %v810 = vld [vmem:[%s764 + $0x160] sm:$0xff]
                  %811 = vst [vmem:[%s765 + $0xb0] sm:$0xff] %v810
                  %v812 = vld [vmem:[%s764 + $0x170] sm:$0xff]
                  %813 = vst [vmem:[%s765 + $0xb8] sm:$0xff] %v812
                  %v814 = vld [vmem:[%s764 + $0x180] sm:$0xff]
                  %815 = vst [vmem:[%s765 + $0xc0] sm:$0xff] %v814
                  %v816 = vld [vmem:[%s764 + $0x190] sm:$0xff]
                  %817 = vst [vmem:[%s765 + $0xc8] sm:$0xff] %v816
                  %v818 = vld [vmem:[%s764 + $0x1a0] sm:$0xff]
                  %819 = vst [vmem:[%s765 + $0xd0] sm:$0xff] %v818
                  %v820 = vld [vmem:[%s764 + $0x1b0] sm:$0xff]
                  %821 = vst [vmem:[%s765 + $0xd8] sm:$0xff] %v820
                  %v822 = vld [vmem:[%s764 + $0x1c0] sm:$0xff]
                  %823 = vst [vmem:[%s765 + $0xe0] sm:$0xff] %v822
                  %v824 = vld [vmem:[%s764 + $0x1d0] sm:$0xff]
                  %825 = vst [vmem:[%s765 + $0xe8] sm:$0xff] %v824
                  %v826 = vld [vmem:[%s764 + $0x1e0] sm:$0xff]
                  %827 = vst [vmem:[%s765 + $0xf0] sm:$0xff] %v826
                  %v828 = vld [vmem:[%s764 + $0x1f0] sm:$0xff]
                  %829 = vst [vmem:[%s765 + $0xf8] sm:$0xff] %v828
                  %v830 = vld [vmem:[%s764 + $0x200] sm:$0xff]
                  %831 = vst [vmem:[%s765 + $0x100] sm:$0xff] %v830
                  %v832 = vld [vmem:[%s764 + $0x210] sm:$0xff]
                  %833 = vst [vmem:[%s765 + $0x108] sm:$0xff] %v832
                  %v834 = vld [vmem:[%s764 + $0x220] sm:$0xff]
                  %835 = vst [vmem:[%s765 + $0x110] sm:$0xff] %v834
                  %v836 = vld [vmem:[%s764 + $0x230] sm:$0xff]
                  %837 = vst [vmem:[%s765 + $0x118] sm:$0xff] %v836
                  %v838 = vld [vmem:[%s764 + $0x240] sm:$0xff]
                  %839 = vst [vmem:[%s765 + $0x120] sm:$0xff] %v838
                  %v840 = vld [vmem:[%s764 + $0x250] sm:$0xff]
                  %841 = vst [vmem:[%s765 + $0x128] sm:$0xff] %v840
                  %v842 = vld [vmem:[%s764 + $0x260] sm:$0xff]
                  %843 = vst [vmem:[%s765 + $0x130] sm:$0xff] %v842
                  %v844 = vld [vmem:[%s764 + $0x270] sm:$0xff]
                  %845 = vst [vmem:[%s765 + $0x138] sm:$0xff] %v844
                  %v846 = vld [vmem:[%s764 + $0x280] sm:$0xff]
                  %847 = vst [vmem:[%s765 + $0x140] sm:$0xff] %v846
                  %v848 = vld [vmem:[%s764 + $0x290] sm:$0xff]
                  %849 = vst [vmem:[%s765 + $0x148] sm:$0xff] %v848
                  %v850 = vld [vmem:[%s764 + $0x2a0] sm:$0xff]
                  %851 = vst [vmem:[%s765 + $0x150] sm:$0xff] %v850
                  %v852 = vld [vmem:[%s764 + $0x2b0] sm:$0xff]
                  %853 = vst [vmem:[%s765 + $0x158] sm:$0xff] %v852
                  %v854 = vld [vmem:[%s764 + $0x2c0] sm:$0xff]
                  %855 = vst [vmem:[%s765 + $0x160] sm:$0xff] %v854
                  %v856 = vld [vmem:[%s764 + $0x2d0] sm:$0xff]
                  %857 = vst [vmem:[%s765 + $0x168] sm:$0xff] %v856
                  %v858 = vld [vmem:[%s764 + $0x2e0] sm:$0xff]
                  %859 = vst [vmem:[%s765 + $0x170] sm:$0xff] %v858
                  %v860 = vld [vmem:[%s764 + $0x2f0] sm:$0xff]
                  %861 = vst [vmem:[%s765 + $0x178] sm:$0xff] %v860
                $region124: #{wan_i2v_cross_attention.12} parent=118 // loop_footer
                  %s763 = sadd.s32 1, %s759
                $region125: #{wan_i2v_cross_attention.12} parent=118 // loop_footer_branch
                  %758 = sbr.rel target = $region121
                $region126: #{wan_i2v_cross_attention.12} parent=118 // loop_exit
                  _
              $region119: #{wan_i2v_cross_attention.12} parent=103 // pred_fallthru
                _
              // Predicated region
              $region127: #{wan_i2v_cross_attention.12} parent=103 // pred_check
                _
              $region128: #{wan_i2v_cross_attention.12} parent=103 // pred_check_branch
                %863 = sbr.rel target = $region130
              $region129: #{wan_i2v_cross_attention.12} parent=103 // pred_region
                _
              $region130: #{wan_i2v_cross_attention.12} parent=103 // pred_fallthru
                _
            $region104: #{wan_i2v_cross_attention.12} parent=99 // pred_fallthru
              _
            // Predicated region
            $region105: #{wan_i2v_cross_attention.12} parent=99 // pred_check
              _
            $region106: #{wan_i2v_cross_attention.12} parent=99 // pred_check_branch
              %649 = sbr.rel target = $region108
            $region107: #{wan_i2v_cross_attention.12} parent=99 // pred_region
              %s651 = ssub.s32 256, 1
              loop: start=0, step=1, limit=1
              $region109: #{wan_i2v_cross_attention.12} parent=107 // loop_pre_header
                _
              $region110: #{wan_i2v_cross_attention.12} parent=107 // loop_header
                %s653 = sphi 0, %s657
                %p654 = scmp.ge.s32.totalorder %s653, 1
                %s658 = sphi %s643, %s643
                %s659 = sphi %s639, %s639
              $region111: #{wan_i2v_cross_attention.12} parent=107 // loop_header_branch
                %656 = sbr.rel (%p654) target = $region115
              $region112: #{wan_i2v_cross_attention.12} parent=107 // loop_body
                %v660 = vld [vmem:[%s658] sm:%s651]
                %661 = vst [vmem:[%s659] sm:%s651] %v660
                %v662 = vld [vmem:[%s658 + $0x10] sm:%s651]
                %663 = vst [vmem:[%s659 + $0x8] sm:%s651] %v662
                %v664 = vld [vmem:[%s658 + $0x20] sm:%s651]
                %665 = vst [vmem:[%s659 + $0x10] sm:%s651] %v664
                %v666 = vld [vmem:[%s658 + $0x30] sm:%s651]
                %667 = vst [vmem:[%s659 + $0x18] sm:%s651] %v666
                %v668 = vld [vmem:[%s658 + $0x40] sm:%s651]
                %669 = vst [vmem:[%s659 + $0x20] sm:%s651] %v668
                %v670 = vld [vmem:[%s658 + $0x50] sm:%s651]
                %671 = vst [vmem:[%s659 + $0x28] sm:%s651] %v670
                %v672 = vld [vmem:[%s658 + $0x60] sm:%s651]
                %673 = vst [vmem:[%s659 + $0x30] sm:%s651] %v672
                %v674 = vld [vmem:[%s658 + $0x70] sm:%s651]
                %675 = vst [vmem:[%s659 + $0x38] sm:%s651] %v674
                %v676 = vld [vmem:[%s658 + $0x80] sm:%s651]
                %677 = vst [vmem:[%s659 + $0x40] sm:%s651] %v676
                %v678 = vld [vmem:[%s658 + $0x90] sm:%s651]
                %679 = vst [vmem:[%s659 + $0x48] sm:%s651] %v678
                %v680 = vld [vmem:[%s658 + $0xa0] sm:%s651]
                %681 = vst [vmem:[%s659 + $0x50] sm:%s651] %v680
                %v682 = vld [vmem:[%s658 + $0xb0] sm:%s651]
                %683 = vst [vmem:[%s659 + $0x58] sm:%s651] %v682
                %v684 = vld [vmem:[%s658 + $0xc0] sm:%s651]
                %685 = vst [vmem:[%s659 + $0x60] sm:%s651] %v684
                %v686 = vld [vmem:[%s658 + $0xd0] sm:%s651]
                %687 = vst [vmem:[%s659 + $0x68] sm:%s651] %v686
                %v688 = vld [vmem:[%s658 + $0xe0] sm:%s651]
                %689 = vst [vmem:[%s659 + $0x70] sm:%s651] %v688
                %v690 = vld [vmem:[%s658 + $0xf0] sm:%s651]
                %691 = vst [vmem:[%s659 + $0x78] sm:%s651] %v690
                %v692 = vld [vmem:[%s658 + $0x100] sm:%s651]
                %693 = vst [vmem:[%s659 + $0x80] sm:%s651] %v692
                %v694 = vld [vmem:[%s658 + $0x110] sm:%s651]
                %695 = vst [vmem:[%s659 + $0x88] sm:%s651] %v694
                %v696 = vld [vmem:[%s658 + $0x120] sm:%s651]
                %697 = vst [vmem:[%s659 + $0x90] sm:%s651] %v696
                %v698 = vld [vmem:[%s658 + $0x130] sm:%s651]
                %699 = vst [vmem:[%s659 + $0x98] sm:%s651] %v698
                %v700 = vld [vmem:[%s658 + $0x140] sm:%s651]
                %701 = vst [vmem:[%s659 + $0xa0] sm:%s651] %v700
                %v702 = vld [vmem:[%s658 + $0x150] sm:%s651]
                %703 = vst [vmem:[%s659 + $0xa8] sm:%s651] %v702
                %v704 = vld [vmem:[%s658 + $0x160] sm:%s651]
                %705 = vst [vmem:[%s659 + $0xb0] sm:%s651] %v704
                %v706 = vld [vmem:[%s658 + $0x170] sm:%s651]
                %707 = vst [vmem:[%s659 + $0xb8] sm:%s651] %v706
                %v708 = vld [vmem:[%s658 + $0x180] sm:%s651]
                %709 = vst [vmem:[%s659 + $0xc0] sm:%s651] %v708
                %v710 = vld [vmem:[%s658 + $0x190] sm:%s651]
                %711 = vst [vmem:[%s659 + $0xc8] sm:%s651] %v710
                %v712 = vld [vmem:[%s658 + $0x1a0] sm:%s651]
                %713 = vst [vmem:[%s659 + $0xd0] sm:%s651] %v712
                %v714 = vld [vmem:[%s658 + $0x1b0] sm:%s651]
                %715 = vst [vmem:[%s659 + $0xd8] sm:%s651] %v714
                %v716 = vld [vmem:[%s658 + $0x1c0] sm:%s651]
                %717 = vst [vmem:[%s659 + $0xe0] sm:%s651] %v716
                %v718 = vld [vmem:[%s658 + $0x1d0] sm:%s651]
                %719 = vst [vmem:[%s659 + $0xe8] sm:%s651] %v718
                %v720 = vld [vmem:[%s658 + $0x1e0] sm:%s651]
                %721 = vst [vmem:[%s659 + $0xf0] sm:%s651] %v720
                %v722 = vld [vmem:[%s658 + $0x1f0] sm:%s651]
                %723 = vst [vmem:[%s659 + $0xf8] sm:%s651] %v722
                %v724 = vld [vmem:[%s658 + $0x200] sm:%s651]
                %725 = vst [vmem:[%s659 + $0x100] sm:%s651] %v724
                %v726 = vld [vmem:[%s658 + $0x210] sm:%s651]
                %727 = vst [vmem:[%s659 + $0x108] sm:%s651] %v726
                %v728 = vld [vmem:[%s658 + $0x220] sm:%s651]
                %729 = vst [vmem:[%s659 + $0x110] sm:%s651] %v728
                %v730 = vld [vmem:[%s658 + $0x230] sm:%s651]
                %731 = vst [vmem:[%s659 + $0x118] sm:%s651] %v730
                %v732 = vld [vmem:[%s658 + $0x240] sm:%s651]
                %733 = vst [vmem:[%s659 + $0x120] sm:%s651] %v732
                %v734 = vld [vmem:[%s658 + $0x250] sm:%s651]
                %735 = vst [vmem:[%s659 + $0x128] sm:%s651] %v734
                %v736 = vld [vmem:[%s658 + $0x260] sm:%s651]
                %737 = vst [vmem:[%s659 + $0x130] sm:%s651] %v736
                %v738 = vld [vmem:[%s658 + $0x270] sm:%s651]
                %739 = vst [vmem:[%s659 + $0x138] sm:%s651] %v738
                %v740 = vld [vmem:[%s658 + $0x280] sm:%s651]
                %741 = vst [vmem:[%s659 + $0x140] sm:%s651] %v740
                %v742 = vld [vmem:[%s658 + $0x290] sm:%s651]
                %743 = vst [vmem:[%s659 + $0x148] sm:%s651] %v742
                %v744 = vld [vmem:[%s658 + $0x2a0] sm:%s651]
                %745 = vst [vmem:[%s659 + $0x150] sm:%s651] %v744
                %v746 = vld [vmem:[%s658 + $0x2b0] sm:%s651]
                %747 = vst [vmem:[%s659 + $0x158] sm:%s651] %v746
                %v748 = vld [vmem:[%s658 + $0x2c0] sm:%s651]
                %749 = vst [vmem:[%s659 + $0x160] sm:%s651] %v748
                %v750 = vld [vmem:[%s658 + $0x2d0] sm:%s651]
                %751 = vst [vmem:[%s659 + $0x168] sm:%s651] %v750
                %v752 = vld [vmem:[%s658 + $0x2e0] sm:%s651]
                %753 = vst [vmem:[%s659 + $0x170] sm:%s651] %v752
                %v754 = vld [vmem:[%s658 + $0x2f0] sm:%s651]
                %755 = vst [vmem:[%s659 + $0x178] sm:%s651] %v754
              $region113: #{wan_i2v_cross_attention.12} parent=107 // loop_footer
                %s657 = sadd.s32 1, %s653
              $region114: #{wan_i2v_cross_attention.12} parent=107 // loop_footer_branch
                %652 = sbr.rel target = $region110
              $region115: #{wan_i2v_cross_attention.12} parent=107 // loop_exit
                _
            $region108: #{wan_i2v_cross_attention.12} parent=99 // pred_fallthru
              _
          $region100: #{wan_i2v_cross_attention.12} parent=95 // pred_fallthru
            _
          %864 = vnop
        $region96: #{wan_i2v_cross_attention.12} parent=15 // pred_fallthru
          _
        // Predicated region
        $region131: #{wan_i2v_cross_attention.12} parent=15 // pred_check
          %p865 = pneg %p147
        $region132: #{wan_i2v_cross_attention.12} parent=15 // pred_check_branch
          %867 = sbr.rel (%p865) target = $region134
        $region133: #{wan_i2v_cross_attention.12} parent=15 // pred_region
          %s868 = sand.u32 %s137, 1
          %s869 = sand.u32 %s137, 1
          %s870 = smul.addr %s869, 128
          %s871 = scalar_lea.vmem [#allocation7], %s870
          %s872 = smul.addr %s27, 32
          %s873 = sadd.s32 %s28, %s872
          %s874 = smul.addr %s873, 8
          %s875 = scalar_lea.vmem %s4, %s874
          // Predicated region
          $region135: #{wan_i2v_cross_attention.12} parent=133 // pred_check
            _
          $region136: #{wan_i2v_cross_attention.12} parent=133 // pred_check_branch
            %877 = sbr.rel (0) target = $region138
          $region137: #{wan_i2v_cross_attention.12} parent=133 // pred_region
            // Predicated region
            $region139: #{wan_i2v_cross_attention.12} parent=137 // pred_check
              _
            $region140: #{wan_i2v_cross_attention.12} parent=137 // pred_check_branch
              %879 = sbr.rel (0) target = $region142
            $region141: #{wan_i2v_cross_attention.12} parent=137 // pred_region
              // Predicated region
              $region154: #{wan_i2v_cross_attention.12} parent=141 // pred_check
                _
              $region155: #{wan_i2v_cross_attention.12} parent=141 // pred_check_branch
                %925 = sbr.rel (0) target = $region157
              $region156: #{wan_i2v_cross_attention.12} parent=141 // pred_region
                loop: start=0, step=1, limit=1
                $region158: #{wan_i2v_cross_attention.12} parent=156 // loop_pre_header
                  _
                $region159: #{wan_i2v_cross_attention.12} parent=156 // loop_header
                  %s927 = sphi 0, %s931
                  %p928 = scmp.ge.s32.totalorder %s927, 1
                  %s932 = sphi %s875, %s875
                  %s933 = sphi %s871, %s871
                $region160: #{wan_i2v_cross_attention.12} parent=156 // loop_header_branch
                  %930 = sbr.rel (%p928) target = $region164
                $region161: #{wan_i2v_cross_attention.12} parent=156 // loop_body
                  %v934 = vld [vmem:[%s932] sm:$0xff]
                  %935 = vst [vmem:[%s933] sm:$0xff] %v934
                  %v936 = vld [vmem:[%s932 + $0x10] sm:$0xff]
                  %937 = vst [vmem:[%s933 + $0x8] sm:$0xff] %v936
                  %v938 = vld [vmem:[%s932 + $0x20] sm:$0xff]
                  %939 = vst [vmem:[%s933 + $0x10] sm:$0xff] %v938
                  %v940 = vld [vmem:[%s932 + $0x30] sm:$0xff]
                  %941 = vst [vmem:[%s933 + $0x18] sm:$0xff] %v940
                  %v942 = vld [vmem:[%s932 + $0x40] sm:$0xff]
                  %943 = vst [vmem:[%s933 + $0x20] sm:$0xff] %v942
                  %v944 = vld [vmem:[%s932 + $0x50] sm:$0xff]
                  %945 = vst [vmem:[%s933 + $0x28] sm:$0xff] %v944
                  %v946 = vld [vmem:[%s932 + $0x60] sm:$0xff]
                  %947 = vst [vmem:[%s933 + $0x30] sm:$0xff] %v946
                  %v948 = vld [vmem:[%s932 + $0x70] sm:$0xff]
                  %949 = vst [vmem:[%s933 + $0x38] sm:$0xff] %v948
                  %v950 = vld [vmem:[%s932 + $0x80] sm:$0xff]
                  %951 = vst [vmem:[%s933 + $0x40] sm:$0xff] %v950
                  %v952 = vld [vmem:[%s932 + $0x90] sm:$0xff]
                  %953 = vst [vmem:[%s933 + $0x48] sm:$0xff] %v952
                  %v954 = vld [vmem:[%s932 + $0xa0] sm:$0xff]
                  %955 = vst [vmem:[%s933 + $0x50] sm:$0xff] %v954
                  %v956 = vld [vmem:[%s932 + $0xb0] sm:$0xff]
                  %957 = vst [vmem:[%s933 + $0x58] sm:$0xff] %v956
                  %v958 = vld [vmem:[%s932 + $0xc0] sm:$0xff]
                  %959 = vst [vmem:[%s933 + $0x60] sm:$0xff] %v958
                  %v960 = vld [vmem:[%s932 + $0xd0] sm:$0xff]
                  %961 = vst [vmem:[%s933 + $0x68] sm:$0xff] %v960
                  %v962 = vld [vmem:[%s932 + $0xe0] sm:$0xff]
                  %963 = vst [vmem:[%s933 + $0x70] sm:$0xff] %v962
                  %v964 = vld [vmem:[%s932 + $0xf0] sm:$0xff]
                  %965 = vst [vmem:[%s933 + $0x78] sm:$0xff] %v964
                $region162: #{wan_i2v_cross_attention.12} parent=156 // loop_footer
                  %s931 = sadd.s32 1, %s927
                $region163: #{wan_i2v_cross_attention.12} parent=156 // loop_footer_branch
                  %926 = sbr.rel target = $region159
                $region164: #{wan_i2v_cross_attention.12} parent=156 // loop_exit
                  _
              $region157: #{wan_i2v_cross_attention.12} parent=141 // pred_fallthru
                _
              // Predicated region
              $region165: #{wan_i2v_cross_attention.12} parent=141 // pred_check
                _
              $region166: #{wan_i2v_cross_attention.12} parent=141 // pred_check_branch
                %967 = sbr.rel target = $region168
              $region167: #{wan_i2v_cross_attention.12} parent=141 // pred_region
                _
              $region168: #{wan_i2v_cross_attention.12} parent=141 // pred_fallthru
                _
            $region142: #{wan_i2v_cross_attention.12} parent=137 // pred_fallthru
              _
            // Predicated region
            $region143: #{wan_i2v_cross_attention.12} parent=137 // pred_check
              _
            $region144: #{wan_i2v_cross_attention.12} parent=137 // pred_check_branch
              %881 = sbr.rel target = $region146
            $region145: #{wan_i2v_cross_attention.12} parent=137 // pred_region
              %s883 = ssub.s32 256, 1
              loop: start=0, step=1, limit=1
              $region147: #{wan_i2v_cross_attention.12} parent=145 // loop_pre_header
                _
              $region148: #{wan_i2v_cross_attention.12} parent=145 // loop_header
                %s885 = sphi 0, %s889
                %p886 = scmp.ge.s32.totalorder %s885, 1
                %s890 = sphi %s875, %s875
                %s891 = sphi %s871, %s871
              $region149: #{wan_i2v_cross_attention.12} parent=145 // loop_header_branch
                %888 = sbr.rel (%p886) target = $region153
              $region150: #{wan_i2v_cross_attention.12} parent=145 // loop_body
                %v892 = vld [vmem:[%s890] sm:%s883]
                %893 = vst [vmem:[%s891] sm:%s883] %v892
                %v894 = vld [vmem:[%s890 + $0x10] sm:%s883]
                %895 = vst [vmem:[%s891 + $0x8] sm:%s883] %v894
                %v896 = vld [vmem:[%s890 + $0x20] sm:%s883]
                %897 = vst [vmem:[%s891 + $0x10] sm:%s883] %v896
                %v898 = vld [vmem:[%s890 + $0x30] sm:%s883]
                %899 = vst [vmem:[%s891 + $0x18] sm:%s883] %v898
                %v900 = vld [vmem:[%s890 + $0x40] sm:%s883]
                %901 = vst [vmem:[%s891 + $0x20] sm:%s883] %v900
                %v902 = vld [vmem:[%s890 + $0x50] sm:%s883]
                %903 = vst [vmem:[%s891 + $0x28] sm:%s883] %v902
                %v904 = vld [vmem:[%s890 + $0x60] sm:%s883]
                %905 = vst [vmem:[%s891 + $0x30] sm:%s883] %v904
                %v906 = vld [vmem:[%s890 + $0x70] sm:%s883]
                %907 = vst [vmem:[%s891 + $0x38] sm:%s883] %v906
                %v908 = vld [vmem:[%s890 + $0x80] sm:%s883]
                %909 = vst [vmem:[%s891 + $0x40] sm:%s883] %v908
                %v910 = vld [vmem:[%s890 + $0x90] sm:%s883]
                %911 = vst [vmem:[%s891 + $0x48] sm:%s883] %v910
                %v912 = vld [vmem:[%s890 + $0xa0] sm:%s883]
                %913 = vst [vmem:[%s891 + $0x50] sm:%s883] %v912
                %v914 = vld [vmem:[%s890 + $0xb0] sm:%s883]
                %915 = vst [vmem:[%s891 + $0x58] sm:%s883] %v914
                %v916 = vld [vmem:[%s890 + $0xc0] sm:%s883]
                %917 = vst [vmem:[%s891 + $0x60] sm:%s883] %v916
                %v918 = vld [vmem:[%s890 + $0xd0] sm:%s883]
                %919 = vst [vmem:[%s891 + $0x68] sm:%s883] %v918
                %v920 = vld [vmem:[%s890 + $0xe0] sm:%s883]
                %921 = vst [vmem:[%s891 + $0x70] sm:%s883] %v920
                %v922 = vld [vmem:[%s890 + $0xf0] sm:%s883]
                %923 = vst [vmem:[%s891 + $0x78] sm:%s883] %v922
              $region151: #{wan_i2v_cross_attention.12} parent=145 // loop_footer
                %s889 = sadd.s32 1, %s885
              $region152: #{wan_i2v_cross_attention.12} parent=145 // loop_footer_branch
                %884 = sbr.rel target = $region148
              $region153: #{wan_i2v_cross_attention.12} parent=145 // loop_exit
                _
            $region146: #{wan_i2v_cross_attention.12} parent=137 // pred_fallthru
              _
          $region138: #{wan_i2v_cross_attention.12} parent=133 // pred_fallthru
            _
          %968 = vnop
        $region134: #{wan_i2v_cross_attention.12} parent=15 // pred_fallthru
          _
        // Predicated region
        $region169: #{wan_i2v_cross_attention.12} parent=15 // pred_check
          %p969 = pneg %p175
        $region170: #{wan_i2v_cross_attention.12} parent=15 // pred_check_branch
          %971 = sbr.rel (%p969) target = $region172
        $region171: #{wan_i2v_cross_attention.12} parent=15 // pred_region
          %s972 = sand.u32 %s165, 1
          %s973 = sand.u32 %s165, 1
          %s974 = smul.addr %s973, 128
          %s975 = scalar_lea.vmem [#allocation8], %s974
          %s976 = smul.addr %s27, 32
          %s977 = sadd.s32 %s28, %s976
          %s978 = smul.addr %s977, 8
          %s979 = scalar_lea.vmem %s5, %s978
          // Predicated region
          $region173: #{wan_i2v_cross_attention.12} parent=171 // pred_check
            _
          $region174: #{wan_i2v_cross_attention.12} parent=171 // pred_check_branch
            %981 = sbr.rel (0) target = $region176
          $region175: #{wan_i2v_cross_attention.12} parent=171 // pred_region
            // Predicated region
            $region177: #{wan_i2v_cross_attention.12} parent=175 // pred_check
              _
            $region178: #{wan_i2v_cross_attention.12} parent=175 // pred_check_branch
              %983 = sbr.rel (0) target = $region180
            $region179: #{wan_i2v_cross_attention.12} parent=175 // pred_region
              // Predicated region
              $region192: #{wan_i2v_cross_attention.12} parent=179 // pred_check
                _
              $region193: #{wan_i2v_cross_attention.12} parent=179 // pred_check_branch
                %1029 = sbr.rel (0) target = $region195
              $region194: #{wan_i2v_cross_attention.12} parent=179 // pred_region
                loop: start=0, step=1, limit=1
                $region196: #{wan_i2v_cross_attention.12} parent=194 // loop_pre_header
                  _
                $region197: #{wan_i2v_cross_attention.12} parent=194 // loop_header
                  %s1031 = sphi 0, %s1035
                  %p1032 = scmp.ge.s32.totalorder %s1031, 1
                  %s1036 = sphi %s979, %s979
                  %s1037 = sphi %s975, %s975
                $region198: #{wan_i2v_cross_attention.12} parent=194 // loop_header_branch
                  %1034 = sbr.rel (%p1032) target = $region202
                $region199: #{wan_i2v_cross_attention.12} parent=194 // loop_body
                  %v1038 = vld [vmem:[%s1036] sm:$0xff]
                  %1039 = vst [vmem:[%s1037] sm:$0xff] %v1038
                  %v1040 = vld [vmem:[%s1036 + $0x10] sm:$0xff]
                  %1041 = vst [vmem:[%s1037 + $0x8] sm:$0xff] %v1040
                  %v1042 = vld [vmem:[%s1036 + $0x20] sm:$0xff]
                  %1043 = vst [vmem:[%s1037 + $0x10] sm:$0xff] %v1042
                  %v1044 = vld [vmem:[%s1036 + $0x30] sm:$0xff]
                  %1045 = vst [vmem:[%s1037 + $0x18] sm:$0xff] %v1044
                  %v1046 = vld [vmem:[%s1036 + $0x40] sm:$0xff]
                  %1047 = vst [vmem:[%s1037 + $0x20] sm:$0xff] %v1046
                  %v1048 = vld [vmem:[%s1036 + $0x50] sm:$0xff]
                  %1049 = vst [vmem:[%s1037 + $0x28] sm:$0xff] %v1048
                  %v1050 = vld [vmem:[%s1036 + $0x60] sm:$0xff]
                  %1051 = vst [vmem:[%s1037 + $0x30] sm:$0xff] %v1050
                  %v1052 = vld [vmem:[%s1036 + $0x70] sm:$0xff]
                  %1053 = vst [vmem:[%s1037 + $0x38] sm:$0xff] %v1052
                  %v1054 = vld [vmem:[%s1036 + $0x80] sm:$0xff]
                  %1055 = vst [vmem:[%s1037 + $0x40] sm:$0xff] %v1054
                  %v1056 = vld [vmem:[%s1036 + $0x90] sm:$0xff]
                  %1057 = vst [vmem:[%s1037 + $0x48] sm:$0xff] %v1056
                  %v1058 = vld [vmem:[%s1036 + $0xa0] sm:$0xff]
                  %1059 = vst [vmem:[%s1037 + $0x50] sm:$0xff] %v1058
                  %v1060 = vld [vmem:[%s1036 + $0xb0] sm:$0xff]
                  %1061 = vst [vmem:[%s1037 + $0x58] sm:$0xff] %v1060
                  %v1062 = vld [vmem:[%s1036 + $0xc0] sm:$0xff]
                  %1063 = vst [vmem:[%s1037 + $0x60] sm:$0xff] %v1062
                  %v1064 = vld [vmem:[%s1036 + $0xd0] sm:$0xff]
                  %1065 = vst [vmem:[%s1037 + $0x68] sm:$0xff] %v1064
                  %v1066 = vld [vmem:[%s1036 + $0xe0] sm:$0xff]
                  %1067 = vst [vmem:[%s1037 + $0x70] sm:$0xff] %v1066
                  %v1068 = vld [vmem:[%s1036 + $0xf0] sm:$0xff]
                  %1069 = vst [vmem:[%s1037 + $0x78] sm:$0xff] %v1068
                $region200: #{wan_i2v_cross_attention.12} parent=194 // loop_footer
                  %s1035 = sadd.s32 1, %s1031
                $region201: #{wan_i2v_cross_attention.12} parent=194 // loop_footer_branch
                  %1030 = sbr.rel target = $region197
                $region202: #{wan_i2v_cross_attention.12} parent=194 // loop_exit
                  _
              $region195: #{wan_i2v_cross_attention.12} parent=179 // pred_fallthru
                _
              // Predicated region
              $region203: #{wan_i2v_cross_attention.12} parent=179 // pred_check
                _
              $region204: #{wan_i2v_cross_attention.12} parent=179 // pred_check_branch
                %1071 = sbr.rel target = $region206
              $region205: #{wan_i2v_cross_attention.12} parent=179 // pred_region
                _
              $region206: #{wan_i2v_cross_attention.12} parent=179 // pred_fallthru
                _
            $region180: #{wan_i2v_cross_attention.12} parent=175 // pred_fallthru
              _
            // Predicated region
            $region181: #{wan_i2v_cross_attention.12} parent=175 // pred_check
              _
            $region182: #{wan_i2v_cross_attention.12} parent=175 // pred_check_branch
              %985 = sbr.rel target = $region184
            $region183: #{wan_i2v_cross_attention.12} parent=175 // pred_region
              %s987 = ssub.s32 256, 1
              loop: start=0, step=1, limit=1
              $region185: #{wan_i2v_cross_attention.12} parent=183 // loop_pre_header
                _
              $region186: #{wan_i2v_cross_attention.12} parent=183 // loop_header
                %s989 = sphi 0, %s993
                %p990 = scmp.ge.s32.totalorder %s989, 1
                %s994 = sphi %s979, %s979
                %s995 = sphi %s975, %s975
              $region187: #{wan_i2v_cross_attention.12} parent=183 // loop_header_branch
                %992 = sbr.rel (%p990) target = $region191
              $region188: #{wan_i2v_cross_attention.12} parent=183 // loop_body
                %v996 = vld [vmem:[%s994] sm:%s987]
                %997 = vst [vmem:[%s995] sm:%s987] %v996
                %v998 = vld [vmem:[%s994 + $0x10] sm:%s987]
                %999 = vst [vmem:[%s995 + $0x8] sm:%s987] %v998
                %v1000 = vld [vmem:[%s994 + $0x20] sm:%s987]
                %1001 = vst [vmem:[%s995 + $0x10] sm:%s987] %v1000
                %v1002 = vld [vmem:[%s994 + $0x30] sm:%s987]
                %1003 = vst [vmem:[%s995 + $0x18] sm:%s987] %v1002
                %v1004 = vld [vmem:[%s994 + $0x40] sm:%s987]
                %1005 = vst [vmem:[%s995 + $0x20] sm:%s987] %v1004
                %v1006 = vld [vmem:[%s994 + $0x50] sm:%s987]
                %1007 = vst [vmem:[%s995 + $0x28] sm:%s987] %v1006
                %v1008 = vld [vmem:[%s994 + $0x60] sm:%s987]
                %1009 = vst [vmem:[%s995 + $0x30] sm:%s987] %v1008
                %v1010 = vld [vmem:[%s994 + $0x70] sm:%s987]
                %1011 = vst [vmem:[%s995 + $0x38] sm:%s987] %v1010
                %v1012 = vld [vmem:[%s994 + $0x80] sm:%s987]
                %1013 = vst [vmem:[%s995 + $0x40] sm:%s987] %v1012
                %v1014 = vld [vmem:[%s994 + $0x90] sm:%s987]
                %1015 = vst [vmem:[%s995 + $0x48] sm:%s987] %v1014
                %v1016 = vld [vmem:[%s994 + $0xa0] sm:%s987]
                %1017 = vst [vmem:[%s995 + $0x50] sm:%s987] %v1016
                %v1018 = vld [vmem:[%s994 + $0xb0] sm:%s987]
                %1019 = vst [vmem:[%s995 + $0x58] sm:%s987] %v1018
                %v1020 = vld [vmem:[%s994 + $0xc0] sm:%s987]
                %1021 = vst [vmem:[%s995 + $0x60] sm:%s987] %v1020
                %v1022 = vld [vmem:[%s994 + $0xd0] sm:%s987]
                %1023 = vst [vmem:[%s995 + $0x68] sm:%s987] %v1022
                %v1024 = vld [vmem:[%s994 + $0xe0] sm:%s987]
                %1025 = vst [vmem:[%s995 + $0x70] sm:%s987] %v1024
                %v1026 = vld [vmem:[%s994 + $0xf0] sm:%s987]
                %1027 = vst [vmem:[%s995 + $0x78] sm:%s987] %v1026
              $region189: #{wan_i2v_cross_attention.12} parent=183 // loop_footer
                %s993 = sadd.s32 1, %s989
              $region190: #{wan_i2v_cross_attention.12} parent=183 // loop_footer_branch
                %988 = sbr.rel target = $region186
              $region191: #{wan_i2v_cross_attention.12} parent=183 // loop_exit
                _
            $region184: #{wan_i2v_cross_attention.12} parent=175 // pred_fallthru
              _
          $region176: #{wan_i2v_cross_attention.12} parent=171 // pred_fallthru
            _
          %1072 = vnop
        $region172: #{wan_i2v_cross_attention.12} parent=15 // pred_fallthru
          _
      $region16: #{wan_i2v_cross_attention.12} parent=5 // pred_fallthru
        _
      %p1073 = scmp.le.s32.totalorder 1, %s20
      %p1074 = scmp.lt.s32.totalorder %s20, 5
      %p1075 = pnand %p1073, %p1074
      %p1076 = pneg %p1075
      // Predicated region
      $region207: #{wan_i2v_cross_attention.12} parent=5 // pred_check
        _
      $region208: #{wan_i2v_cross_attention.12} parent=5 // pred_check_branch
        %1078 = sbr.rel (%p1075) target = $region210
      $region209: #{wan_i2v_cross_attention.12} parent=5 // pred_region
        %s1079 = ssub.s32 %s20, 1
        %s1080 = sand.u32 %s56, 1
        %s1081 = sand.u32 %s56, 1
        %s1082 = smul.addr %s1081, 256
        %s1083 = scalar_lea.vmem [#allocation4], %s1082
        // Predicated region
        $region211: #{wan_i2v_cross_attention.12} parent=209 // pred_check
          %p1084 = pneg %p69
        $region212: #{wan_i2v_cross_attention.12} parent=209 // pred_check_branch
          %1086 = sbr.rel (%p1084) target = $region214
        $region213: #{wan_i2v_cross_attention.12} parent=209 // pred_region
          _
        $region214: #{wan_i2v_cross_attention.12} parent=209 // pred_fallthru
          _
        %s1087 = sand.u32 %s84, 1
        %s1088 = sand.u32 %s84, 1
        %s1089 = smul.addr %s1088, 384
        %s1090 = scalar_lea.vmem [#allocation5], %s1089
        // Predicated region
        $region215: #{wan_i2v_cross_attention.12} parent=209 // pred_check
          %p1091 = pneg %p97
        $region216: #{wan_i2v_cross_attention.12} parent=209 // pred_check_branch
          %1093 = sbr.rel (%p1091) target = $region218
        $region217: #{wan_i2v_cross_attention.12} parent=209 // pred_region
          _
        $region218: #{wan_i2v_cross_attention.12} parent=209 // pred_fallthru
          _
        %s1094 = sand.u32 %s112, 1
        %s1095 = sand.u32 %s112, 1
        %s1096 = smul.addr %s1095, 384
        %s1097 = scalar_lea.vmem [#allocation6], %s1096
        // Predicated region
        $region219: #{wan_i2v_cross_attention.12} parent=209 // pred_check
          %p1098 = pneg %p125
        $region220: #{wan_i2v_cross_attention.12} parent=209 // pred_check_branch
          %1100 = sbr.rel (%p1098) target = $region222
        $region221: #{wan_i2v_cross_attention.12} parent=209 // pred_region
          _
        $region222: #{wan_i2v_cross_attention.12} parent=209 // pred_fallthru
          _
        %s1101 = sand.u32 %s140, 1
        %s1102 = sand.u32 %s140, 1
        %s1103 = smul.addr %s1102, 128
        %s1104 = scalar_lea.vmem [#allocation7], %s1103
        // Predicated region
        $region223: #{wan_i2v_cross_attention.12} parent=209 // pred_check
          %p1105 = pneg %p153
        $region224: #{wan_i2v_cross_attention.12} parent=209 // pred_check_branch
          %1107 = sbr.rel (%p1105) target = $region226
        $region225: #{wan_i2v_cross_attention.12} parent=209 // pred_region
          _
        $region226: #{wan_i2v_cross_attention.12} parent=209 // pred_fallthru
          _
        %s1108 = sand.u32 %s168, 1
        %s1109 = sand.u32 %s168, 1
        %s1110 = smul.addr %s1109, 128
        %s1111 = scalar_lea.vmem [#allocation8], %s1110
        // Predicated region
        $region227: #{wan_i2v_cross_attention.12} parent=209 // pred_check
          %p1112 = pneg %p181
        $region228: #{wan_i2v_cross_attention.12} parent=209 // pred_check_branch
          %1114 = sbr.rel (%p1112) target = $region230
        $region229: #{wan_i2v_cross_attention.12} parent=209 // pred_region
          _
        $region230: #{wan_i2v_cross_attention.12} parent=209 // pred_fallthru
          _
        %s1115 = sand.u32 %s56, 1
        %s1116 = sand.u32 %s56, 1
        %s1117 = smul.addr %s1116, 256
        %s1118 = scalar_lea.vmem [#allocation4], %s1117
        %p1119 = pneg %p69
        %p1120 = pneg %p66
        %s1121 = sand.u32 %s84, 1
        %s1122 = sand.u32 %s84, 1
        %s1123 = smul.addr %s1122, 384
        %s1124 = scalar_lea.vmem [#allocation5], %s1123
        %p1125 = pneg %p97
        %p1126 = pneg %p94
        %s1127 = sand.u32 %s112, 1
        %s1128 = sand.u32 %s112, 1
        %s1129 = smul.addr %s1128, 384
        %s1130 = scalar_lea.vmem [#allocation6], %s1129
        %p1131 = pneg %p125
        %p1132 = pneg %p122
        %s1133 = sand.u32 %s140, 1
        %s1134 = sand.u32 %s140, 1
        %s1135 = smul.addr %s1134, 128
        %s1136 = scalar_lea.vmem [#allocation7], %s1135
        %p1137 = pneg %p153
        %p1138 = pneg %p150
        %s1139 = sand.u32 %s168, 1
        %s1140 = sand.u32 %s168, 1
        %s1141 = smul.addr %s1140, 128
        %s1142 = scalar_lea.vmem [#allocation8], %s1141
        %p1143 = pneg %p181
        %p1144 = pneg %p178
        %p1145 = pneg %p211
        %p1146 = pneg %p208
        %s1147 = sand.u32 %s198, 1
        %s1148 = sand.u32 %s198, 1
        %s1149 = smul.addr %s1148, 256
        %s1150 = scalar_lea.vmem [#allocation9], %s1149
        %s1151 = smul.u32 32, %s32
        %s1152 = smul.u32 32, %s32
        %v1153 = vld [vmem:[%s1083] sm:$0xff]
        %v1154 = vld [vmem:[%s1083 + $0x8] sm:$0xff]
        %v1155 = vld [vmem:[%s1083 + $0x10] sm:$0xff]
        %v1156 = vld [vmem:[%s1083 + $0x18] sm:$0xff]
        %v1157 = vld [vmem:[%s1083 + $0x20] sm:$0xff]
        %v1158 = vld [vmem:[%s1083 + $0x28] sm:$0xff]
        %v1159 = vld [vmem:[%s1083 + $0x30] sm:$0xff]
        %v1160 = vld [vmem:[%s1083 + $0x38] sm:$0xff]
        %v1161 = vld [vmem:[%s1083 + $0x40] sm:$0xff]
        %v1162 = vld [vmem:[%s1083 + $0x48] sm:$0xff]
        %v1163 = vld [vmem:[%s1083 + $0x50] sm:$0xff]
        %v1164 = vld [vmem:[%s1083 + $0x58] sm:$0xff]
        %v1165 = vld [vmem:[%s1083 + $0x60] sm:$0xff]
        %v1166 = vld [vmem:[%s1083 + $0x68] sm:$0xff]
        %v1167 = vld [vmem:[%s1083 + $0x70] sm:$0xff]
        %v1168 = vld [vmem:[%s1083 + $0x78] sm:$0xff]
        %v1169 = vld [vmem:[%s1083 + $0x80] sm:$0xff]
        %v1170 = vld [vmem:[%s1083 + $0x88] sm:$0xff]
        %v1171 = vld [vmem:[%s1083 + $0x90] sm:$0xff]
        %v1172 = vld [vmem:[%s1083 + $0x98] sm:$0xff]
        %v1173 = vld [vmem:[%s1083 + $0xa0] sm:$0xff]
        %v1174 = vld [vmem:[%s1083 + $0xa8] sm:$0xff]
        %v1175 = vld [vmem:[%s1083 + $0xb0] sm:$0xff]
        %v1176 = vld [vmem:[%s1083 + $0xb8] sm:$0xff]
        %v1177 = vld [vmem:[%s1083 + $0xc0] sm:$0xff]
        %v1178 = vld [vmem:[%s1083 + $0xc8] sm:$0xff]
        %v1179 = vld [vmem:[%s1083 + $0xd0] sm:$0xff]
        %v1180 = vld [vmem:[%s1083 + $0xd8] sm:$0xff]
        %v1181 = vld [vmem:[%s1083 + $0xe0] sm:$0xff]
        %v1182 = vld [vmem:[%s1083 + $0xe8] sm:$0xff]
        %v1183 = vld [vmem:[%s1083 + $0xf0] sm:$0xff]
        %v1184 = vld [vmem:[%s1083 + $0xf8] sm:$0xff]
        %v1185 = vmul.f32 %v1153, 0.088388346
        %v1186 = vmul.f32 %v1154, 0.088388346
        %v1187 = vmul.f32 %v1155, 0.088388346
        %v1188 = vmul.f32 %v1156, 0.088388346
        %v1189 = vmul.f32 %v1157, 0.088388346
        %v1190 = vmul.f32 %v1158, 0.088388346
        %v1191 = vmul.f32 %v1159, 0.088388346
        %v1192 = vmul.f32 %v1160, 0.088388346
        %v1193 = vmul.f32 %v1161, 0.088388346
        %v1194 = vmul.f32 %v1162, 0.088388346
        %v1195 = vmul.f32 %v1163, 0.088388346
        %v1196 = vmul.f32 %v1164, 0.088388346
        %v1197 = vmul.f32 %v1165, 0.088388346
        %v1198 = vmul.f32 %v1166, 0.088388346
        %v1199 = vmul.f32 %v1167, 0.088388346
        %v1200 = vmul.f32 %v1168, 0.088388346
        %v1201 = vmul.f32 %v1169, 0.088388346
        %v1202 = vmul.f32 %v1170, 0.088388346
        %v1203 = vmul.f32 %v1171, 0.088388346
        %v1204 = vmul.f32 %v1172, 0.088388346
        %v1205 = vmul.f32 %v1173, 0.088388346
        %v1206 = vmul.f32 %v1174, 0.088388346
        %v1207 = vmul.f32 %v1175, 0.088388346
        %v1208 = vmul.f32 %v1176, 0.088388346
        %v1209 = vmul.f32 %v1177, 0.088388346
        %v1210 = vmul.f32 %v1178, 0.088388346
        %v1211 = vmul.f32 %v1179, 0.088388346
        %v1212 = vmul.f32 %v1180, 0.088388346
        %v1213 = vmul.f32 %v1181, 0.088388346
        %v1214 = vmul.f32 %v1182, 0.088388346
        %v1215 = vmul.f32 %v1183, 0.088388346
        %v1216 = vmul.f32 %v1184, 0.088388346
        %v1217 = vld [vmem:[%s1090] sm:$0xff]
        %v1218 = vld [vmem:[%s1090 + $0x8] sm:$0xff]
        %v1219 = vld [vmem:[%s1090 + $0x10] sm:$0xff]
        %v1220 = vld [vmem:[%s1090 + $0x18] sm:$0xff]
        %v1221 = vld [vmem:[%s1090 + $0x20] sm:$0xff]
        %v1222 = vld [vmem:[%s1090 + $0x28] sm:$0xff]
        %v1223 = vld [vmem:[%s1090 + $0x30] sm:$0xff]
        %v1224 = vld [vmem:[%s1090 + $0x38] sm:$0xff]
        %v1225 = vld [vmem:[%s1090 + $0x40] sm:$0xff]
        %v1226 = vld [vmem:[%s1090 + $0x48] sm:$0xff]
        %v1227 = vld [vmem:[%s1090 + $0x50] sm:$0xff]
        %v1228 = vld [vmem:[%s1090 + $0x58] sm:$0xff]
        %v1229 = vld [vmem:[%s1090 + $0x60] sm:$0xff]
        %v1230 = vld [vmem:[%s1090 + $0x68] sm:$0xff]
        %v1231 = vld [vmem:[%s1090 + $0x70] sm:$0xff]
        %v1232 = vld [vmem:[%s1090 + $0x78] sm:$0xff]
        %v1233 = vld [vmem:[%s1090 + $0x80] sm:$0xff]
        %v1234 = vld [vmem:[%s1090 + $0x88] sm:$0xff]
        %v1235 = vld [vmem:[%s1090 + $0x90] sm:$0xff]
        %v1236 = vld [vmem:[%s1090 + $0x98] sm:$0xff]
        %v1237 = vld [vmem:[%s1090 + $0xa0] sm:$0xff]
        %v1238 = vld [vmem:[%s1090 + $0xa8] sm:$0xff]
        %v1239 = vld [vmem:[%s1090 + $0xb0] sm:$0xff]
        %v1240 = vld [vmem:[%s1090 + $0xb8] sm:$0xff]
        %v1241 = vld [vmem:[%s1090 + $0xc0] sm:$0xff]
        %v1242 = vld [vmem:[%s1090 + $0xc8] sm:$0xff]
        %v1243 = vld [vmem:[%s1090 + $0xd0] sm:$0xff]
        %v1244 = vld [vmem:[%s1090 + $0xd8] sm:$0xff]
        %v1245 = vld [vmem:[%s1090 + $0xe0] sm:$0xff]
        %v1246 = vld [vmem:[%s1090 + $0xe8] sm:$0xff]
        %v1247 = vld [vmem:[%s1090 + $0xf0] sm:$0xff]
        %v1248 = vld [vmem:[%s1090 + $0xf8] sm:$0xff]
        %v1249 = vld [vmem:[%s1090 + $0x100] sm:$0xff]
        %v1250 = vld [vmem:[%s1090 + $0x108] sm:$0xff]
        %v1251 = vld [vmem:[%s1090 + $0x110] sm:$0xff]
        %v1252 = vld [vmem:[%s1090 + $0x118] sm:$0xff]
        %v1253 = vld [vmem:[%s1090 + $0x120] sm:$0xff]
        %v1254 = vld [vmem:[%s1090 + $0x128] sm:$0xff]
        %v1255 = vld [vmem:[%s1090 + $0x130] sm:$0xff]
        %v1256 = vld [vmem:[%s1090 + $0x138] sm:$0xff]
        %v1257 = vld [vmem:[%s1090 + $0x140] sm:$0xff]
        %v1258 = vld [vmem:[%s1090 + $0x148] sm:$0xff]
        %v1259 = vld [vmem:[%s1090 + $0x150] sm:$0xff]
        %v1260 = vld [vmem:[%s1090 + $0x158] sm:$0xff]
        %v1261 = vld [vmem:[%s1090 + $0x160] sm:$0xff]
        %v1262 = vld [vmem:[%s1090 + $0x168] sm:$0xff]
        %v1263 = vld [vmem:[%s1090 + $0x170] sm:$0xff]
        %v1264 = vld [vmem:[%s1090 + $0x178] sm:$0xff]
        %1265 = vmatpush.xpose.msra.mxu0 %v1232
        %1266 = vmatpush.xpose.msra.mxu0 %v1231
        %1267 = vmatpush.xpose.msra.mxu0 %v1230
        %1268 = vmatpush.xpose.msra.mxu0 %v1229
        %1269 = vmatpush.xpose.msra.mxu0 %v1228
        %1270 = vmatpush.xpose.msra.mxu0 %v1227
        %1271 = vmatpush.xpose.msra.mxu0 %v1226
        %1272 = vmatpush.xpose.msra.mxu0 %v1225
        %1273 = vmatpush.xpose.msra.mxu0 %v1224
        %1274 = vmatpush.xpose.msra.mxu0 %v1223
        %1275 = vmatpush.xpose.msra.mxu0 %v1222
        %1276 = vmatpush.xpose.msra.mxu0 %v1221
        %1277 = vmatpush.xpose.msra.mxu0 %v1220
        %1278 = vmatpush.xpose.msra.mxu0 %v1219
        %1279 = vmatpush.xpose.msra.mxu0 %v1218
        %1280 = vmatpush.xpose.msra.mxu0 %v1217
        %1281 = vmatmul.f32.gmra.mxu0 %v1185
        %v1282 = vpop.f32.mrf.mxu0
        %v1283 = vadd.f32 0.0, %v1282
        %1284 = vmatmul.f32.gmra.mxu0 %v1186
        %v1285 = vpop.f32.mrf.mxu0
        %v1286 = vadd.f32 0.0, %v1285
        %1287 = vmatmul.f32.gmra.mxu0 %v1187
        %v1288 = vpop.f32.mrf.mxu0
        %v1289 = vadd.f32 0.0, %v1288
        %1290 = vmatmul.f32.gmra.mxu0 %v1188
        %v1291 = vpop.f32.mrf.mxu0
        %v1292 = vadd.f32 0.0, %v1291
        %1293 = vmatmul.f32.gmra.mxu0 %v1189
        %v1294 = vpop.f32.mrf.mxu0
        %v1295 = vadd.f32 0.0, %v1294
        %1296 = vmatmul.f32.gmra.mxu0 %v1190
        %v1297 = vpop.f32.mrf.mxu0
        %v1298 = vadd.f32 0.0, %v1297
        %1299 = vmatmul.f32.gmra.mxu0 %v1191
        %v1300 = vpop.f32.mrf.mxu0
        %v1301 = vadd.f32 0.0, %v1300
        %1302 = vmatmul.f32.gmra.mxu0 %v1192
        %v1303 = vpop.f32.mrf.mxu0
        %v1304 = vadd.f32 0.0, %v1303
        %1305 = vmatmul.f32.gmra.mxu0 %v1193
        %v1306 = vpop.f32.mrf.mxu0
        %v1307 = vadd.f32 0.0, %v1306
        %1308 = vmatmul.f32.gmra.mxu0 %v1194
        %v1309 = vpop.f32.mrf.mxu0
        %v1310 = vadd.f32 0.0, %v1309
        %1311 = vmatmul.f32.gmra.mxu0 %v1195
        %v1312 = vpop.f32.mrf.mxu0
        %v1313 = vadd.f32 0.0, %v1312
        %1314 = vmatmul.f32.gmra.mxu0 %v1196
        %v1315 = vpop.f32.mrf.mxu0
        %v1316 = vadd.f32 0.0, %v1315
        %1317 = vmatmul.f32.gmra.mxu0 %v1197
        %v1318 = vpop.f32.mrf.mxu0
        %v1319 = vadd.f32 0.0, %v1318
        %1320 = vmatmul.f32.gmra.mxu0 %v1198
        %v1321 = vpop.f32.mrf.mxu0
        %v1322 = vadd.f32 0.0, %v1321
        %1323 = vmatmul.f32.gmra.mxu0 %v1199
        %v1324 = vpop.f32.mrf.mxu0
        %v1325 = vadd.f32 0.0, %v1324
        %1326 = vmatmul.f32.gmra.mxu0 %v1200
        %v1327 = vpop.f32.mrf.mxu0
        %v1328 = vadd.f32 0.0, %v1327
        %1329 = vmatmul.f32.gmra.mxu0 %v1201
        %v1330 = vpop.f32.mrf.mxu0
        %v1331 = vadd.f32 0.0, %v1330
        %1332 = vmatmul.f32.gmra.mxu0 %v1202
        %v1333 = vpop.f32.mrf.mxu0
        %v1334 = vadd.f32 0.0, %v1333
        %1335 = vmatmul.f32.gmra.mxu0 %v1203
        %v1336 = vpop.f32.mrf.mxu0
        %v1337 = vadd.f32 0.0, %v1336
        %1338 = vmatmul.f32.gmra.mxu0 %v1204
        %v1339 = vpop.f32.mrf.mxu0
        %v1340 = vadd.f32 0.0, %v1339
        %1341 = vmatmul.f32.gmra.mxu0 %v1205
        %v1342 = vpop.f32.mrf.mxu0
        %v1343 = vadd.f32 0.0, %v1342
        %1344 = vmatmul.f32.gmra.mxu0 %v1206
        %v1345 = vpop.f32.mrf.mxu0
        %v1346 = vadd.f32 0.0, %v1345
        %1347 = vmatmul.f32.gmra.mxu0 %v1207
        %v1348 = vpop.f32.mrf.mxu0
        %v1349 = vadd.f32 0.0, %v1348
        %1350 = vmatmul.f32.gmra.mxu0 %v1208
        %v1351 = vpop.f32.mrf.mxu0
        %v1352 = vadd.f32 0.0, %v1351
        %1353 = vmatmul.f32.gmra.mxu0 %v1209
        %v1354 = vpop.f32.mrf.mxu0
        %v1355 = vadd.f32 0.0, %v1354
        %1356 = vmatmul.f32.gmra.mxu0 %v1210
        %v1357 = vpop.f32.mrf.mxu0
        %v1358 = vadd.f32 0.0, %v1357
        %1359 = vmatmul.f32.gmra.mxu0 %v1211
        %v1360 = vpop.f32.mrf.mxu0
        %v1361 = vadd.f32 0.0, %v1360
        %1362 = vmatmul.f32.gmra.mxu0 %v1212
        %v1363 = vpop.f32.mrf.mxu0
        %v1364 = vadd.f32 0.0, %v1363
        %1365 = vmatmul.f32.gmra.mxu0 %v1213
        %v1366 = vpop.f32.mrf.mxu0
        %v1367 = vadd.f32 0.0, %v1366
        %1368 = vmatmul.f32.gmra.mxu0 %v1214
        %v1369 = vpop.f32.mrf.mxu0
        %v1370 = vadd.f32 0.0, %v1369
        %1371 = vmatmul.f32.gmra.mxu0 %v1215
        %v1372 = vpop.f32.mrf.mxu0
        %v1373 = vadd.f32 0.0, %v1372
        %1374 = vmatmul.f32.gmra.mxu0 %v1216
        %v1375 = vpop.f32.mrf.mxu0
        %v1376 = vadd.f32 0.0, %v1375
        %1377 = vdwg.mxu0
        %1378 = vmatpush.xpose.msra.mxu0 %v1248
        %1379 = vmatpush.xpose.msra.mxu0 %v1247
        %1380 = vmatpush.xpose.msra.mxu0 %v1246
        %1381 = vmatpush.xpose.msra.mxu0 %v1245
        %1382 = vmatpush.xpose.msra.mxu0 %v1244
        %1383 = vmatpush.xpose.msra.mxu0 %v1243
        %1384 = vmatpush.xpose.msra.mxu0 %v1242
        %1385 = vmatpush.xpose.msra.mxu0 %v1241
        %1386 = vmatpush.xpose.msra.mxu0 %v1240
        %1387 = vmatpush.xpose.msra.mxu0 %v1239
        %1388 = vmatpush.xpose.msra.mxu0 %v1238
        %1389 = vmatpush.xpose.msra.mxu0 %v1237
        %1390 = vmatpush.xpose.msra.mxu0 %v1236
        %1391 = vmatpush.xpose.msra.mxu0 %v1235
        %1392 = vmatpush.xpose.msra.mxu0 %v1234
        %1393 = vmatpush.xpose.msra.mxu0 %v1233
        %1394 = vmatmul.f32.gmra.mxu0 %v1185
        %v1395 = vpop.f32.mrf.mxu0
        %v1396 = vadd.f32 0.0, %v1395
        %1397 = vmatmul.f32.gmra.mxu0 %v1186
        %v1398 = vpop.f32.mrf.mxu0
        %v1399 = vadd.f32 0.0, %v1398
        %1400 = vmatmul.f32.gmra.mxu0 %v1187
        %v1401 = vpop.f32.mrf.mxu0
        %v1402 = vadd.f32 0.0, %v1401
        %1403 = vmatmul.f32.gmra.mxu0 %v1188
        %v1404 = vpop.f32.mrf.mxu0
        %v1405 = vadd.f32 0.0, %v1404
        %1406 = vmatmul.f32.gmra.mxu0 %v1189
        %v1407 = vpop.f32.mrf.mxu0
        %v1408 = vadd.f32 0.0, %v1407
        %1409 = vmatmul.f32.gmra.mxu0 %v1190
        %v1410 = vpop.f32.mrf.mxu0
        %v1411 = vadd.f32 0.0, %v1410
        %1412 = vmatmul.f32.gmra.mxu0 %v1191
        %v1413 = vpop.f32.mrf.mxu0
        %v1414 = vadd.f32 0.0, %v1413
        %1415 = vmatmul.f32.gmra.mxu0 %v1192
        %v1416 = vpop.f32.mrf.mxu0
        %v1417 = vadd.f32 0.0, %v1416
        %1418 = vmatmul.f32.gmra.mxu0 %v1193
        %v1419 = vpop.f32.mrf.mxu0
        %v1420 = vadd.f32 0.0, %v1419
        %1421 = vmatmul.f32.gmra.mxu0 %v1194
        %v1422 = vpop.f32.mrf.mxu0
        %v1423 = vadd.f32 0.0, %v1422
        %1424 = vmatmul.f32.gmra.mxu0 %v1195
        %v1425 = vpop.f32.mrf.mxu0
        %v1426 = vadd.f32 0.0, %v1425
        %1427 = vmatmul.f32.gmra.mxu0 %v1196
        %v1428 = vpop.f32.mrf.mxu0
        %v1429 = vadd.f32 0.0, %v1428
        %1430 = vmatmul.f32.gmra.mxu0 %v1197
        %v1431 = vpop.f32.mrf.mxu0
        %v1432 = vadd.f32 0.0, %v1431
        %1433 = vmatmul.f32.gmra.mxu0 %v1198
        %v1434 = vpop.f32.mrf.mxu0
        %v1435 = vadd.f32 0.0, %v1434
        %1436 = vmatmul.f32.gmra.mxu0 %v1199
        %v1437 = vpop.f32.mrf.mxu0
        %v1438 = vadd.f32 0.0, %v1437
        %1439 = vmatmul.f32.gmra.mxu0 %v1200
        %v1440 = vpop.f32.mrf.mxu0
        %v1441 = vadd.f32 0.0, %v1440
        %1442 = vmatmul.f32.gmra.mxu0 %v1201
        %v1443 = vpop.f32.mrf.mxu0
        %v1444 = vadd.f32 0.0, %v1443
        %1445 = vmatmul.f32.gmra.mxu0 %v1202
        %v1446 = vpop.f32.mrf.mxu0
        %v1447 = vadd.f32 0.0, %v1446
        %1448 = vmatmul.f32.gmra.mxu0 %v1203
        %v1449 = vpop.f32.mrf.mxu0
        %v1450 = vadd.f32 0.0, %v1449
        %1451 = vmatmul.f32.gmra.mxu0 %v1204
        %v1452 = vpop.f32.mrf.mxu0
        %v1453 = vadd.f32 0.0, %v1452
        %1454 = vmatmul.f32.gmra.mxu0 %v1205
        %v1455 = vpop.f32.mrf.mxu0
        %v1456 = vadd.f32 0.0, %v1455
        %1457 = vmatmul.f32.gmra.mxu0 %v1206
        %v1458 = vpop.f32.mrf.mxu0
        %v1459 = vadd.f32 0.0, %v1458
        %1460 = vmatmul.f32.gmra.mxu0 %v1207
        %v1461 = vpop.f32.mrf.mxu0
        %v1462 = vadd.f32 0.0, %v1461
        %1463 = vmatmul.f32.gmra.mxu0 %v1208
        %v1464 = vpop.f32.mrf.mxu0
        %v1465 = vadd.f32 0.0, %v1464
        %1466 = vmatmul.f32.gmra.mxu0 %v1209
        %v1467 = vpop.f32.mrf.mxu0
        %v1468 = vadd.f32 0.0, %v1467
        %1469 = vmatmul.f32.gmra.mxu0 %v1210
        %v1470 = vpop.f32.mrf.mxu0
        %v1471 = vadd.f32 0.0, %v1470
        %1472 = vmatmul.f32.gmra.mxu0 %v1211
        %v1473 = vpop.f32.mrf.mxu0
        %v1474 = vadd.f32 0.0, %v1473
        %1475 = vmatmul.f32.gmra.mxu0 %v1212
        %v1476 = vpop.f32.mrf.mxu0
        %v1477 = vadd.f32 0.0, %v1476
        %1478 = vmatmul.f32.gmra.mxu0 %v1213
        %v1479 = vpop.f32.mrf.mxu0
        %v1480 = vadd.f32 0.0, %v1479
        %1481 = vmatmul.f32.gmra.mxu0 %v1214
        %v1482 = vpop.f32.mrf.mxu0
        %v1483 = vadd.f32 0.0, %v1482
        %1484 = vmatmul.f32.gmra.mxu0 %v1215
        %v1485 = vpop.f32.mrf.mxu0
        %v1486 = vadd.f32 0.0, %v1485
        %1487 = vmatmul.f32.gmra.mxu0 %v1216
        %v1488 = vpop.f32.mrf.mxu0
        %v1489 = vadd.f32 0.0, %v1488
        %1490 = vdwg.mxu0
        %1491 = vmatpush.xpose.msra.mxu0 %v1264
        %1492 = vmatpush.xpose.msra.mxu0 %v1263
        %1493 = vmatpush.xpose.msra.mxu0 %v1262
        %1494 = vmatpush.xpose.msra.mxu0 %v1261
        %1495 = vmatpush.xpose.msra.mxu0 %v1260
        %1496 = vmatpush.xpose.msra.mxu0 %v1259
        %1497 = vmatpush.xpose.msra.mxu0 %v1258
        %1498 = vmatpush.xpose.msra.mxu0 %v1257
        %1499 = vmatpush.xpose.msra.mxu0 %v1256
        %1500 = vmatpush.xpose.msra.mxu0 %v1255
        %1501 = vmatpush.xpose.msra.mxu0 %v1254
        %1502 = vmatpush.xpose.msra.mxu0 %v1253
        %1503 = vmatpush.xpose.msra.mxu0 %v1252
        %1504 = vmatpush.xpose.msra.mxu0 %v1251
        %1505 = vmatpush.xpose.msra.mxu0 %v1250
        %1506 = vmatpush.xpose.msra.mxu0 %v1249
        %1507 = vmatmul.f32.gmra.mxu0 %v1185
        %v1508 = vpop.f32.mrf.mxu0
        %v1509 = vadd.f32 0.0, %v1508
        %1510 = vmatmul.f32.gmra.mxu0 %v1186
        %v1511 = vpop.f32.mrf.mxu0
        %v1512 = vadd.f32 0.0, %v1511
        %1513 = vmatmul.f32.gmra.mxu0 %v1187
        %v1514 = vpop.f32.mrf.mxu0
        %v1515 = vadd.f32 0.0, %v1514
        %1516 = vmatmul.f32.gmra.mxu0 %v1188
        %v1517 = vpop.f32.mrf.mxu0
        %v1518 = vadd.f32 0.0, %v1517
        %1519 = vmatmul.f32.gmra.mxu0 %v1189
        %v1520 = vpop.f32.mrf.mxu0
        %v1521 = vadd.f32 0.0, %v1520
        %1522 = vmatmul.f32.gmra.mxu0 %v1190
        %v1523 = vpop.f32.mrf.mxu0
        %v1524 = vadd.f32 0.0, %v1523
        %1525 = vmatmul.f32.gmra.mxu0 %v1191
        %v1526 = vpop.f32.mrf.mxu0
        %v1527 = vadd.f32 0.0, %v1526
        %1528 = vmatmul.f32.gmra.mxu0 %v1192
        %v1529 = vpop.f32.mrf.mxu0
        %v1530 = vadd.f32 0.0, %v1529
        %1531 = vmatmul.f32.gmra.mxu0 %v1193
        %v1532 = vpop.f32.mrf.mxu0
        %v1533 = vadd.f32 0.0, %v1532
        %1534 = vmatmul.f32.gmra.mxu0 %v1194
        %v1535 = vpop.f32.mrf.mxu0
        %v1536 = vadd.f32 0.0, %v1535
        %1537 = vmatmul.f32.gmra.mxu0 %v1195
        %v1538 = vpop.f32.mrf.mxu0
        %v1539 = vadd.f32 0.0, %v1538
        %1540 = vmatmul.f32.gmra.mxu0 %v1196
        %v1541 = vpop.f32.mrf.mxu0
        %v1542 = vadd.f32 0.0, %v1541
        %1543 = vmatmul.f32.gmra.mxu0 %v1197
        %v1544 = vpop.f32.mrf.mxu0
        %v1545 = vadd.f32 0.0, %v1544
        %1546 = vmatmul.f32.gmra.mxu0 %v1198
        %v1547 = vpop.f32.mrf.mxu0
        %v1548 = vadd.f32 0.0, %v1547
        %1549 = vmatmul.f32.gmra.mxu0 %v1199
        %v1550 = vpop.f32.mrf.mxu0
        %v1551 = vadd.f32 0.0, %v1550
        %1552 = vmatmul.f32.gmra.mxu0 %v1200
        %v1553 = vpop.f32.mrf.mxu0
        %v1554 = vadd.f32 0.0, %v1553
        %1555 = vmatmul.f32.gmra.mxu0 %v1201
        %v1556 = vpop.f32.mrf.mxu0
        %v1557 = vadd.f32 0.0, %v1556
        %1558 = vmatmul.f32.gmra.mxu0 %v1202
        %v1559 = vpop.f32.mrf.mxu0
        %v1560 = vadd.f32 0.0, %v1559
        %1561 = vmatmul.f32.gmra.mxu0 %v1203
        %v1562 = vpop.f32.mrf.mxu0
        %v1563 = vadd.f32 0.0, %v1562
        %1564 = vmatmul.f32.gmra.mxu0 %v1204
        %v1565 = vpop.f32.mrf.mxu0
        %v1566 = vadd.f32 0.0, %v1565
        %1567 = vmatmul.f32.gmra.mxu0 %v1205
        %v1568 = vpop.f32.mrf.mxu0
        %v1569 = vadd.f32 0.0, %v1568
        %1570 = vmatmul.f32.gmra.mxu0 %v1206
        %v1571 = vpop.f32.mrf.mxu0
        %v1572 = vadd.f32 0.0, %v1571
        %1573 = vmatmul.f32.gmra.mxu0 %v1207
        %v1574 = vpop.f32.mrf.mxu0
        %v1575 = vadd.f32 0.0, %v1574
        %1576 = vmatmul.f32.gmra.mxu0 %v1208
        %v1577 = vpop.f32.mrf.mxu0
        %v1578 = vadd.f32 0.0, %v1577
        %1579 = vmatmul.f32.gmra.mxu0 %v1209
        %v1580 = vpop.f32.mrf.mxu0
        %v1581 = vadd.f32 0.0, %v1580
        %1582 = vmatmul.f32.gmra.mxu0 %v1210
        %v1583 = vpop.f32.mrf.mxu0
        %v1584 = vadd.f32 0.0, %v1583
        %1585 = vmatmul.f32.gmra.mxu0 %v1211
        %v1586 = vpop.f32.mrf.mxu0
        %v1587 = vadd.f32 0.0, %v1586
        %1588 = vmatmul.f32.gmra.mxu0 %v1212
        %v1589 = vpop.f32.mrf.mxu0
        %v1590 = vadd.f32 0.0, %v1589
        %1591 = vmatmul.f32.gmra.mxu0 %v1213
        %v1592 = vpop.f32.mrf.mxu0
        %v1593 = vadd.f32 0.0, %v1592
        %1594 = vmatmul.f32.gmra.mxu0 %v1214
        %v1595 = vpop.f32.mrf.mxu0
        %v1596 = vadd.f32 0.0, %v1595
        %1597 = vmatmul.f32.gmra.mxu0 %v1215
        %v1598 = vpop.f32.mrf.mxu0
        %v1599 = vadd.f32 0.0, %v1598
        %1600 = vmatmul.f32.gmra.mxu0 %v1216
        %v1601 = vpop.f32.mrf.mxu0
        %v1602 = vadd.f32 0.0, %v1601
        %1603 = vdwg.mxu0
        %v1604 = vlaneseq
        %v1605 = vand.u32 %v1604, 127
        %v1606 = vadd.s32 %v1605, 128
        %v1607 = vadd.s32 %v1605, 256
        %vm1608 = vcmp.lt.s32.totalorder %v1605, 257
        %vm1609 = vcmp.lt.s32.totalorder %v1606, 257
        %vm1610 = vcmp.lt.s32.totalorder %v1607, 257
        %v1611 = vsel %vm1608, %v1283, -inf
        %v1612 = vsel %vm1609, %v1396, -inf
        %v1613 = vsel %vm1610, %v1509, -inf
        %v1614 = vsel %vm1608, %v1286, -inf
        %v1615 = vsel %vm1609, %v1399, -inf
        %v1616 = vsel %vm1610, %v1512, -inf
        %v1617 = vsel %vm1608, %v1289, -inf
        %v1618 = vsel %vm1609, %v1402, -inf
        %v1619 = vsel %vm1610, %v1515, -inf
        %v1620 = vsel %vm1608, %v1292, -inf
        %v1621 = vsel %vm1609, %v1405, -inf
        %v1622 = vsel %vm1610, %v1518, -inf
        %v1623 = vsel %vm1608, %v1295, -inf
        %v1624 = vsel %vm1609, %v1408, -inf
        %v1625 = vsel %vm1610, %v1521, -inf
        %v1626 = vsel %vm1608, %v1298, -inf
        %v1627 = vsel %vm1609, %v1411, -inf
        %v1628 = vsel %vm1610, %v1524, -inf
        %v1629 = vsel %vm1608, %v1301, -inf
        %v1630 = vsel %vm1609, %v1414, -inf
        %v1631 = vsel %vm1610, %v1527, -inf
        %v1632 = vsel %vm1608, %v1304, -inf
        %v1633 = vsel %vm1609, %v1417, -inf
        %v1634 = vsel %vm1610, %v1530, -inf
        %v1635 = vsel %vm1608, %v1307, -inf
        %v1636 = vsel %vm1609, %v1420, -inf
        %v1637 = vsel %vm1610, %v1533, -inf
        %v1638 = vsel %vm1608, %v1310, -inf
        %v1639 = vsel %vm1609, %v1423, -inf
        %v1640 = vsel %vm1610, %v1536, -inf
        %v1641 = vsel %vm1608, %v1313, -inf
        %v1642 = vsel %vm1609, %v1426, -inf
        %v1643 = vsel %vm1610, %v1539, -inf
        %v1644 = vsel %vm1608, %v1316, -inf
        %v1645 = vsel %vm1609, %v1429, -inf
        %v1646 = vsel %vm1610, %v1542, -inf
        %v1647 = vsel %vm1608, %v1319, -inf
        %v1648 = vsel %vm1609, %v1432, -inf
        %v1649 = vsel %vm1610, %v1545, -inf
        %v1650 = vsel %vm1608, %v1322, -inf
        %v1651 = vsel %vm1609, %v1435, -inf
        %v1652 = vsel %vm1610, %v1548, -inf
        %v1653 = vsel %vm1608, %v1325, -inf
        %v1654 = vsel %vm1609, %v1438, -inf
        %v1655 = vsel %vm1610, %v1551, -inf
        %v1656 = vsel %vm1608, %v1328, -inf
        %v1657 = vsel %vm1609, %v1441, -inf
        %v1658 = vsel %vm1610, %v1554, -inf
        %v1659 = vsel %vm1608, %v1331, -inf
        %v1660 = vsel %vm1609, %v1444, -inf
        %v1661 = vsel %vm1610, %v1557, -inf
        %v1662 = vsel %vm1608, %v1334, -inf
        %v1663 = vsel %vm1609, %v1447, -inf
        %v1664 = vsel %vm1610, %v1560, -inf
        %v1665 = vsel %vm1608, %v1337, -inf
        %v1666 = vsel %vm1609, %v1450, -inf
        %v1667 = vsel %vm1610, %v1563, -inf
        %v1668 = vsel %vm1608, %v1340, -inf
        %v1669 = vsel %vm1609, %v1453, -inf
        %v1670 = vsel %vm1610, %v1566, -inf
        %v1671 = vsel %vm1608, %v1343, -inf
        %v1672 = vsel %vm1609, %v1456, -inf
        %v1673 = vsel %vm1610, %v1569, -inf
        %v1674 = vsel %vm1608, %v1346, -inf
        %v1675 = vsel %vm1609, %v1459, -inf
        %v1676 = vsel %vm1610, %v1572, -inf
        %v1677 = vsel %vm1608, %v1349, -inf
        %v1678 = vsel %vm1609, %v1462, -inf
        %v1679 = vsel %vm1610, %v1575, -inf
        %v1680 = vsel %vm1608, %v1352, -inf
        %v1681 = vsel %vm1609, %v1465, -inf
        %v1682 = vsel %vm1610, %v1578, -inf
        %v1683 = vsel %vm1608, %v1355, -inf
        %v1684 = vsel %vm1609, %v1468, -inf
        %v1685 = vsel %vm1610, %v1581, -inf
        %v1686 = vsel %vm1608, %v1358, -inf
        %v1687 = vsel %vm1609, %v1471, -inf
        %v1688 = vsel %vm1610, %v1584, -inf
        %v1689 = vsel %vm1608, %v1361, -inf
        %v1690 = vsel %vm1609, %v1474, -inf
        %v1691 = vsel %vm1610, %v1587, -inf
        %v1692 = vsel %vm1608, %v1364, -inf
        %v1693 = vsel %vm1609, %v1477, -inf
        %v1694 = vsel %vm1610, %v1590, -inf
        %v1695 = vsel %vm1608, %v1367, -inf
        %v1696 = vsel %vm1609, %v1480, -inf
        %v1697 = vsel %vm1610, %v1593, -inf
        %v1698 = vsel %vm1608, %v1370, -inf
        %v1699 = vsel %vm1609, %v1483, -inf
        %v1700 = vsel %vm1610, %v1596, -inf
        %v1701 = vsel %vm1608, %v1373, -inf
        %v1702 = vsel %vm1609, %v1486, -inf
        %v1703 = vsel %vm1610, %v1599, -inf
        %v1704 = vsel %vm1608, %v1376, -inf
        %v1705 = vsel %vm1609, %v1489, -inf
        %v1706 = vsel %vm1610, %v1602, -inf
        %v1707 = vmax.f32 %v1611, %v1612
        %v1708 = vmax.f32 %v1707, %v1613
        %1709 = vmax.xlane.f32.xlu0 %v1708
        %v1710 = vpop.xlane.xlu0 %1709
        %v1711 = vmax.f32 %v1614, %v1615
        %v1712 = vmax.f32 %v1711, %v1616
        %1713 = vmax.xlane.f32.xlu0 %v1712
        %v1714 = vpop.xlane.xlu0 %1713
        %v1715 = vmax.f32 %v1617, %v1618
        %v1716 = vmax.f32 %v1715, %v1619
        %1717 = vmax.xlane.f32.xlu0 %v1716
        %v1718 = vpop.xlane.xlu0 %1717
        %v1719 = vmax.f32 %v1620, %v1621
        %v1720 = vmax.f32 %v1719, %v1622
        %1721 = vmax.xlane.f32.xlu0 %v1720
        %v1722 = vpop.xlane.xlu0 %1721
        %v1723 = vmax.f32 %v1623, %v1624
        %v1724 = vmax.f32 %v1723, %v1625
        %1725 = vmax.xlane.f32.xlu0 %v1724
        %v1726 = vpop.xlane.xlu0 %1725
        %v1727 = vmax.f32 %v1626, %v1627
        %v1728 = vmax.f32 %v1727, %v1628
        %1729 = vmax.xlane.f32.xlu0 %v1728
        %v1730 = vpop.xlane.xlu0 %1729
        %v1731 = vmax.f32 %v1629, %v1630
        %v1732 = vmax.f32 %v1731, %v1631
        %1733 = vmax.xlane.f32.xlu0 %v1732
        %v1734 = vpop.xlane.xlu0 %1733
        %v1735 = vmax.f32 %v1632, %v1633
        %v1736 = vmax.f32 %v1735, %v1634
        %1737 = vmax.xlane.f32.xlu0 %v1736
        %v1738 = vpop.xlane.xlu0 %1737
        %v1739 = vmax.f32 %v1635, %v1636
        %v1740 = vmax.f32 %v1739, %v1637
        %1741 = vmax.xlane.f32.xlu0 %v1740
        %v1742 = vpop.xlane.xlu0 %1741
        %v1743 = vmax.f32 %v1638, %v1639
        %v1744 = vmax.f32 %v1743, %v1640
        %1745 = vmax.xlane.f32.xlu0 %v1744
        %v1746 = vpop.xlane.xlu0 %1745
        %v1747 = vmax.f32 %v1641, %v1642
        %v1748 = vmax.f32 %v1747, %v1643
        %1749 = vmax.xlane.f32.xlu0 %v1748
        %v1750 = vpop.xlane.xlu0 %1749
        %v1751 = vmax.f32 %v1644, %v1645
        %v1752 = vmax.f32 %v1751, %v1646
        %1753 = vmax.xlane.f32.xlu0 %v1752
        %v1754 = vpop.xlane.xlu0 %1753
        %v1755 = vmax.f32 %v1647, %v1648
        %v1756 = vmax.f32 %v1755, %v1649
        %1757 = vmax.xlane.f32.xlu0 %v1756
        %v1758 = vpop.xlane.xlu0 %1757
        %v1759 = vmax.f32 %v1650, %v1651
        %v1760 = vmax.f32 %v1759, %v1652
        %1761 = vmax.xlane.f32.xlu0 %v1760
        %v1762 = vpop.xlane.xlu0 %1761
        %v1763 = vmax.f32 %v1653, %v1654
        %v1764 = vmax.f32 %v1763, %v1655
        %1765 = vmax.xlane.f32.xlu0 %v1764
        %v1766 = vpop.xlane.xlu0 %1765
        %v1767 = vmax.f32 %v1656, %v1657
        %v1768 = vmax.f32 %v1767, %v1658
        %1769 = vmax.xlane.f32.xlu0 %v1768
        %v1770 = vpop.xlane.xlu0 %1769
        %v1771 = vmax.f32 %v1659, %v1660
        %v1772 = vmax.f32 %v1771, %v1661
        %1773 = vmax.xlane.f32.xlu0 %v1772
        %v1774 = vpop.xlane.xlu0 %1773
        %v1775 = vmax.f32 %v1662, %v1663
        %v1776 = vmax.f32 %v1775, %v1664
        %1777 = vmax.xlane.f32.xlu0 %v1776
        %v1778 = vpop.xlane.xlu0 %1777
        %v1779 = vmax.f32 %v1665, %v1666
        %v1780 = vmax.f32 %v1779, %v1667
        %1781 = vmax.xlane.f32.xlu0 %v1780
        %v1782 = vpop.xlane.xlu0 %1781
        %v1783 = vmax.f32 %v1668, %v1669
        %v1784 = vmax.f32 %v1783, %v1670
        %1785 = vmax.xlane.f32.xlu0 %v1784
        %v1786 = vpop.xlane.xlu0 %1785
        %v1787 = vmax.f32 %v1671, %v1672
        %v1788 = vmax.f32 %v1787, %v1673
        %1789 = vmax.xlane.f32.xlu0 %v1788
        %v1790 = vpop.xlane.xlu0 %1789
        %v1791 = vmax.f32 %v1674, %v1675
        %v1792 = vmax.f32 %v1791, %v1676
        %1793 = vmax.xlane.f32.xlu0 %v1792
        %v1794 = vpop.xlane.xlu0 %1793
        %v1795 = vmax.f32 %v1677, %v1678
        %v1796 = vmax.f32 %v1795, %v1679
        %1797 = vmax.xlane.f32.xlu0 %v1796
        %v1798 = vpop.xlane.xlu0 %1797
        %v1799 = vmax.f32 %v1680, %v1681
        %v1800 = vmax.f32 %v1799, %v1682
        %1801 = vmax.xlane.f32.xlu0 %v1800
        %v1802 = vpop.xlane.xlu0 %1801
        %v1803 = vmax.f32 %v1683, %v1684
        %v1804 = vmax.f32 %v1803, %v1685
        %1805 = vmax.xlane.f32.xlu0 %v1804
        %v1806 = vpop.xlane.xlu0 %1805
        %v1807 = vmax.f32 %v1686, %v1687
        %v1808 = vmax.f32 %v1807, %v1688
        %1809 = vmax.xlane.f32.xlu0 %v1808
        %v1810 = vpop.xlane.xlu0 %1809
        %v1811 = vmax.f32 %v1689, %v1690
        %v1812 = vmax.f32 %v1811, %v1691
        %1813 = vmax.xlane.f32.xlu0 %v1812
        %v1814 = vpop.xlane.xlu0 %1813
        %v1815 = vmax.f32 %v1692, %v1693
        %v1816 = vmax.f32 %v1815, %v1694
        %1817 = vmax.xlane.f32.xlu0 %v1816
        %v1818 = vpop.xlane.xlu0 %1817
        %v1819 = vmax.f32 %v1695, %v1696
        %v1820 = vmax.f32 %v1819, %v1697
        %1821 = vmax.xlane.f32.xlu0 %v1820
        %v1822 = vpop.xlane.xlu0 %1821
        %v1823 = vmax.f32 %v1698, %v1699
        %v1824 = vmax.f32 %v1823, %v1700
        %1825 = vmax.xlane.f32.xlu0 %v1824
        %v1826 = vpop.xlane.xlu0 %1825
        %v1827 = vmax.f32 %v1701, %v1702
        %v1828 = vmax.f32 %v1827, %v1703
        %1829 = vmax.xlane.f32.xlu0 %v1828
        %v1830 = vpop.xlane.xlu0 %1829
        %v1831 = vmax.f32 %v1704, %v1705
        %v1832 = vmax.f32 %v1831, %v1706
        %1833 = vmax.xlane.f32.xlu0 %v1832
        %v1834 = vpop.xlane.xlu0 %1833
        %v1835 = vsub.f32 %v1611, %v1710
        %v1836 = vsub.f32 %v1612, %v1710
        %v1837 = vsub.f32 %v1613, %v1710
        %v1838 = vsub.f32 %v1614, %v1714
        %v1839 = vsub.f32 %v1615, %v1714
        %v1840 = vsub.f32 %v1616, %v1714
        %v1841 = vsub.f32 %v1617, %v1718
        %v1842 = vsub.f32 %v1618, %v1718
        %v1843 = vsub.f32 %v1619, %v1718
        %v1844 = vsub.f32 %v1620, %v1722
        %v1845 = vsub.f32 %v1621, %v1722
        %v1846 = vsub.f32 %v1622, %v1722
        %v1847 = vsub.f32 %v1623, %v1726
        %v1848 = vsub.f32 %v1624, %v1726
        %v1849 = vsub.f32 %v1625, %v1726
        %v1850 = vsub.f32 %v1626, %v1730
        %v1851 = vsub.f32 %v1627, %v1730
        %v1852 = vsub.f32 %v1628, %v1730
        %v1853 = vsub.f32 %v1629, %v1734
        %v1854 = vsub.f32 %v1630, %v1734
        %v1855 = vsub.f32 %v1631, %v1734
        %v1856 = vsub.f32 %v1632, %v1738
        %v1857 = vsub.f32 %v1633, %v1738
        %v1858 = vsub.f32 %v1634, %v1738
        %v1859 = vsub.f32 %v1635, %v1742
        %v1860 = vsub.f32 %v1636, %v1742
        %v1861 = vsub.f32 %v1637, %v1742
        %v1862 = vsub.f32 %v1638, %v1746
        %v1863 = vsub.f32 %v1639, %v1746
        %v1864 = vsub.f32 %v1640, %v1746
        %v1865 = vsub.f32 %v1641, %v1750
        %v1866 = vsub.f32 %v1642, %v1750
        %v1867 = vsub.f32 %v1643, %v1750
        %v1868 = vsub.f32 %v1644, %v1754
        %v1869 = vsub.f32 %v1645, %v1754
        %v1870 = vsub.f32 %v1646, %v1754
        %v1871 = vsub.f32 %v1647, %v1758
        %v1872 = vsub.f32 %v1648, %v1758
        %v1873 = vsub.f32 %v1649, %v1758
        %v1874 = vsub.f32 %v1650, %v1762
        %v1875 = vsub.f32 %v1651, %v1762
        %v1876 = vsub.f32 %v1652, %v1762
        %v1877 = vsub.f32 %v1653, %v1766
        %v1878 = vsub.f32 %v1654, %v1766
        %v1879 = vsub.f32 %v1655, %v1766
        %v1880 = vsub.f32 %v1656, %v1770
        %v1881 = vsub.f32 %v1657, %v1770
        %v1882 = vsub.f32 %v1658, %v1770
        %v1883 = vsub.f32 %v1659, %v1774
        %v1884 = vsub.f32 %v1660, %v1774
        %v1885 = vsub.f32 %v1661, %v1774
        %v1886 = vsub.f32 %v1662, %v1778
        %v1887 = vsub.f32 %v1663, %v1778
        %v1888 = vsub.f32 %v1664, %v1778
        %v1889 = vsub.f32 %v1665, %v1782
        %v1890 = vsub.f32 %v1666, %v1782
        %v1891 = vsub.f32 %v1667, %v1782
        %v1892 = vsub.f32 %v1668, %v1786
        %v1893 = vsub.f32 %v1669, %v1786
        %v1894 = vsub.f32 %v1670, %v1786
        %v1895 = vsub.f32 %v1671, %v1790
        %v1896 = vsub.f32 %v1672, %v1790
        %v1897 = vsub.f32 %v1673, %v1790
        %v1898 = vsub.f32 %v1674, %v1794
        %v1899 = vsub.f32 %v1675, %v1794
        %v1900 = vsub.f32 %v1676, %v1794
        %v1901 = vsub.f32 %v1677, %v1798
        %v1902 = vsub.f32 %v1678, %v1798
        %v1903 = vsub.f32 %v1679, %v1798
        %v1904 = vsub.f32 %v1680, %v1802
        %v1905 = vsub.f32 %v1681, %v1802
        %v1906 = vsub.f32 %v1682, %v1802
        %v1907 = vsub.f32 %v1683, %v1806
        %v1908 = vsub.f32 %v1684, %v1806
        %v1909 = vsub.f32 %v1685, %v1806
        %v1910 = vsub.f32 %v1686, %v1810
        %v1911 = vsub.f32 %v1687, %v1810
        %v1912 = vsub.f32 %v1688, %v1810
        %v1913 = vsub.f32 %v1689, %v1814
        %v1914 = vsub.f32 %v1690, %v1814
        %v1915 = vsub.f32 %v1691, %v1814
        %v1916 = vsub.f32 %v1692, %v1818
        %v1917 = vsub.f32 %v1693, %v1818
        %v1918 = vsub.f32 %v1694, %v1818
        %v1919 = vsub.f32 %v1695, %v1822
        %v1920 = vsub.f32 %v1696, %v1822
        %v1921 = vsub.f32 %v1697, %v1822
        %v1922 = vsub.f32 %v1698, %v1826
        %v1923 = vsub.f32 %v1699, %v1826
        %v1924 = vsub.f32 %v1700, %v1826
        %v1925 = vsub.f32 %v1701, %v1830
        %v1926 = vsub.f32 %v1702, %v1830
        %v1927 = vsub.f32 %v1703, %v1830
        %v1928 = vsub.f32 %v1704, %v1834
        %v1929 = vsub.f32 %v1705, %v1834
        %v1930 = vsub.f32 %v1706, %v1834
        %v1931 = vmul.f32 %v1835, 1.442695
        %v1932 = vpow.pop %v1931
        %v1933 = vmul.f32 %v1836, 1.442695
        %v1934 = vpow.pop %v1933
        %v1935 = vmul.f32 %v1837, 1.442695
        %v1936 = vpow.pop %v1935
        %v1937 = vmul.f32 %v1838, 1.442695
        %v1938 = vpow.pop %v1937
        %v1939 = vmul.f32 %v1839, 1.442695
        %v1940 = vpow.pop %v1939
        %v1941 = vmul.f32 %v1840, 1.442695
        %v1942 = vpow.pop %v1941
        %v1943 = vmul.f32 %v1841, 1.442695
        %v1944 = vpow.pop %v1943
        %v1945 = vmul.f32 %v1842, 1.442695
        %v1946 = vpow.pop %v1945
        %v1947 = vmul.f32 %v1843, 1.442695
        %v1948 = vpow.pop %v1947
        %v1949 = vmul.f32 %v1844, 1.442695
        %v1950 = vpow.pop %v1949
        %v1951 = vmul.f32 %v1845, 1.442695
        %v1952 = vpow.pop %v1951
        %v1953 = vmul.f32 %v1846, 1.442695
        %v1954 = vpow.pop %v1953
        %v1955 = vmul.f32 %v1847, 1.442695
        %v1956 = vpow.pop %v1955
        %v1957 = vmul.f32 %v1848, 1.442695
        %v1958 = vpow.pop %v1957
        %v1959 = vmul.f32 %v1849, 1.442695
        %v1960 = vpow.pop %v1959
        %v1961 = vmul.f32 %v1850, 1.442695
        %v1962 = vpow.pop %v1961
        %v1963 = vmul.f32 %v1851, 1.442695
        %v1964 = vpow.pop %v1963
        %v1965 = vmul.f32 %v1852, 1.442695
        %v1966 = vpow.pop %v1965
        %v1967 = vmul.f32 %v1853, 1.442695
        %v1968 = vpow.pop %v1967
        %v1969 = vmul.f32 %v1854, 1.442695
        %v1970 = vpow.pop %v1969
        %v1971 = vmul.f32 %v1855, 1.442695
        %v1972 = vpow.pop %v1971
        %v1973 = vmul.f32 %v1856, 1.442695
        %v1974 = vpow.pop %v1973
        %v1975 = vmul.f32 %v1857, 1.442695
        %v1976 = vpow.pop %v1975
        %v1977 = vmul.f32 %v1858, 1.442695
        %v1978 = vpow.pop %v1977
        %v1979 = vmul.f32 %v1859, 1.442695
        %v1980 = vpow.pop %v1979
        %v1981 = vmul.f32 %v1860, 1.442695
        %v1982 = vpow.pop %v1981
        %v1983 = vmul.f32 %v1861, 1.442695
        %v1984 = vpow.pop %v1983
        %v1985 = vmul.f32 %v1862, 1.442695
        %v1986 = vpow.pop %v1985
        %v1987 = vmul.f32 %v1863, 1.442695
        %v1988 = vpow.pop %v1987
        %v1989 = vmul.f32 %v1864, 1.442695
        %v1990 = vpow.pop %v1989
        %v1991 = vmul.f32 %v1865, 1.442695
        %v1992 = vpow.pop %v1991
        %v1993 = vmul.f32 %v1866, 1.442695
        %v1994 = vpow.pop %v1993
        %v1995 = vmul.f32 %v1867, 1.442695
        %v1996 = vpow.pop %v1995
        %v1997 = vmul.f32 %v1868, 1.442695
        %v1998 = vpow.pop %v1997
        %v1999 = vmul.f32 %v1869, 1.442695
        %v2000 = vpow.pop %v1999
        %v2001 = vmul.f32 %v1870, 1.442695
        %v2002 = vpow.pop %v2001
        %v2003 = vmul.f32 %v1871, 1.442695
        %v2004 = vpow.pop %v2003
        %v2005 = vmul.f32 %v1872, 1.442695
        %v2006 = vpow.pop %v2005
        %v2007 = vmul.f32 %v1873, 1.442695
        %v2008 = vpow.pop %v2007
        %v2009 = vmul.f32 %v1874, 1.442695
        %v2010 = vpow.pop %v2009
        %v2011 = vmul.f32 %v1875, 1.442695
        %v2012 = vpow.pop %v2011
        %v2013 = vmul.f32 %v1876, 1.442695
        %v2014 = vpow.pop %v2013
        %v2015 = vmul.f32 %v1877, 1.442695
        %v2016 = vpow.pop %v2015
        %v2017 = vmul.f32 %v1878, 1.442695
        %v2018 = vpow.pop %v2017
        %v2019 = vmul.f32 %v1879, 1.442695
        %v2020 = vpow.pop %v2019
        %v2021 = vmul.f32 %v1880, 1.442695
        %v2022 = vpow.pop %v2021
        %v2023 = vmul.f32 %v1881, 1.442695
        %v2024 = vpow.pop %v2023
        %v2025 = vmul.f32 %v1882, 1.442695
        %v2026 = vpow.pop %v2025
        %v2027 = vmul.f32 %v1883, 1.442695
        %v2028 = vpow.pop %v2027
        %v2029 = vmul.f32 %v1884, 1.442695
        %v2030 = vpow.pop %v2029
        %v2031 = vmul.f32 %v1885, 1.442695
        %v2032 = vpow.pop %v2031
        %v2033 = vmul.f32 %v1886, 1.442695
        %v2034 = vpow.pop %v2033
        %v2035 = vmul.f32 %v1887, 1.442695
        %v2036 = vpow.pop %v2035
        %v2037 = vmul.f32 %v1888, 1.442695
        %v2038 = vpow.pop %v2037
        %v2039 = vmul.f32 %v1889, 1.442695
        %v2040 = vpow.pop %v2039
        %v2041 = vmul.f32 %v1890, 1.442695
        %v2042 = vpow.pop %v2041
        %v2043 = vmul.f32 %v1891, 1.442695
        %v2044 = vpow.pop %v2043
        %v2045 = vmul.f32 %v1892, 1.442695
        %v2046 = vpow.pop %v2045
        %v2047 = vmul.f32 %v1893, 1.442695
        %v2048 = vpow.pop %v2047
        %v2049 = vmul.f32 %v1894, 1.442695
        %v2050 = vpow.pop %v2049
        %v2051 = vmul.f32 %v1895, 1.442695
        %v2052 = vpow.pop %v2051
        %v2053 = vmul.f32 %v1896, 1.442695
        %v2054 = vpow.pop %v2053
        %v2055 = vmul.f32 %v1897, 1.442695
        %v2056 = vpow.pop %v2055
        %v2057 = vmul.f32 %v1898, 1.442695
        %v2058 = vpow.pop %v2057
        %v2059 = vmul.f32 %v1899, 1.442695
        %v2060 = vpow.pop %v2059
        %v2061 = vmul.f32 %v1900, 1.442695
        %v2062 = vpow.pop %v2061
        %v2063 = vmul.f32 %v1901, 1.442695
        %v2064 = vpow.pop %v2063
        %v2065 = vmul.f32 %v1902, 1.442695
        %v2066 = vpow.pop %v2065
        %v2067 = vmul.f32 %v1903, 1.442695
        %v2068 = vpow.pop %v2067
        %v2069 = vmul.f32 %v1904, 1.442695
        %v2070 = vpow.pop %v2069
        %v2071 = vmul.f32 %v1905, 1.442695
        %v2072 = vpow.pop %v2071
        %v2073 = vmul.f32 %v1906, 1.442695
        %v2074 = vpow.pop %v2073
        %v2075 = vmul.f32 %v1907, 1.442695
        %v2076 = vpow.pop %v2075
        %v2077 = vmul.f32 %v1908, 1.442695
        %v2078 = vpow.pop %v2077
        %v2079 = vmul.f32 %v1909, 1.442695
        %v2080 = vpow.pop %v2079
        %v2081 = vmul.f32 %v1910, 1.442695
        %v2082 = vpow.pop %v2081
        %v2083 = vmul.f32 %v1911, 1.442695
        %v2084 = vpow.pop %v2083
        %v2085 = vmul.f32 %v1912, 1.442695
        %v2086 = vpow.pop %v2085
        %v2087 = vmul.f32 %v1913, 1.442695
        %v2088 = vpow.pop %v2087
        %v2089 = vmul.f32 %v1914, 1.442695
        %v2090 = vpow.pop %v2089
        %v2091 = vmul.f32 %v1915, 1.442695
        %v2092 = vpow.pop %v2091
        %v2093 = vmul.f32 %v1916, 1.442695
        %v2094 = vpow.pop %v2093
        %v2095 = vmul.f32 %v1917, 1.442695
        %v2096 = vpow.pop %v2095
        %v2097 = vmul.f32 %v1918, 1.442695
        %v2098 = vpow.pop %v2097
        %v2099 = vmul.f32 %v1919, 1.442695
        %v2100 = vpow.pop %v2099
        %v2101 = vmul.f32 %v1920, 1.442695
        %v2102 = vpow.pop %v2101
        %v2103 = vmul.f32 %v1921, 1.442695
        %v2104 = vpow.pop %v2103
        %v2105 = vmul.f32 %v1922, 1.442695
        %v2106 = vpow.pop %v2105
        %v2107 = vmul.f32 %v1923, 1.442695
        %v2108 = vpow.pop %v2107
        %v2109 = vmul.f32 %v1924, 1.442695
        %v2110 = vpow.pop %v2109
        %v2111 = vmul.f32 %v1925, 1.442695
        %v2112 = vpow.pop %v2111
        %v2113 = vmul.f32 %v1926, 1.442695
        %v2114 = vpow.pop %v2113
        %v2115 = vmul.f32 %v1927, 1.442695
        %v2116 = vpow.pop %v2115
        %v2117 = vmul.f32 %v1928, 1.442695
        %v2118 = vpow.pop %v2117
        %v2119 = vmul.f32 %v1929, 1.442695
        %v2120 = vpow.pop %v2119
        %v2121 = vmul.f32 %v1930, 1.442695
        %v2122 = vpow.pop %v2121
        %v2123 = vadd.f32 %v1932, %v1934
        %v2124 = vadd.f32 %v2123, %v1936
        %2125 = vadd.xlane.f32.xlu0 %v2124
        %v2126 = vpop.xlane.xlu0 %2125
        %v2127 = vadd.f32 %v1938, %v1940
        %v2128 = vadd.f32 %v2127, %v1942
        %2129 = vadd.xlane.f32.xlu0 %v2128
        %v2130 = vpop.xlane.xlu0 %2129
        %v2131 = vadd.f32 %v1944, %v1946
        %v2132 = vadd.f32 %v2131, %v1948
        %2133 = vadd.xlane.f32.xlu0 %v2132
        %v2134 = vpop.xlane.xlu0 %2133
        %v2135 = vadd.f32 %v1950, %v1952
        %v2136 = vadd.f32 %v2135, %v1954
        %2137 = vadd.xlane.f32.xlu0 %v2136
        %v2138 = vpop.xlane.xlu0 %2137
        %v2139 = vadd.f32 %v1956, %v1958
        %v2140 = vadd.f32 %v2139, %v1960
        %2141 = vadd.xlane.f32.xlu0 %v2140
        %v2142 = vpop.xlane.xlu0 %2141
        %v2143 = vadd.f32 %v1962, %v1964
        %v2144 = vadd.f32 %v2143, %v1966
        %2145 = vadd.xlane.f32.xlu0 %v2144
        %v2146 = vpop.xlane.xlu0 %2145
        %v2147 = vadd.f32 %v1968, %v1970
        %v2148 = vadd.f32 %v2147, %v1972
        %2149 = vadd.xlane.f32.xlu0 %v2148
        %v2150 = vpop.xlane.xlu0 %2149
        %v2151 = vadd.f32 %v1974, %v1976
        %v2152 = vadd.f32 %v2151, %v1978
        %2153 = vadd.xlane.f32.xlu0 %v2152
        %v2154 = vpop.xlane.xlu0 %2153
        %v2155 = vadd.f32 %v1980, %v1982
        %v2156 = vadd.f32 %v2155, %v1984
        %2157 = vadd.xlane.f32.xlu0 %v2156
        %v2158 = vpop.xlane.xlu0 %2157
        %v2159 = vadd.f32 %v1986, %v1988
        %v2160 = vadd.f32 %v2159, %v1990
        %2161 = vadd.xlane.f32.xlu0 %v2160
        %v2162 = vpop.xlane.xlu0 %2161
        %v2163 = vadd.f32 %v1992, %v1994
        %v2164 = vadd.f32 %v2163, %v1996
        %2165 = vadd.xlane.f32.xlu0 %v2164
        %v2166 = vpop.xlane.xlu0 %2165
        %v2167 = vadd.f32 %v1998, %v2000
        %v2168 = vadd.f32 %v2167, %v2002
        %2169 = vadd.xlane.f32.xlu0 %v2168
        %v2170 = vpop.xlane.xlu0 %2169
        %v2171 = vadd.f32 %v2004, %v2006
        %v2172 = vadd.f32 %v2171, %v2008
        %2173 = vadd.xlane.f32.xlu0 %v2172
        %v2174 = vpop.xlane.xlu0 %2173
        %v2175 = vadd.f32 %v2010, %v2012
        %v2176 = vadd.f32 %v2175, %v2014
        %2177 = vadd.xlane.f32.xlu0 %v2176
        %v2178 = vpop.xlane.xlu0 %2177
        %v2179 = vadd.f32 %v2016, %v2018
        %v2180 = vadd.f32 %v2179, %v2020
        %2181 = vadd.xlane.f32.xlu0 %v2180
        %v2182 = vpop.xlane.xlu0 %2181
        %v2183 = vadd.f32 %v2022, %v2024
        %v2184 = vadd.f32 %v2183, %v2026
        %2185 = vadd.xlane.f32.xlu0 %v2184
        %v2186 = vpop.xlane.xlu0 %2185
        %v2187 = vadd.f32 %v2028, %v2030
        %v2188 = vadd.f32 %v2187, %v2032
        %2189 = vadd.xlane.f32.xlu0 %v2188
        %v2190 = vpop.xlane.xlu0 %2189
        %v2191 = vadd.f32 %v2034, %v2036
        %v2192 = vadd.f32 %v2191, %v2038
        %2193 = vadd.xlane.f32.xlu0 %v2192
        %v2194 = vpop.xlane.xlu0 %2193
        %v2195 = vadd.f32 %v2040, %v2042
        %v2196 = vadd.f32 %v2195, %v2044
        %2197 = vadd.xlane.f32.xlu0 %v2196
        %v2198 = vpop.xlane.xlu0 %2197
        %v2199 = vadd.f32 %v2046, %v2048
        %v2200 = vadd.f32 %v2199, %v2050
        %2201 = vadd.xlane.f32.xlu0 %v2200
        %v2202 = vpop.xlane.xlu0 %2201
        %v2203 = vadd.f32 %v2052, %v2054
        %v2204 = vadd.f32 %v2203, %v2056
        %2205 = vadd.xlane.f32.xlu0 %v2204
        %v2206 = vpop.xlane.xlu0 %2205
        %v2207 = vadd.f32 %v2058, %v2060
        %v2208 = vadd.f32 %v2207, %v2062
        %2209 = vadd.xlane.f32.xlu0 %v2208
        %v2210 = vpop.xlane.xlu0 %2209
        %v2211 = vadd.f32 %v2064, %v2066
        %v2212 = vadd.f32 %v2211, %v2068
        %2213 = vadd.xlane.f32.xlu0 %v2212
        %v2214 = vpop.xlane.xlu0 %2213
        %v2215 = vadd.f32 %v2070, %v2072
        %v2216 = vadd.f32 %v2215, %v2074
        %2217 = vadd.xlane.f32.xlu0 %v2216
        %v2218 = vpop.xlane.xlu0 %2217
        %v2219 = vadd.f32 %v2076, %v2078
        %v2220 = vadd.f32 %v2219, %v2080
        %2221 = vadd.xlane.f32.xlu0 %v2220
        %v2222 = vpop.xlane.xlu0 %2221
        %v2223 = vadd.f32 %v2082, %v2084
        %v2224 = vadd.f32 %v2223, %v2086
        %2225 = vadd.xlane.f32.xlu0 %v2224
        %v2226 = vpop.xlane.xlu0 %2225
        %v2227 = vadd.f32 %v2088, %v2090
        %v2228 = vadd.f32 %v2227, %v2092
        %2229 = vadd.xlane.f32.xlu0 %v2228
        %v2230 = vpop.xlane.xlu0 %2229
        %v2231 = vadd.f32 %v2094, %v2096
        %v2232 = vadd.f32 %v2231, %v2098
        %2233 = vadd.xlane.f32.xlu0 %v2232
        %v2234 = vpop.xlane.xlu0 %2233
        %v2235 = vadd.f32 %v2100, %v2102
        %v2236 = vadd.f32 %v2235, %v2104
        %2237 = vadd.xlane.f32.xlu0 %v2236
        %v2238 = vpop.xlane.xlu0 %2237
        %v2239 = vadd.f32 %v2106, %v2108
        %v2240 = vadd.f32 %v2239, %v2110
        %2241 = vadd.xlane.f32.xlu0 %v2240
        %v2242 = vpop.xlane.xlu0 %2241
        %v2243 = vadd.f32 %v2112, %v2114
        %v2244 = vadd.f32 %v2243, %v2116
        %2245 = vadd.xlane.f32.xlu0 %v2244
        %v2246 = vpop.xlane.xlu0 %2245
        %v2247 = vadd.f32 %v2118, %v2120
        %v2248 = vadd.f32 %v2247, %v2122
        %2249 = vadd.xlane.f32.xlu0 %v2248
        %v2250 = vpop.xlane.xlu0 %2249
        %v2251 = vld [vmem:[%s1097] sm:$0xff]
        %v2252 = vld [vmem:[%s1097 + $0x8] sm:$0xff]
        %v2253 = vld [vmem:[%s1097 + $0x10] sm:$0xff]
        %v2254 = vld [vmem:[%s1097 + $0x18] sm:$0xff]
        %v2255 = vld [vmem:[%s1097 + $0x20] sm:$0xff]
        %v2256 = vld [vmem:[%s1097 + $0x28] sm:$0xff]
        %v2257 = vld [vmem:[%s1097 + $0x30] sm:$0xff]
        %v2258 = vld [vmem:[%s1097 + $0x38] sm:$0xff]
        %v2259 = vld [vmem:[%s1097 + $0x40] sm:$0xff]
        %v2260 = vld [vmem:[%s1097 + $0x48] sm:$0xff]
        %v2261 = vld [vmem:[%s1097 + $0x50] sm:$0xff]
        %v2262 = vld [vmem:[%s1097 + $0x58] sm:$0xff]
        %v2263 = vld [vmem:[%s1097 + $0x60] sm:$0xff]
        %v2264 = vld [vmem:[%s1097 + $0x68] sm:$0xff]
        %v2265 = vld [vmem:[%s1097 + $0x70] sm:$0xff]
        %v2266 = vld [vmem:[%s1097 + $0x78] sm:$0xff]
        %v2267 = vld [vmem:[%s1097 + $0x80] sm:$0xff]
        %v2268 = vld [vmem:[%s1097 + $0x88] sm:$0xff]
        %v2269 = vld [vmem:[%s1097 + $0x90] sm:$0xff]
        %v2270 = vld [vmem:[%s1097 + $0x98] sm:$0xff]
        %v2271 = vld [vmem:[%s1097 + $0xa0] sm:$0xff]
        %v2272 = vld [vmem:[%s1097 + $0xa8] sm:$0xff]
        %v2273 = vld [vmem:[%s1097 + $0xb0] sm:$0xff]
        %v2274 = vld [vmem:[%s1097 + $0xb8] sm:$0xff]
        %v2275 = vld [vmem:[%s1097 + $0xc0] sm:$0xff]
        %v2276 = vld [vmem:[%s1097 + $0xc8] sm:$0xff]
        %v2277 = vld [vmem:[%s1097 + $0xd0] sm:$0xff]
        %v2278 = vld [vmem:[%s1097 + $0xd8] sm:$0xff]
        %v2279 = vld [vmem:[%s1097 + $0xe0] sm:$0xff]
        %v2280 = vld [vmem:[%s1097 + $0xe8] sm:$0xff]
        %v2281 = vld [vmem:[%s1097 + $0xf0] sm:$0xff]
        %v2282 = vld [vmem:[%s1097 + $0xf8] sm:$0xff]
        %v2283 = vld [vmem:[%s1097 + $0x100] sm:$0xff]
        %v2284 = vld [vmem:[%s1097 + $0x108] sm:$0xff]
        %v2285 = vld [vmem:[%s1097 + $0x110] sm:$0xff]
        %v2286 = vld [vmem:[%s1097 + $0x118] sm:$0xff]
        %v2287 = vld [vmem:[%s1097 + $0x120] sm:$0xff]
        %v2288 = vld [vmem:[%s1097 + $0x128] sm:$0xff]
        %v2289 = vld [vmem:[%s1097 + $0x130] sm:$0xff]
        %v2290 = vld [vmem:[%s1097 + $0x138] sm:$0xff]
        %v2291 = vld [vmem:[%s1097 + $0x140] sm:$0xff]
        %v2292 = vld [vmem:[%s1097 + $0x148] sm:$0xff]
        %v2293 = vld [vmem:[%s1097 + $0x150] sm:$0xff]
        %v2294 = vld [vmem:[%s1097 + $0x158] sm:$0xff]
        %v2295 = vld [vmem:[%s1097 + $0x160] sm:$0xff]
        %v2296 = vld [vmem:[%s1097 + $0x168] sm:$0xff]
        %v2297 = vld [vmem:[%s1097 + $0x170] sm:$0xff]
        %v2298 = vld [vmem:[%s1097 + $0x178] sm:$0xff]
        %2299 = vmatpush.msra.mxu0 %v2266
        %2300 = vmatpush.msra.mxu0 %v2265
        %2301 = vmatpush.msra.mxu0 %v2264
        %2302 = vmatpush.msra.mxu0 %v2263
        %2303 = vmatpush.msra.mxu0 %v2262
        %2304 = vmatpush.msra.mxu0 %v2261
        %2305 = vmatpush.msra.mxu0 %v2260
        %2306 = vmatpush.msra.mxu0 %v2259
        %2307 = vmatpush.msra.mxu0 %v2258
        %2308 = vmatpush.msra.mxu0 %v2257
        %2309 = vmatpush.msra.mxu0 %v2256
        %2310 = vmatpush.msra.mxu0 %v2255
        %2311 = vmatpush.msra.mxu0 %v2254
        %2312 = vmatpush.msra.mxu0 %v2253
        %2313 = vmatpush.msra.mxu0 %v2252
        %2314 = vmatpush.msra.mxu0 %v2251
        %2315 = vmatmul.f32.gmra.mxu0 %v1932
        %v2316 = vpop.f32.mrf.mxu0
        %v2317 = vadd.f32 0.0, %v2316
        %2318 = vmatmul.f32.gmra.mxu0 %v1938
        %v2319 = vpop.f32.mrf.mxu0
        %v2320 = vadd.f32 0.0, %v2319
        %2321 = vmatmul.f32.gmra.mxu0 %v1944
        %v2322 = vpop.f32.mrf.mxu0
        %v2323 = vadd.f32 0.0, %v2322
        %2324 = vmatmul.f32.gmra.mxu0 %v1950
        %v2325 = vpop.f32.mrf.mxu0
        %v2326 = vadd.f32 0.0, %v2325
        %2327 = vmatmul.f32.gmra.mxu0 %v1956
        %v2328 = vpop.f32.mrf.mxu0
        %v2329 = vadd.f32 0.0, %v2328
        %2330 = vmatmul.f32.gmra.mxu0 %v1962
        %v2331 = vpop.f32.mrf.mxu0
        %v2332 = vadd.f32 0.0, %v2331
        %2333 = vmatmul.f32.gmra.mxu0 %v1968
        %v2334 = vpop.f32.mrf.mxu0
        %v2335 = vadd.f32 0.0, %v2334
        %2336 = vmatmul.f32.gmra.mxu0 %v1974
        %v2337 = vpop.f32.mrf.mxu0
        %v2338 = vadd.f32 0.0, %v2337
        %2339 = vmatmul.f32.gmra.mxu0 %v1980
        %v2340 = vpop.f32.mrf.mxu0
        %v2341 = vadd.f32 0.0, %v2340
        %2342 = vmatmul.f32.gmra.mxu0 %v1986
        %v2343 = vpop.f32.mrf.mxu0
        %v2344 = vadd.f32 0.0, %v2343
        %2345 = vmatmul.f32.gmra.mxu0 %v1992
        %v2346 = vpop.f32.mrf.mxu0
        %v2347 = vadd.f32 0.0, %v2346
        %2348 = vmatmul.f32.gmra.mxu0 %v1998
        %v2349 = vpop.f32.mrf.mxu0
        %v2350 = vadd.f32 0.0, %v2349
        %2351 = vmatmul.f32.gmra.mxu0 %v2004
        %v2352 = vpop.f32.mrf.mxu0
        %v2353 = vadd.f32 0.0, %v2352
        %2354 = vmatmul.f32.gmra.mxu0 %v2010
        %v2355 = vpop.f32.mrf.mxu0
        %v2356 = vadd.f32 0.0, %v2355
        %2357 = vmatmul.f32.gmra.mxu0 %v2016
        %v2358 = vpop.f32.mrf.mxu0
        %v2359 = vadd.f32 0.0, %v2358
        %2360 = vmatmul.f32.gmra.mxu0 %v2022
        %v2361 = vpop.f32.mrf.mxu0
        %v2362 = vadd.f32 0.0, %v2361
        %2363 = vmatmul.f32.gmra.mxu0 %v2028
        %v2364 = vpop.f32.mrf.mxu0
        %v2365 = vadd.f32 0.0, %v2364
        %2366 = vmatmul.f32.gmra.mxu0 %v2034
        %v2367 = vpop.f32.mrf.mxu0
        %v2368 = vadd.f32 0.0, %v2367
        %2369 = vmatmul.f32.gmra.mxu0 %v2040
        %v2370 = vpop.f32.mrf.mxu0
        %v2371 = vadd.f32 0.0, %v2370
        %2372 = vmatmul.f32.gmra.mxu0 %v2046
        %v2373 = vpop.f32.mrf.mxu0
        %v2374 = vadd.f32 0.0, %v2373
        %2375 = vmatmul.f32.gmra.mxu0 %v2052
        %v2376 = vpop.f32.mrf.mxu0
        %v2377 = vadd.f32 0.0, %v2376
        %2378 = vmatmul.f32.gmra.mxu0 %v2058
        %v2379 = vpop.f32.mrf.mxu0
        %v2380 = vadd.f32 0.0, %v2379
        %2381 = vmatmul.f32.gmra.mxu0 %v2064
        %v2382 = vpop.f32.mrf.mxu0
        %v2383 = vadd.f32 0.0, %v2382
        %2384 = vmatmul.f32.gmra.mxu0 %v2070
        %v2385 = vpop.f32.mrf.mxu0
        %v2386 = vadd.f32 0.0, %v2385
        %2387 = vmatmul.f32.gmra.mxu0 %v2076
        %v2388 = vpop.f32.mrf.mxu0
        %v2389 = vadd.f32 0.0, %v2388
        %2390 = vmatmul.f32.gmra.mxu0 %v2082
        %v2391 = vpop.f32.mrf.mxu0
        %v2392 = vadd.f32 0.0, %v2391
        %2393 = vmatmul.f32.gmra.mxu0 %v2088
        %v2394 = vpop.f32.mrf.mxu0
        %v2395 = vadd.f32 0.0, %v2394
        %2396 = vmatmul.f32.gmra.mxu0 %v2094
        %v2397 = vpop.f32.mrf.mxu0
        %v2398 = vadd.f32 0.0, %v2397
        %2399 = vmatmul.f32.gmra.mxu0 %v2100
        %v2400 = vpop.f32.mrf.mxu0
        %v2401 = vadd.f32 0.0, %v2400
        %2402 = vmatmul.f32.gmra.mxu0 %v2106
        %v2403 = vpop.f32.mrf.mxu0
        %v2404 = vadd.f32 0.0, %v2403
        %2405 = vmatmul.f32.gmra.mxu0 %v2112
        %v2406 = vpop.f32.mrf.mxu0
        %v2407 = vadd.f32 0.0, %v2406
        %2408 = vmatmul.f32.gmra.mxu0 %v2118
        %v2409 = vpop.f32.mrf.mxu0
        %v2410 = vadd.f32 0.0, %v2409
        %2411 = vdwg.mxu0
        %2412 = vmatpush.msra.mxu0 %v2282
        %2413 = vmatpush.msra.mxu0 %v2281
        %2414 = vmatpush.msra.mxu0 %v2280
        %2415 = vmatpush.msra.mxu0 %v2279
        %2416 = vmatpush.msra.mxu0 %v2278
        %2417 = vmatpush.msra.mxu0 %v2277
        %2418 = vmatpush.msra.mxu0 %v2276
        %2419 = vmatpush.msra.mxu0 %v2275
        %2420 = vmatpush.msra.mxu0 %v2274
        %2421 = vmatpush.msra.mxu0 %v2273
        %2422 = vmatpush.msra.mxu0 %v2272
        %2423 = vmatpush.msra.mxu0 %v2271
        %2424 = vmatpush.msra.mxu0 %v2270
        %2425 = vmatpush.msra.mxu0 %v2269
        %2426 = vmatpush.msra.mxu0 %v2268
        %2427 = vmatpush.msra.mxu0 %v2267
        %2428 = vmatmul.f32.gmra.mxu0 %v1934
        %v2429 = vpop.f32.mrf.mxu0
        %v2430 = vadd.f32 %v2317, %v2429
        %2431 = vmatmul.f32.gmra.mxu0 %v1940
        %v2432 = vpop.f32.mrf.mxu0
        %v2433 = vadd.f32 %v2320, %v2432
        %2434 = vmatmul.f32.gmra.mxu0 %v1946
        %v2435 = vpop.f32.mrf.mxu0
        %v2436 = vadd.f32 %v2323, %v2435
        %2437 = vmatmul.f32.gmra.mxu0 %v1952
        %v2438 = vpop.f32.mrf.mxu0
        %v2439 = vadd.f32 %v2326, %v2438
        %2440 = vmatmul.f32.gmra.mxu0 %v1958
        %v2441 = vpop.f32.mrf.mxu0
        %v2442 = vadd.f32 %v2329, %v2441
        %2443 = vmatmul.f32.gmra.mxu0 %v1964
        %v2444 = vpop.f32.mrf.mxu0
        %v2445 = vadd.f32 %v2332, %v2444
        %2446 = vmatmul.f32.gmra.mxu0 %v1970
        %v2447 = vpop.f32.mrf.mxu0
        %v2448 = vadd.f32 %v2335, %v2447
        %2449 = vmatmul.f32.gmra.mxu0 %v1976
        %v2450 = vpop.f32.mrf.mxu0
        %v2451 = vadd.f32 %v2338, %v2450
        %2452 = vmatmul.f32.gmra.mxu0 %v1982
        %v2453 = vpop.f32.mrf.mxu0
        %v2454 = vadd.f32 %v2341, %v2453
        %2455 = vmatmul.f32.gmra.mxu0 %v1988
        %v2456 = vpop.f32.mrf.mxu0
        %v2457 = vadd.f32 %v2344, %v2456
        %2458 = vmatmul.f32.gmra.mxu0 %v1994
        %v2459 = vpop.f32.mrf.mxu0
        %v2460 = vadd.f32 %v2347, %v2459
        %2461 = vmatmul.f32.gmra.mxu0 %v2000
        %v2462 = vpop.f32.mrf.mxu0
        %v2463 = vadd.f32 %v2350, %v2462
        %2464 = vmatmul.f32.gmra.mxu0 %v2006
        %v2465 = vpop.f32.mrf.mxu0
        %v2466 = vadd.f32 %v2353, %v2465
        %2467 = vmatmul.f32.gmra.mxu0 %v2012
        %v2468 = vpop.f32.mrf.mxu0
        %v2469 = vadd.f32 %v2356, %v2468
        %2470 = vmatmul.f32.gmra.mxu0 %v2018
        %v2471 = vpop.f32.mrf.mxu0
        %v2472 = vadd.f32 %v2359, %v2471
        %2473 = vmatmul.f32.gmra.mxu0 %v2024
        %v2474 = vpop.f32.mrf.mxu0
        %v2475 = vadd.f32 %v2362, %v2474
        %2476 = vmatmul.f32.gmra.mxu0 %v2030
        %v2477 = vpop.f32.mrf.mxu0
        %v2478 = vadd.f32 %v2365, %v2477
        %2479 = vmatmul.f32.gmra.mxu0 %v2036
        %v2480 = vpop.f32.mrf.mxu0
        %v2481 = vadd.f32 %v2368, %v2480
        %2482 = vmatmul.f32.gmra.mxu0 %v2042
        %v2483 = vpop.f32.mrf.mxu0
        %v2484 = vadd.f32 %v2371, %v2483
        %2485 = vmatmul.f32.gmra.mxu0 %v2048
        %v2486 = vpop.f32.mrf.mxu0
        %v2487 = vadd.f32 %v2374, %v2486
        %2488 = vmatmul.f32.gmra.mxu0 %v2054
        %v2489 = vpop.f32.mrf.mxu0
        %v2490 = vadd.f32 %v2377, %v2489
        %2491 = vmatmul.f32.gmra.mxu0 %v2060
        %v2492 = vpop.f32.mrf.mxu0
        %v2493 = vadd.f32 %v2380, %v2492
        %2494 = vmatmul.f32.gmra.mxu0 %v2066
        %v2495 = vpop.f32.mrf.mxu0
        %v2496 = vadd.f32 %v2383, %v2495
        %2497 = vmatmul.f32.gmra.mxu0 %v2072
        %v2498 = vpop.f32.mrf.mxu0
        %v2499 = vadd.f32 %v2386, %v2498
        %2500 = vmatmul.f32.gmra.mxu0 %v2078
        %v2501 = vpop.f32.mrf.mxu0
        %v2502 = vadd.f32 %v2389, %v2501
        %2503 = vmatmul.f32.gmra.mxu0 %v2084
        %v2504 = vpop.f32.mrf.mxu0
        %v2505 = vadd.f32 %v2392, %v2504
        %2506 = vmatmul.f32.gmra.mxu0 %v2090
        %v2507 = vpop.f32.mrf.mxu0
        %v2508 = vadd.f32 %v2395, %v2507
        %2509 = vmatmul.f32.gmra.mxu0 %v2096
        %v2510 = vpop.f32.mrf.mxu0
        %v2511 = vadd.f32 %v2398, %v2510
        %2512 = vmatmul.f32.gmra.mxu0 %v2102
        %v2513 = vpop.f32.mrf.mxu0
        %v2514 = vadd.f32 %v2401, %v2513
        %2515 = vmatmul.f32.gmra.mxu0 %v2108
        %v2516 = vpop.f32.mrf.mxu0
        %v2517 = vadd.f32 %v2404, %v2516
        %2518 = vmatmul.f32.gmra.mxu0 %v2114
        %v2519 = vpop.f32.mrf.mxu0
        %v2520 = vadd.f32 %v2407, %v2519
        %2521 = vmatmul.f32.gmra.mxu0 %v2120
        %v2522 = vpop.f32.mrf.mxu0
        %v2523 = vadd.f32 %v2410, %v2522
        %2524 = vdwg.mxu0
        %2525 = vmatpush.msra.mxu0 %v2298
        %2526 = vmatpush.msra.mxu0 %v2297
        %2527 = vmatpush.msra.mxu0 %v2296
        %2528 = vmatpush.msra.mxu0 %v2295
        %2529 = vmatpush.msra.mxu0 %v2294
        %2530 = vmatpush.msra.mxu0 %v2293
        %2531 = vmatpush.msra.mxu0 %v2292
        %2532 = vmatpush.msra.mxu0 %v2291
        %2533 = vmatpush.msra.mxu0 %v2290
        %2534 = vmatpush.msra.mxu0 %v2289
        %2535 = vmatpush.msra.mxu0 %v2288
        %2536 = vmatpush.msra.mxu0 %v2287
        %2537 = vmatpush.msra.mxu0 %v2286
        %2538 = vmatpush.msra.mxu0 %v2285
        %2539 = vmatpush.msra.mxu0 %v2284
        %2540 = vmatpush.msra.mxu0 %v2283
        %2541 = vmatmul.f32.gmra.mxu0 %v1936
        %v2542 = vpop.f32.mrf.mxu0
        %v2543 = vadd.f32 %v2430, %v2542
        %2544 = vmatmul.f32.gmra.mxu0 %v1942
        %v2545 = vpop.f32.mrf.mxu0
        %v2546 = vadd.f32 %v2433, %v2545
        %2547 = vmatmul.f32.gmra.mxu0 %v1948
        %v2548 = vpop.f32.mrf.mxu0
        %v2549 = vadd.f32 %v2436, %v2548
        %2550 = vmatmul.f32.gmra.mxu0 %v1954
        %v2551 = vpop.f32.mrf.mxu0
        %v2552 = vadd.f32 %v2439, %v2551
        %2553 = vmatmul.f32.gmra.mxu0 %v1960
        %v2554 = vpop.f32.mrf.mxu0
        %v2555 = vadd.f32 %v2442, %v2554
        %2556 = vmatmul.f32.gmra.mxu0 %v1966
        %v2557 = vpop.f32.mrf.mxu0
        %v2558 = vadd.f32 %v2445, %v2557
        %2559 = vmatmul.f32.gmra.mxu0 %v1972
        %v2560 = vpop.f32.mrf.mxu0
        %v2561 = vadd.f32 %v2448, %v2560
        %2562 = vmatmul.f32.gmra.mxu0 %v1978
        %v2563 = vpop.f32.mrf.mxu0
        %v2564 = vadd.f32 %v2451, %v2563
        %2565 = vmatmul.f32.gmra.mxu0 %v1984
        %v2566 = vpop.f32.mrf.mxu0
        %v2567 = vadd.f32 %v2454, %v2566
        %2568 = vmatmul.f32.gmra.mxu0 %v1990
        %v2569 = vpop.f32.mrf.mxu0
        %v2570 = vadd.f32 %v2457, %v2569
        %2571 = vmatmul.f32.gmra.mxu0 %v1996
        %v2572 = vpop.f32.mrf.mxu0
        %v2573 = vadd.f32 %v2460, %v2572
        %2574 = vmatmul.f32.gmra.mxu0 %v2002
        %v2575 = vpop.f32.mrf.mxu0
        %v2576 = vadd.f32 %v2463, %v2575
        %2577 = vmatmul.f32.gmra.mxu0 %v2008
        %v2578 = vpop.f32.mrf.mxu0
        %v2579 = vadd.f32 %v2466, %v2578
        %2580 = vmatmul.f32.gmra.mxu0 %v2014
        %v2581 = vpop.f32.mrf.mxu0
        %v2582 = vadd.f32 %v2469, %v2581
        %2583 = vmatmul.f32.gmra.mxu0 %v2020
        %v2584 = vpop.f32.mrf.mxu0
        %v2585 = vadd.f32 %v2472, %v2584
        %2586 = vmatmul.f32.gmra.mxu0 %v2026
        %v2587 = vpop.f32.mrf.mxu0
        %v2588 = vadd.f32 %v2475, %v2587
        %2589 = vmatmul.f32.gmra.mxu0 %v2032
        %v2590 = vpop.f32.mrf.mxu0
        %v2591 = vadd.f32 %v2478, %v2590
        %2592 = vmatmul.f32.gmra.mxu0 %v2038
        %v2593 = vpop.f32.mrf.mxu0
        %v2594 = vadd.f32 %v2481, %v2593
        %2595 = vmatmul.f32.gmra.mxu0 %v2044
        %v2596 = vpop.f32.mrf.mxu0
        %v2597 = vadd.f32 %v2484, %v2596
        %2598 = vmatmul.f32.gmra.mxu0 %v2050
        %v2599 = vpop.f32.mrf.mxu0
        %v2600 = vadd.f32 %v2487, %v2599
        %2601 = vmatmul.f32.gmra.mxu0 %v2056
        %v2602 = vpop.f32.mrf.mxu0
        %v2603 = vadd.f32 %v2490, %v2602
        %2604 = vmatmul.f32.gmra.mxu0 %v2062
        %v2605 = vpop.f32.mrf.mxu0
        %v2606 = vadd.f32 %v2493, %v2605
        %2607 = vmatmul.f32.gmra.mxu0 %v2068
        %v2608 = vpop.f32.mrf.mxu0
        %v2609 = vadd.f32 %v2496, %v2608
        %2610 = vmatmul.f32.gmra.mxu0 %v2074
        %v2611 = vpop.f32.mrf.mxu0
        %v2612 = vadd.f32 %v2499, %v2611
        %2613 = vmatmul.f32.gmra.mxu0 %v2080
        %v2614 = vpop.f32.mrf.mxu0
        %v2615 = vadd.f32 %v2502, %v2614
        %2616 = vmatmul.f32.gmra.mxu0 %v2086
        %v2617 = vpop.f32.mrf.mxu0
        %v2618 = vadd.f32 %v2505, %v2617
        %2619 = vmatmul.f32.gmra.mxu0 %v2092
        %v2620 = vpop.f32.mrf.mxu0
        %v2621 = vadd.f32 %v2508, %v2620
        %2622 = vmatmul.f32.gmra.mxu0 %v2098
        %v2623 = vpop.f32.mrf.mxu0
        %v2624 = vadd.f32 %v2511, %v2623
        %2625 = vmatmul.f32.gmra.mxu0 %v2104
        %v2626 = vpop.f32.mrf.mxu0
        %v2627 = vadd.f32 %v2514, %v2626
        %2628 = vmatmul.f32.gmra.mxu0 %v2110
        %v2629 = vpop.f32.mrf.mxu0
        %v2630 = vadd.f32 %v2517, %v2629
        %2631 = vmatmul.f32.gmra.mxu0 %v2116
        %v2632 = vpop.f32.mrf.mxu0
        %v2633 = vadd.f32 %v2520, %v2632
        %2634 = vmatmul.f32.gmra.mxu0 %v2122
        %v2635 = vpop.f32.mrf.mxu0
        %v2636 = vadd.f32 %v2523, %v2635
        %2637 = vdwg.mxu0
        %v2638 = vrcp.pop %v2126
        %v2639 = vrcp.pop %v2130
        %v2640 = vrcp.pop %v2134
        %v2641 = vrcp.pop %v2138
        %v2642 = vrcp.pop %v2142
        %v2643 = vrcp.pop %v2146
        %v2644 = vrcp.pop %v2150
        %v2645 = vrcp.pop %v2154
        %v2646 = vrcp.pop %v2158
        %v2647 = vrcp.pop %v2162
        %v2648 = vrcp.pop %v2166
        %v2649 = vrcp.pop %v2170
        %v2650 = vrcp.pop %v2174
        %v2651 = vrcp.pop %v2178
        %v2652 = vrcp.pop %v2182
        %v2653 = vrcp.pop %v2186
        %v2654 = vrcp.pop %v2190
        %v2655 = vrcp.pop %v2194
        %v2656 = vrcp.pop %v2198
        %v2657 = vrcp.pop %v2202
        %v2658 = vrcp.pop %v2206
        %v2659 = vrcp.pop %v2210
        %v2660 = vrcp.pop %v2214
        %v2661 = vrcp.pop %v2218
        %v2662 = vrcp.pop %v2222
        %v2663 = vrcp.pop %v2226
        %v2664 = vrcp.pop %v2230
        %v2665 = vrcp.pop %v2234
        %v2666 = vrcp.pop %v2238
        %v2667 = vrcp.pop %v2242
        %v2668 = vrcp.pop %v2246
        %v2669 = vrcp.pop %v2250
        %v2670 = vmul.f32 %v2543, %v2638
        %v2671 = vmul.f32 %v2546, %v2639
        %v2672 = vmul.f32 %v2549, %v2640
        %v2673 = vmul.f32 %v2552, %v2641
        %v2674 = vmul.f32 %v2555, %v2642
        %v2675 = vmul.f32 %v2558, %v2643
        %v2676 = vmul.f32 %v2561, %v2644
        %v2677 = vmul.f32 %v2564, %v2645
        %v2678 = vmul.f32 %v2567, %v2646
        %v2679 = vmul.f32 %v2570, %v2647
        %v2680 = vmul.f32 %v2573, %v2648
        %v2681 = vmul.f32 %v2576, %v2649
        %v2682 = vmul.f32 %v2579, %v2650
        %v2683 = vmul.f32 %v2582, %v2651
        %v2684 = vmul.f32 %v2585, %v2652
        %v2685 = vmul.f32 %v2588, %v2653
        %v2686 = vmul.f32 %v2591, %v2654
        %v2687 = vmul.f32 %v2594, %v2655
        %v2688 = vmul.f32 %v2597, %v2656
        %v2689 = vmul.f32 %v2600, %v2657
        %v2690 = vmul.f32 %v2603, %v2658
        %v2691 = vmul.f32 %v2606, %v2659
        %v2692 = vmul.f32 %v2609, %v2660
        %v2693 = vmul.f32 %v2612, %v2661
        %v2694 = vmul.f32 %v2615, %v2662
        %v2695 = vmul.f32 %v2618, %v2663
        %v2696 = vmul.f32 %v2621, %v2664
        %v2697 = vmul.f32 %v2624, %v2665
        %v2698 = vmul.f32 %v2627, %v2666
        %v2699 = vmul.f32 %v2630, %v2667
        %v2700 = vmul.f32 %v2633, %v2668
        %v2701 = vmul.f32 %v2636, %v2669
        %s2702 = sld [smem:[#allocation3 + %s30]]
        %v2703 = vld [vmem:[%s1104] sm:$0xff]
        %v2704 = vld [vmem:[%s1104 + $0x8] sm:$0xff]
        %v2705 = vld [vmem:[%s1104 + $0x10] sm:$0xff]
        %v2706 = vld [vmem:[%s1104 + $0x18] sm:$0xff]
        %v2707 = vld [vmem:[%s1104 + $0x20] sm:$0xff]
        %v2708 = vld [vmem:[%s1104 + $0x28] sm:$0xff]
        %v2709 = vld [vmem:[%s1104 + $0x30] sm:$0xff]
        %v2710 = vld [vmem:[%s1104 + $0x38] sm:$0xff]
        %v2711 = vld [vmem:[%s1104 + $0x40] sm:$0xff]
        %v2712 = vld [vmem:[%s1104 + $0x48] sm:$0xff]
        %v2713 = vld [vmem:[%s1104 + $0x50] sm:$0xff]
        %v2714 = vld [vmem:[%s1104 + $0x58] sm:$0xff]
        %v2715 = vld [vmem:[%s1104 + $0x60] sm:$0xff]
        %v2716 = vld [vmem:[%s1104 + $0x68] sm:$0xff]
        %v2717 = vld [vmem:[%s1104 + $0x70] sm:$0xff]
        %v2718 = vld [vmem:[%s1104 + $0x78] sm:$0xff]
        %2719 = vmatpush.xpose.msra.mxu0 %v2718
        %2720 = vmatpush.xpose.msra.mxu0 %v2717
        %2721 = vmatpush.xpose.msra.mxu0 %v2716
        %2722 = vmatpush.xpose.msra.mxu0 %v2715
        %2723 = vmatpush.xpose.msra.mxu0 %v2714
        %2724 = vmatpush.xpose.msra.mxu0 %v2713
        %2725 = vmatpush.xpose.msra.mxu0 %v2712
        %2726 = vmatpush.xpose.msra.mxu0 %v2711
        %2727 = vmatpush.xpose.msra.mxu0 %v2710
        %2728 = vmatpush.xpose.msra.mxu0 %v2709
        %2729 = vmatpush.xpose.msra.mxu0 %v2708
        %2730 = vmatpush.xpose.msra.mxu0 %v2707
        %2731 = vmatpush.xpose.msra.mxu0 %v2706
        %2732 = vmatpush.xpose.msra.mxu0 %v2705
        %2733 = vmatpush.xpose.msra.mxu0 %v2704
        %2734 = vmatpush.xpose.msra.mxu0 %v2703
        %2735 = vmatmul.f32.gmra.mxu0 %v1185
        %v2736 = vpop.f32.mrf.mxu0
        %v2737 = vadd.f32 0.0, %v2736
        %2738 = vmatmul.f32.gmra.mxu0 %v1186
        %v2739 = vpop.f32.mrf.mxu0
        %v2740 = vadd.f32 0.0, %v2739
        %2741 = vmatmul.f32.gmra.mxu0 %v1187
        %v2742 = vpop.f32.mrf.mxu0
        %v2743 = vadd.f32 0.0, %v2742
        %2744 = vmatmul.f32.gmra.mxu0 %v1188
        %v2745 = vpop.f32.mrf.mxu0
        %v2746 = vadd.f32 0.0, %v2745
        %2747 = vmatmul.f32.gmra.mxu0 %v1189
        %v2748 = vpop.f32.mrf.mxu0
        %v2749 = vadd.f32 0.0, %v2748
        %2750 = vmatmul.f32.gmra.mxu0 %v1190
        %v2751 = vpop.f32.mrf.mxu0
        %v2752 = vadd.f32 0.0, %v2751
        %2753 = vmatmul.f32.gmra.mxu0 %v1191
        %v2754 = vpop.f32.mrf.mxu0
        %v2755 = vadd.f32 0.0, %v2754
        %2756 = vmatmul.f32.gmra.mxu0 %v1192
        %v2757 = vpop.f32.mrf.mxu0
        %v2758 = vadd.f32 0.0, %v2757
        %2759 = vmatmul.f32.gmra.mxu0 %v1193
        %v2760 = vpop.f32.mrf.mxu0
        %v2761 = vadd.f32 0.0, %v2760
        %2762 = vmatmul.f32.gmra.mxu0 %v1194
        %v2763 = vpop.f32.mrf.mxu0
        %v2764 = vadd.f32 0.0, %v2763
        %2765 = vmatmul.f32.gmra.mxu0 %v1195
        %v2766 = vpop.f32.mrf.mxu0
        %v2767 = vadd.f32 0.0, %v2766
        %2768 = vmatmul.f32.gmra.mxu0 %v1196
        %v2769 = vpop.f32.mrf.mxu0
        %v2770 = vadd.f32 0.0, %v2769
        %2771 = vmatmul.f32.gmra.mxu0 %v1197
        %v2772 = vpop.f32.mrf.mxu0
        %v2773 = vadd.f32 0.0, %v2772
        %2774 = vmatmul.f32.gmra.mxu0 %v1198
        %v2775 = vpop.f32.mrf.mxu0
        %v2776 = vadd.f32 0.0, %v2775
        %2777 = vmatmul.f32.gmra.mxu0 %v1199
        %v2778 = vpop.f32.mrf.mxu0
        %v2779 = vadd.f32 0.0, %v2778
        %2780 = vmatmul.f32.gmra.mxu0 %v1200
        %v2781 = vpop.f32.mrf.mxu0
        %v2782 = vadd.f32 0.0, %v2781
        %2783 = vmatmul.f32.gmra.mxu0 %v1201
        %v2784 = vpop.f32.mrf.mxu0
        %v2785 = vadd.f32 0.0, %v2784
        %2786 = vmatmul.f32.gmra.mxu0 %v1202
        %v2787 = vpop.f32.mrf.mxu0
        %v2788 = vadd.f32 0.0, %v2787
        %2789 = vmatmul.f32.gmra.mxu0 %v1203
        %v2790 = vpop.f32.mrf.mxu0
        %v2791 = vadd.f32 0.0, %v2790
        %2792 = vmatmul.f32.gmra.mxu0 %v1204
        %v2793 = vpop.f32.mrf.mxu0
        %v2794 = vadd.f32 0.0, %v2793
        %2795 = vmatmul.f32.gmra.mxu0 %v1205
        %v2796 = vpop.f32.mrf.mxu0
        %v2797 = vadd.f32 0.0, %v2796
        %2798 = vmatmul.f32.gmra.mxu0 %v1206
        %v2799 = vpop.f32.mrf.mxu0
        %v2800 = vadd.f32 0.0, %v2799
        %2801 = vmatmul.f32.gmra.mxu0 %v1207
        %v2802 = vpop.f32.mrf.mxu0
        %v2803 = vadd.f32 0.0, %v2802
        %2804 = vmatmul.f32.gmra.mxu0 %v1208
        %v2805 = vpop.f32.mrf.mxu0
        %v2806 = vadd.f32 0.0, %v2805
        %2807 = vmatmul.f32.gmra.mxu0 %v1209
        %v2808 = vpop.f32.mrf.mxu0
        %v2809 = vadd.f32 0.0, %v2808
        %2810 = vmatmul.f32.gmra.mxu0 %v1210
        %v2811 = vpop.f32.mrf.mxu0
        %v2812 = vadd.f32 0.0, %v2811
        %2813 = vmatmul.f32.gmra.mxu0 %v1211
        %v2814 = vpop.f32.mrf.mxu0
        %v2815 = vadd.f32 0.0, %v2814
        %2816 = vmatmul.f32.gmra.mxu0 %v1212
        %v2817 = vpop.f32.mrf.mxu0
        %v2818 = vadd.f32 0.0, %v2817
        %2819 = vmatmul.f32.gmra.mxu0 %v1213
        %v2820 = vpop.f32.mrf.mxu0
        %v2821 = vadd.f32 0.0, %v2820
        %2822 = vmatmul.f32.gmra.mxu0 %v1214
        %v2823 = vpop.f32.mrf.mxu0
        %v2824 = vadd.f32 0.0, %v2823
        %2825 = vmatmul.f32.gmra.mxu0 %v1215
        %v2826 = vpop.f32.mrf.mxu0
        %v2827 = vadd.f32 0.0, %v2826
        %2828 = vmatmul.f32.gmra.mxu0 %v1216
        %v2829 = vpop.f32.mrf.mxu0
        %v2830 = vadd.f32 0.0, %v2829
        %2831 = vdwg.mxu0
        %v2832 = vstv %s2702
        %vm2833 = vcmp.lt.s32.totalorder %v1605, %v2832
        %v2834 = vsel %vm2833, %v2737, -inf
        %v2835 = vsel %vm2833, %v2740, -inf
        %v2836 = vsel %vm2833, %v2743, -inf
        %v2837 = vsel %vm2833, %v2746, -inf
        %v2838 = vsel %vm2833, %v2749, -inf
        %v2839 = vsel %vm2833, %v2752, -inf
        %v2840 = vsel %vm2833, %v2755, -inf
        %v2841 = vsel %vm2833, %v2758, -inf
        %v2842 = vsel %vm2833, %v2761, -inf
        %v2843 = vsel %vm2833, %v2764, -inf
        %v2844 = vsel %vm2833, %v2767, -inf
        %v2845 = vsel %vm2833, %v2770, -inf
        %v2846 = vsel %vm2833, %v2773, -inf
        %v2847 = vsel %vm2833, %v2776, -inf
        %v2848 = vsel %vm2833, %v2779, -inf
        %v2849 = vsel %vm2833, %v2782, -inf
        %v2850 = vsel %vm2833, %v2785, -inf
        %v2851 = vsel %vm2833, %v2788, -inf
        %v2852 = vsel %vm2833, %v2791, -inf
        %v2853 = vsel %vm2833, %v2794, -inf
        %v2854 = vsel %vm2833, %v2797, -inf
        %v2855 = vsel %vm2833, %v2800, -inf
        %v2856 = vsel %vm2833, %v2803, -inf
        %v2857 = vsel %vm2833, %v2806, -inf
        %v2858 = vsel %vm2833, %v2809, -inf
        %v2859 = vsel %vm2833, %v2812, -inf
        %v2860 = vsel %vm2833, %v2815, -inf
        %v2861 = vsel %vm2833, %v2818, -inf
        %v2862 = vsel %vm2833, %v2821, -inf
        %v2863 = vsel %vm2833, %v2824, -inf
        %v2864 = vsel %vm2833, %v2827, -inf
        %v2865 = vsel %vm2833, %v2830, -inf
        %2866 = vmax.xlane.f32.xlu0 %v2834
        %v2867 = vpop.xlane.xlu0 %2866
        %2868 = vmax.xlane.f32.xlu0 %v2835
        %v2869 = vpop.xlane.xlu0 %2868
        %2870 = vmax.xlane.f32.xlu0 %v2836
        %v2871 = vpop.xlane.xlu0 %2870
        %2872 = vmax.xlane.f32.xlu0 %v2837
        %v2873 = vpop.xlane.xlu0 %2872
        %2874 = vmax.xlane.f32.xlu0 %v2838
        %v2875 = vpop.xlane.xlu0 %2874
        %2876 = vmax.xlane.f32.xlu0 %v2839
        %v2877 = vpop.xlane.xlu0 %2876
        %2878 = vmax.xlane.f32.xlu0 %v2840
        %v2879 = vpop.xlane.xlu0 %2878
        %2880 = vmax.xlane.f32.xlu0 %v2841
        %v2881 = vpop.xlane.xlu0 %2880
        %2882 = vmax.xlane.f32.xlu0 %v2842
        %v2883 = vpop.xlane.xlu0 %2882
        %2884 = vmax.xlane.f32.xlu0 %v2843
        %v2885 = vpop.xlane.xlu0 %2884
        %2886 = vmax.xlane.f32.xlu0 %v2844
        %v2887 = vpop.xlane.xlu0 %2886
        %2888 = vmax.xlane.f32.xlu0 %v2845
        %v2889 = vpop.xlane.xlu0 %2888
        %2890 = vmax.xlane.f32.xlu0 %v2846
        %v2891 = vpop.xlane.xlu0 %2890
        %2892 = vmax.xlane.f32.xlu0 %v2847
        %v2893 = vpop.xlane.xlu0 %2892
        %2894 = vmax.xlane.f32.xlu0 %v2848
        %v2895 = vpop.xlane.xlu0 %2894
        %2896 = vmax.xlane.f32.xlu0 %v2849
        %v2897 = vpop.xlane.xlu0 %2896
        %2898 = vmax.xlane.f32.xlu0 %v2850
        %v2899 = vpop.xlane.xlu0 %2898
        %2900 = vmax.xlane.f32.xlu0 %v2851
        %v2901 = vpop.xlane.xlu0 %2900
        %2902 = vmax.xlane.f32.xlu0 %v2852
        %v2903 = vpop.xlane.xlu0 %2902
        %2904 = vmax.xlane.f32.xlu0 %v2853
        %v2905 = vpop.xlane.xlu0 %2904
        %2906 = vmax.xlane.f32.xlu0 %v2854
        %v2907 = vpop.xlane.xlu0 %2906
        %2908 = vmax.xlane.f32.xlu0 %v2855
        %v2909 = vpop.xlane.xlu0 %2908
        %2910 = vmax.xlane.f32.xlu0 %v2856
        %v2911 = vpop.xlane.xlu0 %2910
        %2912 = vmax.xlane.f32.xlu0 %v2857
        %v2913 = vpop.xlane.xlu0 %2912
        %2914 = vmax.xlane.f32.xlu0 %v2858
        %v2915 = vpop.xlane.xlu0 %2914
        %2916 = vmax.xlane.f32.xlu0 %v2859
        %v2917 = vpop.xlane.xlu0 %2916
        %2918 = vmax.xlane.f32.xlu0 %v2860
        %v2919 = vpop.xlane.xlu0 %2918
        %2920 = vmax.xlane.f32.xlu0 %v2861
        %v2921 = vpop.xlane.xlu0 %2920
        %2922 = vmax.xlane.f32.xlu0 %v2862
        %v2923 = vpop.xlane.xlu0 %2922
        %2924 = vmax.xlane.f32.xlu0 %v2863
        %v2925 = vpop.xlane.xlu0 %2924
        %2926 = vmax.xlane.f32.xlu0 %v2864
        %v2927 = vpop.xlane.xlu0 %2926
        %2928 = vmax.xlane.f32.xlu0 %v2865
        %v2929 = vpop.xlane.xlu0 %2928
        %v2930 = vsub.f32 %v2834, %v2867
        %v2931 = vsub.f32 %v2835, %v2869
        %v2932 = vsub.f32 %v2836, %v2871
        %v2933 = vsub.f32 %v2837, %v2873
        %v2934 = vsub.f32 %v2838, %v2875
        %v2935 = vsub.f32 %v2839, %v2877
        %v2936 = vsub.f32 %v2840, %v2879
        %v2937 = vsub.f32 %v2841, %v2881
        %v2938 = vsub.f32 %v2842, %v2883
        %v2939 = vsub.f32 %v2843, %v2885
        %v2940 = vsub.f32 %v2844, %v2887
        %v2941 = vsub.f32 %v2845, %v2889
        %v2942 = vsub.f32 %v2846, %v2891
        %v2943 = vsub.f32 %v2847, %v2893
        %v2944 = vsub.f32 %v2848, %v2895
        %v2945 = vsub.f32 %v2849, %v2897
        %v2946 = vsub.f32 %v2850, %v2899
        %v2947 = vsub.f32 %v2851, %v2901
        %v2948 = vsub.f32 %v2852, %v2903
        %v2949 = vsub.f32 %v2853, %v2905
        %v2950 = vsub.f32 %v2854, %v2907
        %v2951 = vsub.f32 %v2855, %v2909
        %v2952 = vsub.f32 %v2856, %v2911
        %v2953 = vsub.f32 %v2857, %v2913
        %v2954 = vsub.f32 %v2858, %v2915
        %v2955 = vsub.f32 %v2859, %v2917
        %v2956 = vsub.f32 %v2860, %v2919
        %v2957 = vsub.f32 %v2861, %v2921
        %v2958 = vsub.f32 %v2862, %v2923
        %v2959 = vsub.f32 %v2863, %v2925
        %v2960 = vsub.f32 %v2864, %v2927
        %v2961 = vsub.f32 %v2865, %v2929
        %v2962 = vmul.f32 %v2930, 1.442695
        %v2963 = vpow.pop %v2962
        %v2964 = vmul.f32 %v2931, 1.442695
        %v2965 = vpow.pop %v2964
        %v2966 = vmul.f32 %v2932, 1.442695
        %v2967 = vpow.pop %v2966
        %v2968 = vmul.f32 %v2933, 1.442695
        %v2969 = vpow.pop %v2968
        %v2970 = vmul.f32 %v2934, 1.442695
        %v2971 = vpow.pop %v2970
        %v2972 = vmul.f32 %v2935, 1.442695
        %v2973 = vpow.pop %v2972
        %v2974 = vmul.f32 %v2936, 1.442695
        %v2975 = vpow.pop %v2974
        %v2976 = vmul.f32 %v2937, 1.442695
        %v2977 = vpow.pop %v2976
        %v2978 = vmul.f32 %v2938, 1.442695
        %v2979 = vpow.pop %v2978
        %v2980 = vmul.f32 %v2939, 1.442695
        %v2981 = vpow.pop %v2980
        %v2982 = vmul.f32 %v2940, 1.442695
        %v2983 = vpow.pop %v2982
        %v2984 = vmul.f32 %v2941, 1.442695
        %v2985 = vpow.pop %v2984
        %v2986 = vmul.f32 %v2942, 1.442695
        %v2987 = vpow.pop %v2986
        %v2988 = vmul.f32 %v2943, 1.442695
        %v2989 = vpow.pop %v2988
        %v2990 = vmul.f32 %v2944, 1.442695
        %v2991 = vpow.pop %v2990
        %v2992 = vmul.f32 %v2945, 1.442695
        %v2993 = vpow.pop %v2992
        %v2994 = vmul.f32 %v2946, 1.442695
        %v2995 = vpow.pop %v2994
        %v2996 = vmul.f32 %v2947, 1.442695
        %v2997 = vpow.pop %v2996
        %v2998 = vmul.f32 %v2948, 1.442695
        %v2999 = vpow.pop %v2998
        %v3000 = vmul.f32 %v2949, 1.442695
        %v3001 = vpow.pop %v3000
        %v3002 = vmul.f32 %v2950, 1.442695
        %v3003 = vpow.pop %v3002
        %v3004 = vmul.f32 %v2951, 1.442695
        %v3005 = vpow.pop %v3004
        %v3006 = vmul.f32 %v2952, 1.442695
        %v3007 = vpow.pop %v3006
        %v3008 = vmul.f32 %v2953, 1.442695
        %v3009 = vpow.pop %v3008
        %v3010 = vmul.f32 %v2954, 1.442695
        %v3011 = vpow.pop %v3010
        %v3012 = vmul.f32 %v2955, 1.442695
        %v3013 = vpow.pop %v3012
        %v3014 = vmul.f32 %v2956, 1.442695
        %v3015 = vpow.pop %v3014
        %v3016 = vmul.f32 %v2957, 1.442695
        %v3017 = vpow.pop %v3016
        %v3018 = vmul.f32 %v2958, 1.442695
        %v3019 = vpow.pop %v3018
        %v3020 = vmul.f32 %v2959, 1.442695
        %v3021 = vpow.pop %v3020
        %v3022 = vmul.f32 %v2960, 1.442695
        %v3023 = vpow.pop %v3022
        %v3024 = vmul.f32 %v2961, 1.442695
        %v3025 = vpow.pop %v3024
        %3026 = vadd.xlane.f32.xlu0 %v2963
        %v3027 = vpop.xlane.xlu0 %3026
        %3028 = vadd.xlane.f32.xlu0 %v2965
        %v3029 = vpop.xlane.xlu0 %3028
        %3030 = vadd.xlane.f32.xlu0 %v2967
        %v3031 = vpop.xlane.xlu0 %3030
        %3032 = vadd.xlane.f32.xlu0 %v2969
        %v3033 = vpop.xlane.xlu0 %3032
        %3034 = vadd.xlane.f32.xlu0 %v2971
        %v3035 = vpop.xlane.xlu0 %3034
        %3036 = vadd.xlane.f32.xlu0 %v2973
        %v3037 = vpop.xlane.xlu0 %3036
        %3038 = vadd.xlane.f32.xlu0 %v2975
        %v3039 = vpop.xlane.xlu0 %3038
        %3040 = vadd.xlane.f32.xlu0 %v2977
        %v3041 = vpop.xlane.xlu0 %3040
        %3042 = vadd.xlane.f32.xlu0 %v2979
        %v3043 = vpop.xlane.xlu0 %3042
        %3044 = vadd.xlane.f32.xlu0 %v2981
        %v3045 = vpop.xlane.xlu0 %3044
        %3046 = vadd.xlane.f32.xlu0 %v2983
        %v3047 = vpop.xlane.xlu0 %3046
        %3048 = vadd.xlane.f32.xlu0 %v2985
        %v3049 = vpop.xlane.xlu0 %3048
        %3050 = vadd.xlane.f32.xlu0 %v2987
        %v3051 = vpop.xlane.xlu0 %3050
        %3052 = vadd.xlane.f32.xlu0 %v2989
        %v3053 = vpop.xlane.xlu0 %3052
        %3054 = vadd.xlane.f32.xlu0 %v2991
        %v3055 = vpop.xlane.xlu0 %3054
        %3056 = vadd.xlane.f32.xlu0 %v2993
        %v3057 = vpop.xlane.xlu0 %3056
        %3058 = vadd.xlane.f32.xlu0 %v2995
        %v3059 = vpop.xlane.xlu0 %3058
        %3060 = vadd.xlane.f32.xlu0 %v2997
        %v3061 = vpop.xlane.xlu0 %3060
        %3062 = vadd.xlane.f32.xlu0 %v2999
        %v3063 = vpop.xlane.xlu0 %3062
        %3064 = vadd.xlane.f32.xlu0 %v3001
        %v3065 = vpop.xlane.xlu0 %3064
        %3066 = vadd.xlane.f32.xlu0 %v3003
        %v3067 = vpop.xlane.xlu0 %3066
        %3068 = vadd.xlane.f32.xlu0 %v3005
        %v3069 = vpop.xlane.xlu0 %3068
        %3070 = vadd.xlane.f32.xlu0 %v3007
        %v3071 = vpop.xlane.xlu0 %3070
        %3072 = vadd.xlane.f32.xlu0 %v3009
        %v3073 = vpop.xlane.xlu0 %3072
        %3074 = vadd.xlane.f32.xlu0 %v3011
        %v3075 = vpop.xlane.xlu0 %3074
        %3076 = vadd.xlane.f32.xlu0 %v3013
        %v3077 = vpop.xlane.xlu0 %3076
        %3078 = vadd.xlane.f32.xlu0 %v3015
        %v3079 = vpop.xlane.xlu0 %3078
        %3080 = vadd.xlane.f32.xlu0 %v3017
        %v3081 = vpop.xlane.xlu0 %3080
        %3082 = vadd.xlane.f32.xlu0 %v3019
        %v3083 = vpop.xlane.xlu0 %3082
        %3084 = vadd.xlane.f32.xlu0 %v3021
        %v3085 = vpop.xlane.xlu0 %3084
        %3086 = vadd.xlane.f32.xlu0 %v3023
        %v3087 = vpop.xlane.xlu0 %3086
        %3088 = vadd.xlane.f32.xlu0 %v3025
        %v3089 = vpop.xlane.xlu0 %3088
        %v3090 = vld [vmem:[%s1111] sm:$0xff]
        %v3091 = vld [vmem:[%s1111 + $0x8] sm:$0xff]
        %v3092 = vld [vmem:[%s1111 + $0x10] sm:$0xff]
        %v3093 = vld [vmem:[%s1111 + $0x18] sm:$0xff]
        %v3094 = vld [vmem:[%s1111 + $0x20] sm:$0xff]
        %v3095 = vld [vmem:[%s1111 + $0x28] sm:$0xff]
        %v3096 = vld [vmem:[%s1111 + $0x30] sm:$0xff]
        %v3097 = vld [vmem:[%s1111 + $0x38] sm:$0xff]
        %v3098 = vld [vmem:[%s1111 + $0x40] sm:$0xff]
        %v3099 = vld [vmem:[%s1111 + $0x48] sm:$0xff]
        %v3100 = vld [vmem:[%s1111 + $0x50] sm:$0xff]
        %v3101 = vld [vmem:[%s1111 + $0x58] sm:$0xff]
        %v3102 = vld [vmem:[%s1111 + $0x60] sm:$0xff]
        %v3103 = vld [vmem:[%s1111 + $0x68] sm:$0xff]
        %v3104 = vld [vmem:[%s1111 + $0x70] sm:$0xff]
        %v3105 = vld [vmem:[%s1111 + $0x78] sm:$0xff]
        %3106 = vmatpush.msra.mxu0 %v3105
        %3107 = vmatpush.msra.mxu0 %v3104
        %3108 = vmatpush.msra.mxu0 %v3103
        %3109 = vmatpush.msra.mxu0 %v3102
        %3110 = vmatpush.msra.mxu0 %v3101
        %3111 = vmatpush.msra.mxu0 %v3100
        %3112 = vmatpush.msra.mxu0 %v3099
        %3113 = vmatpush.msra.mxu0 %v3098
        %3114 = vmatpush.msra.mxu0 %v3097
        %3115 = vmatpush.msra.mxu0 %v3096
        %3116 = vmatpush.msra.mxu0 %v3095
        %3117 = vmatpush.msra.mxu0 %v3094
        %3118 = vmatpush.msra.mxu0 %v3093
        %3119 = vmatpush.msra.mxu0 %v3092
        %3120 = vmatpush.msra.mxu0 %v3091
        %3121 = vmatpush.msra.mxu0 %v3090
        %3122 = vmatmul.f32.gmra.mxu0 %v2963
        %v3123 = vpop.f32.mrf.mxu0
        %v3124 = vadd.f32 0.0, %v3123
        %3125 = vmatmul.f32.gmra.mxu0 %v2965
        %v3126 = vpop.f32.mrf.mxu0
        %v3127 = vadd.f32 0.0, %v3126
        %3128 = vmatmul.f32.gmra.mxu0 %v2967
        %v3129 = vpop.f32.mrf.mxu0
        %v3130 = vadd.f32 0.0, %v3129
        %3131 = vmatmul.f32.gmra.mxu0 %v2969
        %v3132 = vpop.f32.mrf.mxu0
        %v3133 = vadd.f32 0.0, %v3132
        %3134 = vmatmul.f32.gmra.mxu0 %v2971
        %v3135 = vpop.f32.mrf.mxu0
        %v3136 = vadd.f32 0.0, %v3135
        %3137 = vmatmul.f32.gmra.mxu0 %v2973
        %v3138 = vpop.f32.mrf.mxu0
        %v3139 = vadd.f32 0.0, %v3138
        %3140 = vmatmul.f32.gmra.mxu0 %v2975
        %v3141 = vpop.f32.mrf.mxu0
        %v3142 = vadd.f32 0.0, %v3141
        %3143 = vmatmul.f32.gmra.mxu0 %v2977
        %v3144 = vpop.f32.mrf.mxu0
        %v3145 = vadd.f32 0.0, %v3144
        %3146 = vmatmul.f32.gmra.mxu0 %v2979
        %v3147 = vpop.f32.mrf.mxu0
        %v3148 = vadd.f32 0.0, %v3147
        %3149 = vmatmul.f32.gmra.mxu0 %v2981
        %v3150 = vpop.f32.mrf.mxu0
        %v3151 = vadd.f32 0.0, %v3150
        %3152 = vmatmul.f32.gmra.mxu0 %v2983
        %v3153 = vpop.f32.mrf.mxu0
        %v3154 = vadd.f32 0.0, %v3153
        %3155 = vmatmul.f32.gmra.mxu0 %v2985
        %v3156 = vpop.f32.mrf.mxu0
        %v3157 = vadd.f32 0.0, %v3156
        %3158 = vmatmul.f32.gmra.mxu0 %v2987
        %v3159 = vpop.f32.mrf.mxu0
        %v3160 = vadd.f32 0.0, %v3159
        %3161 = vmatmul.f32.gmra.mxu0 %v2989
        %v3162 = vpop.f32.mrf.mxu0
        %v3163 = vadd.f32 0.0, %v3162
        %3164 = vmatmul.f32.gmra.mxu0 %v2991
        %v3165 = vpop.f32.mrf.mxu0
        %v3166 = vadd.f32 0.0, %v3165
        %3167 = vmatmul.f32.gmra.mxu0 %v2993
        %v3168 = vpop.f32.mrf.mxu0
        %v3169 = vadd.f32 0.0, %v3168
        %3170 = vmatmul.f32.gmra.mxu0 %v2995
        %v3171 = vpop.f32.mrf.mxu0
        %v3172 = vadd.f32 0.0, %v3171
        %3173 = vmatmul.f32.gmra.mxu0 %v2997
        %v3174 = vpop.f32.mrf.mxu0
        %v3175 = vadd.f32 0.0, %v3174
        %3176 = vmatmul.f32.gmra.mxu0 %v2999
        %v3177 = vpop.f32.mrf.mxu0
        %v3178 = vadd.f32 0.0, %v3177
        %3179 = vmatmul.f32.gmra.mxu0 %v3001
        %v3180 = vpop.f32.mrf.mxu0
        %v3181 = vadd.f32 0.0, %v3180
        %3182 = vmatmul.f32.gmra.mxu0 %v3003
        %v3183 = vpop.f32.mrf.mxu0
        %v3184 = vadd.f32 0.0, %v3183
        %3185 = vmatmul.f32.gmra.mxu0 %v3005
        %v3186 = vpop.f32.mrf.mxu0
        %v3187 = vadd.f32 0.0, %v3186
        %3188 = vmatmul.f32.gmra.mxu0 %v3007
        %v3189 = vpop.f32.mrf.mxu0
        %v3190 = vadd.f32 0.0, %v3189
        %3191 = vmatmul.f32.gmra.mxu0 %v3009
        %v3192 = vpop.f32.mrf.mxu0
        %v3193 = vadd.f32 0.0, %v3192
        %3194 = vmatmul.f32.gmra.mxu0 %v3011
        %v3195 = vpop.f32.mrf.mxu0
        %v3196 = vadd.f32 0.0, %v3195
        %3197 = vmatmul.f32.gmra.mxu0 %v3013
        %v3198 = vpop.f32.mrf.mxu0
        %v3199 = vadd.f32 0.0, %v3198
        %3200 = vmatmul.f32.gmra.mxu0 %v3015
        %v3201 = vpop.f32.mrf.mxu0
        %v3202 = vadd.f32 0.0, %v3201
        %3203 = vmatmul.f32.gmra.mxu0 %v3017
        %v3204 = vpop.f32.mrf.mxu0
        %v3205 = vadd.f32 0.0, %v3204
        %3206 = vmatmul.f32.gmra.mxu0 %v3019
        %v3207 = vpop.f32.mrf.mxu0
        %v3208 = vadd.f32 0.0, %v3207
        %3209 = vmatmul.f32.gmra.mxu0 %v3021
        %v3210 = vpop.f32.mrf.mxu0
        %v3211 = vadd.f32 0.0, %v3210
        %3212 = vmatmul.f32.gmra.mxu0 %v3023
        %v3213 = vpop.f32.mrf.mxu0
        %v3214 = vadd.f32 0.0, %v3213
        %3215 = vmatmul.f32.gmra.mxu0 %v3025
        %v3216 = vpop.f32.mrf.mxu0
        %v3217 = vadd.f32 0.0, %v3216
        %3218 = vdwg.mxu0
        %v3219 = vrcp.pop %v3027
        %v3220 = vrcp.pop %v3029
        %v3221 = vrcp.pop %v3031
        %v3222 = vrcp.pop %v3033
        %v3223 = vrcp.pop %v3035
        %v3224 = vrcp.pop %v3037
        %v3225 = vrcp.pop %v3039
        %v3226 = vrcp.pop %v3041
        %v3227 = vrcp.pop %v3043
        %v3228 = vrcp.pop %v3045
        %v3229 = vrcp.pop %v3047
        %v3230 = vrcp.pop %v3049
        %v3231 = vrcp.pop %v3051
        %v3232 = vrcp.pop %v3053
        %v3233 = vrcp.pop %v3055
        %v3234 = vrcp.pop %v3057
        %v3235 = vrcp.pop %v3059
        %v3236 = vrcp.pop %v3061
        %v3237 = vrcp.pop %v3063
        %v3238 = vrcp.pop %v3065
        %v3239 = vrcp.pop %v3067
        %v3240 = vrcp.pop %v3069
        %v3241 = vrcp.pop %v3071
        %v3242 = vrcp.pop %v3073
        %v3243 = vrcp.pop %v3075
        %v3244 = vrcp.pop %v3077
        %v3245 = vrcp.pop %v3079
        %v3246 = vrcp.pop %v3081
        %v3247 = vrcp.pop %v3083
        %v3248 = vrcp.pop %v3085
        %v3249 = vrcp.pop %v3087
        %v3250 = vrcp.pop %v3089
        %v3251 = vmul.f32 %v3124, %v3219
        %v3252 = vmul.f32 %v3127, %v3220
        %v3253 = vmul.f32 %v3130, %v3221
        %v3254 = vmul.f32 %v3133, %v3222
        %v3255 = vmul.f32 %v3136, %v3223
        %v3256 = vmul.f32 %v3139, %v3224
        %v3257 = vmul.f32 %v3142, %v3225
        %v3258 = vmul.f32 %v3145, %v3226
        %v3259 = vmul.f32 %v3148, %v3227
        %v3260 = vmul.f32 %v3151, %v3228
        %v3261 = vmul.f32 %v3154, %v3229
        %v3262 = vmul.f32 %v3157, %v3230
        %v3263 = vmul.f32 %v3160, %v3231
        %v3264 = vmul.f32 %v3163, %v3232
        %v3265 = vmul.f32 %v3166, %v3233
        %v3266 = vmul.f32 %v3169, %v3234
        %v3267 = vmul.f32 %v3172, %v3235
        %v3268 = vmul.f32 %v3175, %v3236
        %v3269 = vmul.f32 %v3178, %v3237
        %v3270 = vmul.f32 %v3181, %v3238
        %v3271 = vmul.f32 %v3184, %v3239
        %v3272 = vmul.f32 %v3187, %v3240
        %v3273 = vmul.f32 %v3190, %v3241
        %v3274 = vmul.f32 %v3193, %v3242
        %v3275 = vmul.f32 %v3196, %v3243
        %v3276 = vmul.f32 %v3199, %v3244
        %v3277 = vmul.f32 %v3202, %v3245
        %v3278 = vmul.f32 %v3205, %v3246
        %v3279 = vmul.f32 %v3208, %v3247
        %v3280 = vmul.f32 %v3211, %v3248
        %v3281 = vmul.f32 %v3214, %v3249
        %v3282 = vmul.f32 %v3217, %v3250
        %v3283 = vadd.f32 %v2670, %v3251
        %v3284 = vadd.f32 %v2671, %v3252
        %v3285 = vadd.f32 %v2672, %v3253
        %v3286 = vadd.f32 %v2673, %v3254
        %v3287 = vadd.f32 %v2674, %v3255
        %v3288 = vadd.f32 %v2675, %v3256
        %v3289 = vadd.f32 %v2676, %v3257
        %v3290 = vadd.f32 %v2677, %v3258
        %v3291 = vadd.f32 %v2678, %v3259
        %v3292 = vadd.f32 %v2679, %v3260
        %v3293 = vadd.f32 %v2680, %v3261
        %v3294 = vadd.f32 %v2681, %v3262
        %v3295 = vadd.f32 %v2682, %v3263
        %v3296 = vadd.f32 %v2683, %v3264
        %v3297 = vadd.f32 %v2684, %v3265
        %v3298 = vadd.f32 %v2685, %v3266
        %v3299 = vadd.f32 %v2686, %v3267
        %v3300 = vadd.f32 %v2687, %v3268
        %v3301 = vadd.f32 %v2688, %v3269
        %v3302 = vadd.f32 %v2689, %v3270
        %v3303 = vadd.f32 %v2690, %v3271
        %v3304 = vadd.f32 %v2691, %v3272
        %v3305 = vadd.f32 %v2692, %v3273
        %v3306 = vadd.f32 %v2693, %v3274
        %v3307 = vadd.f32 %v2694, %v3275
        %v3308 = vadd.f32 %v2695, %v3276
        %v3309 = vadd.f32 %v2696, %v3277
        %v3310 = vadd.f32 %v2697, %v3278
        %v3311 = vadd.f32 %v2698, %v3279
        %v3312 = vadd.f32 %v2699, %v3280
        %v3313 = vadd.f32 %v2700, %v3281
        %v3314 = vadd.f32 %v2701, %v3282
        %3315 = vst [vmem:[%s1150] sm:$0xff] %v3283
        %3316 = vst [vmem:[%s1150 + $0x8] sm:$0xff] %v3284
        %3317 = vst [vmem:[%s1150 + $0x10] sm:$0xff] %v3285
        %3318 = vst [vmem:[%s1150 + $0x18] sm:$0xff] %v3286
        %3319 = vst [vmem:[%s1150 + $0x20] sm:$0xff] %v3287
        %3320 = vst [vmem:[%s1150 + $0x28] sm:$0xff] %v3288
        %3321 = vst [vmem:[%s1150 + $0x30] sm:$0xff] %v3289
        %3322 = vst [vmem:[%s1150 + $0x38] sm:$0xff] %v3290
        %3323 = vst [vmem:[%s1150 + $0x40] sm:$0xff] %v3291
        %3324 = vst [vmem:[%s1150 + $0x48] sm:$0xff] %v3292
        %3325 = vst [vmem:[%s1150 + $0x50] sm:$0xff] %v3293
        %3326 = vst [vmem:[%s1150 + $0x58] sm:$0xff] %v3294
        %3327 = vst [vmem:[%s1150 + $0x60] sm:$0xff] %v3295
        %3328 = vst [vmem:[%s1150 + $0x68] sm:$0xff] %v3296
        %3329 = vst [vmem:[%s1150 + $0x70] sm:$0xff] %v3297
        %3330 = vst [vmem:[%s1150 + $0x78] sm:$0xff] %v3298
        %3331 = vst [vmem:[%s1150 + $0x80] sm:$0xff] %v3299
        %3332 = vst [vmem:[%s1150 + $0x88] sm:$0xff] %v3300
        %3333 = vst [vmem:[%s1150 + $0x90] sm:$0xff] %v3301
        %3334 = vst [vmem:[%s1150 + $0x98] sm:$0xff] %v3302
        %3335 = vst [vmem:[%s1150 + $0xa0] sm:$0xff] %v3303
        %3336 = vst [vmem:[%s1150 + $0xa8] sm:$0xff] %v3304
        %3337 = vst [vmem:[%s1150 + $0xb0] sm:$0xff] %v3305
        %3338 = vst [vmem:[%s1150 + $0xb8] sm:$0xff] %v3306
        %3339 = vst [vmem:[%s1150 + $0xc0] sm:$0xff] %v3307
        %3340 = vst [vmem:[%s1150 + $0xc8] sm:$0xff] %v3308
        %3341 = vst [vmem:[%s1150 + $0xd0] sm:$0xff] %v3309
        %3342 = vst [vmem:[%s1150 + $0xd8] sm:$0xff] %v3310
        %3343 = vst [vmem:[%s1150 + $0xe0] sm:$0xff] %v3311
        %3344 = vst [vmem:[%s1150 + $0xe8] sm:$0xff] %v3312
        %3345 = vst [vmem:[%s1150 + $0xf0] sm:$0xff] %v3313
        %3346 = vst [vmem:[%s1150 + $0xf8] sm:$0xff] %v3314
        %s3347 = sand.u32 %s198, 1
        %s3348 = sand.u32 %s198, 1
        %s3349 = smul.addr %s3348, 256
        %s3350 = scalar_lea.vmem [#allocation9], %s3349
        // Predicated region
        $region231: #{wan_i2v_cross_attention.12} parent=209 // pred_check
          %p3351 = pneg %p208
        $region232: #{wan_i2v_cross_attention.12} parent=209 // pred_check_branch
          %3353 = sbr.rel (%p3351) target = $region234
        $region233: #{wan_i2v_cross_attention.12} parent=209 // pred_region
          %s3354 = smul.u32 32, %s32
          %s3355 = smul.addr %s3354, 2
          %s3356 = sadd.s32 %s31, %s3355
          %s3357 = smul.addr %s30, 64
          %s3358 = sadd.s32 %s3356, %s3357
          %s3359 = smul.addr %s3358, 8
          %s3360 = scalar_lea.vmem %s6, %s3359
          // Predicated region
          $region235: #{wan_i2v_cross_attention.12} parent=233 // pred_check
            _
          $region236: #{wan_i2v_cross_attention.12} parent=233 // pred_check_branch
            %3362 = sbr.rel (0) target = $region238
          $region237: #{wan_i2v_cross_attention.12} parent=233 // pred_region
            // Predicated region
            $region239: #{wan_i2v_cross_attention.12} parent=237 // pred_check
              _
            $region240: #{wan_i2v_cross_attention.12} parent=237 // pred_check_branch
              %3364 = sbr.rel (0) target = $region242
            $region241: #{wan_i2v_cross_attention.12} parent=237 // pred_region
              // Predicated region
              $region254: #{wan_i2v_cross_attention.12} parent=241 // pred_check
                _
              $region255: #{wan_i2v_cross_attention.12} parent=241 // pred_check_branch
                %3442 = sbr.rel (0) target = $region257
              $region256: #{wan_i2v_cross_attention.12} parent=241 // pred_region
                loop: start=0, step=1, limit=1
                $region258: #{wan_i2v_cross_attention.12} parent=256 // loop_pre_header
                  _
                $region259: #{wan_i2v_cross_attention.12} parent=256 // loop_header
                  %s3444 = sphi 0, %s3448
                  %p3445 = scmp.ge.s32.totalorder %s3444, 1
                  %s3449 = sphi %s3350, %s3350
                  %s3450 = sphi %s3360, %s3360
                $region260: #{wan_i2v_cross_attention.12} parent=256 // loop_header_branch
                  %3447 = sbr.rel (%p3445) target = $region264
                $region261: #{wan_i2v_cross_attention.12} parent=256 // loop_body
                  %v3451 = vld [vmem:[%s3449] sm:$0xff]
                  %3452 = vst [vmem:[%s3450] sm:$0xff] %v3451
                  %v3453 = vld [vmem:[%s3449 + $0x8] sm:$0xff]
                  %3454 = vst [vmem:[%s3450 + $0x10] sm:$0xff] %v3453
                  %v3455 = vld [vmem:[%s3449 + $0x10] sm:$0xff]
                  %3456 = vst [vmem:[%s3450 + $0x20] sm:$0xff] %v3455
                  %v3457 = vld [vmem:[%s3449 + $0x18] sm:$0xff]
                  %3458 = vst [vmem:[%s3450 + $0x30] sm:$0xff] %v3457
                  %v3459 = vld [vmem:[%s3449 + $0x20] sm:$0xff]
                  %3460 = vst [vmem:[%s3450 + $0x40] sm:$0xff] %v3459
                  %v3461 = vld [vmem:[%s3449 + $0x28] sm:$0xff]
                  %3462 = vst [vmem:[%s3450 + $0x50] sm:$0xff] %v3461
                  %v3463 = vld [vmem:[%s3449 + $0x30] sm:$0xff]
                  %3464 = vst [vmem:[%s3450 + $0x60] sm:$0xff] %v3463
                  %v3465 = vld [vmem:[%s3449 + $0x38] sm:$0xff]
                  %3466 = vst [vmem:[%s3450 + $0x70] sm:$0xff] %v3465
                  %v3467 = vld [vmem:[%s3449 + $0x40] sm:$0xff]
                  %3468 = vst [vmem:[%s3450 + $0x80] sm:$0xff] %v3467
                  %v3469 = vld [vmem:[%s3449 + $0x48] sm:$0xff]
                  %3470 = vst [vmem:[%s3450 + $0x90] sm:$0xff] %v3469
                  %v3471 = vld [vmem:[%s3449 + $0x50] sm:$0xff]
                  %3472 = vst [vmem:[%s3450 + $0xa0] sm:$0xff] %v3471
                  %v3473 = vld [vmem:[%s3449 + $0x58] sm:$0xff]
                  %3474 = vst [vmem:[%s3450 + $0xb0] sm:$0xff] %v3473
                  %v3475 = vld [vmem:[%s3449 + $0x60] sm:$0xff]
                  %3476 = vst [vmem:[%s3450 + $0xc0] sm:$0xff] %v3475
                  %v3477 = vld [vmem:[%s3449 + $0x68] sm:$0xff]
                  %3478 = vst [vmem:[%s3450 + $0xd0] sm:$0xff] %v3477
                  %v3479 = vld [vmem:[%s3449 + $0x70] sm:$0xff]
                  %3480 = vst [vmem:[%s3450 + $0xe0] sm:$0xff] %v3479
                  %v3481 = vld [vmem:[%s3449 + $0x78] sm:$0xff]
                  %3482 = vst [vmem:[%s3450 + $0xf0] sm:$0xff] %v3481
                  %v3483 = vld [vmem:[%s3449 + $0x80] sm:$0xff]
                  %3484 = vst [vmem:[%s3450 + $0x100] sm:$0xff] %v3483
                  %v3485 = vld [vmem:[%s3449 + $0x88] sm:$0xff]
                  %3486 = vst [vmem:[%s3450 + $0x110] sm:$0xff] %v3485
                  %v3487 = vld [vmem:[%s3449 + $0x90] sm:$0xff]
                  %3488 = vst [vmem:[%s3450 + $0x120] sm:$0xff] %v3487
                  %v3489 = vld [vmem:[%s3449 + $0x98] sm:$0xff]
                  %3490 = vst [vmem:[%s3450 + $0x130] sm:$0xff] %v3489
                  %v3491 = vld [vmem:[%s3449 + $0xa0] sm:$0xff]
                  %3492 = vst [vmem:[%s3450 + $0x140] sm:$0xff] %v3491
                  %v3493 = vld [vmem:[%s3449 + $0xa8] sm:$0xff]
                  %3494 = vst [vmem:[%s3450 + $0x150] sm:$0xff] %v3493
                  %v3495 = vld [vmem:[%s3449 + $0xb0] sm:$0xff]
                  %3496 = vst [vmem:[%s3450 + $0x160] sm:$0xff] %v3495
                  %v3497 = vld [vmem:[%s3449 + $0xb8] sm:$0xff]
                  %3498 = vst [vmem:[%s3450 + $0x170] sm:$0xff] %v3497
                  %v3499 = vld [vmem:[%s3449 + $0xc0] sm:$0xff]
                  %3500 = vst [vmem:[%s3450 + $0x180] sm:$0xff] %v3499
                  %v3501 = vld [vmem:[%s3449 + $0xc8] sm:$0xff]
                  %3502 = vst [vmem:[%s3450 + $0x190] sm:$0xff] %v3501
                  %v3503 = vld [vmem:[%s3449 + $0xd0] sm:$0xff]
                  %3504 = vst [vmem:[%s3450 + $0x1a0] sm:$0xff] %v3503
                  %v3505 = vld [vmem:[%s3449 + $0xd8] sm:$0xff]
                  %3506 = vst [vmem:[%s3450 + $0x1b0] sm:$0xff] %v3505
                  %v3507 = vld [vmem:[%s3449 + $0xe0] sm:$0xff]
                  %3508 = vst [vmem:[%s3450 + $0x1c0] sm:$0xff] %v3507
                  %v3509 = vld [vmem:[%s3449 + $0xe8] sm:$0xff]
                  %3510 = vst [vmem:[%s3450 + $0x1d0] sm:$0xff] %v3509
                  %v3511 = vld [vmem:[%s3449 + $0xf0] sm:$0xff]
                  %3512 = vst [vmem:[%s3450 + $0x1e0] sm:$0xff] %v3511
                  %v3513 = vld [vmem:[%s3449 + $0xf8] sm:$0xff]
                  %3514 = vst [vmem:[%s3450 + $0x1f0] sm:$0xff] %v3513
                $region262: #{wan_i2v_cross_attention.12} parent=256 // loop_footer
                  %s3448 = sadd.s32 1, %s3444
                $region263: #{wan_i2v_cross_attention.12} parent=256 // loop_footer_branch
                  %3443 = sbr.rel target = $region259
                $region264: #{wan_i2v_cross_attention.12} parent=256 // loop_exit
                  _
              $region257: #{wan_i2v_cross_attention.12} parent=241 // pred_fallthru
                _
              // Predicated region
              $region265: #{wan_i2v_cross_attention.12} parent=241 // pred_check
                _
              $region266: #{wan_i2v_cross_attention.12} parent=241 // pred_check_branch
                %3516 = sbr.rel target = $region268
              $region267: #{wan_i2v_cross_attention.12} parent=241 // pred_region
                _
              $region268: #{wan_i2v_cross_attention.12} parent=241 // pred_fallthru
                _
            $region242: #{wan_i2v_cross_attention.12} parent=237 // pred_fallthru
              _
            // Predicated region
            $region243: #{wan_i2v_cross_attention.12} parent=237 // pred_check
              _
            $region244: #{wan_i2v_cross_attention.12} parent=237 // pred_check_branch
              %3366 = sbr.rel target = $region246
            $region245: #{wan_i2v_cross_attention.12} parent=237 // pred_region
              %s3368 = ssub.s32 256, 1
              loop: start=0, step=1, limit=1
              $region247: #{wan_i2v_cross_attention.12} parent=245 // loop_pre_header
                _
              $region248: #{wan_i2v_cross_attention.12} parent=245 // loop_header
                %s3370 = sphi 0, %s3374
                %p3371 = scmp.ge.s32.totalorder %s3370, 1
                %s3375 = sphi %s3350, %s3350
                %s3376 = sphi %s3360, %s3360
              $region249: #{wan_i2v_cross_attention.12} parent=245 // loop_header_branch
                %3373 = sbr.rel (%p3371) target = $region253
              $region250: #{wan_i2v_cross_attention.12} parent=245 // loop_body
                %v3377 = vld [vmem:[%s3375] sm:%s3368]
                %3378 = vst [vmem:[%s3376] sm:%s3368] %v3377
                %v3379 = vld [vmem:[%s3375 + $0x8] sm:%s3368]
                %3380 = vst [vmem:[%s3376 + $0x10] sm:%s3368] %v3379
                %v3381 = vld [vmem:[%s3375 + $0x10] sm:%s3368]
                %3382 = vst [vmem:[%s3376 + $0x20] sm:%s3368] %v3381
                %v3383 = vld [vmem:[%s3375 + $0x18] sm:%s3368]
                %3384 = vst [vmem:[%s3376 + $0x30] sm:%s3368] %v3383
                %v3385 = vld [vmem:[%s3375 + $0x20] sm:%s3368]
                %3386 = vst [vmem:[%s3376 + $0x40] sm:%s3368] %v3385
                %v3387 = vld [vmem:[%s3375 + $0x28] sm:%s3368]
                %3388 = vst [vmem:[%s3376 + $0x50] sm:%s3368] %v3387
                %v3389 = vld [vmem:[%s3375 + $0x30] sm:%s3368]
                %3390 = vst [vmem:[%s3376 + $0x60] sm:%s3368] %v3389
                %v3391 = vld [vmem:[%s3375 + $0x38] sm:%s3368]
                %3392 = vst [vmem:[%s3376 + $0x70] sm:%s3368] %v3391
                %v3393 = vld [vmem:[%s3375 + $0x40] sm:%s3368]
                %3394 = vst [vmem:[%s3376 + $0x80] sm:%s3368] %v3393
                %v3395 = vld [vmem:[%s3375 + $0x48] sm:%s3368]
                %3396 = vst [vmem:[%s3376 + $0x90] sm:%s3368] %v3395
                %v3397 = vld [vmem:[%s3375 + $0x50] sm:%s3368]
                %3398 = vst [vmem:[%s3376 + $0xa0] sm:%s3368] %v3397
                %v3399 = vld [vmem:[%s3375 + $0x58] sm:%s3368]
                %3400 = vst [vmem:[%s3376 + $0xb0] sm:%s3368] %v3399
                %v3401 = vld [vmem:[%s3375 + $0x60] sm:%s3368]
                %3402 = vst [vmem:[%s3376 + $0xc0] sm:%s3368] %v3401
                %v3403 = vld [vmem:[%s3375 + $0x68] sm:%s3368]
                %3404 = vst [vmem:[%s3376 + $0xd0] sm:%s3368] %v3403
                %v3405 = vld [vmem:[%s3375 + $0x70] sm:%s3368]
                %3406 = vst [vmem:[%s3376 + $0xe0] sm:%s3368] %v3405
                %v3407 = vld [vmem:[%s3375 + $0x78] sm:%s3368]
                %3408 = vst [vmem:[%s3376 + $0xf0] sm:%s3368] %v3407
                %v3409 = vld [vmem:[%s3375 + $0x80] sm:%s3368]
                %3410 = vst [vmem:[%s3376 + $0x100] sm:%s3368] %v3409
                %v3411 = vld [vmem:[%s3375 + $0x88] sm:%s3368]
                %3412 = vst [vmem:[%s3376 + $0x110] sm:%s3368] %v3411
                %v3413 = vld [vmem:[%s3375 + $0x90] sm:%s3368]
                %3414 = vst [vmem:[%s3376 + $0x120] sm:%s3368] %v3413
                %v3415 = vld [vmem:[%s3375 + $0x98] sm:%s3368]
                %3416 = vst [vmem:[%s3376 + $0x130] sm:%s3368] %v3415
                %v3417 = vld [vmem:[%s3375 + $0xa0] sm:%s3368]
                %3418 = vst [vmem:[%s3376 + $0x140] sm:%s3368] %v3417
                %v3419 = vld [vmem:[%s3375 + $0xa8] sm:%s3368]
                %3420 = vst [vmem:[%s3376 + $0x150] sm:%s3368] %v3419
                %v3421 = vld [vmem:[%s3375 + $0xb0] sm:%s3368]
                %3422 = vst [vmem:[%s3376 + $0x160] sm:%s3368] %v3421
                %v3423 = vld [vmem:[%s3375 + $0xb8] sm:%s3368]
                %3424 = vst [vmem:[%s3376 + $0x170] sm:%s3368] %v3423
                %v3425 = vld [vmem:[%s3375 + $0xc0] sm:%s3368]
                %3426 = vst [vmem:[%s3376 + $0x180] sm:%s3368] %v3425
                %v3427 = vld [vmem:[%s3375 + $0xc8] sm:%s3368]
                %3428 = vst [vmem:[%s3376 + $0x190] sm:%s3368] %v3427
                %v3429 = vld [vmem:[%s3375 + $0xd0] sm:%s3368]
                %3430 = vst [vmem:[%s3376 + $0x1a0] sm:%s3368] %v3429
                %v3431 = vld [vmem:[%s3375 + $0xd8] sm:%s3368]
                %3432 = vst [vmem:[%s3376 + $0x1b0] sm:%s3368] %v3431
                %v3433 = vld [vmem:[%s3375 + $0xe0] sm:%s3368]
                %3434 = vst [vmem:[%s3376 + $0x1c0] sm:%s3368] %v3433
                %v3435 = vld [vmem:[%s3375 + $0xe8] sm:%s3368]
                %3436 = vst [vmem:[%s3376 + $0x1d0] sm:%s3368] %v3435
                %v3437 = vld [vmem:[%s3375 + $0xf0] sm:%s3368]
                %3438 = vst [vmem:[%s3376 + $0x1e0] sm:%s3368] %v3437
                %v3439 = vld [vmem:[%s3375 + $0xf8] sm:%s3368]
                %3440 = vst [vmem:[%s3376 + $0x1f0] sm:%s3368] %v3439
              $region251: #{wan_i2v_cross_attention.12} parent=245 // loop_footer
                %s3374 = sadd.s32 1, %s3370
              $region252: #{wan_i2v_cross_attention.12} parent=245 // loop_footer_branch
                %3369 = sbr.rel target = $region248
              $region253: #{wan_i2v_cross_attention.12} parent=245 // loop_exit
                _
            $region246: #{wan_i2v_cross_attention.12} parent=237 // pred_fallthru
              _
          $region238: #{wan_i2v_cross_attention.12} parent=233 // pred_fallthru
            _
          %3517 = vnop
        $region234: #{wan_i2v_cross_attention.12} parent=209 // pred_fallthru
          _
      $region210: #{wan_i2v_cross_attention.12} parent=5 // pred_fallthru
        _
      %p3518 = scmp.le.s32.totalorder 2, %s20
      // Predicated region
      $region269: #{wan_i2v_cross_attention.12} parent=5 // pred_check
        %p3519 = pneg %p3518
      $region270: #{wan_i2v_cross_attention.12} parent=5 // pred_check_branch
        %3521 = sbr.rel (%p3519) target = $region272
      $region271: #{wan_i2v_cross_attention.12} parent=5 // pred_region
        %s3522 = ssub.s32 %s20, 2
        // Predicated region
        $region273: #{wan_i2v_cross_attention.12} parent=271 // pred_check
          %p3523 = pneg %p214
        $region274: #{wan_i2v_cross_attention.12} parent=271 // pred_check_branch
          %3525 = sbr.rel (%p3523) target = $region276
        $region275: #{wan_i2v_cross_attention.12} parent=271 // pred_region
          %s3526 = sand.u32 %s199, 1
          %s3527 = sand.u32 %s199, 1
          %s3528 = smul.addr %s3527, 256
          %s3529 = scalar_lea.vmem [#allocation9], %s3528
        $region276: #{wan_i2v_cross_attention.12} parent=271 // pred_fallthru
          _
      $region272: #{wan_i2v_cross_attention.12} parent=5 // pred_fallthru
        _
    $region6: #{wan_i2v_cross_attention.12} parent=1 // loop_footer
      %s24 = sadd.s32 1, %s20
    $region7: #{wan_i2v_cross_attention.12} parent=1 // loop_footer_branch
      %19 = sbr.rel target = $region3
    $region8: #{wan_i2v_cross_attention.12} parent=1 // loop_exit
      _

</llo_original>
